<compile_context>
chip_gen: v5e
topology: v5e:2x2
jax: 0.10.0
libtpu: 0.0.40
codegen_flags: <defaults>
</compile_context>

<pallas_src>
import jax
import jax.numpy as jnp
from jax.experimental import pallas as pl
from jax.experimental.pallas import tpu as pltpu

LRELU_SLOPE = 0.1
BN_EPS = 1e-5


def _leaky_relu(x, slope=LRELU_SLOPE):
    return jnp.where(x > 0, x, slope * x)


# ----------------------------- Pallas kernels -----------------------------

def conv_mm_lrelu_kernel(a_ref, w_ref, b_ref, o_ref):
    # o = leaky_relu(a @ w + b); w is bf16, a cast to bf16, f32 accumulate.
    y = jnp.dot(a_ref[...].astype(jnp.bfloat16), w_ref[...],
                preferred_element_type=jnp.float32)
    y = y + b_ref[...]
    o_ref[...] = _leaky_relu(y)


def conv_mm_bn_lrelu_kernel(a_ref, w_ref, b_ref, g_ref, bt_ref, o_ref):
    # o = leaky_relu(BN(a @ w + b)); BN over all rows (train-mode stats).
    # Entire M (batch*spatial) axis lives in this single block, so the
    # per-channel statistics are exact.
    y = jnp.dot(a_ref[...].astype(jnp.bfloat16), w_ref[...],
                preferred_element_type=jnp.float32)
    y = y + b_ref[...]
    mean = jnp.mean(y, axis=0, keepdims=True)
    var = jnp.mean((y - mean) ** 2, axis=0, keepdims=True)  # biased variance
    y = (y - mean) * jax.lax.rsqrt(var + BN_EPS)
    y = y * g_ref[...] + bt_ref[...]
    o_ref[...] = _leaky_relu(y)


def fc_fused_kernel(flat_ref, w3_ref, b3_ref, g3_ref, bt3_ref, w4_ref, b4_ref,
                    fe_ref, yp_ref):
    # Column-block j of:  fe = leaky_relu(BN1d(flat @ W3 + b3))
    # plus this block's partial fc2 logit:  yp[j] = fe_blk @ W4_blk (+ b4 on j==0)
    j = pl.program_id(0)
    z = jnp.dot(flat_ref[...].astype(jnp.bfloat16), w3_ref[...],
                preferred_element_type=jnp.float32)
    z = z + b3_ref[...]
    # BatchNorm1d (train mode): stats over the batch axis.  Every column block
    # contains the full batch, so per-block stats are exact (column tiling is
    # statistics-safe; never tile the batch axis of this kernel).
    mean = jnp.mean(z, axis=0, keepdims=True)
    var = jnp.mean((z - mean) ** 2, axis=0, keepdims=True)
    z = (z - mean) * jax.lax.rsqrt(var + BN_EPS)
    z = z * g3_ref[...] + bt3_ref[...]
    fe = _leaky_relu(z)
    fe_ref[...] = fe

    part = jnp.dot(fe.astype(jnp.bfloat16), w4_ref[...],
                   preferred_element_type=jnp.float32)          # (M, 1)
    part = part + b4_ref[...] * jnp.where(j == 0, 1.0, 0.0)     # bias once
    yp_ref[...] = part[None, :, :]                              # (1, M, 1)


# --------------------------- pallas_call wrappers --------------------------

def _full(shape):
    return pl.BlockSpec(shape, lambda i: (0,) * len(shape))


def pallas_conv_lrelu(a, w, b):
    M, K = a.shape
    N = w.shape[1]
    return pl.pallas_call(
        conv_mm_lrelu_kernel,
        out_shape=jax.ShapeDtypeStruct((M, N), jnp.float32),
        grid=(1,),
        in_specs=[_full((M, K)), _full((K, N)), _full((1, N))],
        out_specs=_full((M, N)),
        compiler_params=pltpu.CompilerParams(
            dimension_semantics=("arbitrary",)),
    )(a, w, b)


def pallas_conv_bn_lrelu(a, w, b, gamma, beta):
    M, K = a.shape
    N = w.shape[1]
    return pl.pallas_call(
        conv_mm_bn_lrelu_kernel,
        out_shape=jax.ShapeDtypeStruct((M, N), jnp.float32),
        grid=(1,),
        in_specs=[_full((M, K)), _full((K, N)), _full((1, N)),
                  _full((1, N)), _full((1, N))],
        out_specs=_full((M, N)),
        compiler_params=pltpu.CompilerParams(
            dimension_semantics=("arbitrary",)),
    )(a, w, b, gamma, beta)


def pallas_fc1_fc2_fused(flat, w3, b3, g3, bt3, w4, b4, *, col_block=512):
    """fc1 (+BN1d +LeakyReLU) fused with fc2, tiled over fc1 output columns.

    Returns (fe_out (M, F) f32, y_partials (F//col_block, M, 1) f32).
    y = sigmoid(sum(y_partials, axis=0)) is done by the caller (2 elements).
    """
    M, K = flat.shape
    F = w3.shape[1]
    assert F % col_block == 0
    n_blocks = F // col_block

    flops = 2 * M * K * F + 2 * M * F            # fc1 + fc2
    bytes_accessed = (w3.size * w3.dtype.itemsize
                      + n_blocks * flat.size * flat.dtype.itemsize
                      + M * F * 4                 # fe_out store
                      + w4.size * w4.dtype.itemsize
                      + n_blocks * M * 4)

    fe, yp = pl.pallas_call(
        fc_fused_kernel,
        out_shape=(jax.ShapeDtypeStruct((M, F), jnp.float32),
                   jax.ShapeDtypeStruct((n_blocks, M, 1), jnp.float32)),
        grid=(n_blocks,),
        in_specs=[
            pl.BlockSpec((M, K), lambda j: (0, 0)),          # flat (whole)
            pl.BlockSpec((K, col_block), lambda j: (0, j)),  # fc1_w column block
            pl.BlockSpec((1, col_block), lambda j: (0, j)),  # fc1_b
            pl.BlockSpec((1, col_block), lambda j: (0, j)),  # bn3 gamma
            pl.BlockSpec((1, col_block), lambda j: (0, j)),  # bn3 beta
            pl.BlockSpec((col_block, 1), lambda j: (j, 0)),  # fc2_w row block
            pl.BlockSpec((1, 1), lambda j: (0, 0)),          # fc2_b
        ],
        out_specs=(
            pl.BlockSpec((M, col_block), lambda j: (0, j)),  # fe_out columns
            pl.BlockSpec((1, M, 1), lambda j: (j, 0, 0)),    # partial fc2 logits
        ),
        compiler_params=pltpu.CompilerParams(
            dimension_semantics=("parallel",),               # megacore split on v7x
            vmem_limit_bytes=32 * 1024 * 1024,               # lift v5e's 16 MiB default
        ),
        cost_estimate=pl.CostEstimate(flops=flops, transcendentals=F,
                                      bytes_accessed=bytes_accessed),
    )(flat, w3, b3, g3, bt3, w4, b4)
    return fe, yp


# --------------------------------- glue ------------------------------------

def im2col(x_nhwc, k, s):
    """Extract k x k patches at stride s. Patch feature order = (kh, kw, cin)."""
    N, H, W, C = x_nhwc.shape
    Ho = (H - k) // s + 1
    Wo = (W - k) // s + 1
    cols = []
    for i in range(k):
        for j in range(k):
            cols.append(x_nhwc[:, i:i + s * Ho:s, j:j + s * Wo:s, :])  # (N,Ho,Wo,C)
    patches = jnp.stack(cols, axis=3)                                   # (N,Ho,Wo,k*k,C)
    return patches.reshape(N, Ho, Wo, k * k * C)


def init_raw_params(key):
    """Random params in PyTorch layouts (OIHW convs, (out,in) linears)."""
    ks = jax.random.split(key, 8)
    p = {}
    p["conv1_w"] = 0.05 * jax.random.normal(ks[0], (64, 1, 4, 4), jnp.float32)
    p["conv1_b"] = 0.01 * jax.random.normal(ks[1], (64,), jnp.float32)
    p["conv2_w"] = 0.05 * jax.random.normal(ks[2], (128, 64, 4, 4), jnp.float32)
    p["conv2_b"] = 0.01 * jax.random.normal(ks[3], (128,), jnp.float32)
    p["bn2_g"] = jnp.ones((128,), jnp.float32)
    p["bn2_b"] = jnp.zeros((128,), jnp.float32)
    p["fc1_w"] = 0.02 * jax.random.normal(ks[4], (1024, 128 * 5 * 5), jnp.float32)
    p["fc1_b"] = 0.01 * jax.random.normal(ks[5], (1024,), jnp.float32)
    p["bn3_g"] = jnp.ones((1024,), jnp.float32)
    p["bn3_b"] = jnp.zeros((1024,), jnp.float32)
    p["fc2_w"] = 0.02 * jax.random.normal(ks[6], (1, 1024), jnp.float32)
    p["fc2_b"] = 0.01 * jax.random.normal(ks[7], (1,), jnp.float32)
    return p


def prepare_params(raw):
    """One-time (init-time) layout conversion: pre-transposed bf16 matmul weights,
    (1, C) f32 biases/BN params, and fc1_w rows permuted from PyTorch's NCHW
    flatten order (c*25 + p) to the NHWC order (p*128 + c) so the hot path needs
    no activation transpose before fc1."""
    p = {}
    # conv weights OIHW -> (kh*kw*cin, cout), bf16
    p["conv1_w"] = jnp.transpose(raw["conv1_w"], (2, 3, 1, 0)).reshape(16, 64).astype(jnp.bfloat16)
    p["conv2_w"] = jnp.transpose(raw["conv2_w"], (2, 3, 1, 0)).reshape(1024, 128).astype(jnp.bfloat16)
    # fc1: (1024, 3200) -> transpose -> permute rows (c,p) -> (p,c) -> bf16
    w3 = raw["fc1_w"].T.reshape(128, 25, 1024).transpose(1, 0, 2).reshape(3200, 1024)
    p["fc1_w"] = w3.astype(jnp.bfloat16)
    p["fc2_w"] = raw["fc2_w"].T.astype(jnp.bfloat16)                    # (1024, 1)
    # biases / BN params: f32, shaped (1, C) for in-kernel broadcast
    p["conv1_b"] = raw["conv1_b"].reshape(1, 64)
    p["conv2_b"] = raw["conv2_b"].reshape(1, 128)
    p["bn2_g"] = raw["bn2_g"].reshape(1, 128)
    p["bn2_b"] = raw["bn2_b"].reshape(1, 128)
    p["fc1_b"] = raw["fc1_b"].reshape(1, 1024)
    p["bn3_g"] = raw["bn3_g"].reshape(1, 1024)
    p["bn3_b"] = raw["bn3_b"].reshape(1, 1024)
    p["fc2_b"] = raw["fc2_b"].reshape(1, 1)
    return p


def discriminator_forward(p, x_nchw):
    N = x_nchw.shape[0]
    x = jnp.transpose(x_nchw, (0, 2, 3, 1))                      # NCHW -> NHWC (C=1: free)

    # conv1: 1 -> 64, k=4, s=2, LeakyReLU(0.1)
    a1 = im2col(x, 4, 2).reshape(N * 13 * 13, 16)
    h1 = pallas_conv_lrelu(a1, p["conv1_w"], p["conv1_b"])       # (N*169, 64)
    h1 = h1.reshape(N, 13, 13, 64)

    # conv2: 64 -> 128, k=4, s=2, BatchNorm2d, LeakyReLU(0.1)
    a2 = im2col(h1, 4, 2).reshape(N * 25, 1024)
    h2 = pallas_conv_bn_lrelu(a2, p["conv2_w"], p["conv2_b"],
                              p["bn2_g"], p["bn2_b"])            # (N*25, 128)

    # PyTorch's x.view(N, 3200) on NCHW is reproduced by the fc1_w row
    # permutation done in prepare_params; here the NHWC rows reshape directly.
    flat = h2.reshape(N, 128 * 5 * 5)                            # (N, 3200), contiguous

    # fc1 (+BN1d +LeakyReLU) fused with fc2; column-parallel over 1024 outputs.
    fe_out, y_parts = pallas_fc1_fc2_fused(flat, p["fc1_w"], p["fc1_b"],
                                           p["bn3_g"], p["bn3_b"],
                                           p["fc2_w"], p["fc2_b"])
    y = jax.nn.sigmoid(jnp.sum(y_parts, axis=0))                 # (N, 1)
    return y, fe_out


if __name__ == "__main__":
    # The module's flatten (128*5*5) hard-codes 28x28 spatial input; batch kept small.
    x = jax.random.normal(jax.random.PRNGKey(0), (2, 1, 28, 28), jnp.float32)  # NCHW
    raw = init_raw_params(jax.random.PRNGKey(1))
    params = prepare_params(raw)   # one-time layout prep, outside the hot path

    fwd = jax.jit(discriminator_forward)
    y, fe_out = fwd(params, x)
    jax.block_until_ready((y, fe_out))

    assert y.shape == (2, 1) and y.dtype == jnp.float32
    assert fe_out.shape == (2, 1024) and fe_out.dtype == jnp.float32
    assert bool(jnp.all(jnp.isfinite(fe_out)))
    assert bool(jnp.all((y >= 0.0) & (y <= 1.0)))
    print("KERNEL_OK")
</pallas_src>

<mosaic_0001>
module attributes {stable_mosaic.version = 11 : i64} {
  func.func @conv_mm_lrelu_kernel(%arg0: i32, %arg1: memref<338x16xf32, #tpu.memory_space<vmem>>, %arg2: memref<16x64xbf16, #tpu.memory_space<vmem>>, %arg3: memref<1x64xf32, #tpu.memory_space<vmem>>, %arg4: memref<338x64xf32, #tpu.memory_space<vmem>>) attributes {dimension_semantics = [#tpu.dimension_semantics<arbitrary>], iteration_bounds = array<i64: 1>, scalar_prefetch = 0 : i64, scratch_operands = 0 : i64, tpu.core_type = #tpu.core_type<tc>, window_params = [{pipeline_mode = #tpu.pipeline_mode<synchronous>, transform_indices = @transform_0, window_bounds = array<i64: 338, 16>}, {pipeline_mode = #tpu.pipeline_mode<synchronous>, transform_indices = @transform_1, window_bounds = array<i64: 16, 64>}, {pipeline_mode = #tpu.pipeline_mode<synchronous>, transform_indices = @transform_2, window_bounds = array<i64: 1, 64>}, {pipeline_mode = #tpu.pipeline_mode<synchronous>, transform_indices = @transform_3, window_bounds = array<i64: 338, 64>}]} {
    %c0 = arith.constant 0 : index
    %c0_0 = arith.constant 0 : index
    %0 = vector.load %arg1[%c0, %c0_0] : memref<338x16xf32, #tpu.memory_space<vmem>>, vector<338x16xf32>
    %1 = arith.truncf %0 : vector<338x16xf32> to vector<338x16xbf16>
    %c0_1 = arith.constant 0 : index
    %c0_2 = arith.constant 0 : index
    %2 = vector.load %arg2[%c0_1, %c0_2] : memref<16x64xbf16, #tpu.memory_space<vmem>>, vector<16x64xbf16>
    %cst = arith.constant dense<0.000000e+00> : vector<338x64xf32>
    %3 = tpu.matmul %1, %2, %cst {dimension_numbers = #tpu.dot_dimension_numbers<[1], [0], [0], [1], [0, 0, 1, 1], [], []>} : vector<338x16xbf16>, vector<16x64xbf16>, vector<338x64xf32> -> vector<338x64xf32>
    %c0_3 = arith.constant 0 : index
    %c0_4 = arith.constant 0 : index
    %4 = vector.load %arg3[%c0_3, %c0_4] : memref<1x64xf32, #tpu.memory_space<vmem>>, vector<1x64xf32>
    %5 = vector.broadcast %4 : vector<1x64xf32> to vector<338x64xf32>
    %6 = arith.addf %3, %5 : vector<338x64xf32>
    %cst_5 = arith.constant 0.000000e+00 : f32
    %7 = vector.broadcast %cst_5 : f32 to vector<338x64xf32>
    %8 = arith.cmpf ogt, %6, %7 : vector<338x64xf32>
    %cst_6 = arith.constant 1.000000e-01 : f32
    %9 = vector.broadcast %cst_6 : f32 to vector<338x64xf32>
    %10 = arith.mulf %9, %6 : vector<338x64xf32>
    %11 = arith.select %8, %6, %10 : vector<338x64xi1>, vector<338x64xf32>
    %c0_7 = arith.constant 0 : index
    %c0_8 = arith.constant 0 : index
    %12 = vector.load %arg4[%c0_7, %c0_8] : memref<338x64xf32, #tpu.memory_space<vmem>>, vector<338x64xf32>
    tpu.vector_store %arg4[%c0_7, %c0_8], %11 {strides = array<i32>} : memref<338x64xf32, #tpu.memory_space<vmem>>, vector<338x64xf32>,
    return
  }
  func.func @transform_0(%arg0: i32) -> (i32, i32) {
    %c0_i32 = arith.constant 0 : i32
    %c0_i32_0 = arith.constant 0 : i32
    %c0_i32_1 = arith.constant 0 : i32
    return %c0_i32, %c0_i32_0 : i32, i32
  }
  func.func @transform_1(%arg0: i32) -> (i32, i32) {
    %c0_i32 = arith.constant 0 : i32
    %c0_i32_0 = arith.constant 0 : i32
    %c0_i32_1 = arith.constant 0 : i32
    return %c0_i32, %c0_i32_0 : i32, i32
  }
  func.func @transform_2(%arg0: i32) -> (i32, i32) {
    %c0_i32 = arith.constant 0 : i32
    %c0_i32_0 = arith.constant 0 : i32
    %c0_i32_1 = arith.constant 0 : i32
    return %c0_i32, %c0_i32_0 : i32, i32
  }
  func.func @transform_3(%arg0: i32) -> (i32, i32) {
    %c0_i32 = arith.constant 0 : i32
    %c0_i32_0 = arith.constant 0 : i32
    %c0_i32_1 = arith.constant 0 : i32
    return %c0_i32, %c0_i32_0 : i32, i32
  }
}

module attributes {stable_mosaic.version = 11 : i64} {
  func.func @conv_mm_bn_lrelu_kernel(%arg0: i32, %arg1: memref<50x1024xf32, #tpu.memory_space<vmem>>, %arg2: memref<1024x128xbf16, #tpu.memory_space<vmem>>, %arg3: memref<1x128xf32, #tpu.memory_space<vmem>>, %arg4: memref<1x128xf32, #tpu.memory_space<vmem>>, %arg5: memref<1x128xf32, #tpu.memory_space<vmem>>, %arg6: memref<50x128xf32, #tpu.memory_space<vmem>>) attributes {dimension_semantics = [#tpu.dimension_semantics<arbitrary>], iteration_bounds = array<i64: 1>, scalar_prefetch = 0 : i64, scratch_operands = 0 : i64, tpu.core_type = #tpu.core_type<tc>, window_params = [{pipeline_mode = #tpu.pipeline_mode<synchronous>, transform_indices = @transform_0, window_bounds = array<i64: 50, 1024>}, {pipeline_mode = #tpu.pipeline_mode<synchronous>, transform_indices = @transform_1, window_bounds = array<i64: 1024, 128>}, {pipeline_mode = #tpu.pipeline_mode<synchronous>, transform_indices = @transform_2, window_bounds = array<i64: 1, 128>}, {pipeline_mode = #tpu.pipeline_mode<synchronous>, transform_indices = @transform_3, window_bounds = array<i64: 1, 128>}, {pipeline_mode = #tpu.pipeline_mode<synchronous>, transform_indices = @transform_4, window_bounds = array<i64: 1, 128>}, {pipeline_mode = #tpu.pipeline_mode<synchronous>, transform_indices = @transform_5, window_bounds = array<i64: 50, 128>}]} {
    %c0 = arith.constant 0 : index
    %c0_0 = arith.constant 0 : index
    %0 = vector.load %arg1[%c0, %c0_0] : memref<50x1024xf32, #tpu.memory_space<vmem>>, vector<50x1024xf32>
    %1 = arith.truncf %0 : vector<50x1024xf32> to vector<50x1024xbf16>
    %c0_1 = arith.constant 0 : index
    %c0_2 = arith.constant 0 : index
    %2 = vector.load %arg2[%c0_1, %c0_2] : memref<1024x128xbf16, #tpu.memory_space<vmem>>, vector<1024x128xbf16>
    %cst = arith.constant dense<0.000000e+00> : vector<50x128xf32>
    %3 = tpu.matmul %1, %2, %cst {dimension_numbers = #tpu.dot_dimension_numbers<[1], [0], [0], [1], [0, 0, 1, 1], [], []>} : vector<50x1024xbf16>, vector<1024x128xbf16>, vector<50x128xf32> -> vector<50x128xf32>
    %c0_3 = arith.constant 0 : index
    %c0_4 = arith.constant 0 : index
    %4 = vector.load %arg3[%c0_3, %c0_4] : memref<1x128xf32, #tpu.memory_space<vmem>>, vector<1x128xf32>
    %5 = vector.broadcast %4 : vector<1x128xf32> to vector<50x128xf32>
    %6 = arith.addf %3, %5 : vector<50x128xf32>
    %cst_5 = arith.constant dense<0.000000e+00> : vector<128xf32>
    %7 = vector.multi_reduction <add>, %6, %cst_5 [0] : vector<50x128xf32> to vector<128xf32>
    %8 = vector.shape_cast %7 : vector<128xf32> to vector<1x128xf32>
    %cst_6 = arith.constant 5.000000e+01 : f32
    %9 = vector.broadcast %cst_6 : f32 to vector<1x128xf32>
    %10 = arith.divf %8, %9 : vector<1x128xf32>
    %11 = vector.broadcast %10 : vector<1x128xf32> to vector<50x128xf32>
    %12 = arith.subf %6, %11 : vector<50x128xf32>
    %13 = arith.mulf %12, %12 : vector<50x128xf32>
    %cst_7 = arith.constant dense<0.000000e+00> : vector<128xf32>
    %14 = vector.multi_reduction <add>, %13, %cst_7 [0] : vector<50x128xf32> to vector<128xf32>
    %15 = vector.shape_cast %14 : vector<128xf32> to vector<1x128xf32>
    %cst_8 = arith.constant 5.000000e+01 : f32
    %16 = vector.broadcast %cst_8 : f32 to vector<1x128xf32>
    %17 = arith.divf %15, %16 : vector<1x128xf32>
    %18 = vector.broadcast %10 : vector<1x128xf32> to vector<50x128xf32>
    %19 = arith.subf %6, %18 : vector<50x128xf32>
    %cst_9 = arith.constant 9.99999974E-6 : f32
    %20 = vector.broadcast %cst_9 : f32 to vector<1x128xf32>
    %21 = arith.addf %17, %20 : vector<1x128xf32>
    %22 = math.rsqrt %21 : vector<1x128xf32>
    %23 = vector.broadcast %22 : vector<1x128xf32> to vector<50x128xf32>
    %24 = arith.mulf %19, %23 : vector<50x128xf32>
    %c0_10 = arith.constant 0 : index
    %c0_11 = arith.constant 0 : index
    %25 = vector.load %arg4[%c0_10, %c0_11] : memref<1x128xf32, #tpu.memory_space<vmem>>, vector<1x128xf32>
    %26 = vector.broadcast %25 : vector<1x128xf32> to vector<50x128xf32>
    %27 = arith.mulf %24, %26 : vector<50x128xf32>
    %c0_12 = arith.constant 0 : index
    %c0_13 = arith.constant 0 : index
    %28 = vector.load %arg5[%c0_12, %c0_13] : memref<1x128xf32, #tpu.memory_space<vmem>>, vector<1x128xf32>
    %29 = vector.broadcast %28 : vector<1x128xf32> to vector<50x128xf32>
    %30 = arith.addf %27, %29 : vector<50x128xf32>
    %cst_14 = arith.constant 0.000000e+00 : f32
    %31 = vector.broadcast %cst_14 : f32 to vector<50x128xf32>
    %32 = arith.cmpf ogt, %30, %31 : vector<50x128xf32>
    %cst_15 = arith.constant 1.000000e-01 : f32
    %33 = vector.broadcast %cst_15 : f32 to vector<50x128xf32>
    %34 = arith.mulf %33, %30 : vector<50x128xf32>
    %35 = arith.select %32, %30, %34 : vector<50x128xi1>, vector<50x128xf32>
    %c0_16 = arith.constant 0 : index
    %c0_17 = arith.constant 0 : index
    %36 = vector.load %arg6[%c0_16, %c0_17] : memref<50x128xf32, #tpu.memory_space<vmem>>, vector<50x128xf32>
    tpu.vector_store %arg6[%c0_16, %c0_17], %35 {strides = array<i32>} : memref<50x128xf32, #tpu.memory_space<vmem>>, vector<50x128xf32>,
    return
  }
  func.func @transform_0(%arg0: i32) -> (i32, i32) {
    %c0_i32 = arith.constant 0 : i32
    %c0_i32_0 = arith.constant 0 : i32
    %c0_i32_1 = arith.constant 0 : i32
    return %c0_i32, %c0_i32_0 : i32, i32
  }
  func.func @transform_1(%arg0: i32) -> (i32, i32) {
    %c0_i32 = arith.constant 0 : i32
    %c0_i32_0 = arith.constant 0 : i32
    %c0_i32_1 = arith.constant 0 : i32
    return %c0_i32, %c0_i32_0 : i32, i32
  }
  func.func @transform_2(%arg0: i32) -> (i32, i32) {
    %c0_i32 = arith.constant 0 : i32
    %c0_i32_0 = arith.constant 0 : i32
    %c0_i32_1 = arith.constant 0 : i32
    return %c0_i32, %c0_i32_0 : i32, i32
  }
  func.func @transform_3(%arg0: i32) -> (i32, i32) {
    %c0_i32 = arith.constant 0 : i32
    %c0_i32_0 = arith.constant 0 : i32
    %c0_i32_1 = arith.constant 0 : i32
    return %c0_i32, %c0_i32_0 : i32, i32
  }
  func.func @transform_4(%arg0: i32) -> (i32, i32) {
    %c0_i32 = arith.constant 0 : i32
    %c0_i32_0 = arith.constant 0 : i32
    %c0_i32_1 = arith.constant 0 : i32
    return %c0_i32, %c0_i32_0 : i32, i32
  }
  func.func @transform_5(%arg0: i32) -> (i32, i32) {
    %c0_i32 = arith.constant 0 : i32
    %c0_i32_0 = arith.constant 0 : i32
    %c0_i32_1 = arith.constant 0 : i32
    return %c0_i32, %c0_i32_0 : i32, i32
  }
}

module attributes {stable_mosaic.version = 11 : i64} {
  func.func @fc_fused_kernel(%arg0: i32, %arg1: memref<2x3200xf32, #tpu.memory_space<vmem>>, %arg2: memref<3200x512xbf16, #tpu.memory_space<vmem>>, %arg3: memref<1x512xf32, #tpu.memory_space<vmem>>, %arg4: memref<1x512xf32, #tpu.memory_space<vmem>>, %arg5: memref<1x512xf32, #tpu.memory_space<vmem>>, %arg6: memref<512x1xbf16, #tpu.memory_space<vmem>>, %arg7: memref<1x1xf32, #tpu.memory_space<vmem>>, %arg8: memref<2x512xf32, #tpu.memory_space<vmem>>, %arg9: memref<1x2x1xf32, #tpu.memory_space<vmem>>) attributes {dimension_semantics = [#tpu.dimension_semantics<parallel>], iteration_bounds = array<i64: 2>, scalar_prefetch = 0 : i64, scratch_operands = 0 : i64, tpu.core_type = #tpu.core_type<tc>, window_params = [{pipeline_mode = #tpu.pipeline_mode<synchronous>, transform_indices = @transform_0, window_bounds = array<i64: 2, 3200>}, {transform_indices = @transform_1, window_bounds = array<i64: 3200, 512>}, {transform_indices = @transform_2, window_bounds = array<i64: 1, 512>}, {transform_indices = @transform_3, window_bounds = array<i64: 1, 512>}, {transform_indices = @transform_4, window_bounds = array<i64: 1, 512>}, {transform_indices = @transform_5, window_bounds = array<i64: 512, 1>}, {pipeline_mode = #tpu.pipeline_mode<synchronous>, transform_indices = @transform_6, window_bounds = array<i64: 1, 1>}, {transform_indices = @transform_7, window_bounds = array<i64: 2, 512>}, {transform_indices = @transform_8, window_bounds = array<i64: 1, 2, 1>}]} {
    %c0 = arith.constant 0 : index
    %c0_0 = arith.constant 0 : index
    %0 = vector.load %arg1[%c0, %c0_0] : memref<2x3200xf32, #tpu.memory_space<vmem>>, vector<2x3200xf32>
    %1 = arith.truncf %0 : vector<2x3200xf32> to vector<2x3200xbf16>
    %c0_1 = arith.constant 0 : index
    %c0_2 = arith.constant 0 : index
    %2 = vector.load %arg2[%c0_1, %c0_2] : memref<3200x512xbf16, #tpu.memory_space<vmem>>, vector<3200x512xbf16>
    %cst = arith.constant dense<0.000000e+00> : vector<2x512xf32>
    %3 = tpu.matmul %1, %2, %cst {dimension_numbers = #tpu.dot_dimension_numbers<[1], [0], [0], [1], [0, 0, 1, 1], [], []>} : vector<2x3200xbf16>, vector<3200x512xbf16>, vector<2x512xf32> -> vector<2x512xf32>
    %c0_3 = arith.constant 0 : index
    %c0_4 = arith.constant 0 : index
    %4 = vector.load %arg3[%c0_3, %c0_4] : memref<1x512xf32, #tpu.memory_space<vmem>>, vector<1x512xf32>
    %5 = vector.broadcast %4 : vector<1x512xf32> to vector<2x512xf32>
    %6 = arith.addf %3, %5 : vector<2x512xf32>
    %cst_5 = arith.constant dense<0.000000e+00> : vector<512xf32>
    %7 = vector.multi_reduction <add>, %6, %cst_5 [0] : vector<2x512xf32> to vector<512xf32>
    %8 = vector.shape_cast %7 : vector<512xf32> to vector<1x512xf32>
    %cst_6 = arith.constant 2.000000e+00 : f32
    %9 = vector.broadcast %cst_6 : f32 to vector<1x512xf32>
    %10 = arith.divf %8, %9 : vector<1x512xf32>
    %11 = vector.broadcast %10 : vector<1x512xf32> to vector<2x512xf32>
    %12 = arith.subf %6, %11 : vector<2x512xf32>
    %13 = arith.mulf %12, %12 : vector<2x512xf32>
    %cst_7 = arith.constant dense<0.000000e+00> : vector<512xf32>
    %14 = vector.multi_reduction <add>, %13, %cst_7 [0] : vector<2x512xf32> to vector<512xf32>
    %15 = vector.shape_cast %14 : vector<512xf32> to vector<1x512xf32>
    %cst_8 = arith.constant 2.000000e+00 : f32
    %16 = vector.broadcast %cst_8 : f32 to vector<1x512xf32>
    %17 = arith.divf %15, %16 : vector<1x512xf32>
    %18 = vector.broadcast %10 : vector<1x512xf32> to vector<2x512xf32>
    %19 = arith.subf %6, %18 : vector<2x512xf32>
    %cst_9 = arith.constant 9.99999974E-6 : f32
    %20 = vector.broadcast %cst_9 : f32 to vector<1x512xf32>
    %21 = arith.addf %17, %20 : vector<1x512xf32>
    %22 = math.rsqrt %21 : vector<1x512xf32>
    %23 = vector.broadcast %22 : vector<1x512xf32> to vector<2x512xf32>
    %24 = arith.mulf %19, %23 : vector<2x512xf32>
    %c0_10 = arith.constant 0 : index
    %c0_11 = arith.constant 0 : index
    %25 = vector.load %arg4[%c0_10, %c0_11] : memref<1x512xf32, #tpu.memory_space<vmem>>, vector<1x512xf32>
    %26 = vector.broadcast %25 : vector<1x512xf32> to vector<2x512xf32>
    %27 = arith.mulf %24, %26 : vector<2x512xf32>
    %c0_12 = arith.constant 0 : index
    %c0_13 = arith.constant 0 : index
    %28 = vector.load %arg5[%c0_12, %c0_13] : memref<1x512xf32, #tpu.memory_space<vmem>>, vector<1x512xf32>
    %29 = vector.broadcast %28 : vector<1x512xf32> to vector<2x512xf32>
    %30 = arith.addf %27, %29 : vector<2x512xf32>
    %cst_14 = arith.constant 0.000000e+00 : f32
    %31 = vector.broadcast %cst_14 : f32 to vector<2x512xf32>
    %32 = arith.cmpf ogt, %30, %31 : vector<2x512xf32>
    %cst_15 = arith.constant 1.000000e-01 : f32
    %33 = vector.broadcast %cst_15 : f32 to vector<2x512xf32>
    %34 = arith.mulf %33, %30 : vector<2x512xf32>
    %35 = arith.select %32, %30, %34 : vector<2x512xi1>, vector<2x512xf32>
    %c0_16 = arith.constant 0 : index
    %c0_17 = arith.constant 0 : index
    %36 = vector.load %arg8[%c0_16, %c0_17] : memref<2x512xf32, #tpu.memory_space<vmem>>, vector<2x512xf32>
    tpu.vector_store %arg8[%c0_16, %c0_17], %35 {strides = array<i32>} : memref<2x512xf32, #tpu.memory_space<vmem>>, vector<2x512xf32>,
    %37 = arith.truncf %35 : vector<2x512xf32> to vector<2x512xbf16>
    %c0_18 = arith.constant 0 : index
    %c0_19 = arith.constant 0 : index
    %38 = vector.load %arg6[%c0_18, %c0_19] : memref<512x1xbf16, #tpu.memory_space<vmem>>, vector<512x1xbf16>
    %cst_20 = arith.constant dense<0.000000e+00> : vector<2x1xf32>
    %39 = tpu.matmul %37, %38, %cst_20 {dimension_numbers = #tpu.dot_dimension_numbers<[1], [0], [0], [1], [0, 0, 1, 1], [], []>} : vector<2x512xbf16>, vector<512x1xbf16>, vector<2x1xf32> -> vector<2x1xf32>
    %c0_21 = arith.constant 0 : index
    %c0_22 = arith.constant 0 : index
    %40 = vector.load %arg7[%c0_21, %c0_22] : memref<1x1xf32, #tpu.memory_space<vmem>>, vector<1x1xf32>
    %c0_i32 = arith.constant 0 : i32
    %41 = arith.cmpi eq, %arg0, %c0_i32 : i32
    %cst_23 = arith.constant 1.000000e+00 : f32
    %cst_24 = arith.constant 0.000000e+00 : f32
    %42 = arith.select %41, %cst_23, %cst_24 : f32
    %43 = vector.broadcast %42 : f32 to vector<1x1xf32>
    %44 = arith.mulf %40, %43 : vector<1x1xf32>
    %45 = vector.broadcast %44 : vector<1x1xf32> to vector<2x1xf32>
    %46 = arith.addf %39, %45 : vector<2x1xf32>
    %47 = vector.shape_cast %46 : vector<2x1xf32> to vector<1x2x1xf32>
    %c0_25 = arith.constant 0 : index
    %c0_26 = arith.constant 0 : index
    %c0_27 = arith.constant 0 : index
    %48 = vector.load %arg9[%c0_25, %c0_26, %c0_27] : memref<1x2x1xf32, #tpu.memory_space<vmem>>, vector<1x2x1xf32>
    tpu.vector_store %arg9[%c0_25, %c0_26, %c0_27], %47 {strides = array<i32>} : memref<1x2x1xf32, #tpu.memory_space<vmem>>, vector<1x2x1xf32>,
    return
  }
  func.func @transform_0(%arg0: i32) -> (i32, i32) {
    %c0_i32 = arith.constant 0 : i32
    %c0_i32_0 = arith.constant 0 : i32
    %c0_i32_1 = arith.constant 0 : i32
    return %c0_i32, %c0_i32_0 : i32, i32
  }
  func.func @transform_1(%arg0: i32) -> (i32, i32) {
    %c0_i32 = arith.constant 0 : i32
    %c0_i32_0 = arith.constant 0 : i32
    return %c0_i32, %arg0 : i32, i32
  }
  func.func @transform_2(%arg0: i32) -> (i32, i32) {
    %c0_i32 = arith.constant 0 : i32
    %c0_i32_0 = arith.constant 0 : i32
    return %c0_i32, %arg0 : i32, i32
  }
  func.func @transform_3(%arg0: i32) -> (i32, i32) {
    %c0_i32 = arith.constant 0 : i32
    %c0_i32_0 = arith.constant 0 : i32
    return %c0_i32, %arg0 : i32, i32
  }
  func.func @transform_4(%arg0: i32) -> (i32, i32) {
    %c0_i32 = arith.constant 0 : i32
    %c0_i32_0 = arith.constant 0 : i32
    return %c0_i32, %arg0 : i32, i32
  }
  func.func @transform_5(%arg0: i32) -> (i32, i32) {
    %c0_i32 = arith.constant 0 : i32
    %c0_i32_0 = arith.constant 0 : i32
    return %arg0, %c0_i32 : i32, i32
  }
  func.func @transform_6(%arg0: i32) -> (i32, i32) {
    %c0_i32 = arith.constant 0 : i32
    %c0_i32_0 = arith.constant 0 : i32
    %c0_i32_1 = arith.constant 0 : i32
    return %c0_i32, %c0_i32_0 : i32, i32
  }
  func.func @transform_7(%arg0: i32) -> (i32, i32) {
    %c0_i32 = arith.constant 0 : i32
    %c0_i32_0 = arith.constant 0 : i32
    return %c0_i32, %arg0 : i32, i32
  }
  func.func @transform_8(%arg0: i32) -> (i32, i32, i32) {
    %c0_i32 = arith.constant 0 : i32
    %c0_i32_0 = arith.constant 0 : i32
    %c0_i32_1 = arith.constant 0 : i32
    return %arg0, %c0_i32, %c0_i32_0 : i32, i32, i32
  }
}

</mosaic_0001>

<llo_original>
// kernel: discriminator_forward.3
$region0: #{discriminator_forward.3}
  #allocation0 [shape = 'u32[]', space=smem, size = 0x4, offset = 0x4, fixed_abs, tag = 'smem constant byte address 0x4 - core index']
  #allocation1 [shape = 'u32[72,128]{1,0:T(1,128)}', space=vmem, size = 0x9000, scoped, tag = 'internal scratch']
  %s0 = inlined_call_operand.vmem [shape: f32[338,16], index: 0, kind: input, shape index: {}]
  %s1 = inlined_call_operand.hbm [shape: bf16[16,64], index: 1, kind: input, shape index: {}]
  %s2 = inlined_call_operand.hbm [shape: f32[1,64], index: 2, kind: input, shape index: {}]
  %s3 = inlined_call_operand.vmem [shape: f32[338,64], index: 3, kind: output, shape index: {}]
  %s4 = sld [smem:[#allocation0]]
  $region30: #{discriminator_forward.3} parent=0
    _
  %s6 = ssub.s32 1, %s4
  %s7 = scalar_select 0, %s6, %s4
  $region1: #{discriminator_forward.3} parent=0
    #allocation2 [shape = 'u8[4096]{0}', space=vmem, size = 0x1000, scoped, tag = 'input window, operand 1, single buffered']
    #allocation3 [shape = 's32[1]{0}', space=sflag, size = 0x4, scoped, tag = 'scoped memory for discriminator_forward.3']
    #allocation4 [shape = 'u8[512]{0}', space=vmem, size = 0x400, scoped, tag = 'input window, operand 2, single buffered']
    #allocation5 [shape = 's32[1]{0}', space=sflag, size = 0x4, scoped, tag = 'scoped memory for discriminator_forward.3']
    %8 = vsyncpa [#allocation3], 0
    %9 = vsyncpa [#allocation5], 0
    // Predicated region
    $region2: #{discriminator_forward.3} parent=1 // pred_check
      _
    $region3: #{discriminator_forward.3} parent=1 // pred_check_branch
      %11 = sbr.rel (0) target = $region5
    $region4: #{discriminator_forward.3} parent=1 // pred_region
      _
    $region5: #{discriminator_forward.3} parent=1 // pred_fallthru
      _
    // Predicated region
    $region6: #{discriminator_forward.3} parent=1 // pred_check
      _
    $region7: #{discriminator_forward.3} parent=1 // pred_check_branch
      %13 = sbr.rel (0) target = $region9
    $region8: #{discriminator_forward.3} parent=1 // pred_region
      %15 = vsyncadd [#allocation3], 0
      %s16 = sshll.u32 %s1, 4
      %s17 = int_to_ptr.hbm [resolvable:$true] %s16
      %s18 = sshll.u32 [#allocation2], 4
      %s19 = int_to_ptr.vmem [resolvable:$true] %s18
      %24 = dma.hbm_to_vmem [thread:$0]  %s17, 128, %s19, [#allocation3], 64, 64, 4
    $region9: #{discriminator_forward.3} parent=1 // pred_fallthru
      _
    // Predicated region
    $region10: #{discriminator_forward.3} parent=1 // pred_check
      _
    $region11: #{discriminator_forward.3} parent=1 // pred_check_branch
      %26 = sbr.rel (0) target = $region13
    $region12: #{discriminator_forward.3} parent=1 // pred_region
      %28 = vsyncadd [#allocation5], 0
      %s30 = sshll.u32 %s2, 4
      %s31 = int_to_ptr.hbm [resolvable:$true] %s30
      %s32 = sshll.u32 [#allocation4], 4
      %s33 = int_to_ptr.vmem [resolvable:$true] %s32
      %35 = dma.hbm_to_vmem [thread:$0]  %s31, 16, %s33, [#allocation5]
    $region13: #{discriminator_forward.3} parent=1 // pred_fallthru
      _
    // Predicated region
    $region14: #{discriminator_forward.3} parent=1 // pred_check
      _
    $region15: #{discriminator_forward.3} parent=1 // pred_check_branch
      %37 = sbr.rel (0) target = $region17
    $region16: #{discriminator_forward.3} parent=1 // pred_region
      %39 = dma.done [#allocation3], 128
    $region17: #{discriminator_forward.3} parent=1 // pred_fallthru
      _
    // Predicated region
    $region18: #{discriminator_forward.3} parent=1 // pred_check
      _
    $region19: #{discriminator_forward.3} parent=1 // pred_check_branch
      %41 = sbr.rel (0) target = $region21
    $region20: #{discriminator_forward.3} parent=1 // pred_region
      %43 = dma.done [#allocation5], 16
    $region21: #{discriminator_forward.3} parent=1 // pred_fallthru
      _
    %v45 = vld [vmem:[%s0] sm:$0xff]
    %v46 = vld [vmem:[%s0 + $0x8] sm:$0xff]
    %v47 = vld [vmem:[%s0 + $0x10] sm:$0xff]
    %v48 = vld [vmem:[%s0 + $0x18] sm:$0xff]
    %v49 = vld [vmem:[%s0 + $0x20] sm:$0xff]
    %v50 = vld [vmem:[%s0 + $0x28] sm:$0xff]
    %v51 = vld [vmem:[%s0 + $0x30] sm:$0xff]
    %v52 = vld [vmem:[%s0 + $0x38] sm:$0xff]
    %v53 = vld [vmem:[%s0 + $0x40] sm:$0xff]
    %v54 = vld [vmem:[%s0 + $0x48] sm:$0xff]
    %v55 = vld [vmem:[%s0 + $0x50] sm:$0xff]
    %v56 = vld [vmem:[%s0 + $0x58] sm:$0xff]
    %v57 = vld [vmem:[%s0 + $0x60] sm:$0xff]
    %v58 = vld [vmem:[%s0 + $0x68] sm:$0xff]
    %v59 = vld [vmem:[%s0 + $0x70] sm:$0xff]
    %v60 = vld [vmem:[%s0 + $0x78] sm:$0xff]
    %v61 = vld [vmem:[%s0 + $0x80] sm:$0xff]
    %v62 = vld [vmem:[%s0 + $0x88] sm:$0xff]
    %v63 = vld [vmem:[%s0 + $0x90] sm:$0xff]
    %v64 = vld [vmem:[%s0 + $0x98] sm:$0xff]
    %v65 = vld [vmem:[%s0 + $0xa0] sm:$0xff]
    %v66 = vld [vmem:[%s0 + $0xa8] sm:$0xff]
    %v67 = vld [vmem:[%s0 + $0xb0] sm:$0xff]
    %v68 = vld [vmem:[%s0 + $0xb8] sm:$0xff]
    %v69 = vld [vmem:[%s0 + $0xc0] sm:$0xff]
    %v70 = vld [vmem:[%s0 + $0xc8] sm:$0xff]
    %v71 = vld [vmem:[%s0 + $0xd0] sm:$0xff]
    %v72 = vld [vmem:[%s0 + $0xd8] sm:$0xff]
    %v73 = vld [vmem:[%s0 + $0xe0] sm:$0xff]
    %v74 = vld [vmem:[%s0 + $0xe8] sm:$0xff]
    %v75 = vld [vmem:[%s0 + $0xf0] sm:$0xff]
    %v76 = vld [vmem:[%s0 + $0xf8] sm:$0xff]
    %v77 = vld [vmem:[%s0 + $0x100] sm:$0xff]
    %v78 = vld [vmem:[%s0 + $0x108] sm:$0xff]
    %v79 = vld [vmem:[%s0 + $0x110] sm:$0xff]
    %v80 = vld [vmem:[%s0 + $0x118] sm:$0xff]
    %v81 = vld [vmem:[%s0 + $0x120] sm:$0xff]
    %v82 = vld [vmem:[%s0 + $0x128] sm:$0xff]
    %v83 = vld [vmem:[%s0 + $0x130] sm:$0xff]
    %v84 = vld [vmem:[%s0 + $0x138] sm:$0xff]
    %v85 = vld [vmem:[%s0 + $0x140] sm:$0xff]
    %v86 = vld [vmem:[%s0 + $0x148] sm:$0xff]
    %v87 = vld [vmem:[%s0 + $0x150] sm:$0x3]
    %v88 = vpack.c.bf16 %v46, %v45
    %v89 = vpack.c.bf16 %v48, %v47
    %v90 = vpack.c.bf16 %v50, %v49
    %v91 = vpack.c.bf16 %v52, %v51
    %v92 = vpack.c.bf16 %v54, %v53
    %v93 = vpack.c.bf16 %v56, %v55
    %v94 = vpack.c.bf16 %v58, %v57
    %v95 = vpack.c.bf16 %v60, %v59
    %v96 = vpack.c.bf16 %v62, %v61
    %v97 = vpack.c.bf16 %v64, %v63
    %v98 = vpack.c.bf16 %v66, %v65
    %v99 = vpack.c.bf16 %v68, %v67
    %v100 = vpack.c.bf16 %v70, %v69
    %v101 = vpack.c.bf16 %v72, %v71
    %v102 = vpack.c.bf16 %v74, %v73
    %v103 = vpack.c.bf16 %v76, %v75
    %v104 = vpack.c.bf16 %v78, %v77
    %v105 = vpack.c.bf16 %v80, %v79
    %v106 = vpack.c.bf16 %v82, %v81
    %v107 = vpack.c.bf16 %v84, %v83
    %v108 = vpack.c.bf16 %v86, %v85
    %v109 = vpack.c.bf16 %v87, %v87
    %v110 = vld [vmem:[#allocation2] sm:$0xf]
    %v111 = vld [vmem:[#allocation2 + $0x4] sm:$0xf]
    %v112 = vld [vmem:[#allocation4] sm:$0x1]
    %v114 = vperm.slane %v112, 0
    %v118 = vunpack.c.l.b16 %v110
    %v119 = vunpack.c.l.b16 %v111
    %v120 = vpack.c.b16 %v119, %v118
    %vm122 = vcmask 130048
    %v124 = vsel %vm122, %v88, 0
    %v127 = vsel %vm122, %v89, 0
    %v130 = vsel %vm122, %v90, 0
    %v133 = vsel %vm122, %v91, 0
    %v136 = vsel %vm122, %v92, 0
    %v139 = vsel %vm122, %v93, 0
    %v142 = vsel %vm122, %v94, 0
    %v145 = vsel %vm122, %v95, 0
    %v148 = vsel %vm122, %v96, 0
    %v151 = vsel %vm122, %v97, 0
    %v154 = vsel %vm122, %v98, 0
    %v157 = vsel %vm122, %v99, 0
    %v160 = vsel %vm122, %v100, 0
    %v163 = vsel %vm122, %v101, 0
    %v166 = vsel %vm122, %v102, 0
    %v169 = vsel %vm122, %v103, 0
    %v172 = vsel %vm122, %v104, 0
    %v175 = vsel %vm122, %v105, 0
    %v178 = vsel %vm122, %v106, 0
    %v181 = vsel %vm122, %v107, 0
    %v184 = vsel %vm122, %v108, 0
    %v187 = vsel %vm122, %v109, 0
    %189 = vmatpush.bf16.msra.mxu0 0
    %190 = vmatpush.bf16.msra.mxu0 0
    %191 = vmatpush.bf16.msra.mxu0 0
    %192 = vmatpush.bf16.msra.mxu0 0
    %193 = vmatpush.bf16.msra.mxu0 0
    %194 = vmatpush.bf16.msra.mxu0 0
    %195 = vmatpush.bf16.msra.mxu0 0
    %196 = vmatpush.bf16.msra.mxu0 %v120
    %197 = vmatmul.bf16.gmra.mxu0 %v124
    %v198 = vpop.f32.mrf.mxu0
    %v199 = vadd.f32 %v114, %v198
    %v200 = vpop.f32.mrf.mxu0
    %v201 = vadd.f32 %v114, %v200
    %202 = vmatmul.bf16.gmra.mxu0 %v127
    %v203 = vpop.f32.mrf.mxu0
    %v204 = vadd.f32 %v114, %v203
    %v205 = vpop.f32.mrf.mxu0
    %v206 = vadd.f32 %v114, %v205
    %207 = vmatmul.bf16.gmra.mxu0 %v130
    %v208 = vpop.f32.mrf.mxu0
    %v209 = vadd.f32 %v114, %v208
    %v210 = vpop.f32.mrf.mxu0
    %v211 = vadd.f32 %v114, %v210
    %212 = vmatmul.bf16.gmra.mxu0 %v133
    %v213 = vpop.f32.mrf.mxu0
    %v214 = vadd.f32 %v114, %v213
    %v215 = vpop.f32.mrf.mxu0
    %v216 = vadd.f32 %v114, %v215
    %217 = vmatmul.bf16.gmra.mxu0 %v136
    %v218 = vpop.f32.mrf.mxu0
    %v219 = vadd.f32 %v114, %v218
    %v220 = vpop.f32.mrf.mxu0
    %v221 = vadd.f32 %v114, %v220
    %222 = vmatmul.bf16.gmra.mxu0 %v139
    %v223 = vpop.f32.mrf.mxu0
    %v224 = vadd.f32 %v114, %v223
    %v225 = vpop.f32.mrf.mxu0
    %v226 = vadd.f32 %v114, %v225
    %227 = vmatmul.bf16.gmra.mxu0 %v142
    %v228 = vpop.f32.mrf.mxu0
    %v229 = vadd.f32 %v114, %v228
    %v230 = vpop.f32.mrf.mxu0
    %v231 = vadd.f32 %v114, %v230
    %232 = vmatmul.bf16.gmra.mxu0 %v145
    %v233 = vpop.f32.mrf.mxu0
    %v234 = vadd.f32 %v114, %v233
    %v235 = vpop.f32.mrf.mxu0
    %v236 = vadd.f32 %v114, %v235
    %237 = vmatmul.bf16.gmra.mxu0 %v148
    %v238 = vpop.f32.mrf.mxu0
    %v239 = vadd.f32 %v114, %v238
    %v240 = vpop.f32.mrf.mxu0
    %v241 = vadd.f32 %v114, %v240
    %242 = vmatmul.bf16.gmra.mxu0 %v151
    %v243 = vpop.f32.mrf.mxu0
    %v244 = vadd.f32 %v114, %v243
    %v245 = vpop.f32.mrf.mxu0
    %v246 = vadd.f32 %v114, %v245
    %247 = vmatmul.bf16.gmra.mxu0 %v154
    %v248 = vpop.f32.mrf.mxu0
    %v249 = vadd.f32 %v114, %v248
    %v250 = vpop.f32.mrf.mxu0
    %v251 = vadd.f32 %v114, %v250
    %252 = vmatmul.bf16.gmra.mxu0 %v157
    %v253 = vpop.f32.mrf.mxu0
    %v254 = vadd.f32 %v114, %v253
    %v255 = vpop.f32.mrf.mxu0
    %v256 = vadd.f32 %v114, %v255
    %257 = vmatmul.bf16.gmra.mxu0 %v160
    %v258 = vpop.f32.mrf.mxu0
    %v259 = vadd.f32 %v114, %v258
    %v260 = vpop.f32.mrf.mxu0
    %v261 = vadd.f32 %v114, %v260
    %262 = vmatmul.bf16.gmra.mxu0 %v163
    %v263 = vpop.f32.mrf.mxu0
    %v264 = vadd.f32 %v114, %v263
    %v265 = vpop.f32.mrf.mxu0
    %v266 = vadd.f32 %v114, %v265
    %267 = vmatmul.bf16.gmra.mxu0 %v166
    %v268 = vpop.f32.mrf.mxu0
    %v269 = vadd.f32 %v114, %v268
    %v270 = vpop.f32.mrf.mxu0
    %v271 = vadd.f32 %v114, %v270
    %272 = vmatmul.bf16.gmra.mxu0 %v169
    %v273 = vpop.f32.mrf.mxu0
    %v274 = vadd.f32 %v114, %v273
    %v275 = vpop.f32.mrf.mxu0
    %v276 = vadd.f32 %v114, %v275
    %277 = vmatmul.bf16.gmra.mxu0 %v172
    %v278 = vpop.f32.mrf.mxu0
    %v279 = vadd.f32 %v114, %v278
    %v280 = vpop.f32.mrf.mxu0
    %v281 = vadd.f32 %v114, %v280
    %282 = vmatmul.bf16.gmra.mxu0 %v175
    %v283 = vpop.f32.mrf.mxu0
    %v284 = vadd.f32 %v114, %v283
    %v285 = vpop.f32.mrf.mxu0
    %v286 = vadd.f32 %v114, %v285
    %287 = vmatmul.bf16.gmra.mxu0 %v178
    %v288 = vpop.f32.mrf.mxu0
    %v289 = vadd.f32 %v114, %v288
    %v290 = vpop.f32.mrf.mxu0
    %v291 = vadd.f32 %v114, %v290
    %292 = vmatmul.bf16.gmra.mxu0 %v181
    %v293 = vpop.f32.mrf.mxu0
    %v294 = vadd.f32 %v114, %v293
    %v295 = vpop.f32.mrf.mxu0
    %v296 = vadd.f32 %v114, %v295
    %297 = vmatmul.bf16.gmra.mxu0 %v184
    %v298 = vpop.f32.mrf.mxu0
    %v299 = vadd.f32 %v114, %v298
    %v300 = vpop.f32.mrf.mxu0
    %v301 = vadd.f32 %v114, %v300
    %302 = vmatmul.bf16.gmra.mxu0 %v187
    %v303 = vpop.f32.mrf.mxu0
    %v304 = vadd.f32 %v114, %v303
    %v305 = vpop.f32.mrf.mxu0
    %306 = vdwg.mxu0
    %vm307 = vcmp.gt.f32.partialorder %v199, 0.0
    %vm308 = vcmp.gt.f32.partialorder %v201, 0.0
    %vm309 = vcmp.gt.f32.partialorder %v204, 0.0
    %vm310 = vcmp.gt.f32.partialorder %v206, 0.0
    %vm311 = vcmp.gt.f32.partialorder %v209, 0.0
    %vm312 = vcmp.gt.f32.partialorder %v211, 0.0
    %vm313 = vcmp.gt.f32.partialorder %v214, 0.0
    %vm314 = vcmp.gt.f32.partialorder %v216, 0.0
    %vm315 = vcmp.gt.f32.partialorder %v219, 0.0
    %vm316 = vcmp.gt.f32.partialorder %v221, 0.0
    %vm317 = vcmp.gt.f32.partialorder %v224, 0.0
    %vm318 = vcmp.gt.f32.partialorder %v226, 0.0
    %vm319 = vcmp.gt.f32.partialorder %v229, 0.0
    %vm320 = vcmp.gt.f32.partialorder %v231, 0.0
    %vm321 = vcmp.gt.f32.partialorder %v234, 0.0
    %vm322 = vcmp.gt.f32.partialorder %v236, 0.0
    %vm323 = vcmp.gt.f32.partialorder %v239, 0.0
    %vm324 = vcmp.gt.f32.partialorder %v241, 0.0
    %vm325 = vcmp.gt.f32.partialorder %v244, 0.0
    %vm326 = vcmp.gt.f32.partialorder %v246, 0.0
    %vm327 = vcmp.gt.f32.partialorder %v249, 0.0
    %vm328 = vcmp.gt.f32.partialorder %v251, 0.0
    %vm329 = vcmp.gt.f32.partialorder %v254, 0.0
    %vm330 = vcmp.gt.f32.partialorder %v256, 0.0
    %vm331 = vcmp.gt.f32.partialorder %v259, 0.0
    %vm332 = vcmp.gt.f32.partialorder %v261, 0.0
    %vm333 = vcmp.gt.f32.partialorder %v264, 0.0
    %vm334 = vcmp.gt.f32.partialorder %v266, 0.0
    %vm335 = vcmp.gt.f32.partialorder %v269, 0.0
    %vm336 = vcmp.gt.f32.partialorder %v271, 0.0
    %vm337 = vcmp.gt.f32.partialorder %v274, 0.0
    %vm338 = vcmp.gt.f32.partialorder %v276, 0.0
    %vm339 = vcmp.gt.f32.partialorder %v279, 0.0
    %vm340 = vcmp.gt.f32.partialorder %v281, 0.0
    %vm341 = vcmp.gt.f32.partialorder %v284, 0.0
    %vm342 = vcmp.gt.f32.partialorder %v286, 0.0
    %vm343 = vcmp.gt.f32.partialorder %v289, 0.0
    %vm344 = vcmp.gt.f32.partialorder %v291, 0.0
    %vm345 = vcmp.gt.f32.partialorder %v294, 0.0
    %vm346 = vcmp.gt.f32.partialorder %v296, 0.0
    %vm347 = vcmp.gt.f32.partialorder %v299, 0.0
    %vm348 = vcmp.gt.f32.partialorder %v301, 0.0
    %vm349 = vcmp.gt.f32.partialorder %v304, 0.0
    %v350 = vmul.f32 %v199, 0.1
    %v351 = vmul.f32 %v201, 0.1
    %v352 = vmul.f32 %v204, 0.1
    %v353 = vmul.f32 %v206, 0.1
    %v354 = vmul.f32 %v209, 0.1
    %v355 = vmul.f32 %v211, 0.1
    %v356 = vmul.f32 %v214, 0.1
    %v357 = vmul.f32 %v216, 0.1
    %v358 = vmul.f32 %v219, 0.1
    %v359 = vmul.f32 %v221, 0.1
    %v360 = vmul.f32 %v224, 0.1
    %v361 = vmul.f32 %v226, 0.1
    %v362 = vmul.f32 %v229, 0.1
    %v363 = vmul.f32 %v231, 0.1
    %v364 = vmul.f32 %v234, 0.1
    %v365 = vmul.f32 %v236, 0.1
    %v366 = vmul.f32 %v239, 0.1
    %v367 = vmul.f32 %v241, 0.1
    %v368 = vmul.f32 %v244, 0.1
    %v369 = vmul.f32 %v246, 0.1
    %v370 = vmul.f32 %v249, 0.1
    %v371 = vmul.f32 %v251, 0.1
    %v372 = vmul.f32 %v254, 0.1
    %v373 = vmul.f32 %v256, 0.1
    %v374 = vmul.f32 %v259, 0.1
    %v375 = vmul.f32 %v261, 0.1
    %v376 = vmul.f32 %v264, 0.1
    %v377 = vmul.f32 %v266, 0.1
    %v378 = vmul.f32 %v269, 0.1
    %v379 = vmul.f32 %v271, 0.1
    %v380 = vmul.f32 %v274, 0.1
    %v381 = vmul.f32 %v276, 0.1
    %v382 = vmul.f32 %v279, 0.1
    %v383 = vmul.f32 %v281, 0.1
    %v384 = vmul.f32 %v284, 0.1
    %v385 = vmul.f32 %v286, 0.1
    %v386 = vmul.f32 %v289, 0.1
    %v387 = vmul.f32 %v291, 0.1
    %v388 = vmul.f32 %v294, 0.1
    %v389 = vmul.f32 %v296, 0.1
    %v390 = vmul.f32 %v299, 0.1
    %v391 = vmul.f32 %v301, 0.1
    %v392 = vmul.f32 %v304, 0.1
    %v393 = vsel %vm307, %v199, %v350
    %v394 = vsel %vm308, %v201, %v351
    %v395 = vsel %vm309, %v204, %v352
    %v396 = vsel %vm310, %v206, %v353
    %v397 = vsel %vm311, %v209, %v354
    %v398 = vsel %vm312, %v211, %v355
    %v399 = vsel %vm313, %v214, %v356
    %v400 = vsel %vm314, %v216, %v357
    %v401 = vsel %vm315, %v219, %v358
    %v402 = vsel %vm316, %v221, %v359
    %v403 = vsel %vm317, %v224, %v360
    %v404 = vsel %vm318, %v226, %v361
    %v405 = vsel %vm319, %v229, %v362
    %v406 = vsel %vm320, %v231, %v363
    %v407 = vsel %vm321, %v234, %v364
    %v408 = vsel %vm322, %v236, %v365
    %v409 = vsel %vm323, %v239, %v366
    %v410 = vsel %vm324, %v241, %v367
    %v411 = vsel %vm325, %v244, %v368
    %v412 = vsel %vm326, %v246, %v369
    %v413 = vsel %vm327, %v249, %v370
    %v414 = vsel %vm328, %v251, %v371
    %v415 = vsel %vm329, %v254, %v372
    %v416 = vsel %vm330, %v256, %v373
    %v417 = vsel %vm331, %v259, %v374
    %v418 = vsel %vm332, %v261, %v375
    %v419 = vsel %vm333, %v264, %v376
    %v420 = vsel %vm334, %v266, %v377
    %v421 = vsel %vm335, %v269, %v378
    %v422 = vsel %vm336, %v271, %v379
    %v423 = vsel %vm337, %v274, %v380
    %v424 = vsel %vm338, %v276, %v381
    %v425 = vsel %vm339, %v279, %v382
    %v426 = vsel %vm340, %v281, %v383
    %v427 = vsel %vm341, %v284, %v384
    %v428 = vsel %vm342, %v286, %v385
    %v429 = vsel %vm343, %v289, %v386
    %v430 = vsel %vm344, %v291, %v387
    %v431 = vsel %vm345, %v294, %v388
    %v432 = vsel %vm346, %v296, %v389
    %v433 = vsel %vm347, %v299, %v390
    %v434 = vsel %vm348, %v301, %v391
    %v435 = vsel %vm349, %v304, %v392
    %vm436 = vcmask 523264
    %437 = vst.msk [vmem:[%s3] sm:$0xff] %vm436, %v393
    %438 = vst.msk [vmem:[%s3 + $0x8] sm:$0xff] %vm436, %v394
    %439 = vst.msk [vmem:[%s3 + $0x10] sm:$0xff] %vm436, %v395
    %440 = vst.msk [vmem:[%s3 + $0x18] sm:$0xff] %vm436, %v396
    %441 = vst.msk [vmem:[%s3 + $0x20] sm:$0xff] %vm436, %v397
    %442 = vst.msk [vmem:[%s3 + $0x28] sm:$0xff] %vm436, %v398
    %443 = vst.msk [vmem:[%s3 + $0x30] sm:$0xff] %vm436, %v399
    %444 = vst.msk [vmem:[%s3 + $0x38] sm:$0xff] %vm436, %v400
    %445 = vst.msk [vmem:[%s3 + $0x40] sm:$0xff] %vm436, %v401
    %446 = vst.msk [vmem:[%s3 + $0x48] sm:$0xff] %vm436, %v402
    %447 = vst.msk [vmem:[%s3 + $0x50] sm:$0xff] %vm436, %v403
    %448 = vst.msk [vmem:[%s3 + $0x58] sm:$0xff] %vm436, %v404
    %449 = vst.msk [vmem:[%s3 + $0x60] sm:$0xff] %vm436, %v405
    %450 = vst.msk [vmem:[%s3 + $0x68] sm:$0xff] %vm436, %v406
    %451 = vst.msk [vmem:[%s3 + $0x70] sm:$0xff] %vm436, %v407
    %452 = vst.msk [vmem:[%s3 + $0x78] sm:$0xff] %vm436, %v408
    %453 = vst.msk [vmem:[%s3 + $0x80] sm:$0xff] %vm436, %v409
    %454 = vst.msk [vmem:[%s3 + $0x88] sm:$0xff] %vm436, %v410
    %455 = vst.msk [vmem:[%s3 + $0x90] sm:$0xff] %vm436, %v411
    %456 = vst.msk [vmem:[%s3 + $0x98] sm:$0xff] %vm436, %v412
    %457 = vst.msk [vmem:[%s3 + $0xa0] sm:$0xff] %vm436, %v413
    %458 = vst.msk [vmem:[%s3 + $0xa8] sm:$0xff] %vm436, %v414
    %459 = vst.msk [vmem:[%s3 + $0xb0] sm:$0xff] %vm436, %v415
    %460 = vst.msk [vmem:[%s3 + $0xb8] sm:$0xff] %vm436, %v416
    %461 = vst.msk [vmem:[%s3 + $0xc0] sm:$0xff] %vm436, %v417
    %462 = vst.msk [vmem:[%s3 + $0xc8] sm:$0xff] %vm436, %v418
    %463 = vst.msk [vmem:[%s3 + $0xd0] sm:$0xff] %vm436, %v419
    %464 = vst.msk [vmem:[%s3 + $0xd8] sm:$0xff] %vm436, %v420
    %465 = vst.msk [vmem:[%s3 + $0xe0] sm:$0xff] %vm436, %v421
    %466 = vst.msk [vmem:[%s3 + $0xe8] sm:$0xff] %vm436, %v422
    %467 = vst.msk [vmem:[%s3 + $0xf0] sm:$0xff] %vm436, %v423
    %468 = vst.msk [vmem:[%s3 + $0xf8] sm:$0xff] %vm436, %v424
    %469 = vst.msk [vmem:[%s3 + $0x100] sm:$0xff] %vm436, %v425
    %470 = vst.msk [vmem:[%s3 + $0x108] sm:$0xff] %vm436, %v426
    %471 = vst.msk [vmem:[%s3 + $0x110] sm:$0xff] %vm436, %v427
    %472 = vst.msk [vmem:[%s3 + $0x118] sm:$0xff] %vm436, %v428
    %473 = vst.msk [vmem:[%s3 + $0x120] sm:$0xff] %vm436, %v429
    %474 = vst.msk [vmem:[%s3 + $0x128] sm:$0xff] %vm436, %v430
    %475 = vst.msk [vmem:[%s3 + $0x130] sm:$0xff] %vm436, %v431
    %476 = vst.msk [vmem:[%s3 + $0x138] sm:$0xff] %vm436, %v432
    %477 = vst.msk [vmem:[%s3 + $0x140] sm:$0xff] %vm436, %v433
    %478 = vst.msk [vmem:[%s3 + $0x148] sm:$0xff] %vm436, %v434
    %vm479 = vcmask 517120
    %480 = vst.msk [vmem:[%s3 + $0x150] sm:$0x3] %vm479, %v435
    // Predicated region
    $region22: #{discriminator_forward.3} parent=1 // pred_check
      _
    $region23: #{discriminator_forward.3} parent=1 // pred_check_branch
      %482 = sbr.rel (0) target = $region25
    $region24: #{discriminator_forward.3} parent=1 // pred_region
      _
    $region25: #{discriminator_forward.3} parent=1 // pred_fallthru
      _
    // Predicated region
    $region26: #{discriminator_forward.3} parent=1 // pred_check
      _
    $region27: #{discriminator_forward.3} parent=1 // pred_check_branch
      %484 = sbr.rel (0) target = $region29
    $region28: #{discriminator_forward.3} parent=1 // pred_region
      _
    $region29: #{discriminator_forward.3} parent=1 // pred_fallthru
      _
    %485 = vsyncpa [#allocation3], 1
    %486 = vsyncpa [#allocation5], 1

// kernel: discriminator_forward.4
$region0: #{discriminator_forward.4}
  #allocation0 [shape = 'u32[]', space=smem, size = 0x4, offset = 0x4, fixed_abs, tag = 'smem constant byte address 0x4 - core index']
  #allocation1 [shape = 'u32[72,128]{1,0:T(1,128)}', space=vmem, size = 0x9000, scoped, tag = 'internal scratch']
  %s0 = inlined_call_operand.vmem [shape: f32[50,1024], index: 0, kind: input, shape index: {}]
  %s1 = inlined_call_operand.hbm [shape: bf16[1024,128], index: 1, kind: input, shape index: {}]
  %s2 = inlined_call_operand.hbm [shape: f32[1,128], index: 2, kind: input, shape index: {}]
  %s3 = inlined_call_operand.hbm [shape: f32[1,128], index: 3, kind: input, shape index: {}]
  %s4 = inlined_call_operand.hbm [shape: f32[1,128], index: 4, kind: input, shape index: {}]
  %s5 = inlined_call_operand.vmem [shape: f32[50,128], index: 5, kind: output, shape index: {}]
  %s6 = sld [smem:[#allocation0]]
  $region46: #{discriminator_forward.4} parent=0
    _
  %s8 = ssub.s32 1, %s6
  %s9 = scalar_select 0, %s8, %s6
  $region1: #{discriminator_forward.4} parent=0
    #allocation2 [shape = 'u8[262144]{0}', space=vmem, size = 0x40000, scoped, tag = 'input window, operand 1, single buffered']
    #allocation3 [shape = 's32[1]{0}', space=sflag, size = 0x4, scoped, tag = 'scoped memory for discriminator_forward.4']
    #allocation4 [shape = 'u8[512]{0}', space=vmem, size = 0x400, scoped, tag = 'input window, operand 2, single buffered']
    #allocation5 [shape = 's32[1]{0}', space=sflag, size = 0x4, scoped, tag = 'scoped memory for discriminator_forward.4']
    #allocation6 [shape = 'u8[512]{0}', space=vmem, size = 0x400, scoped, tag = 'input window, operand 3, single buffered']
    #allocation7 [shape = 'u8[512]{0}', space=vmem, size = 0x400, scoped, tag = 'input window, operand 4, single buffered']
    #allocation8 [shape = 's32[1]{0}', space=sflag, size = 0x4, scoped, tag = 'scoped memory for discriminator_forward.4']
    %10 = vsyncpa [#allocation3], 0
    %11 = vsyncpa [#allocation5], 0
    %12 = vsyncpa [#allocation8], 0
    // Predicated region
    $region2: #{discriminator_forward.4} parent=1 // pred_check
      _
    $region3: #{discriminator_forward.4} parent=1 // pred_check_branch
      %14 = sbr.rel (0) target = $region5
    $region4: #{discriminator_forward.4} parent=1 // pred_region
      _
    $region5: #{discriminator_forward.4} parent=1 // pred_fallthru
      _
    // Predicated region
    $region6: #{discriminator_forward.4} parent=1 // pred_check
      _
    $region7: #{discriminator_forward.4} parent=1 // pred_check_branch
      %16 = sbr.rel (0) target = $region9
    $region8: #{discriminator_forward.4} parent=1 // pred_region
      %18 = vsyncadd [#allocation3], 0
      %s19 = sshll.u32 %s1, 4
      %s20 = int_to_ptr.hbm [resolvable:$true] %s19
      %s21 = sshll.u32 [#allocation2], 4
      %s22 = int_to_ptr.vmem [resolvable:$true] %s21
      %27 = dma.hbm_to_vmem [thread:$0]  %s20, 8192, %s22, [#allocation3], 64, 64, 4
    $region9: #{discriminator_forward.4} parent=1 // pred_fallthru
      _
    // Predicated region
    $region10: #{discriminator_forward.4} parent=1 // pred_check
      _
    $region11: #{discriminator_forward.4} parent=1 // pred_check_branch
      %29 = sbr.rel (0) target = $region13
    $region12: #{discriminator_forward.4} parent=1 // pred_region
      %31 = vsyncadd [#allocation5], 0
      %s33 = sshll.u32 %s2, 4
      %s34 = int_to_ptr.hbm [resolvable:$true] %s33
      %s35 = sshll.u32 [#allocation4], 4
      %s36 = int_to_ptr.vmem [resolvable:$true] %s35
      %38 = dma.hbm_to_vmem [thread:$0]  %s34, 16, %s36, [#allocation5]
    $region13: #{discriminator_forward.4} parent=1 // pred_fallthru
      _
    // Predicated region
    $region14: #{discriminator_forward.4} parent=1 // pred_check
      _
    $region15: #{discriminator_forward.4} parent=1 // pred_check_branch
      %40 = sbr.rel (0) target = $region17
    $region16: #{discriminator_forward.4} parent=1 // pred_region
      %42 = vsyncadd [#allocation5], 0
      %s44 = sshll.u32 %s3, 4
      %s45 = int_to_ptr.hbm [resolvable:$true] %s44
      %s46 = sshll.u32 [#allocation6], 4
      %s47 = int_to_ptr.vmem [resolvable:$true] %s46
      %49 = dma.hbm_to_vmem [thread:$0]  %s45, 16, %s47, [#allocation5]
    $region17: #{discriminator_forward.4} parent=1 // pred_fallthru
      _
    // Predicated region
    $region18: #{discriminator_forward.4} parent=1 // pred_check
      _
    $region19: #{discriminator_forward.4} parent=1 // pred_check_branch
      %51 = sbr.rel (0) target = $region21
    $region20: #{discriminator_forward.4} parent=1 // pred_region
      %53 = vsyncadd [#allocation8], 0
      %s55 = sshll.u32 %s4, 4
      %s56 = int_to_ptr.hbm [resolvable:$true] %s55
      %s57 = sshll.u32 [#allocation7], 4
      %s58 = int_to_ptr.vmem [resolvable:$true] %s57
      %60 = dma.hbm_to_vmem [thread:$0]  %s56, 16, %s58, [#allocation8]
    $region21: #{discriminator_forward.4} parent=1 // pred_fallthru
      _
    // Predicated region
    $region22: #{discriminator_forward.4} parent=1 // pred_check
      _
    $region23: #{discriminator_forward.4} parent=1 // pred_check_branch
      %62 = sbr.rel (0) target = $region25
    $region24: #{discriminator_forward.4} parent=1 // pred_region
      %64 = dma.done [#allocation3], 8192
    $region25: #{discriminator_forward.4} parent=1 // pred_fallthru
      _
    // Predicated region
    $region26: #{discriminator_forward.4} parent=1 // pred_check
      _
    $region27: #{discriminator_forward.4} parent=1 // pred_check_branch
      %66 = sbr.rel (0) target = $region29
    $region28: #{discriminator_forward.4} parent=1 // pred_region
      %68 = dma.done [#allocation5], 16
    $region29: #{discriminator_forward.4} parent=1 // pred_fallthru
      _
    // Predicated region
    $region30: #{discriminator_forward.4} parent=1 // pred_check
      _
    $region31: #{discriminator_forward.4} parent=1 // pred_check_branch
      %70 = sbr.rel (0) target = $region33
    $region32: #{discriminator_forward.4} parent=1 // pred_region
      %72 = dma.done [#allocation5], 16
    $region33: #{discriminator_forward.4} parent=1 // pred_fallthru
      _
    // Predicated region
    $region34: #{discriminator_forward.4} parent=1 // pred_check
      _
    $region35: #{discriminator_forward.4} parent=1 // pred_check_branch
      %74 = sbr.rel (0) target = $region37
    $region36: #{discriminator_forward.4} parent=1 // pred_region
      %76 = dma.done [#allocation8], 16
    $region37: #{discriminator_forward.4} parent=1 // pred_fallthru
      _
    %v77 = vld [vmem:[%s0] sm:$0xff]
    %v78 = vld [vmem:[%s0 + $0x8] sm:$0xff]
    %v79 = vld [vmem:[%s0 + $0x10] sm:$0xff]
    %v80 = vld [vmem:[%s0 + $0x18] sm:$0xff]
    %v81 = vld [vmem:[%s0 + $0x20] sm:$0xff]
    %v82 = vld [vmem:[%s0 + $0x28] sm:$0xff]
    %v83 = vld [vmem:[%s0 + $0x30] sm:$0xff]
    %v84 = vld [vmem:[%s0 + $0x38] sm:$0xff]
    %v85 = vld [vmem:[%s0 + $0x40] sm:$0xff]
    %v86 = vld [vmem:[%s0 + $0x48] sm:$0xff]
    %v87 = vld [vmem:[%s0 + $0x50] sm:$0xff]
    %v88 = vld [vmem:[%s0 + $0x58] sm:$0xff]
    %v89 = vld [vmem:[%s0 + $0x60] sm:$0xff]
    %v90 = vld [vmem:[%s0 + $0x68] sm:$0xff]
    %v91 = vld [vmem:[%s0 + $0x70] sm:$0xff]
    %v92 = vld [vmem:[%s0 + $0x78] sm:$0xff]
    %v93 = vld [vmem:[%s0 + $0x80] sm:$0xff]
    %v94 = vld [vmem:[%s0 + $0x88] sm:$0xff]
    %v95 = vld [vmem:[%s0 + $0x90] sm:$0xff]
    %v96 = vld [vmem:[%s0 + $0x98] sm:$0xff]
    %v97 = vld [vmem:[%s0 + $0xa0] sm:$0xff]
    %v98 = vld [vmem:[%s0 + $0xa8] sm:$0xff]
    %v99 = vld [vmem:[%s0 + $0xb0] sm:$0xff]
    %v100 = vld [vmem:[%s0 + $0xb8] sm:$0xff]
    %v101 = vld [vmem:[%s0 + $0xc0] sm:$0xff]
    %v102 = vld [vmem:[%s0 + $0xc8] sm:$0xff]
    %v103 = vld [vmem:[%s0 + $0xd0] sm:$0xff]
    %v104 = vld [vmem:[%s0 + $0xd8] sm:$0xff]
    %v105 = vld [vmem:[%s0 + $0xe0] sm:$0xff]
    %v106 = vld [vmem:[%s0 + $0xe8] sm:$0xff]
    %v107 = vld [vmem:[%s0 + $0xf0] sm:$0xff]
    %v108 = vld [vmem:[%s0 + $0xf8] sm:$0xff]
    %v109 = vld [vmem:[%s0 + $0x100] sm:$0xff]
    %v110 = vld [vmem:[%s0 + $0x108] sm:$0xff]
    %v111 = vld [vmem:[%s0 + $0x110] sm:$0xff]
    %v112 = vld [vmem:[%s0 + $0x118] sm:$0xff]
    %v113 = vld [vmem:[%s0 + $0x120] sm:$0xff]
    %v114 = vld [vmem:[%s0 + $0x128] sm:$0xff]
    %v115 = vld [vmem:[%s0 + $0x130] sm:$0xff]
    %v116 = vld [vmem:[%s0 + $0x138] sm:$0xff]
    %v117 = vld [vmem:[%s0 + $0x140] sm:$0xff]
    %v118 = vld [vmem:[%s0 + $0x148] sm:$0xff]
    %v119 = vld [vmem:[%s0 + $0x150] sm:$0xff]
    %v120 = vld [vmem:[%s0 + $0x158] sm:$0xff]
    %v121 = vld [vmem:[%s0 + $0x160] sm:$0xff]
    %v122 = vld [vmem:[%s0 + $0x168] sm:$0xff]
    %v123 = vld [vmem:[%s0 + $0x170] sm:$0xff]
    %v124 = vld [vmem:[%s0 + $0x178] sm:$0xff]
    %v125 = vld [vmem:[%s0 + $0x180] sm:$0x3]
    %v126 = vld [vmem:[%s0 + $0x188] sm:$0x3]
    %v127 = vld [vmem:[%s0 + $0x190] sm:$0x3]
    %v128 = vld [vmem:[%s0 + $0x198] sm:$0x3]
    %v129 = vld [vmem:[%s0 + $0x1a0] sm:$0x3]
    %v130 = vld [vmem:[%s0 + $0x1a8] sm:$0x3]
    %v131 = vld [vmem:[%s0 + $0x1b0] sm:$0x3]
    %v132 = vld [vmem:[%s0 + $0x1b8] sm:$0x3]
    %v133 = vpack.c.bf16 %v85, %v77
    %v134 = vpack.c.bf16 %v86, %v78
    %v135 = vpack.c.bf16 %v87, %v79
    %v136 = vpack.c.bf16 %v88, %v80
    %v137 = vpack.c.bf16 %v89, %v81
    %v138 = vpack.c.bf16 %v90, %v82
    %v139 = vpack.c.bf16 %v91, %v83
    %v140 = vpack.c.bf16 %v92, %v84
    %v141 = vpack.c.bf16 %v101, %v93
    %v142 = vpack.c.bf16 %v102, %v94
    %v143 = vpack.c.bf16 %v103, %v95
    %v144 = vpack.c.bf16 %v104, %v96
    %v145 = vpack.c.bf16 %v105, %v97
    %v146 = vpack.c.bf16 %v106, %v98
    %v147 = vpack.c.bf16 %v107, %v99
    %v148 = vpack.c.bf16 %v108, %v100
    %v149 = vpack.c.bf16 %v117, %v109
    %v150 = vpack.c.bf16 %v118, %v110
    %v151 = vpack.c.bf16 %v119, %v111
    %v152 = vpack.c.bf16 %v120, %v112
    %v153 = vpack.c.bf16 %v121, %v113
    %v154 = vpack.c.bf16 %v122, %v114
    %v155 = vpack.c.bf16 %v123, %v115
    %v156 = vpack.c.bf16 %v124, %v116
    %v157 = vpack.c.bf16 %v125, %v125
    %v158 = vpack.c.bf16 %v126, %v126
    %v159 = vpack.c.bf16 %v127, %v127
    %v160 = vpack.c.bf16 %v128, %v128
    %v161 = vpack.c.bf16 %v129, %v129
    %v162 = vpack.c.bf16 %v130, %v130
    %v163 = vpack.c.bf16 %v131, %v131
    %v164 = vpack.c.bf16 %v132, %v132
    %v165 = vld [vmem:[#allocation2] sm:$0xf]
    %v166 = vld [vmem:[#allocation2 + $0x4] sm:$0xf]
    %v167 = vld [vmem:[#allocation2 + $0x8] sm:$0xf]
    %v168 = vld [vmem:[#allocation2 + $0xc] sm:$0xf]
    %v169 = vld [vmem:[#allocation2 + $0x10] sm:$0xf]
    %v170 = vld [vmem:[#allocation2 + $0x14] sm:$0xf]
    %v171 = vld [vmem:[#allocation2 + $0x18] sm:$0xf]
    %v172 = vld [vmem:[#allocation2 + $0x1c] sm:$0xf]
    %v173 = vld [vmem:[#allocation2 + $0x20] sm:$0xf]
    %v174 = vld [vmem:[#allocation2 + $0x24] sm:$0xf]
    %v175 = vld [vmem:[#allocation2 + $0x28] sm:$0xf]
    %v176 = vld [vmem:[#allocation2 + $0x2c] sm:$0xf]
    %v177 = vld [vmem:[#allocation2 + $0x30] sm:$0xf]
    %v178 = vld [vmem:[#allocation2 + $0x34] sm:$0xf]
    %v179 = vld [vmem:[#allocation2 + $0x38] sm:$0xf]
    %v180 = vld [vmem:[#allocation2 + $0x3c] sm:$0xf]
    %v181 = vld [vmem:[#allocation2 + $0x40] sm:$0xf]
    %v182 = vld [vmem:[#allocation2 + $0x44] sm:$0xf]
    %v183 = vld [vmem:[#allocation2 + $0x48] sm:$0xf]
    %v184 = vld [vmem:[#allocation2 + $0x4c] sm:$0xf]
    %v185 = vld [vmem:[#allocation2 + $0x50] sm:$0xf]
    %v186 = vld [vmem:[#allocation2 + $0x54] sm:$0xf]
    %v187 = vld [vmem:[#allocation2 + $0x58] sm:$0xf]
    %v188 = vld [vmem:[#allocation2 + $0x5c] sm:$0xf]
    %v189 = vld [vmem:[#allocation2 + $0x60] sm:$0xf]
    %v190 = vld [vmem:[#allocation2 + $0x64] sm:$0xf]
    %v191 = vld [vmem:[#allocation2 + $0x68] sm:$0xf]
    %v192 = vld [vmem:[#allocation2 + $0x6c] sm:$0xf]
    %v193 = vld [vmem:[#allocation2 + $0x70] sm:$0xf]
    %v194 = vld [vmem:[#allocation2 + $0x74] sm:$0xf]
    %v195 = vld [vmem:[#allocation2 + $0x78] sm:$0xf]
    %v196 = vld [vmem:[#allocation2 + $0x7c] sm:$0xf]
    %v197 = vld [vmem:[#allocation2 + $0x80] sm:$0xf]
    %v198 = vld [vmem:[#allocation2 + $0x84] sm:$0xf]
    %v199 = vld [vmem:[#allocation2 + $0x88] sm:$0xf]
    %v200 = vld [vmem:[#allocation2 + $0x8c] sm:$0xf]
    %v201 = vld [vmem:[#allocation2 + $0x90] sm:$0xf]
    %v202 = vld [vmem:[#allocation2 + $0x94] sm:$0xf]
    %v203 = vld [vmem:[#allocation2 + $0x98] sm:$0xf]
    %v204 = vld [vmem:[#allocation2 + $0x9c] sm:$0xf]
    %v205 = vld [vmem:[#allocation2 + $0xa0] sm:$0xf]
    %v206 = vld [vmem:[#allocation2 + $0xa4] sm:$0xf]
    %v207 = vld [vmem:[#allocation2 + $0xa8] sm:$0xf]
    %v208 = vld [vmem:[#allocation2 + $0xac] sm:$0xf]
    %v209 = vld [vmem:[#allocation2 + $0xb0] sm:$0xf]
    %v210 = vld [vmem:[#allocation2 + $0xb4] sm:$0xf]
    %v211 = vld [vmem:[#allocation2 + $0xb8] sm:$0xf]
    %v212 = vld [vmem:[#allocation2 + $0xbc] sm:$0xf]
    %v213 = vld [vmem:[#allocation2 + $0xc0] sm:$0xf]
    %v214 = vld [vmem:[#allocation2 + $0xc4] sm:$0xf]
    %v215 = vld [vmem:[#allocation2 + $0xc8] sm:$0xf]
    %v216 = vld [vmem:[#allocation2 + $0xcc] sm:$0xf]
    %v217 = vld [vmem:[#allocation2 + $0xd0] sm:$0xf]
    %v218 = vld [vmem:[#allocation2 + $0xd4] sm:$0xf]
    %v219 = vld [vmem:[#allocation2 + $0xd8] sm:$0xf]
    %v220 = vld [vmem:[#allocation2 + $0xdc] sm:$0xf]
    %v221 = vld [vmem:[#allocation2 + $0xe0] sm:$0xf]
    %v222 = vld [vmem:[#allocation2 + $0xe4] sm:$0xf]
    %v223 = vld [vmem:[#allocation2 + $0xe8] sm:$0xf]
    %v224 = vld [vmem:[#allocation2 + $0xec] sm:$0xf]
    %v225 = vld [vmem:[#allocation2 + $0xf0] sm:$0xf]
    %v226 = vld [vmem:[#allocation2 + $0xf4] sm:$0xf]
    %v227 = vld [vmem:[#allocation2 + $0xf8] sm:$0xf]
    %v228 = vld [vmem:[#allocation2 + $0xfc] sm:$0xf]
    %v229 = vld [vmem:[#allocation2 + $0x100] sm:$0xf]
    %v230 = vld [vmem:[#allocation2 + $0x104] sm:$0xf]
    %v231 = vld [vmem:[#allocation2 + $0x108] sm:$0xf]
    %v232 = vld [vmem:[#allocation2 + $0x10c] sm:$0xf]
    %v233 = vld [vmem:[#allocation2 + $0x110] sm:$0xf]
    %v234 = vld [vmem:[#allocation2 + $0x114] sm:$0xf]
    %v235 = vld [vmem:[#allocation2 + $0x118] sm:$0xf]
    %v236 = vld [vmem:[#allocation2 + $0x11c] sm:$0xf]
    %v237 = vld [vmem:[#allocation2 + $0x120] sm:$0xf]
    %v238 = vld [vmem:[#allocation2 + $0x124] sm:$0xf]
    %v239 = vld [vmem:[#allocation2 + $0x128] sm:$0xf]
    %v240 = vld [vmem:[#allocation2 + $0x12c] sm:$0xf]
    %v241 = vld [vmem:[#allocation2 + $0x130] sm:$0xf]
    %v242 = vld [vmem:[#allocation2 + $0x134] sm:$0xf]
    %v243 = vld [vmem:[#allocation2 + $0x138] sm:$0xf]
    %v244 = vld [vmem:[#allocation2 + $0x13c] sm:$0xf]
    %v245 = vld [vmem:[#allocation2 + $0x140] sm:$0xf]
    %v246 = vld [vmem:[#allocation2 + $0x144] sm:$0xf]
    %v247 = vld [vmem:[#allocation2 + $0x148] sm:$0xf]
    %v248 = vld [vmem:[#allocation2 + $0x14c] sm:$0xf]
    %v249 = vld [vmem:[#allocation2 + $0x150] sm:$0xf]
    %v250 = vld [vmem:[#allocation2 + $0x154] sm:$0xf]
    %v251 = vld [vmem:[#allocation2 + $0x158] sm:$0xf]
    %v252 = vld [vmem:[#allocation2 + $0x15c] sm:$0xf]
    %v253 = vld [vmem:[#allocation2 + $0x160] sm:$0xf]
    %v254 = vld [vmem:[#allocation2 + $0x164] sm:$0xf]
    %v255 = vld [vmem:[#allocation2 + $0x168] sm:$0xf]
    %v256 = vld [vmem:[#allocation2 + $0x16c] sm:$0xf]
    %v257 = vld [vmem:[#allocation2 + $0x170] sm:$0xf]
    %v258 = vld [vmem:[#allocation2 + $0x174] sm:$0xf]
    %v259 = vld [vmem:[#allocation2 + $0x178] sm:$0xf]
    %v260 = vld [vmem:[#allocation2 + $0x17c] sm:$0xf]
    %v261 = vld [vmem:[#allocation2 + $0x180] sm:$0xf]
    %v262 = vld [vmem:[#allocation2 + $0x184] sm:$0xf]
    %v263 = vld [vmem:[#allocation2 + $0x188] sm:$0xf]
    %v264 = vld [vmem:[#allocation2 + $0x18c] sm:$0xf]
    %v265 = vld [vmem:[#allocation2 + $0x190] sm:$0xf]
    %v266 = vld [vmem:[#allocation2 + $0x194] sm:$0xf]
    %v267 = vld [vmem:[#allocation2 + $0x198] sm:$0xf]
    %v268 = vld [vmem:[#allocation2 + $0x19c] sm:$0xf]
    %v269 = vld [vmem:[#allocation2 + $0x1a0] sm:$0xf]
    %v270 = vld [vmem:[#allocation2 + $0x1a4] sm:$0xf]
    %v271 = vld [vmem:[#allocation2 + $0x1a8] sm:$0xf]
    %v272 = vld [vmem:[#allocation2 + $0x1ac] sm:$0xf]
    %v273 = vld [vmem:[#allocation2 + $0x1b0] sm:$0xf]
    %v274 = vld [vmem:[#allocation2 + $0x1b4] sm:$0xf]
    %v275 = vld [vmem:[#allocation2 + $0x1b8] sm:$0xf]
    %v276 = vld [vmem:[#allocation2 + $0x1bc] sm:$0xf]
    %v277 = vld [vmem:[#allocation2 + $0x1c0] sm:$0xf]
    %v278 = vld [vmem:[#allocation2 + $0x1c4] sm:$0xf]
    %v279 = vld [vmem:[#allocation2 + $0x1c8] sm:$0xf]
    %v280 = vld [vmem:[#allocation2 + $0x1cc] sm:$0xf]
    %v281 = vld [vmem:[#allocation2 + $0x1d0] sm:$0xf]
    %v282 = vld [vmem:[#allocation2 + $0x1d4] sm:$0xf]
    %v283 = vld [vmem:[#allocation2 + $0x1d8] sm:$0xf]
    %v284 = vld [vmem:[#allocation2 + $0x1dc] sm:$0xf]
    %v285 = vld [vmem:[#allocation2 + $0x1e0] sm:$0xf]
    %v286 = vld [vmem:[#allocation2 + $0x1e4] sm:$0xf]
    %v287 = vld [vmem:[#allocation2 + $0x1e8] sm:$0xf]
    %v288 = vld [vmem:[#allocation2 + $0x1ec] sm:$0xf]
    %v289 = vld [vmem:[#allocation2 + $0x1f0] sm:$0xf]
    %v290 = vld [vmem:[#allocation2 + $0x1f4] sm:$0xf]
    %v291 = vld [vmem:[#allocation2 + $0x1f8] sm:$0xf]
    %v292 = vld [vmem:[#allocation2 + $0x1fc] sm:$0xf]
    %v293 = vld [vmem:[#allocation4] sm:$0x1]
    %v295 = vperm.slane %v293, 0
    %v425 = vunpack.c.l.b16 %v165
    %v426 = vunpack.c.l.b16 %v166
    %v427 = vunpack.c.l.b16 %v167
    %v428 = vunpack.c.l.b16 %v168
    %v429 = vunpack.c.l.b16 %v169
    %v430 = vunpack.c.l.b16 %v170
    %v431 = vunpack.c.l.b16 %v171
    %v432 = vunpack.c.l.b16 %v172
    %v433 = vunpack.c.l.b16 %v173
    %v434 = vunpack.c.l.b16 %v174
    %v435 = vunpack.c.l.b16 %v175
    %v436 = vunpack.c.l.b16 %v176
    %v437 = vunpack.c.l.b16 %v177
    %v438 = vunpack.c.l.b16 %v178
    %v439 = vunpack.c.l.b16 %v179
    %v440 = vunpack.c.l.b16 %v180
    %v441 = vunpack.c.l.b16 %v181
    %v442 = vunpack.c.l.b16 %v182
    %v443 = vunpack.c.l.b16 %v183
    %v444 = vunpack.c.l.b16 %v184
    %v445 = vunpack.c.l.b16 %v185
    %v446 = vunpack.c.l.b16 %v186
    %v447 = vunpack.c.l.b16 %v187
    %v448 = vunpack.c.l.b16 %v188
    %v449 = vunpack.c.l.b16 %v189
    %v450 = vunpack.c.l.b16 %v190
    %v451 = vunpack.c.l.b16 %v191
    %v452 = vunpack.c.l.b16 %v192
    %v453 = vunpack.c.l.b16 %v193
    %v454 = vunpack.c.l.b16 %v194
    %v455 = vunpack.c.l.b16 %v195
    %v456 = vunpack.c.l.b16 %v196
    %v457 = vunpack.c.l.b16 %v197
    %v458 = vunpack.c.l.b16 %v198
    %v459 = vunpack.c.l.b16 %v199
    %v460 = vunpack.c.l.b16 %v200
    %v461 = vunpack.c.l.b16 %v201
    %v462 = vunpack.c.l.b16 %v202
    %v463 = vunpack.c.l.b16 %v203
    %v464 = vunpack.c.l.b16 %v204
    %v465 = vunpack.c.l.b16 %v205
    %v466 = vunpack.c.l.b16 %v206
    %v467 = vunpack.c.l.b16 %v207
    %v468 = vunpack.c.l.b16 %v208
    %v469 = vunpack.c.l.b16 %v209
    %v470 = vunpack.c.l.b16 %v210
    %v471 = vunpack.c.l.b16 %v211
    %v472 = vunpack.c.l.b16 %v212
    %v473 = vunpack.c.l.b16 %v213
    %v474 = vunpack.c.l.b16 %v214
    %v475 = vunpack.c.l.b16 %v215
    %v476 = vunpack.c.l.b16 %v216
    %v477 = vunpack.c.l.b16 %v217
    %v478 = vunpack.c.l.b16 %v218
    %v479 = vunpack.c.l.b16 %v219
    %v480 = vunpack.c.l.b16 %v220
    %v481 = vunpack.c.l.b16 %v221
    %v482 = vunpack.c.l.b16 %v222
    %v483 = vunpack.c.l.b16 %v223
    %v484 = vunpack.c.l.b16 %v224
    %v485 = vunpack.c.l.b16 %v225
    %v486 = vunpack.c.l.b16 %v226
    %v487 = vunpack.c.l.b16 %v227
    %v488 = vunpack.c.l.b16 %v228
    %v489 = vunpack.c.l.b16 %v229
    %v490 = vunpack.c.l.b16 %v230
    %v491 = vunpack.c.l.b16 %v231
    %v492 = vunpack.c.l.b16 %v232
    %v493 = vunpack.c.l.b16 %v233
    %v494 = vunpack.c.l.b16 %v234
    %v495 = vunpack.c.l.b16 %v235
    %v496 = vunpack.c.l.b16 %v236
    %v497 = vunpack.c.l.b16 %v237
    %v498 = vunpack.c.l.b16 %v238
    %v499 = vunpack.c.l.b16 %v239
    %v500 = vunpack.c.l.b16 %v240
    %v501 = vunpack.c.l.b16 %v241
    %v502 = vunpack.c.l.b16 %v242
    %v503 = vunpack.c.l.b16 %v243
    %v504 = vunpack.c.l.b16 %v244
    %v505 = vunpack.c.l.b16 %v245
    %v506 = vunpack.c.l.b16 %v246
    %v507 = vunpack.c.l.b16 %v247
    %v508 = vunpack.c.l.b16 %v248
    %v509 = vunpack.c.l.b16 %v249
    %v510 = vunpack.c.l.b16 %v250
    %v511 = vunpack.c.l.b16 %v251
    %v512 = vunpack.c.l.b16 %v252
    %v513 = vunpack.c.l.b16 %v253
    %v514 = vunpack.c.l.b16 %v254
    %v515 = vunpack.c.l.b16 %v255
    %v516 = vunpack.c.l.b16 %v256
    %v517 = vunpack.c.l.b16 %v257
    %v518 = vunpack.c.l.b16 %v258
    %v519 = vunpack.c.l.b16 %v259
    %v520 = vunpack.c.l.b16 %v260
    %v521 = vunpack.c.l.b16 %v261
    %v522 = vunpack.c.l.b16 %v262
    %v523 = vunpack.c.l.b16 %v263
    %v524 = vunpack.c.l.b16 %v264
    %v525 = vunpack.c.l.b16 %v265
    %v526 = vunpack.c.l.b16 %v266
    %v527 = vunpack.c.l.b16 %v267
    %v528 = vunpack.c.l.b16 %v268
    %v529 = vunpack.c.l.b16 %v269
    %v530 = vunpack.c.l.b16 %v270
    %v531 = vunpack.c.l.b16 %v271
    %v532 = vunpack.c.l.b16 %v272
    %v533 = vunpack.c.l.b16 %v273
    %v534 = vunpack.c.l.b16 %v274
    %v535 = vunpack.c.l.b16 %v275
    %v536 = vunpack.c.l.b16 %v276
    %v537 = vunpack.c.l.b16 %v277
    %v538 = vunpack.c.l.b16 %v278
    %v539 = vunpack.c.l.b16 %v279
    %v540 = vunpack.c.l.b16 %v280
    %v541 = vunpack.c.l.b16 %v281
    %v542 = vunpack.c.l.b16 %v282
    %v543 = vunpack.c.l.b16 %v283
    %v544 = vunpack.c.l.b16 %v284
    %v545 = vunpack.c.l.b16 %v285
    %v546 = vunpack.c.l.b16 %v286
    %v547 = vunpack.c.l.b16 %v287
    %v548 = vunpack.c.l.b16 %v288
    %v549 = vunpack.c.l.b16 %v289
    %v550 = vunpack.c.l.b16 %v290
    %v551 = vunpack.c.l.b16 %v291
    %v552 = vunpack.c.l.b16 %v292
    %v553 = vpack.c.b16 %v426, %v425
    %v554 = vpack.c.b16 %v428, %v427
    %v555 = vpack.c.b16 %v430, %v429
    %v556 = vpack.c.b16 %v432, %v431
    %v557 = vpack.c.b16 %v434, %v433
    %v558 = vpack.c.b16 %v436, %v435
    %v559 = vpack.c.b16 %v438, %v437
    %v560 = vpack.c.b16 %v440, %v439
    %v561 = vpack.c.b16 %v442, %v441
    %v562 = vpack.c.b16 %v444, %v443
    %v563 = vpack.c.b16 %v446, %v445
    %v564 = vpack.c.b16 %v448, %v447
    %v565 = vpack.c.b16 %v450, %v449
    %v566 = vpack.c.b16 %v452, %v451
    %v567 = vpack.c.b16 %v454, %v453
    %v568 = vpack.c.b16 %v456, %v455
    %v569 = vpack.c.b16 %v458, %v457
    %v570 = vpack.c.b16 %v460, %v459
    %v571 = vpack.c.b16 %v462, %v461
    %v572 = vpack.c.b16 %v464, %v463
    %v573 = vpack.c.b16 %v466, %v465
    %v574 = vpack.c.b16 %v468, %v467
    %v575 = vpack.c.b16 %v470, %v469
    %v576 = vpack.c.b16 %v472, %v471
    %v577 = vpack.c.b16 %v474, %v473
    %v578 = vpack.c.b16 %v476, %v475
    %v579 = vpack.c.b16 %v478, %v477
    %v580 = vpack.c.b16 %v480, %v479
    %v581 = vpack.c.b16 %v482, %v481
    %v582 = vpack.c.b16 %v484, %v483
    %v583 = vpack.c.b16 %v486, %v485
    %v584 = vpack.c.b16 %v488, %v487
    %v585 = vpack.c.b16 %v490, %v489
    %v586 = vpack.c.b16 %v492, %v491
    %v587 = vpack.c.b16 %v494, %v493
    %v588 = vpack.c.b16 %v496, %v495
    %v589 = vpack.c.b16 %v498, %v497
    %v590 = vpack.c.b16 %v500, %v499
    %v591 = vpack.c.b16 %v502, %v501
    %v592 = vpack.c.b16 %v504, %v503
    %v593 = vpack.c.b16 %v506, %v505
    %v594 = vpack.c.b16 %v508, %v507
    %v595 = vpack.c.b16 %v510, %v509
    %v596 = vpack.c.b16 %v512, %v511
    %v597 = vpack.c.b16 %v514, %v513
    %v598 = vpack.c.b16 %v516, %v515
    %v599 = vpack.c.b16 %v518, %v517
    %v600 = vpack.c.b16 %v520, %v519
    %v601 = vpack.c.b16 %v522, %v521
    %v602 = vpack.c.b16 %v524, %v523
    %v603 = vpack.c.b16 %v526, %v525
    %v604 = vpack.c.b16 %v528, %v527
    %v605 = vpack.c.b16 %v530, %v529
    %v606 = vpack.c.b16 %v532, %v531
    %v607 = vpack.c.b16 %v534, %v533
    %v608 = vpack.c.b16 %v536, %v535
    %v609 = vpack.c.b16 %v538, %v537
    %v610 = vpack.c.b16 %v540, %v539
    %v611 = vpack.c.b16 %v542, %v541
    %v612 = vpack.c.b16 %v544, %v543
    %v613 = vpack.c.b16 %v546, %v545
    %v614 = vpack.c.b16 %v548, %v547
    %v615 = vpack.c.b16 %v550, %v549
    %v616 = vpack.c.b16 %v552, %v551
    %681 = vmatpush.bf16.msra.mxu0 %v560
    %682 = vmatpush.bf16.msra.mxu0 %v559
    %683 = vmatpush.bf16.msra.mxu0 %v558
    %684 = vmatpush.bf16.msra.mxu0 %v557
    %685 = vmatpush.bf16.msra.mxu0 %v556
    %686 = vmatpush.bf16.msra.mxu0 %v555
    %687 = vmatpush.bf16.msra.mxu0 %v554
    %688 = vmatpush.bf16.msra.mxu0 %v553
    %689 = vmatmul.bf16.gmra.mxu0 %v133
    %v690 = vpop.f32.mrf.mxu0
    %v691 = vadd.f32 %v295, %v690
    %v692 = vpop.f32.mrf.mxu0
    %v693 = vadd.f32 %v295, %v692
    %694 = vmatmul.bf16.gmra.mxu0 %v141
    %v695 = vpop.f32.mrf.mxu0
    %v696 = vadd.f32 %v295, %v695
    %v697 = vpop.f32.mrf.mxu0
    %v698 = vadd.f32 %v295, %v697
    %699 = vmatmul.bf16.gmra.mxu0 %v149
    %v700 = vpop.f32.mrf.mxu0
    %v701 = vadd.f32 %v295, %v700
    %v702 = vpop.f32.mrf.mxu0
    %v703 = vadd.f32 %v295, %v702
    %704 = vmatmul.bf16.gmra.mxu0 %v157
    %v705 = vpop.f32.mrf.mxu0
    %v706 = vadd.f32 %v295, %v705
    %v707 = vpop.f32.mrf.mxu0
    %708 = vdwg.mxu0
    %709 = vmatpush.bf16.msra.mxu0 %v568
    %710 = vmatpush.bf16.msra.mxu0 %v567
    %711 = vmatpush.bf16.msra.mxu0 %v566
    %712 = vmatpush.bf16.msra.mxu0 %v565
    %713 = vmatpush.bf16.msra.mxu0 %v564
    %714 = vmatpush.bf16.msra.mxu0 %v563
    %715 = vmatpush.bf16.msra.mxu0 %v562
    %716 = vmatpush.bf16.msra.mxu0 %v561
    %717 = vmatmul.bf16.gmra.mxu0 %v134
    %v718 = vpop.f32.mrf.mxu0
    %v719 = vadd.f32 %v691, %v718
    %v720 = vpop.f32.mrf.mxu0
    %v721 = vadd.f32 %v693, %v720
    %722 = vmatmul.bf16.gmra.mxu0 %v142
    %v723 = vpop.f32.mrf.mxu0
    %v724 = vadd.f32 %v696, %v723
    %v725 = vpop.f32.mrf.mxu0
    %v726 = vadd.f32 %v698, %v725
    %727 = vmatmul.bf16.gmra.mxu0 %v150
    %v728 = vpop.f32.mrf.mxu0
    %v729 = vadd.f32 %v701, %v728
    %v730 = vpop.f32.mrf.mxu0
    %v731 = vadd.f32 %v703, %v730
    %732 = vmatmul.bf16.gmra.mxu0 %v158
    %v733 = vpop.f32.mrf.mxu0
    %v734 = vadd.f32 %v706, %v733
    %v735 = vpop.f32.mrf.mxu0
    %736 = vdwg.mxu0
    %737 = vmatpush.bf16.msra.mxu0 %v576
    %738 = vmatpush.bf16.msra.mxu0 %v575
    %739 = vmatpush.bf16.msra.mxu0 %v574
    %740 = vmatpush.bf16.msra.mxu0 %v573
    %741 = vmatpush.bf16.msra.mxu0 %v572
    %742 = vmatpush.bf16.msra.mxu0 %v571
    %743 = vmatpush.bf16.msra.mxu0 %v570
    %744 = vmatpush.bf16.msra.mxu0 %v569
    %745 = vmatmul.bf16.gmra.mxu0 %v135
    %v746 = vpop.f32.mrf.mxu0
    %v747 = vadd.f32 %v719, %v746
    %v748 = vpop.f32.mrf.mxu0
    %v749 = vadd.f32 %v721, %v748
    %750 = vmatmul.bf16.gmra.mxu0 %v143
    %v751 = vpop.f32.mrf.mxu0
    %v752 = vadd.f32 %v724, %v751
    %v753 = vpop.f32.mrf.mxu0
    %v754 = vadd.f32 %v726, %v753
    %755 = vmatmul.bf16.gmra.mxu0 %v151
    %v756 = vpop.f32.mrf.mxu0
    %v757 = vadd.f32 %v729, %v756
    %v758 = vpop.f32.mrf.mxu0
    %v759 = vadd.f32 %v731, %v758
    %760 = vmatmul.bf16.gmra.mxu0 %v159
    %v761 = vpop.f32.mrf.mxu0
    %v762 = vadd.f32 %v734, %v761
    %v763 = vpop.f32.mrf.mxu0
    %764 = vdwg.mxu0
    %765 = vmatpush.bf16.msra.mxu0 %v584
    %766 = vmatpush.bf16.msra.mxu0 %v583
    %767 = vmatpush.bf16.msra.mxu0 %v582
    %768 = vmatpush.bf16.msra.mxu0 %v581
    %769 = vmatpush.bf16.msra.mxu0 %v580
    %770 = vmatpush.bf16.msra.mxu0 %v579
    %771 = vmatpush.bf16.msra.mxu0 %v578
    %772 = vmatpush.bf16.msra.mxu0 %v577
    %773 = vmatmul.bf16.gmra.mxu0 %v136
    %v774 = vpop.f32.mrf.mxu0
    %v775 = vadd.f32 %v747, %v774
    %v776 = vpop.f32.mrf.mxu0
    %v777 = vadd.f32 %v749, %v776
    %778 = vmatmul.bf16.gmra.mxu0 %v144
    %v779 = vpop.f32.mrf.mxu0
    %v780 = vadd.f32 %v752, %v779
    %v781 = vpop.f32.mrf.mxu0
    %v782 = vadd.f32 %v754, %v781
    %783 = vmatmul.bf16.gmra.mxu0 %v152
    %v784 = vpop.f32.mrf.mxu0
    %v785 = vadd.f32 %v757, %v784
    %v786 = vpop.f32.mrf.mxu0
    %v787 = vadd.f32 %v759, %v786
    %788 = vmatmul.bf16.gmra.mxu0 %v160
    %v789 = vpop.f32.mrf.mxu0
    %v790 = vadd.f32 %v762, %v789
    %v791 = vpop.f32.mrf.mxu0
    %792 = vdwg.mxu0
    %793 = vmatpush.bf16.msra.mxu0 %v592
    %794 = vmatpush.bf16.msra.mxu0 %v591
    %795 = vmatpush.bf16.msra.mxu0 %v590
    %796 = vmatpush.bf16.msra.mxu0 %v589
    %797 = vmatpush.bf16.msra.mxu0 %v588
    %798 = vmatpush.bf16.msra.mxu0 %v587
    %799 = vmatpush.bf16.msra.mxu0 %v586
    %800 = vmatpush.bf16.msra.mxu0 %v585
    %801 = vmatmul.bf16.gmra.mxu0 %v137
    %v802 = vpop.f32.mrf.mxu0
    %v803 = vadd.f32 %v775, %v802
    %v804 = vpop.f32.mrf.mxu0
    %v805 = vadd.f32 %v777, %v804
    %806 = vmatmul.bf16.gmra.mxu0 %v145
    %v807 = vpop.f32.mrf.mxu0
    %v808 = vadd.f32 %v780, %v807
    %v809 = vpop.f32.mrf.mxu0
    %v810 = vadd.f32 %v782, %v809
    %811 = vmatmul.bf16.gmra.mxu0 %v153
    %v812 = vpop.f32.mrf.mxu0
    %v813 = vadd.f32 %v785, %v812
    %v814 = vpop.f32.mrf.mxu0
    %v815 = vadd.f32 %v787, %v814
    %816 = vmatmul.bf16.gmra.mxu0 %v161
    %v817 = vpop.f32.mrf.mxu0
    %v818 = vadd.f32 %v790, %v817
    %v819 = vpop.f32.mrf.mxu0
    %820 = vdwg.mxu0
    %821 = vmatpush.bf16.msra.mxu0 %v600
    %822 = vmatpush.bf16.msra.mxu0 %v599
    %823 = vmatpush.bf16.msra.mxu0 %v598
    %824 = vmatpush.bf16.msra.mxu0 %v597
    %825 = vmatpush.bf16.msra.mxu0 %v596
    %826 = vmatpush.bf16.msra.mxu0 %v595
    %827 = vmatpush.bf16.msra.mxu0 %v594
    %828 = vmatpush.bf16.msra.mxu0 %v593
    %829 = vmatmul.bf16.gmra.mxu0 %v138
    %v830 = vpop.f32.mrf.mxu0
    %v831 = vadd.f32 %v803, %v830
    %v832 = vpop.f32.mrf.mxu0
    %v833 = vadd.f32 %v805, %v832
    %834 = vmatmul.bf16.gmra.mxu0 %v146
    %v835 = vpop.f32.mrf.mxu0
    %v836 = vadd.f32 %v808, %v835
    %v837 = vpop.f32.mrf.mxu0
    %v838 = vadd.f32 %v810, %v837
    %839 = vmatmul.bf16.gmra.mxu0 %v154
    %v840 = vpop.f32.mrf.mxu0
    %v841 = vadd.f32 %v813, %v840
    %v842 = vpop.f32.mrf.mxu0
    %v843 = vadd.f32 %v815, %v842
    %844 = vmatmul.bf16.gmra.mxu0 %v162
    %v845 = vpop.f32.mrf.mxu0
    %v846 = vadd.f32 %v818, %v845
    %v847 = vpop.f32.mrf.mxu0
    %848 = vdwg.mxu0
    %849 = vmatpush.bf16.msra.mxu0 %v608
    %850 = vmatpush.bf16.msra.mxu0 %v607
    %851 = vmatpush.bf16.msra.mxu0 %v606
    %852 = vmatpush.bf16.msra.mxu0 %v605
    %853 = vmatpush.bf16.msra.mxu0 %v604
    %854 = vmatpush.bf16.msra.mxu0 %v603
    %855 = vmatpush.bf16.msra.mxu0 %v602
    %856 = vmatpush.bf16.msra.mxu0 %v601
    %857 = vmatmul.bf16.gmra.mxu0 %v139
    %v858 = vpop.f32.mrf.mxu0
    %v859 = vadd.f32 %v831, %v858
    %v860 = vpop.f32.mrf.mxu0
    %v861 = vadd.f32 %v833, %v860
    %862 = vmatmul.bf16.gmra.mxu0 %v147
    %v863 = vpop.f32.mrf.mxu0
    %v864 = vadd.f32 %v836, %v863
    %v865 = vpop.f32.mrf.mxu0
    %v866 = vadd.f32 %v838, %v865
    %867 = vmatmul.bf16.gmra.mxu0 %v155
    %v868 = vpop.f32.mrf.mxu0
    %v869 = vadd.f32 %v841, %v868
    %v870 = vpop.f32.mrf.mxu0
    %v871 = vadd.f32 %v843, %v870
    %872 = vmatmul.bf16.gmra.mxu0 %v163
    %v873 = vpop.f32.mrf.mxu0
    %v874 = vadd.f32 %v846, %v873
    %v875 = vpop.f32.mrf.mxu0
    %876 = vdwg.mxu0
    %877 = vmatpush.bf16.msra.mxu0 %v616
    %878 = vmatpush.bf16.msra.mxu0 %v615
    %879 = vmatpush.bf16.msra.mxu0 %v614
    %880 = vmatpush.bf16.msra.mxu0 %v613
    %881 = vmatpush.bf16.msra.mxu0 %v612
    %882 = vmatpush.bf16.msra.mxu0 %v611
    %883 = vmatpush.bf16.msra.mxu0 %v610
    %884 = vmatpush.bf16.msra.mxu0 %v609
    %885 = vmatmul.bf16.gmra.mxu0 %v140
    %v886 = vpop.f32.mrf.mxu0
    %v887 = vadd.f32 %v859, %v886
    %v888 = vpop.f32.mrf.mxu0
    %v889 = vadd.f32 %v861, %v888
    %890 = vmatmul.bf16.gmra.mxu0 %v148
    %v891 = vpop.f32.mrf.mxu0
    %v892 = vadd.f32 %v864, %v891
    %v893 = vpop.f32.mrf.mxu0
    %v894 = vadd.f32 %v866, %v893
    %895 = vmatmul.bf16.gmra.mxu0 %v156
    %v896 = vpop.f32.mrf.mxu0
    %v897 = vadd.f32 %v869, %v896
    %v898 = vpop.f32.mrf.mxu0
    %v899 = vadd.f32 %v871, %v898
    %900 = vmatmul.bf16.gmra.mxu0 %v164
    %v901 = vpop.f32.mrf.mxu0
    %v902 = vadd.f32 %v874, %v901
    %v903 = vpop.f32.mrf.mxu0
    %904 = vdwg.mxu0
    %v905 = vadd.f32 %v887, %v889
    %v906 = vadd.f32 %v905, %v892
    %v907 = vadd.f32 %v906, %v894
    %v908 = vadd.f32 %v907, %v897
    %v909 = vadd.f32 %v908, %v899
    %vm910 = vcmask 1041408
    %v911 = vsel %vm910, %v902, 0.0
    %v912 = vadd.f32 %v909, %v911
    %v913 = vrot.slane %v912, 4
    %v914 = vadd.f32 %v912, %v913
    %v915 = vrot.slane %v914, 2
    %v916 = vadd.f32 %v914, %v915
    %v917 = vrot.slane %v916, 1
    %v918 = vadd.f32 %v916, %v917
    %v919 = vrcp.pop 50.0
    %v920 = vmul.f32 50.0, %v919
    %v921 = vsub.f32 1.0, %v920
    %v922 = vmul.f32 %v919, %v921
    %v923 = vadd.f32 %v919, %v922
    %vm924 = vweird.f32 %v919
    %v925 = vsel %vm924, %v919, %v923
    %v926 = vmul.f32 %v918, %v925
    %v927 = vsub.f32 %v887, %v926
    %v928 = vsub.f32 %v889, %v926
    %v929 = vsub.f32 %v892, %v926
    %v930 = vsub.f32 %v894, %v926
    %v931 = vsub.f32 %v897, %v926
    %v932 = vsub.f32 %v899, %v926
    %v933 = vsub.f32 %v902, %v926
    %v934 = vmul.f32 %v927, %v927
    %v935 = vmul.f32 %v928, %v928
    %v936 = vmul.f32 %v929, %v929
    %v937 = vmul.f32 %v930, %v930
    %v938 = vmul.f32 %v931, %v931
    %v939 = vmul.f32 %v932, %v932
    %v940 = vmul.f32 %v933, %v933
    %v941 = vadd.f32 %v934, %v935
    %v942 = vadd.f32 %v941, %v936
    %v943 = vadd.f32 %v942, %v937
    %v944 = vadd.f32 %v943, %v938
    %v945 = vadd.f32 %v944, %v939
    %v946 = vsel %vm910, %v940, 0.0
    %v947 = vadd.f32 %v945, %v946
    %v948 = vrot.slane %v947, 4
    %v949 = vadd.f32 %v947, %v948
    %v950 = vrot.slane %v949, 2
    %v951 = vadd.f32 %v949, %v950
    %v952 = vrot.slane %v951, 1
    %v953 = vadd.f32 %v951, %v952
    %v954 = vmul.f32 %v953, %v925
    %v955 = vadd.f32 %v954, 1e-05
    %v956 = vrsqrt.pop %v955
    %v957 = vmul.f32 %v956, %v955
    %v958 = vmul.f32 %v957, %v956
    %v959 = vmul.f32 0.5, %v958
    %v960 = vsub.f32 1.5, %v959
    %v961 = vmul.f32 %v956, %v960
    %vm962 = vweird.f32 %v955
    %vm963 = vweird.f32 %v956
    %vm964 = vmor %vm962, %vm963
    %v965 = vsel %vm964, %v956, %v961
    %v966 = vmul.f32 %v927, %v965
    %v967 = vmul.f32 %v928, %v965
    %v968 = vmul.f32 %v929, %v965
    %v969 = vmul.f32 %v930, %v965
    %v970 = vmul.f32 %v931, %v965
    %v971 = vmul.f32 %v932, %v965
    %v972 = vmul.f32 %v933, %v965
    %v973 = vld [vmem:[#allocation6] sm:$0x1]
    %v975 = vperm.slane %v973, 0
    %v977 = vmul.f32 %v966, %v975
    %v978 = vmul.f32 %v967, %v975
    %v979 = vmul.f32 %v968, %v975
    %v980 = vmul.f32 %v969, %v975
    %v981 = vmul.f32 %v970, %v975
    %v982 = vmul.f32 %v971, %v975
    %v983 = vmul.f32 %v972, %v975
    %v984 = vld [vmem:[#allocation7] sm:$0x1]
    %v986 = vperm.slane %v984, 0
    %v988 = vadd.f32 %v977, %v986
    %v989 = vadd.f32 %v978, %v986
    %v990 = vadd.f32 %v979, %v986
    %v991 = vadd.f32 %v980, %v986
    %v992 = vadd.f32 %v981, %v986
    %v993 = vadd.f32 %v982, %v986
    %v994 = vadd.f32 %v983, %v986
    %vm995 = vcmp.gt.f32.partialorder %v988, 0.0
    %vm996 = vcmp.gt.f32.partialorder %v989, 0.0
    %vm997 = vcmp.gt.f32.partialorder %v990, 0.0
    %vm998 = vcmp.gt.f32.partialorder %v991, 0.0
    %vm999 = vcmp.gt.f32.partialorder %v992, 0.0
    %vm1000 = vcmp.gt.f32.partialorder %v993, 0.0
    %vm1001 = vcmp.gt.f32.partialorder %v994, 0.0
    %v1002 = vmul.f32 %v988, 0.1
    %v1003 = vmul.f32 %v989, 0.1
    %v1004 = vmul.f32 %v990, 0.1
    %v1005 = vmul.f32 %v991, 0.1
    %v1006 = vmul.f32 %v992, 0.1
    %v1007 = vmul.f32 %v993, 0.1
    %v1008 = vmul.f32 %v994, 0.1
    %v1009 = vsel %vm995, %v988, %v1002
    %v1010 = vsel %vm996, %v989, %v1003
    %v1011 = vsel %vm997, %v990, %v1004
    %v1012 = vsel %vm998, %v991, %v1005
    %v1013 = vsel %vm999, %v992, %v1006
    %v1014 = vsel %vm1000, %v993, %v1007
    %v1015 = vsel %vm1001, %v994, %v1008
    %1016 = vst [vmem:[%s5] sm:$0xff] %v1009
    %1017 = vst [vmem:[%s5 + $0x8] sm:$0xff] %v1010
    %1018 = vst [vmem:[%s5 + $0x10] sm:$0xff] %v1011
    %1019 = vst [vmem:[%s5 + $0x18] sm:$0xff] %v1012
    %1020 = vst [vmem:[%s5 + $0x20] sm:$0xff] %v1013
    %1021 = vst [vmem:[%s5 + $0x28] sm:$0xff] %v1014
    %1022 = vst [vmem:[%s5 + $0x30] sm:$0x3] %v1015
    // Predicated region
    $region38: #{discriminator_forward.4} parent=1 // pred_check
      _
    $region39: #{discriminator_forward.4} parent=1 // pred_check_branch
      %1024 = sbr.rel (0) target = $region41
    $region40: #{discriminator_forward.4} parent=1 // pred_region
      _
    $region41: #{discriminator_forward.4} parent=1 // pred_fallthru
      _
    // Predicated region
    $region42: #{discriminator_forward.4} parent=1 // pred_check
      _
    $region43: #{discriminator_forward.4} parent=1 // pred_check_branch
      %1026 = sbr.rel (0) target = $region45
    $region44: #{discriminator_forward.4} parent=1 // pred_region
      _
    $region45: #{discriminator_forward.4} parent=1 // pred_fallthru
      _
    %1027 = vsyncpa [#allocation3], 1
    %1028 = vsyncpa [#allocation5], 1
    %1029 = vsyncpa [#allocation8], 1

// kernel: discriminator_forward.5
$region0: #{discriminator_forward.5}
  #allocation0 [shape = 'u32[]', space=smem, size = 0x4, offset = 0x4, fixed_abs, tag = 'smem constant byte address 0x4 - core index']
  #allocation1 [shape = 'u32[72,128]{1,0:T(1,128)}', space=vmem, size = 0x9000, scoped, tag = 'internal scratch']
  #allocation2 [shape = 'f32[1,1]{1,0:T(1,128)S(1)}', space=vmem, size = 0x200, scoped, tag = 'scoped memory for discriminator_forward.5']
  %s0 = inlined_call_operand.vmem [shape: f32[2,3200], index: 0, kind: input, shape index: {}]
  %s1 = inlined_call_operand.hbm [shape: bf16[3200,1024], index: 1, kind: input, shape index: {}]
  %s2 = inlined_call_operand.hbm [shape: f32[1,1024], index: 2, kind: input, shape index: {}]
  %s3 = inlined_call_operand.hbm [shape: f32[1,1024], index: 3, kind: input, shape index: {}]
  %s4 = inlined_call_operand.hbm [shape: f32[1,1024], index: 4, kind: input, shape index: {}]
  %s5 = inlined_call_operand.vmem [shape: bf16[1024,1], index: 5, kind: input, shape index: {}]
  %s6 = inlined_call_operand.<no memory space> [shape: f32[1,1], index: 6, kind: input, shape index: {}]
  %s7 = inlined_call_operand.hbm [shape: f32[2,1024], index: 7, kind: output, shape index: {0}]
  %s8 = inlined_call_operand.vmem [shape: f32[2,2,1], index: 8, kind: output, shape index: {1}]
  %9 = xla_tuple %s7, %s8
  %s10 = sld [smem:[#allocation0]]
  $region85: #{discriminator_forward.5} parent=0
    _
  %s12 = ssub.s32 1, %s10
  %s13 = scalar_select 0, %s12, %s10
  %v14 = vstv %s6
  %15 = vst [vmem:[#allocation2] sm:$0x1] %v14
  $region1: #{discriminator_forward.5} parent=0
    #allocation3 [shape = 'u8[6553600]{0}', space=vmem, size = 0x640000, scoped, tag = 'input window, operand 1']
    #allocation4 [shape = 's32[2]{0}', space=sflag, size = 0x8, scoped, tag = 'scoped memory for discriminator_forward.5']
    #allocation5 [shape = 's32[2]{0}', space=sflag, size = 0x8, scoped, tag = 'scoped memory for discriminator_forward.5']
    #allocation6 [shape = 'u8[4096]{0}', space=vmem, size = 0x1000, scoped, tag = 'input window, operand 2']
    #allocation7 [shape = 's32[2]{0}', space=sflag, size = 0x8, scoped, tag = 'scoped memory for discriminator_forward.5']
    #allocation8 [shape = 'u8[4096]{0}', space=vmem, size = 0x1000, scoped, tag = 'input window, operand 3']
    #allocation9 [shape = 'u8[4096]{0}', space=vmem, size = 0x1000, scoped, tag = 'input window, operand 4']
    #allocation10 [shape = 's32[2]{0}', space=sflag, size = 0x8, scoped, tag = 'scoped memory for discriminator_forward.5']
    #allocation11 [shape = 'u8[8192]{0}', space=vmem, size = 0x2000, scoped, tag = 'output window, operand 0']
    %16 = vsyncpa [#allocation4], 0
    %s17 = scalar_lea.sflag [#allocation4], 1
    %18 = vsyncpa %s17, 0
    %19 = vsyncpa [#allocation7], 0
    %s20 = scalar_lea.sflag [#allocation7], 1
    %21 = vsyncpa %s20, 0
    %22 = vsyncpa [#allocation10], 0
    %s23 = scalar_lea.sflag [#allocation10], 1
    %24 = vsyncpa %s23, 0
    %25 = vsyncpa [#allocation5], 0
    %s26 = scalar_lea.sflag [#allocation5], 1
    %27 = vsyncpa %s26, 0
    loop: start=0, step=1, limit=4
    $region2: #{discriminator_forward.5} parent=1 // loop_pre_header
      _
    $region3: #{discriminator_forward.5} parent=1 // loop_header
      %s29 = sphi 0, %s33
      %p30 = scmp.ge.s32.totalorder %s29, 4
      %s37 = sphi 0, %s37
      %s39 = sphi 0, %s37
      %s40 = sphi 0, %s39
      %s54 = sphi 0, %s40
      %s60 = sphi 0, %s62
      %s63 = sphi 0, %s60
      %s64 = sphi 0, %s63
      %s80 = sphi 0, %s64
      %s86 = sphi 0, %s88
      %s89 = sphi 0, %s86
      %s90 = sphi 0, %s89
      %s106 = sphi 0, %s90
      %s112 = sphi 0, %s114
      %s115 = sphi 0, %s112
      %s116 = sphi 0, %s115
      %s132 = sphi 0, %s116
      %s138 = sphi 0, %s140
      %s141 = sphi 0, %s138
      %s142 = sphi 0, %s141
      %s158 = sphi 0, %s142
      %s164 = sphi 0, %s166
      %s167 = sphi 0, %s164
      %s168 = sphi 0, %s167
      %s184 = sphi 0, %s168
      %s188 = sphi 0, %s188
      %s190 = sphi 0, %s188
      %s191 = sphi 0, %s190
      %s205 = sphi 0, %s191
      %s211 = sphi 0, %s213
      %s214 = sphi 0, %s211
      %s215 = sphi 0, %s214
      %s231 = sphi 0, %s215
      %s237 = sphi 0, %s239
      %s240 = sphi 0, %s237
      %s241 = sphi 0, %s240
      %s257 = sphi 0, %s241
    $region4: #{discriminator_forward.5} parent=1 // loop_header_branch
      %32 = sbr.rel (%p30) target = $region8
    $region5: #{discriminator_forward.5} parent=1 // loop_body
      %s34 = ssub.s32 %s29, 1
      %s35 = ssub.s32 %s29, 2
      %s36 = sadd.s32 %s29, 1
      %s38 = sadd.s32 %s37, 1
      %p41 = scmp.eq.s32.totalorder %s29, 1
      %p42 = scmp.ne.s32.totalorder %s37, %s39
      %p43 = scmp.eq.s32.totalorder %s29, 0
      %p44 = por %p42, %p43
      %p45 = scmp.ne.s32.totalorder %s37, %s39
      %p46 = scmp.eq.s32.totalorder %s34, 1
      %p47 = por %p45, %p46
      %p48 = scmp.ne.s32.totalorder %s39, %s40
      %p49 = scmp.eq.s32.totalorder %s34, 0
      %p50 = por %p48, %p49
      %p51 = scmp.ne.s32.totalorder %s39, %s40
      %p52 = scmp.eq.s32.totalorder %s35, 1
      %p53 = por %p51, %p52
      %p55 = scmp.ne.s32.totalorder %s40, %s54
      %p56 = scmp.eq.s32.totalorder %s35, 0
      %p57 = por %p55, %p56
      %s58 = ssub.s32 %s29, %s36
      %p59 = scmp.eq.s32.totalorder %s58, 0
      %s61 = sadd.s32 %s60, 1
      %s62 = scalar_select %p59, %s60, %s61
      %p65 = pneg %p59
      %p66 = scmp.eq.s32.totalorder %s29, 1
      %p67 = por %p65, %p66
      %p68 = scmp.ne.s32.totalorder %s60, %s63
      %p69 = scmp.eq.s32.totalorder %s29, 0
      %p70 = por %p68, %p69
      %p71 = scmp.ne.s32.totalorder %s60, %s63
      %p72 = scmp.eq.s32.totalorder %s34, 1
      %p73 = por %p71, %p72
      %p74 = scmp.ne.s32.totalorder %s63, %s64
      %p75 = scmp.eq.s32.totalorder %s34, 0
      %p76 = por %p74, %p75
      %p77 = scmp.ne.s32.totalorder %s63, %s64
      %p78 = scmp.eq.s32.totalorder %s35, 1
      %p79 = por %p77, %p78
      %p81 = scmp.ne.s32.totalorder %s64, %s80
      %p82 = scmp.eq.s32.totalorder %s35, 0
      %p83 = por %p81, %p82
      %s84 = ssub.s32 %s29, %s36
      %p85 = scmp.eq.s32.totalorder %s84, 0
      %s87 = sadd.s32 %s86, 1
      %s88 = scalar_select %p85, %s86, %s87
      %p91 = pneg %p85
      %p92 = scmp.eq.s32.totalorder %s29, 1
      %p93 = por %p91, %p92
      %p94 = scmp.ne.s32.totalorder %s86, %s89
      %p95 = scmp.eq.s32.totalorder %s29, 0
      %p96 = por %p94, %p95
      %p97 = scmp.ne.s32.totalorder %s86, %s89
      %p98 = scmp.eq.s32.totalorder %s34, 1
      %p99 = por %p97, %p98
      %p100 = scmp.ne.s32.totalorder %s89, %s90
      %p101 = scmp.eq.s32.totalorder %s34, 0
      %p102 = por %p100, %p101
      %p103 = scmp.ne.s32.totalorder %s89, %s90
      %p104 = scmp.eq.s32.totalorder %s35, 1
      %p105 = por %p103, %p104
      %p107 = scmp.ne.s32.totalorder %s90, %s106
      %p108 = scmp.eq.s32.totalorder %s35, 0
      %p109 = por %p107, %p108
      %s110 = ssub.s32 %s29, %s36
      %p111 = scmp.eq.s32.totalorder %s110, 0
      %s113 = sadd.s32 %s112, 1
      %s114 = scalar_select %p111, %s112, %s113
      %p117 = pneg %p111
      %p118 = scmp.eq.s32.totalorder %s29, 1
      %p119 = por %p117, %p118
      %p120 = scmp.ne.s32.totalorder %s112, %s115
      %p121 = scmp.eq.s32.totalorder %s29, 0
      %p122 = por %p120, %p121
      %p123 = scmp.ne.s32.totalorder %s112, %s115
      %p124 = scmp.eq.s32.totalorder %s34, 1
      %p125 = por %p123, %p124
      %p126 = scmp.ne.s32.totalorder %s115, %s116
      %p127 = scmp.eq.s32.totalorder %s34, 0
      %p128 = por %p126, %p127
      %p129 = scmp.ne.s32.totalorder %s115, %s116
      %p130 = scmp.eq.s32.totalorder %s35, 1
      %p131 = por %p129, %p130
      %p133 = scmp.ne.s32.totalorder %s116, %s132
      %p134 = scmp.eq.s32.totalorder %s35, 0
      %p135 = por %p133, %p134
      %s136 = ssub.s32 %s29, %s36
      %p137 = scmp.eq.s32.totalorder %s136, 0
      %s139 = sadd.s32 %s138, 1
      %s140 = scalar_select %p137, %s138, %s139
      %p143 = pneg %p137
      %p144 = scmp.eq.s32.totalorder %s29, 1
      %p145 = por %p143, %p144
      %p146 = scmp.ne.s32.totalorder %s138, %s141
      %p147 = scmp.eq.s32.totalorder %s29, 0
      %p148 = por %p146, %p147
      %p149 = scmp.ne.s32.totalorder %s138, %s141
      %p150 = scmp.eq.s32.totalorder %s34, 1
      %p151 = por %p149, %p150
      %p152 = scmp.ne.s32.totalorder %s141, %s142
      %p153 = scmp.eq.s32.totalorder %s34, 0
      %p154 = por %p152, %p153
      %p155 = scmp.ne.s32.totalorder %s141, %s142
      %p156 = scmp.eq.s32.totalorder %s35, 1
      %p157 = por %p155, %p156
      %p159 = scmp.ne.s32.totalorder %s142, %s158
      %p160 = scmp.eq.s32.totalorder %s35, 0
      %p161 = por %p159, %p160
      %s162 = ssub.s32 %s29, %s36
      %p163 = scmp.eq.s32.totalorder %s162, 0
      %s165 = sadd.s32 %s164, 1
      %s166 = scalar_select %p163, %s164, %s165
      %p169 = pneg %p163
      %p170 = scmp.eq.s32.totalorder %s29, 1
      %p171 = por %p169, %p170
      %p172 = scmp.ne.s32.totalorder %s164, %s167
      %p173 = scmp.eq.s32.totalorder %s29, 0
      %p174 = por %p172, %p173
      %p175 = scmp.ne.s32.totalorder %s164, %s167
      %p176 = scmp.eq.s32.totalorder %s34, 1
      %p177 = por %p175, %p176
      %p178 = scmp.ne.s32.totalorder %s167, %s168
      %p179 = scmp.eq.s32.totalorder %s34, 0
      %p180 = por %p178, %p179
      %p181 = scmp.ne.s32.totalorder %s167, %s168
      %p182 = scmp.eq.s32.totalorder %s35, 1
      %p183 = por %p181, %p182
      %p185 = scmp.ne.s32.totalorder %s168, %s184
      %p186 = scmp.eq.s32.totalorder %s35, 0
      %p187 = por %p185, %p186
      %s189 = sadd.s32 %s188, 1
      %p192 = scmp.eq.s32.totalorder %s29, 1
      %p193 = scmp.ne.s32.totalorder %s188, %s190
      %p194 = scmp.eq.s32.totalorder %s29, 0
      %p195 = por %p193, %p194
      %p196 = scmp.ne.s32.totalorder %s188, %s190
      %p197 = scmp.eq.s32.totalorder %s34, 1
      %p198 = por %p196, %p197
      %p199 = scmp.ne.s32.totalorder %s190, %s191
      %p200 = scmp.eq.s32.totalorder %s34, 0
      %p201 = por %p199, %p200
      %p202 = scmp.ne.s32.totalorder %s190, %s191
      %p203 = scmp.eq.s32.totalorder %s35, 1
      %p204 = por %p202, %p203
      %p206 = scmp.ne.s32.totalorder %s191, %s205
      %p207 = scmp.eq.s32.totalorder %s35, 0
      %p208 = por %p206, %p207
      %s209 = ssub.s32 %s29, %s36
      %p210 = scmp.eq.s32.totalorder %s209, 0
      %s212 = sadd.s32 %s211, 1
      %s213 = scalar_select %p210, %s211, %s212
      %p216 = pneg %p210
      %p217 = scmp.eq.s32.totalorder %s29, 1
      %p218 = por %p216, %p217
      %p219 = scmp.ne.s32.totalorder %s211, %s214
      %p220 = scmp.eq.s32.totalorder %s29, 0
      %p221 = por %p219, %p220
      %p222 = scmp.ne.s32.totalorder %s211, %s214
      %p223 = scmp.eq.s32.totalorder %s34, 1
      %p224 = por %p222, %p223
      %p225 = scmp.ne.s32.totalorder %s214, %s215
      %p226 = scmp.eq.s32.totalorder %s34, 0
      %p227 = por %p225, %p226
      %p228 = scmp.ne.s32.totalorder %s214, %s215
      %p229 = scmp.eq.s32.totalorder %s35, 1
      %p230 = por %p228, %p229
      %p232 = scmp.ne.s32.totalorder %s215, %s231
      %p233 = scmp.eq.s32.totalorder %s35, 0
      %p234 = por %p232, %p233
      %s235 = ssub.s32 %s29, %s36
      %p236 = scmp.eq.s32.totalorder %s235, 0
      %s238 = sadd.s32 %s237, 1
      %s239 = scalar_select %p236, %s237, %s238
      %p242 = pneg %p236
      %p243 = scmp.eq.s32.totalorder %s29, 1
      %p244 = por %p242, %p243
      %p245 = scmp.ne.s32.totalorder %s237, %s240
      %p246 = scmp.eq.s32.totalorder %s29, 0
      %p247 = por %p245, %p246
      %p248 = scmp.ne.s32.totalorder %s237, %s240
      %p249 = scmp.eq.s32.totalorder %s34, 1
      %p250 = por %p248, %p249
      %p251 = scmp.ne.s32.totalorder %s240, %s241
      %p252 = scmp.eq.s32.totalorder %s34, 0
      %p253 = por %p251, %p252
      %p254 = scmp.ne.s32.totalorder %s240, %s241
      %p255 = scmp.eq.s32.totalorder %s35, 1
      %p256 = por %p254, %p255
      %p258 = scmp.ne.s32.totalorder %s241, %s257
      %p259 = scmp.eq.s32.totalorder %s35, 0
      %p260 = por %p258, %p259
      %p261 = scmp.le.s32.totalorder 1, %s29
      %p262 = scmp.lt.s32.totalorder %s29, 3
      %p263 = pnand %p261, %p262
      %p264 = pneg %p263
      // Predicated region
      $region9: #{discriminator_forward.5} parent=5 // pred_check
        _
      $region10: #{discriminator_forward.5} parent=5 // pred_check_branch
        %266 = sbr.rel (%p263) target = $region12
      $region11: #{discriminator_forward.5} parent=5 // pred_region
        %s267 = ssub.s32 %s29, 1
        // Predicated region
        $region13: #{discriminator_forward.5} parent=11 // pred_check
          %p268 = pneg %p50
        $region14: #{discriminator_forward.5} parent=11 // pred_check_branch
          %270 = sbr.rel (%p268) target = $region16
        $region15: #{discriminator_forward.5} parent=11 // pred_region
          _
        $region16: #{discriminator_forward.5} parent=11 // pred_fallthru
          _
        // Predicated region
        $region17: #{discriminator_forward.5} parent=11 // pred_check
          %p271 = pneg %p201
        $region18: #{discriminator_forward.5} parent=11 // pred_check_branch
          %273 = sbr.rel (%p271) target = $region20
        $region19: #{discriminator_forward.5} parent=11 // pred_region
          _
        $region20: #{discriminator_forward.5} parent=11 // pred_fallthru
          _
      $region12: #{discriminator_forward.5} parent=5 // pred_fallthru
        _
      %p274 = scmp.lt.s32.totalorder %s29, 2
      // Predicated region
      $region21: #{discriminator_forward.5} parent=5 // pred_check
        %p275 = pneg %p274
      $region22: #{discriminator_forward.5} parent=5 // pred_check_branch
        %277 = sbr.rel (%p275) target = $region24
      $region23: #{discriminator_forward.5} parent=5 // pred_region
        // Predicated region
        $region25: #{discriminator_forward.5} parent=23 // pred_check
          %p278 = pneg %p70
        $region26: #{discriminator_forward.5} parent=23 // pred_check_branch
          %280 = sbr.rel (%p278) target = $region28
        $region27: #{discriminator_forward.5} parent=23 // pred_region
          %s281 = sand.u32 %s60, 1
          %s282 = scalar_lea.sflag [#allocation4], %s281
          %s283 = sand.u32 %s60, 1
          %s284 = smul.addr %s283, 6400
          %s285 = scalar_lea.vmem [#allocation3], %s284
          %s286 = smul.u32 4, %s29
          %288 = vsyncadd %s282, 0
          %s289 = smul.addr %s286, 4
          %s290 = scalar_lea.hbm %s1, %s289
          %s291 = sshll.u32 %s290, 4
          %s292 = int_to_ptr.hbm [resolvable:$true] %s291
          %s293 = sshll.u32 %s285, 4
          %s294 = int_to_ptr.vmem [resolvable:$true] %s293
          %299 = dma.hbm_to_vmem [thread:$0]  %s292, 102400, %s294, %s282, 512, 256, 16
        $region28: #{discriminator_forward.5} parent=23 // pred_fallthru
          _
        // Predicated region
        $region29: #{discriminator_forward.5} parent=23 // pred_check
          %p300 = pneg %p96
        $region30: #{discriminator_forward.5} parent=23 // pred_check_branch
          %302 = sbr.rel (%p300) target = $region32
        $region31: #{discriminator_forward.5} parent=23 // pred_region
          %s303 = sand.u32 %s29, 1
          %s304 = scalar_lea.sflag [#allocation7], %s303
          %s305 = sand.u32 %s86, 1
          %s306 = smul.addr %s305, 4
          %s307 = scalar_lea.vmem [#allocation6], %s306
          %s308 = smul.u32 4, %s29
          %310 = vsyncadd %s304, 0
          %s311 = scalar_lea.hbm %s2, %s308
          %s313 = sshll.u32 %s311, 4
          %s314 = int_to_ptr.hbm [resolvable:$true] %s313
          %s315 = sshll.u32 %s307, 4
          %s316 = int_to_ptr.vmem [resolvable:$true] %s315
          %318 = dma.hbm_to_vmem [thread:$0]  %s314, 64, %s316, %s304
        $region32: #{discriminator_forward.5} parent=23 // pred_fallthru
          _
        // Predicated region
        $region33: #{discriminator_forward.5} parent=23 // pred_check
          %p319 = pneg %p122
        $region34: #{discriminator_forward.5} parent=23 // pred_check_branch
          %321 = sbr.rel (%p319) target = $region36
        $region35: #{discriminator_forward.5} parent=23 // pred_region
          %s322 = sand.u32 %s29, 1
          %s323 = scalar_lea.sflag [#allocation7], %s322
          %s324 = sand.u32 %s112, 1
          %s325 = smul.addr %s324, 4
          %s326 = scalar_lea.vmem [#allocation8], %s325
          %s327 = smul.u32 4, %s29
          %329 = vsyncadd %s323, 0
          %s330 = scalar_lea.hbm %s3, %s327
          %s332 = sshll.u32 %s330, 4
          %s333 = int_to_ptr.hbm [resolvable:$true] %s332
          %s334 = sshll.u32 %s326, 4
          %s335 = int_to_ptr.vmem [resolvable:$true] %s334
          %337 = dma.hbm_to_vmem [thread:$0]  %s333, 64, %s335, %s323
        $region36: #{discriminator_forward.5} parent=23 // pred_fallthru
          _
        // Predicated region
        $region37: #{discriminator_forward.5} parent=23 // pred_check
          %p338 = pneg %p148
        $region38: #{discriminator_forward.5} parent=23 // pred_check_branch
          %340 = sbr.rel (%p338) target = $region40
        $region39: #{discriminator_forward.5} parent=23 // pred_region
          %s341 = sand.u32 %s138, 1
          %s342 = scalar_lea.sflag [#allocation10], %s341
          %s343 = sand.u32 %s138, 1
          %s344 = smul.addr %s343, 4
          %s345 = scalar_lea.vmem [#allocation9], %s344
          %s346 = smul.u32 4, %s29
          %348 = vsyncadd %s342, 0
          %s349 = scalar_lea.hbm %s4, %s346
          %s351 = sshll.u32 %s349, 4
          %s352 = int_to_ptr.hbm [resolvable:$true] %s351
          %s353 = sshll.u32 %s345, 4
          %s354 = int_to_ptr.vmem [resolvable:$true] %s353
          %356 = dma.hbm_to_vmem [thread:$0]  %s352, 64, %s354, %s342
        $region40: #{discriminator_forward.5} parent=23 // pred_fallthru
          _
        // Predicated region
        $region41: #{discriminator_forward.5} parent=23 // pred_check
          %p357 = pneg %p174
        $region42: #{discriminator_forward.5} parent=23 // pred_check_branch
          %359 = sbr.rel (%p357) target = $region44
        $region43: #{discriminator_forward.5} parent=23 // pred_region
          %s360 = smul.u32 64, %s29
          %p361 = scmp.lt.s32.totalorder %s360, 127
          %s362 = scalar_select %p361, %s360, 127
          %s363 = smul.addr %s362, 4
          %s364 = scalar_lea.vmem %s5, %s363
          %s365 = smul.u32 64, %s29
        $region44: #{discriminator_forward.5} parent=23 // pred_fallthru
          _
      $region24: #{discriminator_forward.5} parent=5 // pred_fallthru
        _
      %p366 = scmp.le.s32.totalorder 1, %s29
      %p367 = scmp.lt.s32.totalorder %s29, 3
      %p368 = pnand %p366, %p367
      %p369 = pneg %p368
      // Predicated region
      $region45: #{discriminator_forward.5} parent=5 // pred_check
        _
      $region46: #{discriminator_forward.5} parent=5 // pred_check_branch
        %371 = sbr.rel (%p368) target = $region48
      $region47: #{discriminator_forward.5} parent=5 // pred_region
        %s372 = ssub.s32 %s29, 1
        %s373 = sand.u32 %s63, 1
        %s374 = scalar_lea.sflag [#allocation4], %s373
        %s375 = sand.u32 %s63, 1
        %s376 = smul.addr %s375, 6400
        %s377 = scalar_lea.vmem [#allocation3], %s376
        // Predicated region
        $region49: #{discriminator_forward.5} parent=47 // pred_check
          %p378 = pneg %p76
        $region50: #{discriminator_forward.5} parent=47 // pred_check_branch
          %380 = sbr.rel (%p378) target = $region52
        $region51: #{discriminator_forward.5} parent=47 // pred_region
          %382 = dma.done %s374, 102400
        $region52: #{discriminator_forward.5} parent=47 // pred_fallthru
          _
        %s383 = sand.u32 %s34, 1
        %s384 = scalar_lea.sflag [#allocation7], %s383
        %s385 = sand.u32 %s89, 1
        %s386 = smul.addr %s385, 4
        %s387 = scalar_lea.vmem [#allocation6], %s386
        // Predicated region
        $region53: #{discriminator_forward.5} parent=47 // pred_check
          %p388 = pneg %p102
        $region54: #{discriminator_forward.5} parent=47 // pred_check_branch
          %390 = sbr.rel (%p388) target = $region56
        $region55: #{discriminator_forward.5} parent=47 // pred_region
          %392 = dma.done %s384, 64
        $region56: #{discriminator_forward.5} parent=47 // pred_fallthru
          _
        %s393 = sand.u32 %s34, 1
        %s394 = scalar_lea.sflag [#allocation7], %s393
        %s395 = sand.u32 %s115, 1
        %s396 = smul.addr %s395, 4
        %s397 = scalar_lea.vmem [#allocation8], %s396
        // Predicated region
        $region57: #{discriminator_forward.5} parent=47 // pred_check
          %p398 = pneg %p128
        $region58: #{discriminator_forward.5} parent=47 // pred_check_branch
          %400 = sbr.rel (%p398) target = $region60
        $region59: #{discriminator_forward.5} parent=47 // pred_region
          %402 = dma.done %s394, 64
        $region60: #{discriminator_forward.5} parent=47 // pred_fallthru
          _
        %s403 = sand.u32 %s141, 1
        %s404 = scalar_lea.sflag [#allocation10], %s403
        %s405 = sand.u32 %s141, 1
        %s406 = smul.addr %s405, 4
        %s407 = scalar_lea.vmem [#allocation9], %s406
        // Predicated region
        $region61: #{discriminator_forward.5} parent=47 // pred_check
          %p408 = pneg %p154
        $region62: #{discriminator_forward.5} parent=47 // pred_check_branch
          %410 = sbr.rel (%p408) target = $region64
        $region63: #{discriminator_forward.5} parent=47 // pred_region
          %412 = dma.done %s404, 64
        $region64: #{discriminator_forward.5} parent=47 // pred_fallthru
          _
        %p413 = pneg %p50
        %p414 = pneg %p47
        %s415 = sand.u32 %s63, 1
        %s416 = scalar_lea.sflag [#allocation4], %s415
        %s417 = sand.u32 %s63, 1
        %s418 = smul.addr %s417, 6400
        %s419 = scalar_lea.vmem [#allocation3], %s418
        %p420 = pneg %p76
        %p421 = pneg %p73
        %s422 = sand.u32 %s34, 1
        %s423 = scalar_lea.sflag [#allocation7], %s422
        %s424 = sand.u32 %s89, 1
        %s425 = smul.addr %s424, 4
        %s426 = scalar_lea.vmem [#allocation6], %s425
        %p427 = pneg %p102
        %p428 = pneg %p99
        %s429 = sand.u32 %s34, 1
        %s430 = scalar_lea.sflag [#allocation7], %s429
        %s431 = sand.u32 %s115, 1
        %s432 = smul.addr %s431, 4
        %s433 = scalar_lea.vmem [#allocation8], %s432
        %p434 = pneg %p128
        %p435 = pneg %p125
        %s436 = sand.u32 %s141, 1
        %s437 = scalar_lea.sflag [#allocation10], %s436
        %s438 = sand.u32 %s141, 1
        %s439 = smul.addr %s438, 4
        %s440 = scalar_lea.vmem [#allocation9], %s439
        %p441 = pneg %p154
        %p442 = pneg %p151
        %s443 = smul.u32 64, %s34
        %p444 = scmp.lt.s32.totalorder %s443, 127
        %s445 = scalar_select %p444, %s443, 127
        %s446 = smul.addr %s445, 4
        %s447 = scalar_lea.vmem %s5, %s446
        %p448 = pneg %p180
        %p449 = pneg %p177
        %p450 = pneg %p201
        %p451 = pneg %p198
        %p452 = pneg %p227
        %p453 = pneg %p224
        %s454 = sand.u32 %s214, 1
        %s455 = scalar_lea.sflag [#allocation5], %s454
        %s456 = sand.u32 %s214, 1
        %s457 = smul.addr %s456, 8
        %s458 = scalar_lea.vmem [#allocation11], %s457
        %p459 = pneg %p253
        %p460 = pneg %p250
        %p461 = scmp.lt.s32.totalorder %s34, 1
        %s462 = scalar_select %p461, %s34, 1
        %s463 = smul.addr %s462, 2
        %s464 = scalar_lea.vmem %s8, %s463
        %s465 = smul.u32 4, %s34
        %s466 = smul.u32 4, %s34
        %s467 = smul.u32 4, %s34
        %s468 = smul.u32 4, %s34
        %s469 = smul.u32 64, %s34
        %p470 = scmp.lt.s32.totalorder %s469, 127
        %s471 = scalar_select %p470, %s469, 127
        %s472 = smul.addr %s471, 4
        %s473 = scalar_lea.vmem %s5, %s472
        %s474 = smul.u32 64, %s34
        %s475 = smul.u32 4, %s34
        %p476 = scmp.lt.s32.totalorder %s34, 1
        %s477 = scalar_select %p476, %s34, 1
        %s478 = smul.addr %s477, 2
        %s479 = scalar_lea.vmem %s8, %s478
        %v480 = vld [vmem:[%s0] sm:$0xff]
        %v481 = vld [vmem:[%s0 + $0x8] sm:$0xff]
        %v482 = vld [vmem:[%s0 + $0x10] sm:$0xff]
        %v483 = vld [vmem:[%s0 + $0x18] sm:$0xff]
        %v484 = vld [vmem:[%s0 + $0x20] sm:$0xff]
        %v485 = vld [vmem:[%s0 + $0x28] sm:$0xff]
        %v486 = vld [vmem:[%s0 + $0x30] sm:$0x3]
        %494 = vst [vmem:[#allocation1] ss:$4 sm:$0xff] %v480
        %s495 = scalar_lea.vmem [#allocation1], 32
        %496 = vst [vmem:[%s495] ss:$4 sm:$0xff] %v481
        %v497 = vld.sshfl [vmem:[#allocation1] sm:$0xff pattern:$0x73625140]
        %v498 = vld.sshfl [vmem:[#allocation1 + $0x8] sm:$0xff pattern:$0x73625140]
        %v499 = vld.sshfl [vmem:[#allocation1 + $0x10] sm:$0xff pattern:$0x73625140]
        %v500 = vld.sshfl [vmem:[#allocation1 + $0x18] sm:$0xff pattern:$0x73625140]
        %v501 = vld.sshfl [vmem:[#allocation1 + $0x20] sm:$0xff pattern:$0x73625140]
        %v502 = vld.sshfl [vmem:[#allocation1 + $0x28] sm:$0xff pattern:$0x73625140]
        %v503 = vld.sshfl [vmem:[#allocation1 + $0x30] sm:$0xff pattern:$0x73625140]
        %v504 = vld.sshfl [vmem:[#allocation1 + $0x38] sm:$0xff pattern:$0x73625140]
        %505 = vst [vmem:[#allocation1] ss:$4 sm:$0xff] %v482
        %506 = vst [vmem:[%s495] ss:$4 sm:$0xff] %v483
        %v507 = vld.sshfl [vmem:[#allocation1] sm:$0xff pattern:$0x73625140]
        %v508 = vld.sshfl [vmem:[#allocation1 + $0x8] sm:$0xff pattern:$0x73625140]
        %v509 = vld.sshfl [vmem:[#allocation1 + $0x10] sm:$0xff pattern:$0x73625140]
        %v510 = vld.sshfl [vmem:[#allocation1 + $0x18] sm:$0xff pattern:$0x73625140]
        %v511 = vld.sshfl [vmem:[#allocation1 + $0x20] sm:$0xff pattern:$0x73625140]
        %v512 = vld.sshfl [vmem:[#allocation1 + $0x28] sm:$0xff pattern:$0x73625140]
        %v513 = vld.sshfl [vmem:[#allocation1 + $0x30] sm:$0xff pattern:$0x73625140]
        %v514 = vld.sshfl [vmem:[#allocation1 + $0x38] sm:$0xff pattern:$0x73625140]
        %515 = vst [vmem:[#allocation1] ss:$4 sm:$0xff] %v484
        %516 = vst [vmem:[%s495] ss:$4 sm:$0xff] %v485
        %v517 = vld.sshfl [vmem:[#allocation1] sm:$0xff pattern:$0x73625140]
        %v518 = vld.sshfl [vmem:[#allocation1 + $0x8] sm:$0xff pattern:$0x73625140]
        %v519 = vld.sshfl [vmem:[#allocation1 + $0x10] sm:$0xff pattern:$0x73625140]
        %v520 = vld.sshfl [vmem:[#allocation1 + $0x18] sm:$0xff pattern:$0x73625140]
        %v521 = vld.sshfl [vmem:[#allocation1 + $0x20] sm:$0xff pattern:$0x73625140]
        %v522 = vld.sshfl [vmem:[#allocation1 + $0x28] sm:$0xff pattern:$0x73625140]
        %v523 = vld.sshfl [vmem:[#allocation1 + $0x30] sm:$0xff pattern:$0x73625140]
        %v524 = vld.sshfl [vmem:[#allocation1 + $0x38] sm:$0xff pattern:$0x73625140]
        %525 = vst [vmem:[#allocation1] ss:$4 sm:$0xff] %v486
        %v526 = vld.sshfl [vmem:[#allocation1] sm:$0xff pattern:$0x73625140]
        %v552 = vpack.c.bf16 %v497, %v497
        %v553 = vpack.c.bf16 %v498, %v498
        %v554 = vpack.c.bf16 %v499, %v499
        %v555 = vpack.c.bf16 %v500, %v500
        %v556 = vpack.c.bf16 %v501, %v501
        %v557 = vpack.c.bf16 %v502, %v502
        %v558 = vpack.c.bf16 %v503, %v503
        %v559 = vpack.c.bf16 %v504, %v504
        %v560 = vpack.c.bf16 %v507, %v507
        %v561 = vpack.c.bf16 %v508, %v508
        %v562 = vpack.c.bf16 %v509, %v509
        %v563 = vpack.c.bf16 %v510, %v510
        %v564 = vpack.c.bf16 %v511, %v511
        %v565 = vpack.c.bf16 %v512, %v512
        %v566 = vpack.c.bf16 %v513, %v513
        %v567 = vpack.c.bf16 %v514, %v514
        %v568 = vpack.c.bf16 %v517, %v517
        %v569 = vpack.c.bf16 %v518, %v518
        %v570 = vpack.c.bf16 %v519, %v519
        %v571 = vpack.c.bf16 %v520, %v520
        %v572 = vpack.c.bf16 %v521, %v521
        %v573 = vpack.c.bf16 %v522, %v522
        %v574 = vpack.c.bf16 %v523, %v523
        %v575 = vpack.c.bf16 %v524, %v524
        %v576 = vpack.c.bf16 %v526, %v526
        %v577 = vld [vmem:[%s377] sm:$0xff]
        %v578 = vld [vmem:[%s377 + $0x8] sm:$0xff]
        %v579 = vld [vmem:[%s377 + $0x10] sm:$0xff]
        %v580 = vld [vmem:[%s377 + $0x18] sm:$0xff]
        %v581 = vld [vmem:[%s377 + $0x20] sm:$0xff]
        %v582 = vld [vmem:[%s377 + $0x28] sm:$0xff]
        %v583 = vld [vmem:[%s377 + $0x30] sm:$0xff]
        %v584 = vld [vmem:[%s377 + $0x38] sm:$0xff]
        %v585 = vld [vmem:[%s377 + $0x40] sm:$0xff]
        %v586 = vld [vmem:[%s377 + $0x48] sm:$0xff]
        %v587 = vld [vmem:[%s377 + $0x50] sm:$0xff]
        %v588 = vld [vmem:[%s377 + $0x58] sm:$0xff]
        %v589 = vld [vmem:[%s377 + $0x60] sm:$0xff]
        %v590 = vld [vmem:[%s377 + $0x68] sm:$0xff]
        %v591 = vld [vmem:[%s377 + $0x70] sm:$0xff]
        %v592 = vld [vmem:[%s377 + $0x78] sm:$0xff]
        %v593 = vld [vmem:[%s377 + $0x80] sm:$0xff]
        %v594 = vld [vmem:[%s377 + $0x88] sm:$0xff]
        %v595 = vld [vmem:[%s377 + $0x90] sm:$0xff]
        %v596 = vld [vmem:[%s377 + $0x98] sm:$0xff]
        %v597 = vld [vmem:[%s377 + $0xa0] sm:$0xff]
        %v598 = vld [vmem:[%s377 + $0xa8] sm:$0xff]
        %v599 = vld [vmem:[%s377 + $0xb0] sm:$0xff]
        %v600 = vld [vmem:[%s377 + $0xb8] sm:$0xff]
        %v601 = vld [vmem:[%s377 + $0xc0] sm:$0xff]
        %v602 = vld [vmem:[%s377 + $0xc8] sm:$0xff]
        %v603 = vld [vmem:[%s377 + $0xd0] sm:$0xff]
        %v604 = vld [vmem:[%s377 + $0xd8] sm:$0xff]
        %v605 = vld [vmem:[%s377 + $0xe0] sm:$0xff]
        %v606 = vld [vmem:[%s377 + $0xe8] sm:$0xff]
        %v607 = vld [vmem:[%s377 + $0xf0] sm:$0xff]
        %v608 = vld [vmem:[%s377 + $0xf8] sm:$0xff]
        %v609 = vld [vmem:[%s377 + $0x100] sm:$0xff]
        %v610 = vld [vmem:[%s377 + $0x108] sm:$0xff]
        %v611 = vld [vmem:[%s377 + $0x110] sm:$0xff]
        %v612 = vld [vmem:[%s377 + $0x118] sm:$0xff]
        %v613 = vld [vmem:[%s377 + $0x120] sm:$0xff]
        %v614 = vld [vmem:[%s377 + $0x128] sm:$0xff]
        %v615 = vld [vmem:[%s377 + $0x130] sm:$0xff]
        %v616 = vld [vmem:[%s377 + $0x138] sm:$0xff]
        %v617 = vld [vmem:[%s377 + $0x140] sm:$0xff]
        %v618 = vld [vmem:[%s377 + $0x148] sm:$0xff]
        %v619 = vld [vmem:[%s377 + $0x150] sm:$0xff]
        %v620 = vld [vmem:[%s377 + $0x158] sm:$0xff]
        %v621 = vld [vmem:[%s377 + $0x160] sm:$0xff]
        %v622 = vld [vmem:[%s377 + $0x168] sm:$0xff]
        %v623 = vld [vmem:[%s377 + $0x170] sm:$0xff]
        %v624 = vld [vmem:[%s377 + $0x178] sm:$0xff]
        %v625 = vld [vmem:[%s377 + $0x180] sm:$0xff]
        %v626 = vld [vmem:[%s377 + $0x188] sm:$0xff]
        %v627 = vld [vmem:[%s377 + $0x190] sm:$0xff]
        %v628 = vld [vmem:[%s377 + $0x198] sm:$0xff]
        %v629 = vld [vmem:[%s377 + $0x1a0] sm:$0xff]
        %v630 = vld [vmem:[%s377 + $0x1a8] sm:$0xff]
        %v631 = vld [vmem:[%s377 + $0x1b0] sm:$0xff]
        %v632 = vld [vmem:[%s377 + $0x1b8] sm:$0xff]
        %v633 = vld [vmem:[%s377 + $0x1c0] sm:$0xff]
        %v634 = vld [vmem:[%s377 + $0x1c8] sm:$0xff]
        %v635 = vld [vmem:[%s377 + $0x1d0] sm:$0xff]
        %v636 = vld [vmem:[%s377 + $0x1d8] sm:$0xff]
        %v637 = vld [vmem:[%s377 + $0x1e0] sm:$0xff]
        %v638 = vld [vmem:[%s377 + $0x1e8] sm:$0xff]
        %v639 = vld [vmem:[%s377 + $0x1f0] sm:$0xff]
        %v640 = vld [vmem:[%s377 + $0x1f8] sm:$0xff]
        %v641 = vld [vmem:[%s377 + $0x200] sm:$0xff]
        %v642 = vld [vmem:[%s377 + $0x208] sm:$0xff]
        %v643 = vld [vmem:[%s377 + $0x210] sm:$0xff]
        %v644 = vld [vmem:[%s377 + $0x218] sm:$0xff]
        %v645 = vld [vmem:[%s377 + $0x220] sm:$0xff]
        %v646 = vld [vmem:[%s377 + $0x228] sm:$0xff]
        %v647 = vld [vmem:[%s377 + $0x230] sm:$0xff]
        %v648 = vld [vmem:[%s377 + $0x238] sm:$0xff]
        %v649 = vld [vmem:[%s377 + $0x240] sm:$0xff]
        %v650 = vld [vmem:[%s377 + $0x248] sm:$0xff]
        %v651 = vld [vmem:[%s377 + $0x250] sm:$0xff]
        %v652 = vld [vmem:[%s377 + $0x258] sm:$0xff]
        %v653 = vld [vmem:[%s377 + $0x260] sm:$0xff]
        %v654 = vld [vmem:[%s377 + $0x268] sm:$0xff]
        %v655 = vld [vmem:[%s377 + $0x270] sm:$0xff]
        %v656 = vld [vmem:[%s377 + $0x278] sm:$0xff]
        %v657 = vld [vmem:[%s377 + $0x280] sm:$0xff]
        %v658 = vld [vmem:[%s377 + $0x288] sm:$0xff]
        %v659 = vld [vmem:[%s377 + $0x290] sm:$0xff]
        %v660 = vld [vmem:[%s377 + $0x298] sm:$0xff]
        %v661 = vld [vmem:[%s377 + $0x2a0] sm:$0xff]
        %v662 = vld [vmem:[%s377 + $0x2a8] sm:$0xff]
        %v663 = vld [vmem:[%s377 + $0x2b0] sm:$0xff]
        %v664 = vld [vmem:[%s377 + $0x2b8] sm:$0xff]
        %v665 = vld [vmem:[%s377 + $0x2c0] sm:$0xff]
        %v666 = vld [vmem:[%s377 + $0x2c8] sm:$0xff]
        %v667 = vld [vmem:[%s377 + $0x2d0] sm:$0xff]
        %v668 = vld [vmem:[%s377 + $0x2d8] sm:$0xff]
        %v669 = vld [vmem:[%s377 + $0x2e0] sm:$0xff]
        %v670 = vld [vmem:[%s377 + $0x2e8] sm:$0xff]
        %v671 = vld [vmem:[%s377 + $0x2f0] sm:$0xff]
        %v672 = vld [vmem:[%s377 + $0x2f8] sm:$0xff]
        %v673 = vld [vmem:[%s377 + $0x300] sm:$0xff]
        %v674 = vld [vmem:[%s377 + $0x308] sm:$0xff]
        %v675 = vld [vmem:[%s377 + $0x310] sm:$0xff]
        %v676 = vld [vmem:[%s377 + $0x318] sm:$0xff]
        %v677 = vld [vmem:[%s377 + $0x320] sm:$0xff]
        %v678 = vld [vmem:[%s377 + $0x328] sm:$0xff]
        %v679 = vld [vmem:[%s377 + $0x330] sm:$0xff]
        %v680 = vld [vmem:[%s377 + $0x338] sm:$0xff]
        %v681 = vld [vmem:[%s377 + $0x340] sm:$0xff]
        %v682 = vld [vmem:[%s377 + $0x348] sm:$0xff]
        %v683 = vld [vmem:[%s377 + $0x350] sm:$0xff]
        %v684 = vld [vmem:[%s377 + $0x358] sm:$0xff]
        %v685 = vld [vmem:[%s377 + $0x360] sm:$0xff]
        %v686 = vld [vmem:[%s377 + $0x368] sm:$0xff]
        %v687 = vld [vmem:[%s377 + $0x370] sm:$0xff]
        %v688 = vld [vmem:[%s377 + $0x378] sm:$0xff]
        %v689 = vld [vmem:[%s377 + $0x380] sm:$0xff]
        %v690 = vld [vmem:[%s377 + $0x388] sm:$0xff]
        %v691 = vld [vmem:[%s377 + $0x390] sm:$0xff]
        %v692 = vld [vmem:[%s377 + $0x398] sm:$0xff]
        %v693 = vld [vmem:[%s377 + $0x3a0] sm:$0xff]
        %v694 = vld [vmem:[%s377 + $0x3a8] sm:$0xff]
        %v695 = vld [vmem:[%s377 + $0x3b0] sm:$0xff]
        %v696 = vld [vmem:[%s377 + $0x3b8] sm:$0xff]
        %v697 = vld [vmem:[%s377 + $0x3c0] sm:$0xff]
        %v698 = vld [vmem:[%s377 + $0x3c8] sm:$0xff]
        %v699 = vld [vmem:[%s377 + $0x3d0] sm:$0xff]
        %v700 = vld [vmem:[%s377 + $0x3d8] sm:$0xff]
        %v701 = vld [vmem:[%s377 + $0x3e0] sm:$0xff]
        %v702 = vld [vmem:[%s377 + $0x3e8] sm:$0xff]
        %v703 = vld [vmem:[%s377 + $0x3f0] sm:$0xff]
        %v704 = vld [vmem:[%s377 + $0x3f8] sm:$0xff]
        %v705 = vld [vmem:[%s377 + $0x400] sm:$0xff]
        %v706 = vld [vmem:[%s377 + $0x408] sm:$0xff]
        %v707 = vld [vmem:[%s377 + $0x410] sm:$0xff]
        %v708 = vld [vmem:[%s377 + $0x418] sm:$0xff]
        %v709 = vld [vmem:[%s377 + $0x420] sm:$0xff]
        %v710 = vld [vmem:[%s377 + $0x428] sm:$0xff]
        %v711 = vld [vmem:[%s377 + $0x430] sm:$0xff]
        %v712 = vld [vmem:[%s377 + $0x438] sm:$0xff]
        %v713 = vld [vmem:[%s377 + $0x440] sm:$0xff]
        %v714 = vld [vmem:[%s377 + $0x448] sm:$0xff]
        %v715 = vld [vmem:[%s377 + $0x450] sm:$0xff]
        %v716 = vld [vmem:[%s377 + $0x458] sm:$0xff]
        %v717 = vld [vmem:[%s377 + $0x460] sm:$0xff]
        %v718 = vld [vmem:[%s377 + $0x468] sm:$0xff]
        %v719 = vld [vmem:[%s377 + $0x470] sm:$0xff]
        %v720 = vld [vmem:[%s377 + $0x478] sm:$0xff]
        %v721 = vld [vmem:[%s377 + $0x480] sm:$0xff]
        %v722 = vld [vmem:[%s377 + $0x488] sm:$0xff]
        %v723 = vld [vmem:[%s377 + $0x490] sm:$0xff]
        %v724 = vld [vmem:[%s377 + $0x498] sm:$0xff]
        %v725 = vld [vmem:[%s377 + $0x4a0] sm:$0xff]
        %v726 = vld [vmem:[%s377 + $0x4a8] sm:$0xff]
        %v727 = vld [vmem:[%s377 + $0x4b0] sm:$0xff]
        %v728 = vld [vmem:[%s377 + $0x4b8] sm:$0xff]
        %v729 = vld [vmem:[%s377 + $0x4c0] sm:$0xff]
        %v730 = vld [vmem:[%s377 + $0x4c8] sm:$0xff]
        %v731 = vld [vmem:[%s377 + $0x4d0] sm:$0xff]
        %v732 = vld [vmem:[%s377 + $0x4d8] sm:$0xff]
        %v733 = vld [vmem:[%s377 + $0x4e0] sm:$0xff]
        %v734 = vld [vmem:[%s377 + $0x4e8] sm:$0xff]
        %v735 = vld [vmem:[%s377 + $0x4f0] sm:$0xff]
        %v736 = vld [vmem:[%s377 + $0x4f8] sm:$0xff]
        %v737 = vld [vmem:[%s377 + $0x500] sm:$0xff]
        %v738 = vld [vmem:[%s377 + $0x508] sm:$0xff]
        %v739 = vld [vmem:[%s377 + $0x510] sm:$0xff]
        %v740 = vld [vmem:[%s377 + $0x518] sm:$0xff]
        %v741 = vld [vmem:[%s377 + $0x520] sm:$0xff]
        %v742 = vld [vmem:[%s377 + $0x528] sm:$0xff]
        %v743 = vld [vmem:[%s377 + $0x530] sm:$0xff]
        %v744 = vld [vmem:[%s377 + $0x538] sm:$0xff]
        %v745 = vld [vmem:[%s377 + $0x540] sm:$0xff]
        %v746 = vld [vmem:[%s377 + $0x548] sm:$0xff]
        %v747 = vld [vmem:[%s377 + $0x550] sm:$0xff]
        %v748 = vld [vmem:[%s377 + $0x558] sm:$0xff]
        %v749 = vld [vmem:[%s377 + $0x560] sm:$0xff]
        %v750 = vld [vmem:[%s377 + $0x568] sm:$0xff]
        %v751 = vld [vmem:[%s377 + $0x570] sm:$0xff]
        %v752 = vld [vmem:[%s377 + $0x578] sm:$0xff]
        %v753 = vld [vmem:[%s377 + $0x580] sm:$0xff]
        %v754 = vld [vmem:[%s377 + $0x588] sm:$0xff]
        %v755 = vld [vmem:[%s377 + $0x590] sm:$0xff]
        %v756 = vld [vmem:[%s377 + $0x598] sm:$0xff]
        %v757 = vld [vmem:[%s377 + $0x5a0] sm:$0xff]
        %v758 = vld [vmem:[%s377 + $0x5a8] sm:$0xff]
        %v759 = vld [vmem:[%s377 + $0x5b0] sm:$0xff]
        %v760 = vld [vmem:[%s377 + $0x5b8] sm:$0xff]
        %v761 = vld [vmem:[%s377 + $0x5c0] sm:$0xff]
        %v762 = vld [vmem:[%s377 + $0x5c8] sm:$0xff]
        %v763 = vld [vmem:[%s377 + $0x5d0] sm:$0xff]
        %v764 = vld [vmem:[%s377 + $0x5d8] sm:$0xff]
        %v765 = vld [vmem:[%s377 + $0x5e0] sm:$0xff]
        %v766 = vld [vmem:[%s377 + $0x5e8] sm:$0xff]
        %v767 = vld [vmem:[%s377 + $0x5f0] sm:$0xff]
        %v768 = vld [vmem:[%s377 + $0x5f8] sm:$0xff]
        %v769 = vld [vmem:[%s377 + $0x600] sm:$0xff]
        %v770 = vld [vmem:[%s377 + $0x608] sm:$0xff]
        %v771 = vld [vmem:[%s377 + $0x610] sm:$0xff]
        %v772 = vld [vmem:[%s377 + $0x618] sm:$0xff]
        %v773 = vld [vmem:[%s377 + $0x620] sm:$0xff]
        %v774 = vld [vmem:[%s377 + $0x628] sm:$0xff]
        %v775 = vld [vmem:[%s377 + $0x630] sm:$0xff]
        %v776 = vld [vmem:[%s377 + $0x638] sm:$0xff]
        %v777 = vld [vmem:[%s377 + $0x640] sm:$0xff]
        %v778 = vld [vmem:[%s377 + $0x648] sm:$0xff]
        %v779 = vld [vmem:[%s377 + $0x650] sm:$0xff]
        %v780 = vld [vmem:[%s377 + $0x658] sm:$0xff]
        %v781 = vld [vmem:[%s377 + $0x660] sm:$0xff]
        %v782 = vld [vmem:[%s377 + $0x668] sm:$0xff]
        %v783 = vld [vmem:[%s377 + $0x670] sm:$0xff]
        %v784 = vld [vmem:[%s377 + $0x678] sm:$0xff]
        %v785 = vld [vmem:[%s377 + $0x680] sm:$0xff]
        %v786 = vld [vmem:[%s377 + $0x688] sm:$0xff]
        %v787 = vld [vmem:[%s377 + $0x690] sm:$0xff]
        %v788 = vld [vmem:[%s377 + $0x698] sm:$0xff]
        %v789 = vld [vmem:[%s377 + $0x6a0] sm:$0xff]
        %v790 = vld [vmem:[%s377 + $0x6a8] sm:$0xff]
        %v791 = vld [vmem:[%s377 + $0x6b0] sm:$0xff]
        %v792 = vld [vmem:[%s377 + $0x6b8] sm:$0xff]
        %v793 = vld [vmem:[%s377 + $0x6c0] sm:$0xff]
        %v794 = vld [vmem:[%s377 + $0x6c8] sm:$0xff]
        %v795 = vld [vmem:[%s377 + $0x6d0] sm:$0xff]
        %v796 = vld [vmem:[%s377 + $0x6d8] sm:$0xff]
        %v797 = vld [vmem:[%s377 + $0x6e0] sm:$0xff]
        %v798 = vld [vmem:[%s377 + $0x6e8] sm:$0xff]
        %v799 = vld [vmem:[%s377 + $0x6f0] sm:$0xff]
        %v800 = vld [vmem:[%s377 + $0x6f8] sm:$0xff]
        %v801 = vld [vmem:[%s377 + $0x700] sm:$0xff]
        %v802 = vld [vmem:[%s377 + $0x708] sm:$0xff]
        %v803 = vld [vmem:[%s377 + $0x710] sm:$0xff]
        %v804 = vld [vmem:[%s377 + $0x718] sm:$0xff]
        %v805 = vld [vmem:[%s377 + $0x720] sm:$0xff]
        %v806 = vld [vmem:[%s377 + $0x728] sm:$0xff]
        %v807 = vld [vmem:[%s377 + $0x730] sm:$0xff]
        %v808 = vld [vmem:[%s377 + $0x738] sm:$0xff]
        %v809 = vld [vmem:[%s377 + $0x740] sm:$0xff]
        %v810 = vld [vmem:[%s377 + $0x748] sm:$0xff]
        %v811 = vld [vmem:[%s377 + $0x750] sm:$0xff]
        %v812 = vld [vmem:[%s377 + $0x758] sm:$0xff]
        %v813 = vld [vmem:[%s377 + $0x760] sm:$0xff]
        %v814 = vld [vmem:[%s377 + $0x768] sm:$0xff]
        %v815 = vld [vmem:[%s377 + $0x770] sm:$0xff]
        %v816 = vld [vmem:[%s377 + $0x778] sm:$0xff]
        %v817 = vld [vmem:[%s377 + $0x780] sm:$0xff]
        %v818 = vld [vmem:[%s377 + $0x788] sm:$0xff]
        %v819 = vld [vmem:[%s377 + $0x790] sm:$0xff]
        %v820 = vld [vmem:[%s377 + $0x798] sm:$0xff]
        %v821 = vld [vmem:[%s377 + $0x7a0] sm:$0xff]
        %v822 = vld [vmem:[%s377 + $0x7a8] sm:$0xff]
        %v823 = vld [vmem:[%s377 + $0x7b0] sm:$0xff]
        %v824 = vld [vmem:[%s377 + $0x7b8] sm:$0xff]
        %v825 = vld [vmem:[%s377 + $0x7c0] sm:$0xff]
        %v826 = vld [vmem:[%s377 + $0x7c8] sm:$0xff]
        %v827 = vld [vmem:[%s377 + $0x7d0] sm:$0xff]
        %v828 = vld [vmem:[%s377 + $0x7d8] sm:$0xff]
        %v829 = vld [vmem:[%s377 + $0x7e0] sm:$0xff]
        %v830 = vld [vmem:[%s377 + $0x7e8] sm:$0xff]
        %v831 = vld [vmem:[%s377 + $0x7f0] sm:$0xff]
        %v832 = vld [vmem:[%s377 + $0x7f8] sm:$0xff]
        %v833 = vld [vmem:[%s377 + $0x800] sm:$0xff]
        %v834 = vld [vmem:[%s377 + $0x808] sm:$0xff]
        %v835 = vld [vmem:[%s377 + $0x810] sm:$0xff]
        %v836 = vld [vmem:[%s377 + $0x818] sm:$0xff]
        %v837 = vld [vmem:[%s377 + $0x820] sm:$0xff]
        %v838 = vld [vmem:[%s377 + $0x828] sm:$0xff]
        %v839 = vld [vmem:[%s377 + $0x830] sm:$0xff]
        %v840 = vld [vmem:[%s377 + $0x838] sm:$0xff]
        %v841 = vld [vmem:[%s377 + $0x840] sm:$0xff]
        %v842 = vld [vmem:[%s377 + $0x848] sm:$0xff]
        %v843 = vld [vmem:[%s377 + $0x850] sm:$0xff]
        %v844 = vld [vmem:[%s377 + $0x858] sm:$0xff]
        %v845 = vld [vmem:[%s377 + $0x860] sm:$0xff]
        %v846 = vld [vmem:[%s377 + $0x868] sm:$0xff]
        %v847 = vld [vmem:[%s377 + $0x870] sm:$0xff]
        %v848 = vld [vmem:[%s377 + $0x878] sm:$0xff]
        %v849 = vld [vmem:[%s377 + $0x880] sm:$0xff]
        %v850 = vld [vmem:[%s377 + $0x888] sm:$0xff]
        %v851 = vld [vmem:[%s377 + $0x890] sm:$0xff]
        %v852 = vld [vmem:[%s377 + $0x898] sm:$0xff]
        %v853 = vld [vmem:[%s377 + $0x8a0] sm:$0xff]
        %v854 = vld [vmem:[%s377 + $0x8a8] sm:$0xff]
        %v855 = vld [vmem:[%s377 + $0x8b0] sm:$0xff]
        %v856 = vld [vmem:[%s377 + $0x8b8] sm:$0xff]
        %v857 = vld [vmem:[%s377 + $0x8c0] sm:$0xff]
        %v858 = vld [vmem:[%s377 + $0x8c8] sm:$0xff]
        %v859 = vld [vmem:[%s377 + $0x8d0] sm:$0xff]
        %v860 = vld [vmem:[%s377 + $0x8d8] sm:$0xff]
        %v861 = vld [vmem:[%s377 + $0x8e0] sm:$0xff]
        %v862 = vld [vmem:[%s377 + $0x8e8] sm:$0xff]
        %v863 = vld [vmem:[%s377 + $0x8f0] sm:$0xff]
        %v864 = vld [vmem:[%s377 + $0x8f8] sm:$0xff]
        %v865 = vld [vmem:[%s377 + $0x900] sm:$0xff]
        %v866 = vld [vmem:[%s377 + $0x908] sm:$0xff]
        %v867 = vld [vmem:[%s377 + $0x910] sm:$0xff]
        %v868 = vld [vmem:[%s377 + $0x918] sm:$0xff]
        %v869 = vld [vmem:[%s377 + $0x920] sm:$0xff]
        %v870 = vld [vmem:[%s377 + $0x928] sm:$0xff]
        %v871 = vld [vmem:[%s377 + $0x930] sm:$0xff]
        %v872 = vld [vmem:[%s377 + $0x938] sm:$0xff]
        %v873 = vld [vmem:[%s377 + $0x940] sm:$0xff]
        %v874 = vld [vmem:[%s377 + $0x948] sm:$0xff]
        %v875 = vld [vmem:[%s377 + $0x950] sm:$0xff]
        %v876 = vld [vmem:[%s377 + $0x958] sm:$0xff]
        %v877 = vld [vmem:[%s377 + $0x960] sm:$0xff]
        %v878 = vld [vmem:[%s377 + $0x968] sm:$0xff]
        %v879 = vld [vmem:[%s377 + $0x970] sm:$0xff]
        %v880 = vld [vmem:[%s377 + $0x978] sm:$0xff]
        %v881 = vld [vmem:[%s377 + $0x980] sm:$0xff]
        %v882 = vld [vmem:[%s377 + $0x988] sm:$0xff]
        %v883 = vld [vmem:[%s377 + $0x990] sm:$0xff]
        %v884 = vld [vmem:[%s377 + $0x998] sm:$0xff]
        %v885 = vld [vmem:[%s377 + $0x9a0] sm:$0xff]
        %v886 = vld [vmem:[%s377 + $0x9a8] sm:$0xff]
        %v887 = vld [vmem:[%s377 + $0x9b0] sm:$0xff]
        %v888 = vld [vmem:[%s377 + $0x9b8] sm:$0xff]
        %v889 = vld [vmem:[%s377 + $0x9c0] sm:$0xff]
        %v890 = vld [vmem:[%s377 + $0x9c8] sm:$0xff]
        %v891 = vld [vmem:[%s377 + $0x9d0] sm:$0xff]
        %v892 = vld [vmem:[%s377 + $0x9d8] sm:$0xff]
        %v893 = vld [vmem:[%s377 + $0x9e0] sm:$0xff]
        %v894 = vld [vmem:[%s377 + $0x9e8] sm:$0xff]
        %v895 = vld [vmem:[%s377 + $0x9f0] sm:$0xff]
        %v896 = vld [vmem:[%s377 + $0x9f8] sm:$0xff]
        %v897 = vld [vmem:[%s377 + $0xa00] sm:$0xff]
        %v898 = vld [vmem:[%s377 + $0xa08] sm:$0xff]
        %v899 = vld [vmem:[%s377 + $0xa10] sm:$0xff]
        %v900 = vld [vmem:[%s377 + $0xa18] sm:$0xff]
        %v901 = vld [vmem:[%s377 + $0xa20] sm:$0xff]
        %v902 = vld [vmem:[%s377 + $0xa28] sm:$0xff]
        %v903 = vld [vmem:[%s377 + $0xa30] sm:$0xff]
        %v904 = vld [vmem:[%s377 + $0xa38] sm:$0xff]
        %v905 = vld [vmem:[%s377 + $0xa40] sm:$0xff]
        %v906 = vld [vmem:[%s377 + $0xa48] sm:$0xff]
        %v907 = vld [vmem:[%s377 + $0xa50] sm:$0xff]
        %v908 = vld [vmem:[%s377 + $0xa58] sm:$0xff]
        %v909 = vld [vmem:[%s377 + $0xa60] sm:$0xff]
        %v910 = vld [vmem:[%s377 + $0xa68] sm:$0xff]
        %v911 = vld [vmem:[%s377 + $0xa70] sm:$0xff]
        %v912 = vld [vmem:[%s377 + $0xa78] sm:$0xff]
        %v913 = vld [vmem:[%s377 + $0xa80] sm:$0xff]
        %v914 = vld [vmem:[%s377 + $0xa88] sm:$0xff]
        %v915 = vld [vmem:[%s377 + $0xa90] sm:$0xff]
        %v916 = vld [vmem:[%s377 + $0xa98] sm:$0xff]
        %v917 = vld [vmem:[%s377 + $0xaa0] sm:$0xff]
        %v918 = vld [vmem:[%s377 + $0xaa8] sm:$0xff]
        %v919 = vld [vmem:[%s377 + $0xab0] sm:$0xff]
        %v920 = vld [vmem:[%s377 + $0xab8] sm:$0xff]
        %v921 = vld [vmem:[%s377 + $0xac0] sm:$0xff]
        %v922 = vld [vmem:[%s377 + $0xac8] sm:$0xff]
        %v923 = vld [vmem:[%s377 + $0xad0] sm:$0xff]
        %v924 = vld [vmem:[%s377 + $0xad8] sm:$0xff]
        %v925 = vld [vmem:[%s377 + $0xae0] sm:$0xff]
        %v926 = vld [vmem:[%s377 + $0xae8] sm:$0xff]
        %v927 = vld [vmem:[%s377 + $0xaf0] sm:$0xff]
        %v928 = vld [vmem:[%s377 + $0xaf8] sm:$0xff]
        %v929 = vld [vmem:[%s377 + $0xb00] sm:$0xff]
        %v930 = vld [vmem:[%s377 + $0xb08] sm:$0xff]
        %v931 = vld [vmem:[%s377 + $0xb10] sm:$0xff]
        %v932 = vld [vmem:[%s377 + $0xb18] sm:$0xff]
        %v933 = vld [vmem:[%s377 + $0xb20] sm:$0xff]
        %v934 = vld [vmem:[%s377 + $0xb28] sm:$0xff]
        %v935 = vld [vmem:[%s377 + $0xb30] sm:$0xff]
        %v936 = vld [vmem:[%s377 + $0xb38] sm:$0xff]
        %v937 = vld [vmem:[%s377 + $0xb40] sm:$0xff]
        %v938 = vld [vmem:[%s377 + $0xb48] sm:$0xff]
        %v939 = vld [vmem:[%s377 + $0xb50] sm:$0xff]
        %v940 = vld [vmem:[%s377 + $0xb58] sm:$0xff]
        %v941 = vld [vmem:[%s377 + $0xb60] sm:$0xff]
        %v942 = vld [vmem:[%s377 + $0xb68] sm:$0xff]
        %v943 = vld [vmem:[%s377 + $0xb70] sm:$0xff]
        %v944 = vld [vmem:[%s377 + $0xb78] sm:$0xff]
        %v945 = vld [vmem:[%s377 + $0xb80] sm:$0xff]
        %v946 = vld [vmem:[%s377 + $0xb88] sm:$0xff]
        %v947 = vld [vmem:[%s377 + $0xb90] sm:$0xff]
        %v948 = vld [vmem:[%s377 + $0xb98] sm:$0xff]
        %v949 = vld [vmem:[%s377 + $0xba0] sm:$0xff]
        %v950 = vld [vmem:[%s377 + $0xba8] sm:$0xff]
        %v951 = vld [vmem:[%s377 + $0xbb0] sm:$0xff]
        %v952 = vld [vmem:[%s377 + $0xbb8] sm:$0xff]
        %v953 = vld [vmem:[%s377 + $0xbc0] sm:$0xff]
        %v954 = vld [vmem:[%s377 + $0xbc8] sm:$0xff]
        %v955 = vld [vmem:[%s377 + $0xbd0] sm:$0xff]
        %v956 = vld [vmem:[%s377 + $0xbd8] sm:$0xff]
        %v957 = vld [vmem:[%s377 + $0xbe0] sm:$0xff]
        %v958 = vld [vmem:[%s377 + $0xbe8] sm:$0xff]
        %v959 = vld [vmem:[%s377 + $0xbf0] sm:$0xff]
        %v960 = vld [vmem:[%s377 + $0xbf8] sm:$0xff]
        %v961 = vld [vmem:[%s377 + $0xc00] sm:$0xff]
        %v962 = vld [vmem:[%s377 + $0xc08] sm:$0xff]
        %v963 = vld [vmem:[%s377 + $0xc10] sm:$0xff]
        %v964 = vld [vmem:[%s377 + $0xc18] sm:$0xff]
        %v965 = vld [vmem:[%s377 + $0xc20] sm:$0xff]
        %v966 = vld [vmem:[%s377 + $0xc28] sm:$0xff]
        %v967 = vld [vmem:[%s377 + $0xc30] sm:$0xff]
        %v968 = vld [vmem:[%s377 + $0xc38] sm:$0xff]
        %v969 = vld [vmem:[%s377 + $0xc40] sm:$0xff]
        %v970 = vld [vmem:[%s377 + $0xc48] sm:$0xff]
        %v971 = vld [vmem:[%s377 + $0xc50] sm:$0xff]
        %v972 = vld [vmem:[%s377 + $0xc58] sm:$0xff]
        %v973 = vld [vmem:[%s377 + $0xc60] sm:$0xff]
        %v974 = vld [vmem:[%s377 + $0xc68] sm:$0xff]
        %v975 = vld [vmem:[%s377 + $0xc70] sm:$0xff]
        %v976 = vld [vmem:[%s377 + $0xc78] sm:$0xff]
        %v977 = vld [vmem:[%s377 + $0xc80] sm:$0xff]
        %v978 = vld [vmem:[%s377 + $0xc88] sm:$0xff]
        %v979 = vld [vmem:[%s377 + $0xc90] sm:$0xff]
        %v980 = vld [vmem:[%s377 + $0xc98] sm:$0xff]
        %v981 = vld [vmem:[%s377 + $0xca0] sm:$0xff]
        %v982 = vld [vmem:[%s377 + $0xca8] sm:$0xff]
        %v983 = vld [vmem:[%s377 + $0xcb0] sm:$0xff]
        %v984 = vld [vmem:[%s377 + $0xcb8] sm:$0xff]
        %v985 = vld [vmem:[%s377 + $0xcc0] sm:$0xff]
        %v986 = vld [vmem:[%s377 + $0xcc8] sm:$0xff]
        %v987 = vld [vmem:[%s377 + $0xcd0] sm:$0xff]
        %v988 = vld [vmem:[%s377 + $0xcd8] sm:$0xff]
        %v989 = vld [vmem:[%s377 + $0xce0] sm:$0xff]
        %v990 = vld [vmem:[%s377 + $0xce8] sm:$0xff]
        %v991 = vld [vmem:[%s377 + $0xcf0] sm:$0xff]
        %v992 = vld [vmem:[%s377 + $0xcf8] sm:$0xff]
        %v993 = vld [vmem:[%s377 + $0xd00] sm:$0xff]
        %v994 = vld [vmem:[%s377 + $0xd08] sm:$0xff]
        %v995 = vld [vmem:[%s377 + $0xd10] sm:$0xff]
        %v996 = vld [vmem:[%s377 + $0xd18] sm:$0xff]
        %v997 = vld [vmem:[%s377 + $0xd20] sm:$0xff]
        %v998 = vld [vmem:[%s377 + $0xd28] sm:$0xff]
        %v999 = vld [vmem:[%s377 + $0xd30] sm:$0xff]
        %v1000 = vld [vmem:[%s377 + $0xd38] sm:$0xff]
        %v1001 = vld [vmem:[%s377 + $0xd40] sm:$0xff]
        %v1002 = vld [vmem:[%s377 + $0xd48] sm:$0xff]
        %v1003 = vld [vmem:[%s377 + $0xd50] sm:$0xff]
        %v1004 = vld [vmem:[%s377 + $0xd58] sm:$0xff]
        %v1005 = vld [vmem:[%s377 + $0xd60] sm:$0xff]
        %v1006 = vld [vmem:[%s377 + $0xd68] sm:$0xff]
        %v1007 = vld [vmem:[%s377 + $0xd70] sm:$0xff]
        %v1008 = vld [vmem:[%s377 + $0xd78] sm:$0xff]
        %v1009 = vld [vmem:[%s377 + $0xd80] sm:$0xff]
        %v1010 = vld [vmem:[%s377 + $0xd88] sm:$0xff]
        %v1011 = vld [vmem:[%s377 + $0xd90] sm:$0xff]
        %v1012 = vld [vmem:[%s377 + $0xd98] sm:$0xff]
        %v1013 = vld [vmem:[%s377 + $0xda0] sm:$0xff]
        %v1014 = vld [vmem:[%s377 + $0xda8] sm:$0xff]
        %v1015 = vld [vmem:[%s377 + $0xdb0] sm:$0xff]
        %v1016 = vld [vmem:[%s377 + $0xdb8] sm:$0xff]
        %v1017 = vld [vmem:[%s377 + $0xdc0] sm:$0xff]
        %v1018 = vld [vmem:[%s377 + $0xdc8] sm:$0xff]
        %v1019 = vld [vmem:[%s377 + $0xdd0] sm:$0xff]
        %v1020 = vld [vmem:[%s377 + $0xdd8] sm:$0xff]
        %v1021 = vld [vmem:[%s377 + $0xde0] sm:$0xff]
        %v1022 = vld [vmem:[%s377 + $0xde8] sm:$0xff]
        %v1023 = vld [vmem:[%s377 + $0xdf0] sm:$0xff]
        %v1024 = vld [vmem:[%s377 + $0xdf8] sm:$0xff]
        %v1025 = vld [vmem:[%s377 + $0xe00] sm:$0xff]
        %v1026 = vld [vmem:[%s377 + $0xe08] sm:$0xff]
        %v1027 = vld [vmem:[%s377 + $0xe10] sm:$0xff]
        %v1028 = vld [vmem:[%s377 + $0xe18] sm:$0xff]
        %v1029 = vld [vmem:[%s377 + $0xe20] sm:$0xff]
        %v1030 = vld [vmem:[%s377 + $0xe28] sm:$0xff]
        %v1031 = vld [vmem:[%s377 + $0xe30] sm:$0xff]
        %v1032 = vld [vmem:[%s377 + $0xe38] sm:$0xff]
        %v1033 = vld [vmem:[%s377 + $0xe40] sm:$0xff]
        %v1034 = vld [vmem:[%s377 + $0xe48] sm:$0xff]
        %v1035 = vld [vmem:[%s377 + $0xe50] sm:$0xff]
        %v1036 = vld [vmem:[%s377 + $0xe58] sm:$0xff]
        %v1037 = vld [vmem:[%s377 + $0xe60] sm:$0xff]
        %v1038 = vld [vmem:[%s377 + $0xe68] sm:$0xff]
        %v1039 = vld [vmem:[%s377 + $0xe70] sm:$0xff]
        %v1040 = vld [vmem:[%s377 + $0xe78] sm:$0xff]
        %v1041 = vld [vmem:[%s377 + $0xe80] sm:$0xff]
        %v1042 = vld [vmem:[%s377 + $0xe88] sm:$0xff]
        %v1043 = vld [vmem:[%s377 + $0xe90] sm:$0xff]
        %v1044 = vld [vmem:[%s377 + $0xe98] sm:$0xff]
        %v1045 = vld [vmem:[%s377 + $0xea0] sm:$0xff]
        %v1046 = vld [vmem:[%s377 + $0xea8] sm:$0xff]
        %v1047 = vld [vmem:[%s377 + $0xeb0] sm:$0xff]
        %v1048 = vld [vmem:[%s377 + $0xeb8] sm:$0xff]
        %v1049 = vld [vmem:[%s377 + $0xec0] sm:$0xff]
        %v1050 = vld [vmem:[%s377 + $0xec8] sm:$0xff]
        %v1051 = vld [vmem:[%s377 + $0xed0] sm:$0xff]
        %v1052 = vld [vmem:[%s377 + $0xed8] sm:$0xff]
        %v1053 = vld [vmem:[%s377 + $0xee0] sm:$0xff]
        %v1054 = vld [vmem:[%s377 + $0xee8] sm:$0xff]
        %v1055 = vld [vmem:[%s377 + $0xef0] sm:$0xff]
        %v1056 = vld [vmem:[%s377 + $0xef8] sm:$0xff]
        %v1057 = vld [vmem:[%s377 + $0xf00] sm:$0xff]
        %v1058 = vld [vmem:[%s377 + $0xf08] sm:$0xff]
        %v1059 = vld [vmem:[%s377 + $0xf10] sm:$0xff]
        %v1060 = vld [vmem:[%s377 + $0xf18] sm:$0xff]
        %v1061 = vld [vmem:[%s377 + $0xf20] sm:$0xff]
        %v1062 = vld [vmem:[%s377 + $0xf28] sm:$0xff]
        %v1063 = vld [vmem:[%s377 + $0xf30] sm:$0xff]
        %v1064 = vld [vmem:[%s377 + $0xf38] sm:$0xff]
        %v1065 = vld [vmem:[%s377 + $0xf40] sm:$0xff]
        %v1066 = vld [vmem:[%s377 + $0xf48] sm:$0xff]
        %v1067 = vld [vmem:[%s377 + $0xf50] sm:$0xff]
        %v1068 = vld [vmem:[%s377 + $0xf58] sm:$0xff]
        %v1069 = vld [vmem:[%s377 + $0xf60] sm:$0xff]
        %v1070 = vld [vmem:[%s377 + $0xf68] sm:$0xff]
        %v1071 = vld [vmem:[%s377 + $0xf70] sm:$0xff]
        %v1072 = vld [vmem:[%s377 + $0xf78] sm:$0xff]
        %v1073 = vld [vmem:[%s377 + $0xf80] sm:$0xff]
        %v1074 = vld [vmem:[%s377 + $0xf88] sm:$0xff]
        %v1075 = vld [vmem:[%s377 + $0xf90] sm:$0xff]
        %v1076 = vld [vmem:[%s377 + $0xf98] sm:$0xff]
        %v1077 = vld [vmem:[%s377 + $0xfa0] sm:$0xff]
        %v1078 = vld [vmem:[%s377 + $0xfa8] sm:$0xff]
        %v1079 = vld [vmem:[%s377 + $0xfb0] sm:$0xff]
        %v1080 = vld [vmem:[%s377 + $0xfb8] sm:$0xff]
        %v1081 = vld [vmem:[%s377 + $0xfc0] sm:$0xff]
        %v1082 = vld [vmem:[%s377 + $0xfc8] sm:$0xff]
        %v1083 = vld [vmem:[%s377 + $0xfd0] sm:$0xff]
        %v1084 = vld [vmem:[%s377 + $0xfd8] sm:$0xff]
        %v1085 = vld [vmem:[%s377 + $0xfe0] sm:$0xff]
        %v1086 = vld [vmem:[%s377 + $0xfe8] sm:$0xff]
        %v1087 = vld [vmem:[%s377 + $0xff0] sm:$0xff]
        %v1088 = vld [vmem:[%s377 + $0xff8] sm:$0xff]
        %v1089 = vld [vmem:[%s377 + $0x1000] sm:$0xff]
        %v1090 = vld [vmem:[%s377 + $0x1008] sm:$0xff]
        %v1091 = vld [vmem:[%s377 + $0x1010] sm:$0xff]
        %v1092 = vld [vmem:[%s377 + $0x1018] sm:$0xff]
        %v1093 = vld [vmem:[%s377 + $0x1020] sm:$0xff]
        %v1094 = vld [vmem:[%s377 + $0x1028] sm:$0xff]
        %v1095 = vld [vmem:[%s377 + $0x1030] sm:$0xff]
        %v1096 = vld [vmem:[%s377 + $0x1038] sm:$0xff]
        %v1097 = vld [vmem:[%s377 + $0x1040] sm:$0xff]
        %v1098 = vld [vmem:[%s377 + $0x1048] sm:$0xff]
        %v1099 = vld [vmem:[%s377 + $0x1050] sm:$0xff]
        %v1100 = vld [vmem:[%s377 + $0x1058] sm:$0xff]
        %v1101 = vld [vmem:[%s377 + $0x1060] sm:$0xff]
        %v1102 = vld [vmem:[%s377 + $0x1068] sm:$0xff]
        %v1103 = vld [vmem:[%s377 + $0x1070] sm:$0xff]
        %v1104 = vld [vmem:[%s377 + $0x1078] sm:$0xff]
        %v1105 = vld [vmem:[%s377 + $0x1080] sm:$0xff]
        %v1106 = vld [vmem:[%s377 + $0x1088] sm:$0xff]
        %v1107 = vld [vmem:[%s377 + $0x1090] sm:$0xff]
        %v1108 = vld [vmem:[%s377 + $0x1098] sm:$0xff]
        %v1109 = vld [vmem:[%s377 + $0x10a0] sm:$0xff]
        %v1110 = vld [vmem:[%s377 + $0x10a8] sm:$0xff]
        %v1111 = vld [vmem:[%s377 + $0x10b0] sm:$0xff]
        %v1112 = vld [vmem:[%s377 + $0x10b8] sm:$0xff]
        %v1113 = vld [vmem:[%s377 + $0x10c0] sm:$0xff]
        %v1114 = vld [vmem:[%s377 + $0x10c8] sm:$0xff]
        %v1115 = vld [vmem:[%s377 + $0x10d0] sm:$0xff]
        %v1116 = vld [vmem:[%s377 + $0x10d8] sm:$0xff]
        %v1117 = vld [vmem:[%s377 + $0x10e0] sm:$0xff]
        %v1118 = vld [vmem:[%s377 + $0x10e8] sm:$0xff]
        %v1119 = vld [vmem:[%s377 + $0x10f0] sm:$0xff]
        %v1120 = vld [vmem:[%s377 + $0x10f8] sm:$0xff]
        %v1121 = vld [vmem:[%s377 + $0x1100] sm:$0xff]
        %v1122 = vld [vmem:[%s377 + $0x1108] sm:$0xff]
        %v1123 = vld [vmem:[%s377 + $0x1110] sm:$0xff]
        %v1124 = vld [vmem:[%s377 + $0x1118] sm:$0xff]
        %v1125 = vld [vmem:[%s377 + $0x1120] sm:$0xff]
        %v1126 = vld [vmem:[%s377 + $0x1128] sm:$0xff]
        %v1127 = vld [vmem:[%s377 + $0x1130] sm:$0xff]
        %v1128 = vld [vmem:[%s377 + $0x1138] sm:$0xff]
        %v1129 = vld [vmem:[%s377 + $0x1140] sm:$0xff]
        %v1130 = vld [vmem:[%s377 + $0x1148] sm:$0xff]
        %v1131 = vld [vmem:[%s377 + $0x1150] sm:$0xff]
        %v1132 = vld [vmem:[%s377 + $0x1158] sm:$0xff]
        %v1133 = vld [vmem:[%s377 + $0x1160] sm:$0xff]
        %v1134 = vld [vmem:[%s377 + $0x1168] sm:$0xff]
        %v1135 = vld [vmem:[%s377 + $0x1170] sm:$0xff]
        %v1136 = vld [vmem:[%s377 + $0x1178] sm:$0xff]
        %v1137 = vld [vmem:[%s377 + $0x1180] sm:$0xff]
        %v1138 = vld [vmem:[%s377 + $0x1188] sm:$0xff]
        %v1139 = vld [vmem:[%s377 + $0x1190] sm:$0xff]
        %v1140 = vld [vmem:[%s377 + $0x1198] sm:$0xff]
        %v1141 = vld [vmem:[%s377 + $0x11a0] sm:$0xff]
        %v1142 = vld [vmem:[%s377 + $0x11a8] sm:$0xff]
        %v1143 = vld [vmem:[%s377 + $0x11b0] sm:$0xff]
        %v1144 = vld [vmem:[%s377 + $0x11b8] sm:$0xff]
        %v1145 = vld [vmem:[%s377 + $0x11c0] sm:$0xff]
        %v1146 = vld [vmem:[%s377 + $0x11c8] sm:$0xff]
        %v1147 = vld [vmem:[%s377 + $0x11d0] sm:$0xff]
        %v1148 = vld [vmem:[%s377 + $0x11d8] sm:$0xff]
        %v1149 = vld [vmem:[%s377 + $0x11e0] sm:$0xff]
        %v1150 = vld [vmem:[%s377 + $0x11e8] sm:$0xff]
        %v1151 = vld [vmem:[%s377 + $0x11f0] sm:$0xff]
        %v1152 = vld [vmem:[%s377 + $0x11f8] sm:$0xff]
        %v1153 = vld [vmem:[%s377 + $0x1200] sm:$0xff]
        %v1154 = vld [vmem:[%s377 + $0x1208] sm:$0xff]
        %v1155 = vld [vmem:[%s377 + $0x1210] sm:$0xff]
        %v1156 = vld [vmem:[%s377 + $0x1218] sm:$0xff]
        %v1157 = vld [vmem:[%s377 + $0x1220] sm:$0xff]
        %v1158 = vld [vmem:[%s377 + $0x1228] sm:$0xff]
        %v1159 = vld [vmem:[%s377 + $0x1230] sm:$0xff]
        %v1160 = vld [vmem:[%s377 + $0x1238] sm:$0xff]
        %v1161 = vld [vmem:[%s377 + $0x1240] sm:$0xff]
        %v1162 = vld [vmem:[%s377 + $0x1248] sm:$0xff]
        %v1163 = vld [vmem:[%s377 + $0x1250] sm:$0xff]
        %v1164 = vld [vmem:[%s377 + $0x1258] sm:$0xff]
        %v1165 = vld [vmem:[%s377 + $0x1260] sm:$0xff]
        %v1166 = vld [vmem:[%s377 + $0x1268] sm:$0xff]
        %v1167 = vld [vmem:[%s377 + $0x1270] sm:$0xff]
        %v1168 = vld [vmem:[%s377 + $0x1278] sm:$0xff]
        %v1169 = vld [vmem:[%s377 + $0x1280] sm:$0xff]
        %v1170 = vld [vmem:[%s377 + $0x1288] sm:$0xff]
        %v1171 = vld [vmem:[%s377 + $0x1290] sm:$0xff]
        %v1172 = vld [vmem:[%s377 + $0x1298] sm:$0xff]
        %v1173 = vld [vmem:[%s377 + $0x12a0] sm:$0xff]
        %v1174 = vld [vmem:[%s377 + $0x12a8] sm:$0xff]
        %v1175 = vld [vmem:[%s377 + $0x12b0] sm:$0xff]
        %v1176 = vld [vmem:[%s377 + $0x12b8] sm:$0xff]
        %v1177 = vld [vmem:[%s377 + $0x12c0] sm:$0xff]
        %v1178 = vld [vmem:[%s377 + $0x12c8] sm:$0xff]
        %v1179 = vld [vmem:[%s377 + $0x12d0] sm:$0xff]
        %v1180 = vld [vmem:[%s377 + $0x12d8] sm:$0xff]
        %v1181 = vld [vmem:[%s377 + $0x12e0] sm:$0xff]
        %v1182 = vld [vmem:[%s377 + $0x12e8] sm:$0xff]
        %v1183 = vld [vmem:[%s377 + $0x12f0] sm:$0xff]
        %v1184 = vld [vmem:[%s377 + $0x12f8] sm:$0xff]
        %v1185 = vld [vmem:[%s377 + $0x1300] sm:$0xff]
        %v1186 = vld [vmem:[%s377 + $0x1308] sm:$0xff]
        %v1187 = vld [vmem:[%s377 + $0x1310] sm:$0xff]
        %v1188 = vld [vmem:[%s377 + $0x1318] sm:$0xff]
        %v1189 = vld [vmem:[%s377 + $0x1320] sm:$0xff]
        %v1190 = vld [vmem:[%s377 + $0x1328] sm:$0xff]
        %v1191 = vld [vmem:[%s377 + $0x1330] sm:$0xff]
        %v1192 = vld [vmem:[%s377 + $0x1338] sm:$0xff]
        %v1193 = vld [vmem:[%s377 + $0x1340] sm:$0xff]
        %v1194 = vld [vmem:[%s377 + $0x1348] sm:$0xff]
        %v1195 = vld [vmem:[%s377 + $0x1350] sm:$0xff]
        %v1196 = vld [vmem:[%s377 + $0x1358] sm:$0xff]
        %v1197 = vld [vmem:[%s377 + $0x1360] sm:$0xff]
        %v1198 = vld [vmem:[%s377 + $0x1368] sm:$0xff]
        %v1199 = vld [vmem:[%s377 + $0x1370] sm:$0xff]
        %v1200 = vld [vmem:[%s377 + $0x1378] sm:$0xff]
        %v1201 = vld [vmem:[%s377 + $0x1380] sm:$0xff]
        %v1202 = vld [vmem:[%s377 + $0x1388] sm:$0xff]
        %v1203 = vld [vmem:[%s377 + $0x1390] sm:$0xff]
        %v1204 = vld [vmem:[%s377 + $0x1398] sm:$0xff]
        %v1205 = vld [vmem:[%s377 + $0x13a0] sm:$0xff]
        %v1206 = vld [vmem:[%s377 + $0x13a8] sm:$0xff]
        %v1207 = vld [vmem:[%s377 + $0x13b0] sm:$0xff]
        %v1208 = vld [vmem:[%s377 + $0x13b8] sm:$0xff]
        %v1209 = vld [vmem:[%s377 + $0x13c0] sm:$0xff]
        %v1210 = vld [vmem:[%s377 + $0x13c8] sm:$0xff]
        %v1211 = vld [vmem:[%s377 + $0x13d0] sm:$0xff]
        %v1212 = vld [vmem:[%s377 + $0x13d8] sm:$0xff]
        %v1213 = vld [vmem:[%s377 + $0x13e0] sm:$0xff]
        %v1214 = vld [vmem:[%s377 + $0x13e8] sm:$0xff]
        %v1215 = vld [vmem:[%s377 + $0x13f0] sm:$0xff]
        %v1216 = vld [vmem:[%s377 + $0x13f8] sm:$0xff]
        %v1217 = vld [vmem:[%s377 + $0x1400] sm:$0xff]
        %v1218 = vld [vmem:[%s377 + $0x1408] sm:$0xff]
        %v1219 = vld [vmem:[%s377 + $0x1410] sm:$0xff]
        %v1220 = vld [vmem:[%s377 + $0x1418] sm:$0xff]
        %v1221 = vld [vmem:[%s377 + $0x1420] sm:$0xff]
        %v1222 = vld [vmem:[%s377 + $0x1428] sm:$0xff]
        %v1223 = vld [vmem:[%s377 + $0x1430] sm:$0xff]
        %v1224 = vld [vmem:[%s377 + $0x1438] sm:$0xff]
        %v1225 = vld [vmem:[%s377 + $0x1440] sm:$0xff]
        %v1226 = vld [vmem:[%s377 + $0x1448] sm:$0xff]
        %v1227 = vld [vmem:[%s377 + $0x1450] sm:$0xff]
        %v1228 = vld [vmem:[%s377 + $0x1458] sm:$0xff]
        %v1229 = vld [vmem:[%s377 + $0x1460] sm:$0xff]
        %v1230 = vld [vmem:[%s377 + $0x1468] sm:$0xff]
        %v1231 = vld [vmem:[%s377 + $0x1470] sm:$0xff]
        %v1232 = vld [vmem:[%s377 + $0x1478] sm:$0xff]
        %v1233 = vld [vmem:[%s377 + $0x1480] sm:$0xff]
        %v1234 = vld [vmem:[%s377 + $0x1488] sm:$0xff]
        %v1235 = vld [vmem:[%s377 + $0x1490] sm:$0xff]
        %v1236 = vld [vmem:[%s377 + $0x1498] sm:$0xff]
        %v1237 = vld [vmem:[%s377 + $0x14a0] sm:$0xff]
        %v1238 = vld [vmem:[%s377 + $0x14a8] sm:$0xff]
        %v1239 = vld [vmem:[%s377 + $0x14b0] sm:$0xff]
        %v1240 = vld [vmem:[%s377 + $0x14b8] sm:$0xff]
        %v1241 = vld [vmem:[%s377 + $0x14c0] sm:$0xff]
        %v1242 = vld [vmem:[%s377 + $0x14c8] sm:$0xff]
        %v1243 = vld [vmem:[%s377 + $0x14d0] sm:$0xff]
        %v1244 = vld [vmem:[%s377 + $0x14d8] sm:$0xff]
        %v1245 = vld [vmem:[%s377 + $0x14e0] sm:$0xff]
        %v1246 = vld [vmem:[%s377 + $0x14e8] sm:$0xff]
        %v1247 = vld [vmem:[%s377 + $0x14f0] sm:$0xff]
        %v1248 = vld [vmem:[%s377 + $0x14f8] sm:$0xff]
        %v1249 = vld [vmem:[%s377 + $0x1500] sm:$0xff]
        %v1250 = vld [vmem:[%s377 + $0x1508] sm:$0xff]
        %v1251 = vld [vmem:[%s377 + $0x1510] sm:$0xff]
        %v1252 = vld [vmem:[%s377 + $0x1518] sm:$0xff]
        %v1253 = vld [vmem:[%s377 + $0x1520] sm:$0xff]
        %v1254 = vld [vmem:[%s377 + $0x1528] sm:$0xff]
        %v1255 = vld [vmem:[%s377 + $0x1530] sm:$0xff]
        %v1256 = vld [vmem:[%s377 + $0x1538] sm:$0xff]
        %v1257 = vld [vmem:[%s377 + $0x1540] sm:$0xff]
        %v1258 = vld [vmem:[%s377 + $0x1548] sm:$0xff]
        %v1259 = vld [vmem:[%s377 + $0x1550] sm:$0xff]
        %v1260 = vld [vmem:[%s377 + $0x1558] sm:$0xff]
        %v1261 = vld [vmem:[%s377 + $0x1560] sm:$0xff]
        %v1262 = vld [vmem:[%s377 + $0x1568] sm:$0xff]
        %v1263 = vld [vmem:[%s377 + $0x1570] sm:$0xff]
        %v1264 = vld [vmem:[%s377 + $0x1578] sm:$0xff]
        %v1265 = vld [vmem:[%s377 + $0x1580] sm:$0xff]
        %v1266 = vld [vmem:[%s377 + $0x1588] sm:$0xff]
        %v1267 = vld [vmem:[%s377 + $0x1590] sm:$0xff]
        %v1268 = vld [vmem:[%s377 + $0x1598] sm:$0xff]
        %v1269 = vld [vmem:[%s377 + $0x15a0] sm:$0xff]
        %v1270 = vld [vmem:[%s377 + $0x15a8] sm:$0xff]
        %v1271 = vld [vmem:[%s377 + $0x15b0] sm:$0xff]
        %v1272 = vld [vmem:[%s377 + $0x15b8] sm:$0xff]
        %v1273 = vld [vmem:[%s377 + $0x15c0] sm:$0xff]
        %v1274 = vld [vmem:[%s377 + $0x15c8] sm:$0xff]
        %v1275 = vld [vmem:[%s377 + $0x15d0] sm:$0xff]
        %v1276 = vld [vmem:[%s377 + $0x15d8] sm:$0xff]
        %v1277 = vld [vmem:[%s377 + $0x15e0] sm:$0xff]
        %v1278 = vld [vmem:[%s377 + $0x15e8] sm:$0xff]
        %v1279 = vld [vmem:[%s377 + $0x15f0] sm:$0xff]
        %v1280 = vld [vmem:[%s377 + $0x15f8] sm:$0xff]
        %v1281 = vld [vmem:[%s377 + $0x1600] sm:$0xff]
        %v1282 = vld [vmem:[%s377 + $0x1608] sm:$0xff]
        %v1283 = vld [vmem:[%s377 + $0x1610] sm:$0xff]
        %v1284 = vld [vmem:[%s377 + $0x1618] sm:$0xff]
        %v1285 = vld [vmem:[%s377 + $0x1620] sm:$0xff]
        %v1286 = vld [vmem:[%s377 + $0x1628] sm:$0xff]
        %v1287 = vld [vmem:[%s377 + $0x1630] sm:$0xff]
        %v1288 = vld [vmem:[%s377 + $0x1638] sm:$0xff]
        %v1289 = vld [vmem:[%s377 + $0x1640] sm:$0xff]
        %v1290 = vld [vmem:[%s377 + $0x1648] sm:$0xff]
        %v1291 = vld [vmem:[%s377 + $0x1650] sm:$0xff]
        %v1292 = vld [vmem:[%s377 + $0x1658] sm:$0xff]
        %v1293 = vld [vmem:[%s377 + $0x1660] sm:$0xff]
        %v1294 = vld [vmem:[%s377 + $0x1668] sm:$0xff]
        %v1295 = vld [vmem:[%s377 + $0x1670] sm:$0xff]
        %v1296 = vld [vmem:[%s377 + $0x1678] sm:$0xff]
        %v1297 = vld [vmem:[%s377 + $0x1680] sm:$0xff]
        %v1298 = vld [vmem:[%s377 + $0x1688] sm:$0xff]
        %v1299 = vld [vmem:[%s377 + $0x1690] sm:$0xff]
        %v1300 = vld [vmem:[%s377 + $0x1698] sm:$0xff]
        %v1301 = vld [vmem:[%s377 + $0x16a0] sm:$0xff]
        %v1302 = vld [vmem:[%s377 + $0x16a8] sm:$0xff]
        %v1303 = vld [vmem:[%s377 + $0x16b0] sm:$0xff]
        %v1304 = vld [vmem:[%s377 + $0x16b8] sm:$0xff]
        %v1305 = vld [vmem:[%s377 + $0x16c0] sm:$0xff]
        %v1306 = vld [vmem:[%s377 + $0x16c8] sm:$0xff]
        %v1307 = vld [vmem:[%s377 + $0x16d0] sm:$0xff]
        %v1308 = vld [vmem:[%s377 + $0x16d8] sm:$0xff]
        %v1309 = vld [vmem:[%s377 + $0x16e0] sm:$0xff]
        %v1310 = vld [vmem:[%s377 + $0x16e8] sm:$0xff]
        %v1311 = vld [vmem:[%s377 + $0x16f0] sm:$0xff]
        %v1312 = vld [vmem:[%s377 + $0x16f8] sm:$0xff]
        %v1313 = vld [vmem:[%s377 + $0x1700] sm:$0xff]
        %v1314 = vld [vmem:[%s377 + $0x1708] sm:$0xff]
        %v1315 = vld [vmem:[%s377 + $0x1710] sm:$0xff]
        %v1316 = vld [vmem:[%s377 + $0x1718] sm:$0xff]
        %v1317 = vld [vmem:[%s377 + $0x1720] sm:$0xff]
        %v1318 = vld [vmem:[%s377 + $0x1728] sm:$0xff]
        %v1319 = vld [vmem:[%s377 + $0x1730] sm:$0xff]
        %v1320 = vld [vmem:[%s377 + $0x1738] sm:$0xff]
        %v1321 = vld [vmem:[%s377 + $0x1740] sm:$0xff]
        %v1322 = vld [vmem:[%s377 + $0x1748] sm:$0xff]
        %v1323 = vld [vmem:[%s377 + $0x1750] sm:$0xff]
        %v1324 = vld [vmem:[%s377 + $0x1758] sm:$0xff]
        %v1325 = vld [vmem:[%s377 + $0x1760] sm:$0xff]
        %v1326 = vld [vmem:[%s377 + $0x1768] sm:$0xff]
        %v1327 = vld [vmem:[%s377 + $0x1770] sm:$0xff]
        %v1328 = vld [vmem:[%s377 + $0x1778] sm:$0xff]
        %v1329 = vld [vmem:[%s377 + $0x1780] sm:$0xff]
        %v1330 = vld [vmem:[%s377 + $0x1788] sm:$0xff]
        %v1331 = vld [vmem:[%s377 + $0x1790] sm:$0xff]
        %v1332 = vld [vmem:[%s377 + $0x1798] sm:$0xff]
        %v1333 = vld [vmem:[%s377 + $0x17a0] sm:$0xff]
        %v1334 = vld [vmem:[%s377 + $0x17a8] sm:$0xff]
        %v1335 = vld [vmem:[%s377 + $0x17b0] sm:$0xff]
        %v1336 = vld [vmem:[%s377 + $0x17b8] sm:$0xff]
        %v1337 = vld [vmem:[%s377 + $0x17c0] sm:$0xff]
        %v1338 = vld [vmem:[%s377 + $0x17c8] sm:$0xff]
        %v1339 = vld [vmem:[%s377 + $0x17d0] sm:$0xff]
        %v1340 = vld [vmem:[%s377 + $0x17d8] sm:$0xff]
        %v1341 = vld [vmem:[%s377 + $0x17e0] sm:$0xff]
        %v1342 = vld [vmem:[%s377 + $0x17e8] sm:$0xff]
        %v1343 = vld [vmem:[%s377 + $0x17f0] sm:$0xff]
        %v1344 = vld [vmem:[%s377 + $0x17f8] sm:$0xff]
        %v1345 = vld [vmem:[%s377 + $0x1800] sm:$0xff]
        %v1346 = vld [vmem:[%s377 + $0x1808] sm:$0xff]
        %v1347 = vld [vmem:[%s377 + $0x1810] sm:$0xff]
        %v1348 = vld [vmem:[%s377 + $0x1818] sm:$0xff]
        %v1349 = vld [vmem:[%s377 + $0x1820] sm:$0xff]
        %v1350 = vld [vmem:[%s377 + $0x1828] sm:$0xff]
        %v1351 = vld [vmem:[%s377 + $0x1830] sm:$0xff]
        %v1352 = vld [vmem:[%s377 + $0x1838] sm:$0xff]
        %v1353 = vld [vmem:[%s377 + $0x1840] sm:$0xff]
        %v1354 = vld [vmem:[%s377 + $0x1848] sm:$0xff]
        %v1355 = vld [vmem:[%s377 + $0x1850] sm:$0xff]
        %v1356 = vld [vmem:[%s377 + $0x1858] sm:$0xff]
        %v1357 = vld [vmem:[%s377 + $0x1860] sm:$0xff]
        %v1358 = vld [vmem:[%s377 + $0x1868] sm:$0xff]
        %v1359 = vld [vmem:[%s377 + $0x1870] sm:$0xff]
        %v1360 = vld [vmem:[%s377 + $0x1878] sm:$0xff]
        %v1361 = vld [vmem:[%s377 + $0x1880] sm:$0xff]
        %v1362 = vld [vmem:[%s377 + $0x1888] sm:$0xff]
        %v1363 = vld [vmem:[%s377 + $0x1890] sm:$0xff]
        %v1364 = vld [vmem:[%s377 + $0x1898] sm:$0xff]
        %v1365 = vld [vmem:[%s377 + $0x18a0] sm:$0xff]
        %v1366 = vld [vmem:[%s377 + $0x18a8] sm:$0xff]
        %v1367 = vld [vmem:[%s377 + $0x18b0] sm:$0xff]
        %v1368 = vld [vmem:[%s377 + $0x18b8] sm:$0xff]
        %v1369 = vld [vmem:[%s377 + $0x18c0] sm:$0xff]
        %v1370 = vld [vmem:[%s377 + $0x18c8] sm:$0xff]
        %v1371 = vld [vmem:[%s377 + $0x18d0] sm:$0xff]
        %v1372 = vld [vmem:[%s377 + $0x18d8] sm:$0xff]
        %v1373 = vld [vmem:[%s377 + $0x18e0] sm:$0xff]
        %v1374 = vld [vmem:[%s377 + $0x18e8] sm:$0xff]
        %v1375 = vld [vmem:[%s377 + $0x18f0] sm:$0xff]
        %v1376 = vld [vmem:[%s377 + $0x18f8] sm:$0xff]
        %v1377 = vld [vmem:[%s387] sm:$0xf]
        %v1379 = vperm.slane %v1377, 0
        %v1380 = vperm.slane %v1377, 1
        %v1381 = vperm.slane %v1377, 2
        %v1382 = vperm.slane %v1377, 3
        %v2187 = vunpack.c.l.b16 %v577
        %v2188 = vunpack.c.h.b16 %v577
        %v2189 = vunpack.c.l.b16 %v578
        %v2190 = vunpack.c.h.b16 %v578
        %v2191 = vunpack.c.l.b16 %v579
        %v2192 = vunpack.c.h.b16 %v579
        %v2193 = vunpack.c.l.b16 %v580
        %v2194 = vunpack.c.h.b16 %v580
        %v2195 = vunpack.c.l.b16 %v581
        %v2196 = vunpack.c.h.b16 %v581
        %v2197 = vunpack.c.l.b16 %v582
        %v2198 = vunpack.c.h.b16 %v582
        %v2199 = vunpack.c.l.b16 %v583
        %v2200 = vunpack.c.h.b16 %v583
        %v2201 = vunpack.c.l.b16 %v584
        %v2202 = vunpack.c.h.b16 %v584
        %v2203 = vunpack.c.l.b16 %v585
        %v2204 = vunpack.c.h.b16 %v585
        %v2205 = vunpack.c.l.b16 %v586
        %v2206 = vunpack.c.h.b16 %v586
        %v2207 = vunpack.c.l.b16 %v587
        %v2208 = vunpack.c.h.b16 %v587
        %v2209 = vunpack.c.l.b16 %v588
        %v2210 = vunpack.c.h.b16 %v588
        %v2211 = vunpack.c.l.b16 %v589
        %v2212 = vunpack.c.h.b16 %v589
        %v2213 = vunpack.c.l.b16 %v590
        %v2214 = vunpack.c.h.b16 %v590
        %v2215 = vunpack.c.l.b16 %v591
        %v2216 = vunpack.c.h.b16 %v591
        %v2217 = vunpack.c.l.b16 %v592
        %v2218 = vunpack.c.h.b16 %v592
        %v2219 = vunpack.c.l.b16 %v593
        %v2220 = vunpack.c.h.b16 %v593
        %v2221 = vunpack.c.l.b16 %v594
        %v2222 = vunpack.c.h.b16 %v594
        %v2223 = vunpack.c.l.b16 %v595
        %v2224 = vunpack.c.h.b16 %v595
        %v2225 = vunpack.c.l.b16 %v596
        %v2226 = vunpack.c.h.b16 %v596
        %v2227 = vunpack.c.l.b16 %v597
        %v2228 = vunpack.c.h.b16 %v597
        %v2229 = vunpack.c.l.b16 %v598
        %v2230 = vunpack.c.h.b16 %v598
        %v2231 = vunpack.c.l.b16 %v599
        %v2232 = vunpack.c.h.b16 %v599
        %v2233 = vunpack.c.l.b16 %v600
        %v2234 = vunpack.c.h.b16 %v600
        %v2235 = vunpack.c.l.b16 %v601
        %v2236 = vunpack.c.h.b16 %v601
        %v2237 = vunpack.c.l.b16 %v602
        %v2238 = vunpack.c.h.b16 %v602
        %v2239 = vunpack.c.l.b16 %v603
        %v2240 = vunpack.c.h.b16 %v603
        %v2241 = vunpack.c.l.b16 %v604
        %v2242 = vunpack.c.h.b16 %v604
        %v2243 = vunpack.c.l.b16 %v605
        %v2244 = vunpack.c.h.b16 %v605
        %v2245 = vunpack.c.l.b16 %v606
        %v2246 = vunpack.c.h.b16 %v606
        %v2247 = vunpack.c.l.b16 %v607
        %v2248 = vunpack.c.h.b16 %v607
        %v2249 = vunpack.c.l.b16 %v608
        %v2250 = vunpack.c.h.b16 %v608
        %v2251 = vunpack.c.l.b16 %v609
        %v2252 = vunpack.c.h.b16 %v609
        %v2253 = vunpack.c.l.b16 %v610
        %v2254 = vunpack.c.h.b16 %v610
        %v2255 = vunpack.c.l.b16 %v611
        %v2256 = vunpack.c.h.b16 %v611
        %v2257 = vunpack.c.l.b16 %v612
        %v2258 = vunpack.c.h.b16 %v612
        %v2259 = vunpack.c.l.b16 %v613
        %v2260 = vunpack.c.h.b16 %v613
        %v2261 = vunpack.c.l.b16 %v614
        %v2262 = vunpack.c.h.b16 %v614
        %v2263 = vunpack.c.l.b16 %v615
        %v2264 = vunpack.c.h.b16 %v615
        %v2265 = vunpack.c.l.b16 %v616
        %v2266 = vunpack.c.h.b16 %v616
        %v2267 = vunpack.c.l.b16 %v617
        %v2268 = vunpack.c.h.b16 %v617
        %v2269 = vunpack.c.l.b16 %v618
        %v2270 = vunpack.c.h.b16 %v618
        %v2271 = vunpack.c.l.b16 %v619
        %v2272 = vunpack.c.h.b16 %v619
        %v2273 = vunpack.c.l.b16 %v620
        %v2274 = vunpack.c.h.b16 %v620
        %v2275 = vunpack.c.l.b16 %v621
        %v2276 = vunpack.c.h.b16 %v621
        %v2277 = vunpack.c.l.b16 %v622
        %v2278 = vunpack.c.h.b16 %v622
        %v2279 = vunpack.c.l.b16 %v623
        %v2280 = vunpack.c.h.b16 %v623
        %v2281 = vunpack.c.l.b16 %v624
        %v2282 = vunpack.c.h.b16 %v624
        %v2283 = vunpack.c.l.b16 %v625
        %v2284 = vunpack.c.h.b16 %v625
        %v2285 = vunpack.c.l.b16 %v626
        %v2286 = vunpack.c.h.b16 %v626
        %v2287 = vunpack.c.l.b16 %v627
        %v2288 = vunpack.c.h.b16 %v627
        %v2289 = vunpack.c.l.b16 %v628
        %v2290 = vunpack.c.h.b16 %v628
        %v2291 = vunpack.c.l.b16 %v629
        %v2292 = vunpack.c.h.b16 %v629
        %v2293 = vunpack.c.l.b16 %v630
        %v2294 = vunpack.c.h.b16 %v630
        %v2295 = vunpack.c.l.b16 %v631
        %v2296 = vunpack.c.h.b16 %v631
        %v2297 = vunpack.c.l.b16 %v632
        %v2298 = vunpack.c.h.b16 %v632
        %v2299 = vunpack.c.l.b16 %v633
        %v2300 = vunpack.c.h.b16 %v633
        %v2301 = vunpack.c.l.b16 %v634
        %v2302 = vunpack.c.h.b16 %v634
        %v2303 = vunpack.c.l.b16 %v635
        %v2304 = vunpack.c.h.b16 %v635
        %v2305 = vunpack.c.l.b16 %v636
        %v2306 = vunpack.c.h.b16 %v636
        %v2307 = vunpack.c.l.b16 %v637
        %v2308 = vunpack.c.h.b16 %v637
        %v2309 = vunpack.c.l.b16 %v638
        %v2310 = vunpack.c.h.b16 %v638
        %v2311 = vunpack.c.l.b16 %v639
        %v2312 = vunpack.c.h.b16 %v639
        %v2313 = vunpack.c.l.b16 %v640
        %v2314 = vunpack.c.h.b16 %v640
        %v2315 = vunpack.c.l.b16 %v641
        %v2316 = vunpack.c.h.b16 %v641
        %v2317 = vunpack.c.l.b16 %v642
        %v2318 = vunpack.c.h.b16 %v642
        %v2319 = vunpack.c.l.b16 %v643
        %v2320 = vunpack.c.h.b16 %v643
        %v2321 = vunpack.c.l.b16 %v644
        %v2322 = vunpack.c.h.b16 %v644
        %v2323 = vunpack.c.l.b16 %v645
        %v2324 = vunpack.c.h.b16 %v645
        %v2325 = vunpack.c.l.b16 %v646
        %v2326 = vunpack.c.h.b16 %v646
        %v2327 = vunpack.c.l.b16 %v647
        %v2328 = vunpack.c.h.b16 %v647
        %v2329 = vunpack.c.l.b16 %v648
        %v2330 = vunpack.c.h.b16 %v648
        %v2331 = vunpack.c.l.b16 %v649
        %v2332 = vunpack.c.h.b16 %v649
        %v2333 = vunpack.c.l.b16 %v650
        %v2334 = vunpack.c.h.b16 %v650
        %v2335 = vunpack.c.l.b16 %v651
        %v2336 = vunpack.c.h.b16 %v651
        %v2337 = vunpack.c.l.b16 %v652
        %v2338 = vunpack.c.h.b16 %v652
        %v2339 = vunpack.c.l.b16 %v653
        %v2340 = vunpack.c.h.b16 %v653
        %v2341 = vunpack.c.l.b16 %v654
        %v2342 = vunpack.c.h.b16 %v654
        %v2343 = vunpack.c.l.b16 %v655
        %v2344 = vunpack.c.h.b16 %v655
        %v2345 = vunpack.c.l.b16 %v656
        %v2346 = vunpack.c.h.b16 %v656
        %v2347 = vunpack.c.l.b16 %v657
        %v2348 = vunpack.c.h.b16 %v657
        %v2349 = vunpack.c.l.b16 %v658
        %v2350 = vunpack.c.h.b16 %v658
        %v2351 = vunpack.c.l.b16 %v659
        %v2352 = vunpack.c.h.b16 %v659
        %v2353 = vunpack.c.l.b16 %v660
        %v2354 = vunpack.c.h.b16 %v660
        %v2355 = vunpack.c.l.b16 %v661
        %v2356 = vunpack.c.h.b16 %v661
        %v2357 = vunpack.c.l.b16 %v662
        %v2358 = vunpack.c.h.b16 %v662
        %v2359 = vunpack.c.l.b16 %v663
        %v2360 = vunpack.c.h.b16 %v663
        %v2361 = vunpack.c.l.b16 %v664
        %v2362 = vunpack.c.h.b16 %v664
        %v2363 = vunpack.c.l.b16 %v665
        %v2364 = vunpack.c.h.b16 %v665
        %v2365 = vunpack.c.l.b16 %v666
        %v2366 = vunpack.c.h.b16 %v666
        %v2367 = vunpack.c.l.b16 %v667
        %v2368 = vunpack.c.h.b16 %v667
        %v2369 = vunpack.c.l.b16 %v668
        %v2370 = vunpack.c.h.b16 %v668
        %v2371 = vunpack.c.l.b16 %v669
        %v2372 = vunpack.c.h.b16 %v669
        %v2373 = vunpack.c.l.b16 %v670
        %v2374 = vunpack.c.h.b16 %v670
        %v2375 = vunpack.c.l.b16 %v671
        %v2376 = vunpack.c.h.b16 %v671
        %v2377 = vunpack.c.l.b16 %v672
        %v2378 = vunpack.c.h.b16 %v672
        %v2379 = vunpack.c.l.b16 %v673
        %v2380 = vunpack.c.h.b16 %v673
        %v2381 = vunpack.c.l.b16 %v674
        %v2382 = vunpack.c.h.b16 %v674
        %v2383 = vunpack.c.l.b16 %v675
        %v2384 = vunpack.c.h.b16 %v675
        %v2385 = vunpack.c.l.b16 %v676
        %v2386 = vunpack.c.h.b16 %v676
        %v2387 = vunpack.c.l.b16 %v677
        %v2388 = vunpack.c.h.b16 %v677
        %v2389 = vunpack.c.l.b16 %v678
        %v2390 = vunpack.c.h.b16 %v678
        %v2391 = vunpack.c.l.b16 %v679
        %v2392 = vunpack.c.h.b16 %v679
        %v2393 = vunpack.c.l.b16 %v680
        %v2394 = vunpack.c.h.b16 %v680
        %v2395 = vunpack.c.l.b16 %v681
        %v2396 = vunpack.c.h.b16 %v681
        %v2397 = vunpack.c.l.b16 %v682
        %v2398 = vunpack.c.h.b16 %v682
        %v2399 = vunpack.c.l.b16 %v683
        %v2400 = vunpack.c.h.b16 %v683
        %v2401 = vunpack.c.l.b16 %v684
        %v2402 = vunpack.c.h.b16 %v684
        %v2403 = vunpack.c.l.b16 %v685
        %v2404 = vunpack.c.h.b16 %v685
        %v2405 = vunpack.c.l.b16 %v686
        %v2406 = vunpack.c.h.b16 %v686
        %v2407 = vunpack.c.l.b16 %v687
        %v2408 = vunpack.c.h.b16 %v687
        %v2409 = vunpack.c.l.b16 %v688
        %v2410 = vunpack.c.h.b16 %v688
        %v2411 = vunpack.c.l.b16 %v689
        %v2412 = vunpack.c.h.b16 %v689
        %v2413 = vunpack.c.l.b16 %v690
        %v2414 = vunpack.c.h.b16 %v690
        %v2415 = vunpack.c.l.b16 %v691
        %v2416 = vunpack.c.h.b16 %v691
        %v2417 = vunpack.c.l.b16 %v692
        %v2418 = vunpack.c.h.b16 %v692
        %v2419 = vunpack.c.l.b16 %v693
        %v2420 = vunpack.c.h.b16 %v693
        %v2421 = vunpack.c.l.b16 %v694
        %v2422 = vunpack.c.h.b16 %v694
        %v2423 = vunpack.c.l.b16 %v695
        %v2424 = vunpack.c.h.b16 %v695
        %v2425 = vunpack.c.l.b16 %v696
        %v2426 = vunpack.c.h.b16 %v696
        %v2427 = vunpack.c.l.b16 %v697
        %v2428 = vunpack.c.h.b16 %v697
        %v2429 = vunpack.c.l.b16 %v698
        %v2430 = vunpack.c.h.b16 %v698
        %v2431 = vunpack.c.l.b16 %v699
        %v2432 = vunpack.c.h.b16 %v699
        %v2433 = vunpack.c.l.b16 %v700
        %v2434 = vunpack.c.h.b16 %v700
        %v2435 = vunpack.c.l.b16 %v701
        %v2436 = vunpack.c.h.b16 %v701
        %v2437 = vunpack.c.l.b16 %v702
        %v2438 = vunpack.c.h.b16 %v702
        %v2439 = vunpack.c.l.b16 %v703
        %v2440 = vunpack.c.h.b16 %v703
        %v2441 = vunpack.c.l.b16 %v704
        %v2442 = vunpack.c.h.b16 %v704
        %v2443 = vunpack.c.l.b16 %v705
        %v2444 = vunpack.c.h.b16 %v705
        %v2445 = vunpack.c.l.b16 %v706
        %v2446 = vunpack.c.h.b16 %v706
        %v2447 = vunpack.c.l.b16 %v707
        %v2448 = vunpack.c.h.b16 %v707
        %v2449 = vunpack.c.l.b16 %v708
        %v2450 = vunpack.c.h.b16 %v708
        %v2451 = vunpack.c.l.b16 %v709
        %v2452 = vunpack.c.h.b16 %v709
        %v2453 = vunpack.c.l.b16 %v710
        %v2454 = vunpack.c.h.b16 %v710
        %v2455 = vunpack.c.l.b16 %v711
        %v2456 = vunpack.c.h.b16 %v711
        %v2457 = vunpack.c.l.b16 %v712
        %v2458 = vunpack.c.h.b16 %v712
        %v2459 = vunpack.c.l.b16 %v713
        %v2460 = vunpack.c.h.b16 %v713
        %v2461 = vunpack.c.l.b16 %v714
        %v2462 = vunpack.c.h.b16 %v714
        %v2463 = vunpack.c.l.b16 %v715
        %v2464 = vunpack.c.h.b16 %v715
        %v2465 = vunpack.c.l.b16 %v716
        %v2466 = vunpack.c.h.b16 %v716
        %v2467 = vunpack.c.l.b16 %v717
        %v2468 = vunpack.c.h.b16 %v717
        %v2469 = vunpack.c.l.b16 %v718
        %v2470 = vunpack.c.h.b16 %v718
        %v2471 = vunpack.c.l.b16 %v719
        %v2472 = vunpack.c.h.b16 %v719
        %v2473 = vunpack.c.l.b16 %v720
        %v2474 = vunpack.c.h.b16 %v720
        %v2475 = vunpack.c.l.b16 %v721
        %v2476 = vunpack.c.h.b16 %v721
        %v2477 = vunpack.c.l.b16 %v722
        %v2478 = vunpack.c.h.b16 %v722
        %v2479 = vunpack.c.l.b16 %v723
        %v2480 = vunpack.c.h.b16 %v723
        %v2481 = vunpack.c.l.b16 %v724
        %v2482 = vunpack.c.h.b16 %v724
        %v2483 = vunpack.c.l.b16 %v725
        %v2484 = vunpack.c.h.b16 %v725
        %v2485 = vunpack.c.l.b16 %v726
        %v2486 = vunpack.c.h.b16 %v726
        %v2487 = vunpack.c.l.b16 %v727
        %v2488 = vunpack.c.h.b16 %v727
        %v2489 = vunpack.c.l.b16 %v728
        %v2490 = vunpack.c.h.b16 %v728
        %v2491 = vunpack.c.l.b16 %v729
        %v2492 = vunpack.c.h.b16 %v729
        %v2493 = vunpack.c.l.b16 %v730
        %v2494 = vunpack.c.h.b16 %v730
        %v2495 = vunpack.c.l.b16 %v731
        %v2496 = vunpack.c.h.b16 %v731
        %v2497 = vunpack.c.l.b16 %v732
        %v2498 = vunpack.c.h.b16 %v732
        %v2499 = vunpack.c.l.b16 %v733
        %v2500 = vunpack.c.h.b16 %v733
        %v2501 = vunpack.c.l.b16 %v734
        %v2502 = vunpack.c.h.b16 %v734
        %v2503 = vunpack.c.l.b16 %v735
        %v2504 = vunpack.c.h.b16 %v735
        %v2505 = vunpack.c.l.b16 %v736
        %v2506 = vunpack.c.h.b16 %v736
        %v2507 = vunpack.c.l.b16 %v737
        %v2508 = vunpack.c.h.b16 %v737
        %v2509 = vunpack.c.l.b16 %v738
        %v2510 = vunpack.c.h.b16 %v738
        %v2511 = vunpack.c.l.b16 %v739
        %v2512 = vunpack.c.h.b16 %v739
        %v2513 = vunpack.c.l.b16 %v740
        %v2514 = vunpack.c.h.b16 %v740
        %v2515 = vunpack.c.l.b16 %v741
        %v2516 = vunpack.c.h.b16 %v741
        %v2517 = vunpack.c.l.b16 %v742
        %v2518 = vunpack.c.h.b16 %v742
        %v2519 = vunpack.c.l.b16 %v743
        %v2520 = vunpack.c.h.b16 %v743
        %v2521 = vunpack.c.l.b16 %v744
        %v2522 = vunpack.c.h.b16 %v744
        %v2523 = vunpack.c.l.b16 %v745
        %v2524 = vunpack.c.h.b16 %v745
        %v2525 = vunpack.c.l.b16 %v746
        %v2526 = vunpack.c.h.b16 %v746
        %v2527 = vunpack.c.l.b16 %v747
        %v2528 = vunpack.c.h.b16 %v747
        %v2529 = vunpack.c.l.b16 %v748
        %v2530 = vunpack.c.h.b16 %v748
        %v2531 = vunpack.c.l.b16 %v749
        %v2532 = vunpack.c.h.b16 %v749
        %v2533 = vunpack.c.l.b16 %v750
        %v2534 = vunpack.c.h.b16 %v750
        %v2535 = vunpack.c.l.b16 %v751
        %v2536 = vunpack.c.h.b16 %v751
        %v2537 = vunpack.c.l.b16 %v752
        %v2538 = vunpack.c.h.b16 %v752
        %v2539 = vunpack.c.l.b16 %v753
        %v2540 = vunpack.c.h.b16 %v753
        %v2541 = vunpack.c.l.b16 %v754
        %v2542 = vunpack.c.h.b16 %v754
        %v2543 = vunpack.c.l.b16 %v755
        %v2544 = vunpack.c.h.b16 %v755
        %v2545 = vunpack.c.l.b16 %v756
        %v2546 = vunpack.c.h.b16 %v756
        %v2547 = vunpack.c.l.b16 %v757
        %v2548 = vunpack.c.h.b16 %v757
        %v2549 = vunpack.c.l.b16 %v758
        %v2550 = vunpack.c.h.b16 %v758
        %v2551 = vunpack.c.l.b16 %v759
        %v2552 = vunpack.c.h.b16 %v759
        %v2553 = vunpack.c.l.b16 %v760
        %v2554 = vunpack.c.h.b16 %v760
        %v2555 = vunpack.c.l.b16 %v761
        %v2556 = vunpack.c.h.b16 %v761
        %v2557 = vunpack.c.l.b16 %v762
        %v2558 = vunpack.c.h.b16 %v762
        %v2559 = vunpack.c.l.b16 %v763
        %v2560 = vunpack.c.h.b16 %v763
        %v2561 = vunpack.c.l.b16 %v764
        %v2562 = vunpack.c.h.b16 %v764
        %v2563 = vunpack.c.l.b16 %v765
        %v2564 = vunpack.c.h.b16 %v765
        %v2565 = vunpack.c.l.b16 %v766
        %v2566 = vunpack.c.h.b16 %v766
        %v2567 = vunpack.c.l.b16 %v767
        %v2568 = vunpack.c.h.b16 %v767
        %v2569 = vunpack.c.l.b16 %v768
        %v2570 = vunpack.c.h.b16 %v768
        %v2571 = vunpack.c.l.b16 %v769
        %v2572 = vunpack.c.h.b16 %v769
        %v2573 = vunpack.c.l.b16 %v770
        %v2574 = vunpack.c.h.b16 %v770
        %v2575 = vunpack.c.l.b16 %v771
        %v2576 = vunpack.c.h.b16 %v771
        %v2577 = vunpack.c.l.b16 %v772
        %v2578 = vunpack.c.h.b16 %v772
        %v2579 = vunpack.c.l.b16 %v773
        %v2580 = vunpack.c.h.b16 %v773
        %v2581 = vunpack.c.l.b16 %v774
        %v2582 = vunpack.c.h.b16 %v774
        %v2583 = vunpack.c.l.b16 %v775
        %v2584 = vunpack.c.h.b16 %v775
        %v2585 = vunpack.c.l.b16 %v776
        %v2586 = vunpack.c.h.b16 %v776
        %v2587 = vunpack.c.l.b16 %v777
        %v2588 = vunpack.c.h.b16 %v777
        %v2589 = vunpack.c.l.b16 %v778
        %v2590 = vunpack.c.h.b16 %v778
        %v2591 = vunpack.c.l.b16 %v779
        %v2592 = vunpack.c.h.b16 %v779
        %v2593 = vunpack.c.l.b16 %v780
        %v2594 = vunpack.c.h.b16 %v780
        %v2595 = vunpack.c.l.b16 %v781
        %v2596 = vunpack.c.h.b16 %v781
        %v2597 = vunpack.c.l.b16 %v782
        %v2598 = vunpack.c.h.b16 %v782
        %v2599 = vunpack.c.l.b16 %v783
        %v2600 = vunpack.c.h.b16 %v783
        %v2601 = vunpack.c.l.b16 %v784
        %v2602 = vunpack.c.h.b16 %v784
        %v2603 = vunpack.c.l.b16 %v785
        %v2604 = vunpack.c.h.b16 %v785
        %v2605 = vunpack.c.l.b16 %v786
        %v2606 = vunpack.c.h.b16 %v786
        %v2607 = vunpack.c.l.b16 %v787
        %v2608 = vunpack.c.h.b16 %v787
        %v2609 = vunpack.c.l.b16 %v788
        %v2610 = vunpack.c.h.b16 %v788
        %v2611 = vunpack.c.l.b16 %v789
        %v2612 = vunpack.c.h.b16 %v789
        %v2613 = vunpack.c.l.b16 %v790
        %v2614 = vunpack.c.h.b16 %v790
        %v2615 = vunpack.c.l.b16 %v791
        %v2616 = vunpack.c.h.b16 %v791
        %v2617 = vunpack.c.l.b16 %v792
        %v2618 = vunpack.c.h.b16 %v792
        %v2619 = vunpack.c.l.b16 %v793
        %v2620 = vunpack.c.h.b16 %v793
        %v2621 = vunpack.c.l.b16 %v794
        %v2622 = vunpack.c.h.b16 %v794
        %v2623 = vunpack.c.l.b16 %v795
        %v2624 = vunpack.c.h.b16 %v795
        %v2625 = vunpack.c.l.b16 %v796
        %v2626 = vunpack.c.h.b16 %v796
        %v2627 = vunpack.c.l.b16 %v797
        %v2628 = vunpack.c.h.b16 %v797
        %v2629 = vunpack.c.l.b16 %v798
        %v2630 = vunpack.c.h.b16 %v798
        %v2631 = vunpack.c.l.b16 %v799
        %v2632 = vunpack.c.h.b16 %v799
        %v2633 = vunpack.c.l.b16 %v800
        %v2634 = vunpack.c.h.b16 %v800
        %v2635 = vunpack.c.l.b16 %v801
        %v2636 = vunpack.c.h.b16 %v801
        %v2637 = vunpack.c.l.b16 %v802
        %v2638 = vunpack.c.h.b16 %v802
        %v2639 = vunpack.c.l.b16 %v803
        %v2640 = vunpack.c.h.b16 %v803
        %v2641 = vunpack.c.l.b16 %v804
        %v2642 = vunpack.c.h.b16 %v804
        %v2643 = vunpack.c.l.b16 %v805
        %v2644 = vunpack.c.h.b16 %v805
        %v2645 = vunpack.c.l.b16 %v806
        %v2646 = vunpack.c.h.b16 %v806
        %v2647 = vunpack.c.l.b16 %v807
        %v2648 = vunpack.c.h.b16 %v807
        %v2649 = vunpack.c.l.b16 %v808
        %v2650 = vunpack.c.h.b16 %v808
        %v2651 = vunpack.c.l.b16 %v809
        %v2652 = vunpack.c.h.b16 %v809
        %v2653 = vunpack.c.l.b16 %v810
        %v2654 = vunpack.c.h.b16 %v810
        %v2655 = vunpack.c.l.b16 %v811
        %v2656 = vunpack.c.h.b16 %v811
        %v2657 = vunpack.c.l.b16 %v812
        %v2658 = vunpack.c.h.b16 %v812
        %v2659 = vunpack.c.l.b16 %v813
        %v2660 = vunpack.c.h.b16 %v813
        %v2661 = vunpack.c.l.b16 %v814
        %v2662 = vunpack.c.h.b16 %v814
        %v2663 = vunpack.c.l.b16 %v815
        %v2664 = vunpack.c.h.b16 %v815
        %v2665 = vunpack.c.l.b16 %v816
        %v2666 = vunpack.c.h.b16 %v816
        %v2667 = vunpack.c.l.b16 %v817
        %v2668 = vunpack.c.h.b16 %v817
        %v2669 = vunpack.c.l.b16 %v818
        %v2670 = vunpack.c.h.b16 %v818
        %v2671 = vunpack.c.l.b16 %v819
        %v2672 = vunpack.c.h.b16 %v819
        %v2673 = vunpack.c.l.b16 %v820
        %v2674 = vunpack.c.h.b16 %v820
        %v2675 = vunpack.c.l.b16 %v821
        %v2676 = vunpack.c.h.b16 %v821
        %v2677 = vunpack.c.l.b16 %v822
        %v2678 = vunpack.c.h.b16 %v822
        %v2679 = vunpack.c.l.b16 %v823
        %v2680 = vunpack.c.h.b16 %v823
        %v2681 = vunpack.c.l.b16 %v824
        %v2682 = vunpack.c.h.b16 %v824
        %v2683 = vunpack.c.l.b16 %v825
        %v2684 = vunpack.c.h.b16 %v825
        %v2685 = vunpack.c.l.b16 %v826
        %v2686 = vunpack.c.h.b16 %v826
        %v2687 = vunpack.c.l.b16 %v827
        %v2688 = vunpack.c.h.b16 %v827
        %v2689 = vunpack.c.l.b16 %v828
        %v2690 = vunpack.c.h.b16 %v828
        %v2691 = vunpack.c.l.b16 %v829
        %v2692 = vunpack.c.h.b16 %v829
        %v2693 = vunpack.c.l.b16 %v830
        %v2694 = vunpack.c.h.b16 %v830
        %v2695 = vunpack.c.l.b16 %v831
        %v2696 = vunpack.c.h.b16 %v831
        %v2697 = vunpack.c.l.b16 %v832
        %v2698 = vunpack.c.h.b16 %v832
        %v2699 = vunpack.c.l.b16 %v833
        %v2700 = vunpack.c.h.b16 %v833
        %v2701 = vunpack.c.l.b16 %v834
        %v2702 = vunpack.c.h.b16 %v834
        %v2703 = vunpack.c.l.b16 %v835
        %v2704 = vunpack.c.h.b16 %v835
        %v2705 = vunpack.c.l.b16 %v836
        %v2706 = vunpack.c.h.b16 %v836
        %v2707 = vunpack.c.l.b16 %v837
        %v2708 = vunpack.c.h.b16 %v837
        %v2709 = vunpack.c.l.b16 %v838
        %v2710 = vunpack.c.h.b16 %v838
        %v2711 = vunpack.c.l.b16 %v839
        %v2712 = vunpack.c.h.b16 %v839
        %v2713 = vunpack.c.l.b16 %v840
        %v2714 = vunpack.c.h.b16 %v840
        %v2715 = vunpack.c.l.b16 %v841
        %v2716 = vunpack.c.h.b16 %v841
        %v2717 = vunpack.c.l.b16 %v842
        %v2718 = vunpack.c.h.b16 %v842
        %v2719 = vunpack.c.l.b16 %v843
        %v2720 = vunpack.c.h.b16 %v843
        %v2721 = vunpack.c.l.b16 %v844
        %v2722 = vunpack.c.h.b16 %v844
        %v2723 = vunpack.c.l.b16 %v845
        %v2724 = vunpack.c.h.b16 %v845
        %v2725 = vunpack.c.l.b16 %v846
        %v2726 = vunpack.c.h.b16 %v846
        %v2727 = vunpack.c.l.b16 %v847
        %v2728 = vunpack.c.h.b16 %v847
        %v2729 = vunpack.c.l.b16 %v848
        %v2730 = vunpack.c.h.b16 %v848
        %v2731 = vunpack.c.l.b16 %v849
        %v2732 = vunpack.c.h.b16 %v849
        %v2733 = vunpack.c.l.b16 %v850
        %v2734 = vunpack.c.h.b16 %v850
        %v2735 = vunpack.c.l.b16 %v851
        %v2736 = vunpack.c.h.b16 %v851
        %v2737 = vunpack.c.l.b16 %v852
        %v2738 = vunpack.c.h.b16 %v852
        %v2739 = vunpack.c.l.b16 %v853
        %v2740 = vunpack.c.h.b16 %v853
        %v2741 = vunpack.c.l.b16 %v854
        %v2742 = vunpack.c.h.b16 %v854
        %v2743 = vunpack.c.l.b16 %v855
        %v2744 = vunpack.c.h.b16 %v855
        %v2745 = vunpack.c.l.b16 %v856
        %v2746 = vunpack.c.h.b16 %v856
        %v2747 = vunpack.c.l.b16 %v857
        %v2748 = vunpack.c.h.b16 %v857
        %v2749 = vunpack.c.l.b16 %v858
        %v2750 = vunpack.c.h.b16 %v858
        %v2751 = vunpack.c.l.b16 %v859
        %v2752 = vunpack.c.h.b16 %v859
        %v2753 = vunpack.c.l.b16 %v860
        %v2754 = vunpack.c.h.b16 %v860
        %v2755 = vunpack.c.l.b16 %v861
        %v2756 = vunpack.c.h.b16 %v861
        %v2757 = vunpack.c.l.b16 %v862
        %v2758 = vunpack.c.h.b16 %v862
        %v2759 = vunpack.c.l.b16 %v863
        %v2760 = vunpack.c.h.b16 %v863
        %v2761 = vunpack.c.l.b16 %v864
        %v2762 = vunpack.c.h.b16 %v864
        %v2763 = vunpack.c.l.b16 %v865
        %v2764 = vunpack.c.h.b16 %v865
        %v2765 = vunpack.c.l.b16 %v866
        %v2766 = vunpack.c.h.b16 %v866
        %v2767 = vunpack.c.l.b16 %v867
        %v2768 = vunpack.c.h.b16 %v867
        %v2769 = vunpack.c.l.b16 %v868
        %v2770 = vunpack.c.h.b16 %v868
        %v2771 = vunpack.c.l.b16 %v869
        %v2772 = vunpack.c.h.b16 %v869
        %v2773 = vunpack.c.l.b16 %v870
        %v2774 = vunpack.c.h.b16 %v870
        %v2775 = vunpack.c.l.b16 %v871
        %v2776 = vunpack.c.h.b16 %v871
        %v2777 = vunpack.c.l.b16 %v872
        %v2778 = vunpack.c.h.b16 %v872
        %v2779 = vunpack.c.l.b16 %v873
        %v2780 = vunpack.c.h.b16 %v873
        %v2781 = vunpack.c.l.b16 %v874
        %v2782 = vunpack.c.h.b16 %v874
        %v2783 = vunpack.c.l.b16 %v875
        %v2784 = vunpack.c.h.b16 %v875
        %v2785 = vunpack.c.l.b16 %v876
        %v2786 = vunpack.c.h.b16 %v876
        %v2787 = vunpack.c.l.b16 %v877
        %v2788 = vunpack.c.h.b16 %v877
        %v2789 = vunpack.c.l.b16 %v878
        %v2790 = vunpack.c.h.b16 %v878
        %v2791 = vunpack.c.l.b16 %v879
        %v2792 = vunpack.c.h.b16 %v879
        %v2793 = vunpack.c.l.b16 %v880
        %v2794 = vunpack.c.h.b16 %v880
        %v2795 = vunpack.c.l.b16 %v881
        %v2796 = vunpack.c.h.b16 %v881
        %v2797 = vunpack.c.l.b16 %v882
        %v2798 = vunpack.c.h.b16 %v882
        %v2799 = vunpack.c.l.b16 %v883
        %v2800 = vunpack.c.h.b16 %v883
        %v2801 = vunpack.c.l.b16 %v884
        %v2802 = vunpack.c.h.b16 %v884
        %v2803 = vunpack.c.l.b16 %v885
        %v2804 = vunpack.c.h.b16 %v885
        %v2805 = vunpack.c.l.b16 %v886
        %v2806 = vunpack.c.h.b16 %v886
        %v2807 = vunpack.c.l.b16 %v887
        %v2808 = vunpack.c.h.b16 %v887
        %v2809 = vunpack.c.l.b16 %v888
        %v2810 = vunpack.c.h.b16 %v888
        %v2811 = vunpack.c.l.b16 %v889
        %v2812 = vunpack.c.h.b16 %v889
        %v2813 = vunpack.c.l.b16 %v890
        %v2814 = vunpack.c.h.b16 %v890
        %v2815 = vunpack.c.l.b16 %v891
        %v2816 = vunpack.c.h.b16 %v891
        %v2817 = vunpack.c.l.b16 %v892
        %v2818 = vunpack.c.h.b16 %v892
        %v2819 = vunpack.c.l.b16 %v893
        %v2820 = vunpack.c.h.b16 %v893
        %v2821 = vunpack.c.l.b16 %v894
        %v2822 = vunpack.c.h.b16 %v894
        %v2823 = vunpack.c.l.b16 %v895
        %v2824 = vunpack.c.h.b16 %v895
        %v2825 = vunpack.c.l.b16 %v896
        %v2826 = vunpack.c.h.b16 %v896
        %v2827 = vunpack.c.l.b16 %v897
        %v2828 = vunpack.c.h.b16 %v897
        %v2829 = vunpack.c.l.b16 %v898
        %v2830 = vunpack.c.h.b16 %v898
        %v2831 = vunpack.c.l.b16 %v899
        %v2832 = vunpack.c.h.b16 %v899
        %v2833 = vunpack.c.l.b16 %v900
        %v2834 = vunpack.c.h.b16 %v900
        %v2835 = vunpack.c.l.b16 %v901
        %v2836 = vunpack.c.h.b16 %v901
        %v2837 = vunpack.c.l.b16 %v902
        %v2838 = vunpack.c.h.b16 %v902
        %v2839 = vunpack.c.l.b16 %v903
        %v2840 = vunpack.c.h.b16 %v903
        %v2841 = vunpack.c.l.b16 %v904
        %v2842 = vunpack.c.h.b16 %v904
        %v2843 = vunpack.c.l.b16 %v905
        %v2844 = vunpack.c.h.b16 %v905
        %v2845 = vunpack.c.l.b16 %v906
        %v2846 = vunpack.c.h.b16 %v906
        %v2847 = vunpack.c.l.b16 %v907
        %v2848 = vunpack.c.h.b16 %v907
        %v2849 = vunpack.c.l.b16 %v908
        %v2850 = vunpack.c.h.b16 %v908
        %v2851 = vunpack.c.l.b16 %v909
        %v2852 = vunpack.c.h.b16 %v909
        %v2853 = vunpack.c.l.b16 %v910
        %v2854 = vunpack.c.h.b16 %v910
        %v2855 = vunpack.c.l.b16 %v911
        %v2856 = vunpack.c.h.b16 %v911
        %v2857 = vunpack.c.l.b16 %v912
        %v2858 = vunpack.c.h.b16 %v912
        %v2859 = vunpack.c.l.b16 %v913
        %v2860 = vunpack.c.h.b16 %v913
        %v2861 = vunpack.c.l.b16 %v914
        %v2862 = vunpack.c.h.b16 %v914
        %v2863 = vunpack.c.l.b16 %v915
        %v2864 = vunpack.c.h.b16 %v915
        %v2865 = vunpack.c.l.b16 %v916
        %v2866 = vunpack.c.h.b16 %v916
        %v2867 = vunpack.c.l.b16 %v917
        %v2868 = vunpack.c.h.b16 %v917
        %v2869 = vunpack.c.l.b16 %v918
        %v2870 = vunpack.c.h.b16 %v918
        %v2871 = vunpack.c.l.b16 %v919
        %v2872 = vunpack.c.h.b16 %v919
        %v2873 = vunpack.c.l.b16 %v920
        %v2874 = vunpack.c.h.b16 %v920
        %v2875 = vunpack.c.l.b16 %v921
        %v2876 = vunpack.c.h.b16 %v921
        %v2877 = vunpack.c.l.b16 %v922
        %v2878 = vunpack.c.h.b16 %v922
        %v2879 = vunpack.c.l.b16 %v923
        %v2880 = vunpack.c.h.b16 %v923
        %v2881 = vunpack.c.l.b16 %v924
        %v2882 = vunpack.c.h.b16 %v924
        %v2883 = vunpack.c.l.b16 %v925
        %v2884 = vunpack.c.h.b16 %v925
        %v2885 = vunpack.c.l.b16 %v926
        %v2886 = vunpack.c.h.b16 %v926
        %v2887 = vunpack.c.l.b16 %v927
        %v2888 = vunpack.c.h.b16 %v927
        %v2889 = vunpack.c.l.b16 %v928
        %v2890 = vunpack.c.h.b16 %v928
        %v2891 = vunpack.c.l.b16 %v929
        %v2892 = vunpack.c.h.b16 %v929
        %v2893 = vunpack.c.l.b16 %v930
        %v2894 = vunpack.c.h.b16 %v930
        %v2895 = vunpack.c.l.b16 %v931
        %v2896 = vunpack.c.h.b16 %v931
        %v2897 = vunpack.c.l.b16 %v932
        %v2898 = vunpack.c.h.b16 %v932
        %v2899 = vunpack.c.l.b16 %v933
        %v2900 = vunpack.c.h.b16 %v933
        %v2901 = vunpack.c.l.b16 %v934
        %v2902 = vunpack.c.h.b16 %v934
        %v2903 = vunpack.c.l.b16 %v935
        %v2904 = vunpack.c.h.b16 %v935
        %v2905 = vunpack.c.l.b16 %v936
        %v2906 = vunpack.c.h.b16 %v936
        %v2907 = vunpack.c.l.b16 %v937
        %v2908 = vunpack.c.h.b16 %v937
        %v2909 = vunpack.c.l.b16 %v938
        %v2910 = vunpack.c.h.b16 %v938
        %v2911 = vunpack.c.l.b16 %v939
        %v2912 = vunpack.c.h.b16 %v939
        %v2913 = vunpack.c.l.b16 %v940
        %v2914 = vunpack.c.h.b16 %v940
        %v2915 = vunpack.c.l.b16 %v941
        %v2916 = vunpack.c.h.b16 %v941
        %v2917 = vunpack.c.l.b16 %v942
        %v2918 = vunpack.c.h.b16 %v942
        %v2919 = vunpack.c.l.b16 %v943
        %v2920 = vunpack.c.h.b16 %v943
        %v2921 = vunpack.c.l.b16 %v944
        %v2922 = vunpack.c.h.b16 %v944
        %v2923 = vunpack.c.l.b16 %v945
        %v2924 = vunpack.c.h.b16 %v945
        %v2925 = vunpack.c.l.b16 %v946
        %v2926 = vunpack.c.h.b16 %v946
        %v2927 = vunpack.c.l.b16 %v947
        %v2928 = vunpack.c.h.b16 %v947
        %v2929 = vunpack.c.l.b16 %v948
        %v2930 = vunpack.c.h.b16 %v948
        %v2931 = vunpack.c.l.b16 %v949
        %v2932 = vunpack.c.h.b16 %v949
        %v2933 = vunpack.c.l.b16 %v950
        %v2934 = vunpack.c.h.b16 %v950
        %v2935 = vunpack.c.l.b16 %v951
        %v2936 = vunpack.c.h.b16 %v951
        %v2937 = vunpack.c.l.b16 %v952
        %v2938 = vunpack.c.h.b16 %v952
        %v2939 = vunpack.c.l.b16 %v953
        %v2940 = vunpack.c.h.b16 %v953
        %v2941 = vunpack.c.l.b16 %v954
        %v2942 = vunpack.c.h.b16 %v954
        %v2943 = vunpack.c.l.b16 %v955
        %v2944 = vunpack.c.h.b16 %v955
        %v2945 = vunpack.c.l.b16 %v956
        %v2946 = vunpack.c.h.b16 %v956
        %v2947 = vunpack.c.l.b16 %v957
        %v2948 = vunpack.c.h.b16 %v957
        %v2949 = vunpack.c.l.b16 %v958
        %v2950 = vunpack.c.h.b16 %v958
        %v2951 = vunpack.c.l.b16 %v959
        %v2952 = vunpack.c.h.b16 %v959
        %v2953 = vunpack.c.l.b16 %v960
        %v2954 = vunpack.c.h.b16 %v960
        %v2955 = vunpack.c.l.b16 %v961
        %v2956 = vunpack.c.h.b16 %v961
        %v2957 = vunpack.c.l.b16 %v962
        %v2958 = vunpack.c.h.b16 %v962
        %v2959 = vunpack.c.l.b16 %v963
        %v2960 = vunpack.c.h.b16 %v963
        %v2961 = vunpack.c.l.b16 %v964
        %v2962 = vunpack.c.h.b16 %v964
        %v2963 = vunpack.c.l.b16 %v965
        %v2964 = vunpack.c.h.b16 %v965
        %v2965 = vunpack.c.l.b16 %v966
        %v2966 = vunpack.c.h.b16 %v966
        %v2967 = vunpack.c.l.b16 %v967
        %v2968 = vunpack.c.h.b16 %v967
        %v2969 = vunpack.c.l.b16 %v968
        %v2970 = vunpack.c.h.b16 %v968
        %v2971 = vunpack.c.l.b16 %v969
        %v2972 = vunpack.c.h.b16 %v969
        %v2973 = vunpack.c.l.b16 %v970
        %v2974 = vunpack.c.h.b16 %v970
        %v2975 = vunpack.c.l.b16 %v971
        %v2976 = vunpack.c.h.b16 %v971
        %v2977 = vunpack.c.l.b16 %v972
        %v2978 = vunpack.c.h.b16 %v972
        %v2979 = vunpack.c.l.b16 %v973
        %v2980 = vunpack.c.h.b16 %v973
        %v2981 = vunpack.c.l.b16 %v974
        %v2982 = vunpack.c.h.b16 %v974
        %v2983 = vunpack.c.l.b16 %v975
        %v2984 = vunpack.c.h.b16 %v975
        %v2985 = vunpack.c.l.b16 %v976
        %v2986 = vunpack.c.h.b16 %v976
        %v2987 = vunpack.c.l.b16 %v977
        %v2988 = vunpack.c.h.b16 %v977
        %v2989 = vunpack.c.l.b16 %v978
        %v2990 = vunpack.c.h.b16 %v978
        %v2991 = vunpack.c.l.b16 %v979
        %v2992 = vunpack.c.h.b16 %v979
        %v2993 = vunpack.c.l.b16 %v980
        %v2994 = vunpack.c.h.b16 %v980
        %v2995 = vunpack.c.l.b16 %v981
        %v2996 = vunpack.c.h.b16 %v981
        %v2997 = vunpack.c.l.b16 %v982
        %v2998 = vunpack.c.h.b16 %v982
        %v2999 = vunpack.c.l.b16 %v983
        %v3000 = vunpack.c.h.b16 %v983
        %v3001 = vunpack.c.l.b16 %v984
        %v3002 = vunpack.c.h.b16 %v984
        %v3003 = vunpack.c.l.b16 %v985
        %v3004 = vunpack.c.h.b16 %v985
        %v3005 = vunpack.c.l.b16 %v986
        %v3006 = vunpack.c.h.b16 %v986
        %v3007 = vunpack.c.l.b16 %v987
        %v3008 = vunpack.c.h.b16 %v987
        %v3009 = vunpack.c.l.b16 %v988
        %v3010 = vunpack.c.h.b16 %v988
        %v3011 = vunpack.c.l.b16 %v989
        %v3012 = vunpack.c.h.b16 %v989
        %v3013 = vunpack.c.l.b16 %v990
        %v3014 = vunpack.c.h.b16 %v990
        %v3015 = vunpack.c.l.b16 %v991
        %v3016 = vunpack.c.h.b16 %v991
        %v3017 = vunpack.c.l.b16 %v992
        %v3018 = vunpack.c.h.b16 %v992
        %v3019 = vunpack.c.l.b16 %v993
        %v3020 = vunpack.c.h.b16 %v993
        %v3021 = vunpack.c.l.b16 %v994
        %v3022 = vunpack.c.h.b16 %v994
        %v3023 = vunpack.c.l.b16 %v995
        %v3024 = vunpack.c.h.b16 %v995
        %v3025 = vunpack.c.l.b16 %v996
        %v3026 = vunpack.c.h.b16 %v996
        %v3027 = vunpack.c.l.b16 %v997
        %v3028 = vunpack.c.h.b16 %v997
        %v3029 = vunpack.c.l.b16 %v998
        %v3030 = vunpack.c.h.b16 %v998
        %v3031 = vunpack.c.l.b16 %v999
        %v3032 = vunpack.c.h.b16 %v999
        %v3033 = vunpack.c.l.b16 %v1000
        %v3034 = vunpack.c.h.b16 %v1000
        %v3035 = vunpack.c.l.b16 %v1001
        %v3036 = vunpack.c.h.b16 %v1001
        %v3037 = vunpack.c.l.b16 %v1002
        %v3038 = vunpack.c.h.b16 %v1002
        %v3039 = vunpack.c.l.b16 %v1003
        %v3040 = vunpack.c.h.b16 %v1003
        %v3041 = vunpack.c.l.b16 %v1004
        %v3042 = vunpack.c.h.b16 %v1004
        %v3043 = vunpack.c.l.b16 %v1005
        %v3044 = vunpack.c.h.b16 %v1005
        %v3045 = vunpack.c.l.b16 %v1006
        %v3046 = vunpack.c.h.b16 %v1006
        %v3047 = vunpack.c.l.b16 %v1007
        %v3048 = vunpack.c.h.b16 %v1007
        %v3049 = vunpack.c.l.b16 %v1008
        %v3050 = vunpack.c.h.b16 %v1008
        %v3051 = vunpack.c.l.b16 %v1009
        %v3052 = vunpack.c.h.b16 %v1009
        %v3053 = vunpack.c.l.b16 %v1010
        %v3054 = vunpack.c.h.b16 %v1010
        %v3055 = vunpack.c.l.b16 %v1011
        %v3056 = vunpack.c.h.b16 %v1011
        %v3057 = vunpack.c.l.b16 %v1012
        %v3058 = vunpack.c.h.b16 %v1012
        %v3059 = vunpack.c.l.b16 %v1013
        %v3060 = vunpack.c.h.b16 %v1013
        %v3061 = vunpack.c.l.b16 %v1014
        %v3062 = vunpack.c.h.b16 %v1014
        %v3063 = vunpack.c.l.b16 %v1015
        %v3064 = vunpack.c.h.b16 %v1015
        %v3065 = vunpack.c.l.b16 %v1016
        %v3066 = vunpack.c.h.b16 %v1016
        %v3067 = vunpack.c.l.b16 %v1017
        %v3068 = vunpack.c.h.b16 %v1017
        %v3069 = vunpack.c.l.b16 %v1018
        %v3070 = vunpack.c.h.b16 %v1018
        %v3071 = vunpack.c.l.b16 %v1019
        %v3072 = vunpack.c.h.b16 %v1019
        %v3073 = vunpack.c.l.b16 %v1020
        %v3074 = vunpack.c.h.b16 %v1020
        %v3075 = vunpack.c.l.b16 %v1021
        %v3076 = vunpack.c.h.b16 %v1021
        %v3077 = vunpack.c.l.b16 %v1022
        %v3078 = vunpack.c.h.b16 %v1022
        %v3079 = vunpack.c.l.b16 %v1023
        %v3080 = vunpack.c.h.b16 %v1023
        %v3081 = vunpack.c.l.b16 %v1024
        %v3082 = vunpack.c.h.b16 %v1024
        %v3083 = vunpack.c.l.b16 %v1025
        %v3084 = vunpack.c.h.b16 %v1025
        %v3085 = vunpack.c.l.b16 %v1026
        %v3086 = vunpack.c.h.b16 %v1026
        %v3087 = vunpack.c.l.b16 %v1027
        %v3088 = vunpack.c.h.b16 %v1027
        %v3089 = vunpack.c.l.b16 %v1028
        %v3090 = vunpack.c.h.b16 %v1028
        %v3091 = vunpack.c.l.b16 %v1029
        %v3092 = vunpack.c.h.b16 %v1029
        %v3093 = vunpack.c.l.b16 %v1030
        %v3094 = vunpack.c.h.b16 %v1030
        %v3095 = vunpack.c.l.b16 %v1031
        %v3096 = vunpack.c.h.b16 %v1031
        %v3097 = vunpack.c.l.b16 %v1032
        %v3098 = vunpack.c.h.b16 %v1032
        %v3099 = vunpack.c.l.b16 %v1033
        %v3100 = vunpack.c.h.b16 %v1033
        %v3101 = vunpack.c.l.b16 %v1034
        %v3102 = vunpack.c.h.b16 %v1034
        %v3103 = vunpack.c.l.b16 %v1035
        %v3104 = vunpack.c.h.b16 %v1035
        %v3105 = vunpack.c.l.b16 %v1036
        %v3106 = vunpack.c.h.b16 %v1036
        %v3107 = vunpack.c.l.b16 %v1037
        %v3108 = vunpack.c.h.b16 %v1037
        %v3109 = vunpack.c.l.b16 %v1038
        %v3110 = vunpack.c.h.b16 %v1038
        %v3111 = vunpack.c.l.b16 %v1039
        %v3112 = vunpack.c.h.b16 %v1039
        %v3113 = vunpack.c.l.b16 %v1040
        %v3114 = vunpack.c.h.b16 %v1040
        %v3115 = vunpack.c.l.b16 %v1041
        %v3116 = vunpack.c.h.b16 %v1041
        %v3117 = vunpack.c.l.b16 %v1042
        %v3118 = vunpack.c.h.b16 %v1042
        %v3119 = vunpack.c.l.b16 %v1043
        %v3120 = vunpack.c.h.b16 %v1043
        %v3121 = vunpack.c.l.b16 %v1044
        %v3122 = vunpack.c.h.b16 %v1044
        %v3123 = vunpack.c.l.b16 %v1045
        %v3124 = vunpack.c.h.b16 %v1045
        %v3125 = vunpack.c.l.b16 %v1046
        %v3126 = vunpack.c.h.b16 %v1046
        %v3127 = vunpack.c.l.b16 %v1047
        %v3128 = vunpack.c.h.b16 %v1047
        %v3129 = vunpack.c.l.b16 %v1048
        %v3130 = vunpack.c.h.b16 %v1048
        %v3131 = vunpack.c.l.b16 %v1049
        %v3132 = vunpack.c.h.b16 %v1049
        %v3133 = vunpack.c.l.b16 %v1050
        %v3134 = vunpack.c.h.b16 %v1050
        %v3135 = vunpack.c.l.b16 %v1051
        %v3136 = vunpack.c.h.b16 %v1051
        %v3137 = vunpack.c.l.b16 %v1052
        %v3138 = vunpack.c.h.b16 %v1052
        %v3139 = vunpack.c.l.b16 %v1053
        %v3140 = vunpack.c.h.b16 %v1053
        %v3141 = vunpack.c.l.b16 %v1054
        %v3142 = vunpack.c.h.b16 %v1054
        %v3143 = vunpack.c.l.b16 %v1055
        %v3144 = vunpack.c.h.b16 %v1055
        %v3145 = vunpack.c.l.b16 %v1056
        %v3146 = vunpack.c.h.b16 %v1056
        %v3147 = vunpack.c.l.b16 %v1057
        %v3148 = vunpack.c.h.b16 %v1057
        %v3149 = vunpack.c.l.b16 %v1058
        %v3150 = vunpack.c.h.b16 %v1058
        %v3151 = vunpack.c.l.b16 %v1059
        %v3152 = vunpack.c.h.b16 %v1059
        %v3153 = vunpack.c.l.b16 %v1060
        %v3154 = vunpack.c.h.b16 %v1060
        %v3155 = vunpack.c.l.b16 %v1061
        %v3156 = vunpack.c.h.b16 %v1061
        %v3157 = vunpack.c.l.b16 %v1062
        %v3158 = vunpack.c.h.b16 %v1062
        %v3159 = vunpack.c.l.b16 %v1063
        %v3160 = vunpack.c.h.b16 %v1063
        %v3161 = vunpack.c.l.b16 %v1064
        %v3162 = vunpack.c.h.b16 %v1064
        %v3163 = vunpack.c.l.b16 %v1065
        %v3164 = vunpack.c.h.b16 %v1065
        %v3165 = vunpack.c.l.b16 %v1066
        %v3166 = vunpack.c.h.b16 %v1066
        %v3167 = vunpack.c.l.b16 %v1067
        %v3168 = vunpack.c.h.b16 %v1067
        %v3169 = vunpack.c.l.b16 %v1068
        %v3170 = vunpack.c.h.b16 %v1068
        %v3171 = vunpack.c.l.b16 %v1069
        %v3172 = vunpack.c.h.b16 %v1069
        %v3173 = vunpack.c.l.b16 %v1070
        %v3174 = vunpack.c.h.b16 %v1070
        %v3175 = vunpack.c.l.b16 %v1071
        %v3176 = vunpack.c.h.b16 %v1071
        %v3177 = vunpack.c.l.b16 %v1072
        %v3178 = vunpack.c.h.b16 %v1072
        %v3179 = vunpack.c.l.b16 %v1073
        %v3180 = vunpack.c.h.b16 %v1073
        %v3181 = vunpack.c.l.b16 %v1074
        %v3182 = vunpack.c.h.b16 %v1074
        %v3183 = vunpack.c.l.b16 %v1075
        %v3184 = vunpack.c.h.b16 %v1075
        %v3185 = vunpack.c.l.b16 %v1076
        %v3186 = vunpack.c.h.b16 %v1076
        %v3187 = vunpack.c.l.b16 %v1077
        %v3188 = vunpack.c.h.b16 %v1077
        %v3189 = vunpack.c.l.b16 %v1078
        %v3190 = vunpack.c.h.b16 %v1078
        %v3191 = vunpack.c.l.b16 %v1079
        %v3192 = vunpack.c.h.b16 %v1079
        %v3193 = vunpack.c.l.b16 %v1080
        %v3194 = vunpack.c.h.b16 %v1080
        %v3195 = vunpack.c.l.b16 %v1081
        %v3196 = vunpack.c.h.b16 %v1081
        %v3197 = vunpack.c.l.b16 %v1082
        %v3198 = vunpack.c.h.b16 %v1082
        %v3199 = vunpack.c.l.b16 %v1083
        %v3200 = vunpack.c.h.b16 %v1083
        %v3201 = vunpack.c.l.b16 %v1084
        %v3202 = vunpack.c.h.b16 %v1084
        %v3203 = vunpack.c.l.b16 %v1085
        %v3204 = vunpack.c.h.b16 %v1085
        %v3205 = vunpack.c.l.b16 %v1086
        %v3206 = vunpack.c.h.b16 %v1086
        %v3207 = vunpack.c.l.b16 %v1087
        %v3208 = vunpack.c.h.b16 %v1087
        %v3209 = vunpack.c.l.b16 %v1088
        %v3210 = vunpack.c.h.b16 %v1088
        %v3211 = vunpack.c.l.b16 %v1089
        %v3212 = vunpack.c.h.b16 %v1089
        %v3213 = vunpack.c.l.b16 %v1090
        %v3214 = vunpack.c.h.b16 %v1090
        %v3215 = vunpack.c.l.b16 %v1091
        %v3216 = vunpack.c.h.b16 %v1091
        %v3217 = vunpack.c.l.b16 %v1092
        %v3218 = vunpack.c.h.b16 %v1092
        %v3219 = vunpack.c.l.b16 %v1093
        %v3220 = vunpack.c.h.b16 %v1093
        %v3221 = vunpack.c.l.b16 %v1094
        %v3222 = vunpack.c.h.b16 %v1094
        %v3223 = vunpack.c.l.b16 %v1095
        %v3224 = vunpack.c.h.b16 %v1095
        %v3225 = vunpack.c.l.b16 %v1096
        %v3226 = vunpack.c.h.b16 %v1096
        %v3227 = vunpack.c.l.b16 %v1097
        %v3228 = vunpack.c.h.b16 %v1097
        %v3229 = vunpack.c.l.b16 %v1098
        %v3230 = vunpack.c.h.b16 %v1098
        %v3231 = vunpack.c.l.b16 %v1099
        %v3232 = vunpack.c.h.b16 %v1099
        %v3233 = vunpack.c.l.b16 %v1100
        %v3234 = vunpack.c.h.b16 %v1100
        %v3235 = vunpack.c.l.b16 %v1101
        %v3236 = vunpack.c.h.b16 %v1101
        %v3237 = vunpack.c.l.b16 %v1102
        %v3238 = vunpack.c.h.b16 %v1102
        %v3239 = vunpack.c.l.b16 %v1103
        %v3240 = vunpack.c.h.b16 %v1103
        %v3241 = vunpack.c.l.b16 %v1104
        %v3242 = vunpack.c.h.b16 %v1104
        %v3243 = vunpack.c.l.b16 %v1105
        %v3244 = vunpack.c.h.b16 %v1105
        %v3245 = vunpack.c.l.b16 %v1106
        %v3246 = vunpack.c.h.b16 %v1106
        %v3247 = vunpack.c.l.b16 %v1107
        %v3248 = vunpack.c.h.b16 %v1107
        %v3249 = vunpack.c.l.b16 %v1108
        %v3250 = vunpack.c.h.b16 %v1108
        %v3251 = vunpack.c.l.b16 %v1109
        %v3252 = vunpack.c.h.b16 %v1109
        %v3253 = vunpack.c.l.b16 %v1110
        %v3254 = vunpack.c.h.b16 %v1110
        %v3255 = vunpack.c.l.b16 %v1111
        %v3256 = vunpack.c.h.b16 %v1111
        %v3257 = vunpack.c.l.b16 %v1112
        %v3258 = vunpack.c.h.b16 %v1112
        %v3259 = vunpack.c.l.b16 %v1113
        %v3260 = vunpack.c.h.b16 %v1113
        %v3261 = vunpack.c.l.b16 %v1114
        %v3262 = vunpack.c.h.b16 %v1114
        %v3263 = vunpack.c.l.b16 %v1115
        %v3264 = vunpack.c.h.b16 %v1115
        %v3265 = vunpack.c.l.b16 %v1116
        %v3266 = vunpack.c.h.b16 %v1116
        %v3267 = vunpack.c.l.b16 %v1117
        %v3268 = vunpack.c.h.b16 %v1117
        %v3269 = vunpack.c.l.b16 %v1118
        %v3270 = vunpack.c.h.b16 %v1118
        %v3271 = vunpack.c.l.b16 %v1119
        %v3272 = vunpack.c.h.b16 %v1119
        %v3273 = vunpack.c.l.b16 %v1120
        %v3274 = vunpack.c.h.b16 %v1120
        %v3275 = vunpack.c.l.b16 %v1121
        %v3276 = vunpack.c.h.b16 %v1121
        %v3277 = vunpack.c.l.b16 %v1122
        %v3278 = vunpack.c.h.b16 %v1122
        %v3279 = vunpack.c.l.b16 %v1123
        %v3280 = vunpack.c.h.b16 %v1123
        %v3281 = vunpack.c.l.b16 %v1124
        %v3282 = vunpack.c.h.b16 %v1124
        %v3283 = vunpack.c.l.b16 %v1125
        %v3284 = vunpack.c.h.b16 %v1125
        %v3285 = vunpack.c.l.b16 %v1126
        %v3286 = vunpack.c.h.b16 %v1126
        %v3287 = vunpack.c.l.b16 %v1127
        %v3288 = vunpack.c.h.b16 %v1127
        %v3289 = vunpack.c.l.b16 %v1128
        %v3290 = vunpack.c.h.b16 %v1128
        %v3291 = vunpack.c.l.b16 %v1129
        %v3292 = vunpack.c.h.b16 %v1129
        %v3293 = vunpack.c.l.b16 %v1130
        %v3294 = vunpack.c.h.b16 %v1130
        %v3295 = vunpack.c.l.b16 %v1131
        %v3296 = vunpack.c.h.b16 %v1131
        %v3297 = vunpack.c.l.b16 %v1132
        %v3298 = vunpack.c.h.b16 %v1132
        %v3299 = vunpack.c.l.b16 %v1133
        %v3300 = vunpack.c.h.b16 %v1133
        %v3301 = vunpack.c.l.b16 %v1134
        %v3302 = vunpack.c.h.b16 %v1134
        %v3303 = vunpack.c.l.b16 %v1135
        %v3304 = vunpack.c.h.b16 %v1135
        %v3305 = vunpack.c.l.b16 %v1136
        %v3306 = vunpack.c.h.b16 %v1136
        %v3307 = vunpack.c.l.b16 %v1137
        %v3308 = vunpack.c.h.b16 %v1137
        %v3309 = vunpack.c.l.b16 %v1138
        %v3310 = vunpack.c.h.b16 %v1138
        %v3311 = vunpack.c.l.b16 %v1139
        %v3312 = vunpack.c.h.b16 %v1139
        %v3313 = vunpack.c.l.b16 %v1140
        %v3314 = vunpack.c.h.b16 %v1140
        %v3315 = vunpack.c.l.b16 %v1141
        %v3316 = vunpack.c.h.b16 %v1141
        %v3317 = vunpack.c.l.b16 %v1142
        %v3318 = vunpack.c.h.b16 %v1142
        %v3319 = vunpack.c.l.b16 %v1143
        %v3320 = vunpack.c.h.b16 %v1143
        %v3321 = vunpack.c.l.b16 %v1144
        %v3322 = vunpack.c.h.b16 %v1144
        %v3323 = vunpack.c.l.b16 %v1145
        %v3324 = vunpack.c.h.b16 %v1145
        %v3325 = vunpack.c.l.b16 %v1146
        %v3326 = vunpack.c.h.b16 %v1146
        %v3327 = vunpack.c.l.b16 %v1147
        %v3328 = vunpack.c.h.b16 %v1147
        %v3329 = vunpack.c.l.b16 %v1148
        %v3330 = vunpack.c.h.b16 %v1148
        %v3331 = vunpack.c.l.b16 %v1149
        %v3332 = vunpack.c.h.b16 %v1149
        %v3333 = vunpack.c.l.b16 %v1150
        %v3334 = vunpack.c.h.b16 %v1150
        %v3335 = vunpack.c.l.b16 %v1151
        %v3336 = vunpack.c.h.b16 %v1151
        %v3337 = vunpack.c.l.b16 %v1152
        %v3338 = vunpack.c.h.b16 %v1152
        %v3339 = vunpack.c.l.b16 %v1153
        %v3340 = vunpack.c.h.b16 %v1153
        %v3341 = vunpack.c.l.b16 %v1154
        %v3342 = vunpack.c.h.b16 %v1154
        %v3343 = vunpack.c.l.b16 %v1155
        %v3344 = vunpack.c.h.b16 %v1155
        %v3345 = vunpack.c.l.b16 %v1156
        %v3346 = vunpack.c.h.b16 %v1156
        %v3347 = vunpack.c.l.b16 %v1157
        %v3348 = vunpack.c.h.b16 %v1157
        %v3349 = vunpack.c.l.b16 %v1158
        %v3350 = vunpack.c.h.b16 %v1158
        %v3351 = vunpack.c.l.b16 %v1159
        %v3352 = vunpack.c.h.b16 %v1159
        %v3353 = vunpack.c.l.b16 %v1160
        %v3354 = vunpack.c.h.b16 %v1160
        %v3355 = vunpack.c.l.b16 %v1161
        %v3356 = vunpack.c.h.b16 %v1161
        %v3357 = vunpack.c.l.b16 %v1162
        %v3358 = vunpack.c.h.b16 %v1162
        %v3359 = vunpack.c.l.b16 %v1163
        %v3360 = vunpack.c.h.b16 %v1163
        %v3361 = vunpack.c.l.b16 %v1164
        %v3362 = vunpack.c.h.b16 %v1164
        %v3363 = vunpack.c.l.b16 %v1165
        %v3364 = vunpack.c.h.b16 %v1165
        %v3365 = vunpack.c.l.b16 %v1166
        %v3366 = vunpack.c.h.b16 %v1166
        %v3367 = vunpack.c.l.b16 %v1167
        %v3368 = vunpack.c.h.b16 %v1167
        %v3369 = vunpack.c.l.b16 %v1168
        %v3370 = vunpack.c.h.b16 %v1168
        %v3371 = vunpack.c.l.b16 %v1169
        %v3372 = vunpack.c.h.b16 %v1169
        %v3373 = vunpack.c.l.b16 %v1170
        %v3374 = vunpack.c.h.b16 %v1170
        %v3375 = vunpack.c.l.b16 %v1171
        %v3376 = vunpack.c.h.b16 %v1171
        %v3377 = vunpack.c.l.b16 %v1172
        %v3378 = vunpack.c.h.b16 %v1172
        %v3379 = vunpack.c.l.b16 %v1173
        %v3380 = vunpack.c.h.b16 %v1173
        %v3381 = vunpack.c.l.b16 %v1174
        %v3382 = vunpack.c.h.b16 %v1174
        %v3383 = vunpack.c.l.b16 %v1175
        %v3384 = vunpack.c.h.b16 %v1175
        %v3385 = vunpack.c.l.b16 %v1176
        %v3386 = vunpack.c.h.b16 %v1176
        %v3387 = vunpack.c.l.b16 %v1177
        %v3388 = vunpack.c.h.b16 %v1177
        %v3389 = vunpack.c.l.b16 %v1178
        %v3390 = vunpack.c.h.b16 %v1178
        %v3391 = vunpack.c.l.b16 %v1179
        %v3392 = vunpack.c.h.b16 %v1179
        %v3393 = vunpack.c.l.b16 %v1180
        %v3394 = vunpack.c.h.b16 %v1180
        %v3395 = vunpack.c.l.b16 %v1181
        %v3396 = vunpack.c.h.b16 %v1181
        %v3397 = vunpack.c.l.b16 %v1182
        %v3398 = vunpack.c.h.b16 %v1182
        %v3399 = vunpack.c.l.b16 %v1183
        %v3400 = vunpack.c.h.b16 %v1183
        %v3401 = vunpack.c.l.b16 %v1184
        %v3402 = vunpack.c.h.b16 %v1184
        %v3403 = vunpack.c.l.b16 %v1185
        %v3404 = vunpack.c.h.b16 %v1185
        %v3405 = vunpack.c.l.b16 %v1186
        %v3406 = vunpack.c.h.b16 %v1186
        %v3407 = vunpack.c.l.b16 %v1187
        %v3408 = vunpack.c.h.b16 %v1187
        %v3409 = vunpack.c.l.b16 %v1188
        %v3410 = vunpack.c.h.b16 %v1188
        %v3411 = vunpack.c.l.b16 %v1189
        %v3412 = vunpack.c.h.b16 %v1189
        %v3413 = vunpack.c.l.b16 %v1190
        %v3414 = vunpack.c.h.b16 %v1190
        %v3415 = vunpack.c.l.b16 %v1191
        %v3416 = vunpack.c.h.b16 %v1191
        %v3417 = vunpack.c.l.b16 %v1192
        %v3418 = vunpack.c.h.b16 %v1192
        %v3419 = vunpack.c.l.b16 %v1193
        %v3420 = vunpack.c.h.b16 %v1193
        %v3421 = vunpack.c.l.b16 %v1194
        %v3422 = vunpack.c.h.b16 %v1194
        %v3423 = vunpack.c.l.b16 %v1195
        %v3424 = vunpack.c.h.b16 %v1195
        %v3425 = vunpack.c.l.b16 %v1196
        %v3426 = vunpack.c.h.b16 %v1196
        %v3427 = vunpack.c.l.b16 %v1197
        %v3428 = vunpack.c.h.b16 %v1197
        %v3429 = vunpack.c.l.b16 %v1198
        %v3430 = vunpack.c.h.b16 %v1198
        %v3431 = vunpack.c.l.b16 %v1199
        %v3432 = vunpack.c.h.b16 %v1199
        %v3433 = vunpack.c.l.b16 %v1200
        %v3434 = vunpack.c.h.b16 %v1200
        %v3435 = vunpack.c.l.b16 %v1201
        %v3436 = vunpack.c.h.b16 %v1201
        %v3437 = vunpack.c.l.b16 %v1202
        %v3438 = vunpack.c.h.b16 %v1202
        %v3439 = vunpack.c.l.b16 %v1203
        %v3440 = vunpack.c.h.b16 %v1203
        %v3441 = vunpack.c.l.b16 %v1204
        %v3442 = vunpack.c.h.b16 %v1204
        %v3443 = vunpack.c.l.b16 %v1205
        %v3444 = vunpack.c.h.b16 %v1205
        %v3445 = vunpack.c.l.b16 %v1206
        %v3446 = vunpack.c.h.b16 %v1206
        %v3447 = vunpack.c.l.b16 %v1207
        %v3448 = vunpack.c.h.b16 %v1207
        %v3449 = vunpack.c.l.b16 %v1208
        %v3450 = vunpack.c.h.b16 %v1208
        %v3451 = vunpack.c.l.b16 %v1209
        %v3452 = vunpack.c.h.b16 %v1209
        %v3453 = vunpack.c.l.b16 %v1210
        %v3454 = vunpack.c.h.b16 %v1210
        %v3455 = vunpack.c.l.b16 %v1211
        %v3456 = vunpack.c.h.b16 %v1211
        %v3457 = vunpack.c.l.b16 %v1212
        %v3458 = vunpack.c.h.b16 %v1212
        %v3459 = vunpack.c.l.b16 %v1213
        %v3460 = vunpack.c.h.b16 %v1213
        %v3461 = vunpack.c.l.b16 %v1214
        %v3462 = vunpack.c.h.b16 %v1214
        %v3463 = vunpack.c.l.b16 %v1215
        %v3464 = vunpack.c.h.b16 %v1215
        %v3465 = vunpack.c.l.b16 %v1216
        %v3466 = vunpack.c.h.b16 %v1216
        %v3467 = vunpack.c.l.b16 %v1217
        %v3468 = vunpack.c.h.b16 %v1217
        %v3469 = vunpack.c.l.b16 %v1218
        %v3470 = vunpack.c.h.b16 %v1218
        %v3471 = vunpack.c.l.b16 %v1219
        %v3472 = vunpack.c.h.b16 %v1219
        %v3473 = vunpack.c.l.b16 %v1220
        %v3474 = vunpack.c.h.b16 %v1220
        %v3475 = vunpack.c.l.b16 %v1221
        %v3476 = vunpack.c.h.b16 %v1221
        %v3477 = vunpack.c.l.b16 %v1222
        %v3478 = vunpack.c.h.b16 %v1222
        %v3479 = vunpack.c.l.b16 %v1223
        %v3480 = vunpack.c.h.b16 %v1223
        %v3481 = vunpack.c.l.b16 %v1224
        %v3482 = vunpack.c.h.b16 %v1224
        %v3483 = vunpack.c.l.b16 %v1225
        %v3484 = vunpack.c.h.b16 %v1225
        %v3485 = vunpack.c.l.b16 %v1226
        %v3486 = vunpack.c.h.b16 %v1226
        %v3487 = vunpack.c.l.b16 %v1227
        %v3488 = vunpack.c.h.b16 %v1227
        %v3489 = vunpack.c.l.b16 %v1228
        %v3490 = vunpack.c.h.b16 %v1228
        %v3491 = vunpack.c.l.b16 %v1229
        %v3492 = vunpack.c.h.b16 %v1229
        %v3493 = vunpack.c.l.b16 %v1230
        %v3494 = vunpack.c.h.b16 %v1230
        %v3495 = vunpack.c.l.b16 %v1231
        %v3496 = vunpack.c.h.b16 %v1231
        %v3497 = vunpack.c.l.b16 %v1232
        %v3498 = vunpack.c.h.b16 %v1232
        %v3499 = vunpack.c.l.b16 %v1233
        %v3500 = vunpack.c.h.b16 %v1233
        %v3501 = vunpack.c.l.b16 %v1234
        %v3502 = vunpack.c.h.b16 %v1234
        %v3503 = vunpack.c.l.b16 %v1235
        %v3504 = vunpack.c.h.b16 %v1235
        %v3505 = vunpack.c.l.b16 %v1236
        %v3506 = vunpack.c.h.b16 %v1236
        %v3507 = vunpack.c.l.b16 %v1237
        %v3508 = vunpack.c.h.b16 %v1237
        %v3509 = vunpack.c.l.b16 %v1238
        %v3510 = vunpack.c.h.b16 %v1238
        %v3511 = vunpack.c.l.b16 %v1239
        %v3512 = vunpack.c.h.b16 %v1239
        %v3513 = vunpack.c.l.b16 %v1240
        %v3514 = vunpack.c.h.b16 %v1240
        %v3515 = vunpack.c.l.b16 %v1241
        %v3516 = vunpack.c.h.b16 %v1241
        %v3517 = vunpack.c.l.b16 %v1242
        %v3518 = vunpack.c.h.b16 %v1242
        %v3519 = vunpack.c.l.b16 %v1243
        %v3520 = vunpack.c.h.b16 %v1243
        %v3521 = vunpack.c.l.b16 %v1244
        %v3522 = vunpack.c.h.b16 %v1244
        %v3523 = vunpack.c.l.b16 %v1245
        %v3524 = vunpack.c.h.b16 %v1245
        %v3525 = vunpack.c.l.b16 %v1246
        %v3526 = vunpack.c.h.b16 %v1246
        %v3527 = vunpack.c.l.b16 %v1247
        %v3528 = vunpack.c.h.b16 %v1247
        %v3529 = vunpack.c.l.b16 %v1248
        %v3530 = vunpack.c.h.b16 %v1248
        %v3531 = vunpack.c.l.b16 %v1249
        %v3532 = vunpack.c.h.b16 %v1249
        %v3533 = vunpack.c.l.b16 %v1250
        %v3534 = vunpack.c.h.b16 %v1250
        %v3535 = vunpack.c.l.b16 %v1251
        %v3536 = vunpack.c.h.b16 %v1251
        %v3537 = vunpack.c.l.b16 %v1252
        %v3538 = vunpack.c.h.b16 %v1252
        %v3539 = vunpack.c.l.b16 %v1253
        %v3540 = vunpack.c.h.b16 %v1253
        %v3541 = vunpack.c.l.b16 %v1254
        %v3542 = vunpack.c.h.b16 %v1254
        %v3543 = vunpack.c.l.b16 %v1255
        %v3544 = vunpack.c.h.b16 %v1255
        %v3545 = vunpack.c.l.b16 %v1256
        %v3546 = vunpack.c.h.b16 %v1256
        %v3547 = vunpack.c.l.b16 %v1257
        %v3548 = vunpack.c.h.b16 %v1257
        %v3549 = vunpack.c.l.b16 %v1258
        %v3550 = vunpack.c.h.b16 %v1258
        %v3551 = vunpack.c.l.b16 %v1259
        %v3552 = vunpack.c.h.b16 %v1259
        %v3553 = vunpack.c.l.b16 %v1260
        %v3554 = vunpack.c.h.b16 %v1260
        %v3555 = vunpack.c.l.b16 %v1261
        %v3556 = vunpack.c.h.b16 %v1261
        %v3557 = vunpack.c.l.b16 %v1262
        %v3558 = vunpack.c.h.b16 %v1262
        %v3559 = vunpack.c.l.b16 %v1263
        %v3560 = vunpack.c.h.b16 %v1263
        %v3561 = vunpack.c.l.b16 %v1264
        %v3562 = vunpack.c.h.b16 %v1264
        %v3563 = vunpack.c.l.b16 %v1265
        %v3564 = vunpack.c.h.b16 %v1265
        %v3565 = vunpack.c.l.b16 %v1266
        %v3566 = vunpack.c.h.b16 %v1266
        %v3567 = vunpack.c.l.b16 %v1267
        %v3568 = vunpack.c.h.b16 %v1267
        %v3569 = vunpack.c.l.b16 %v1268
        %v3570 = vunpack.c.h.b16 %v1268
        %v3571 = vunpack.c.l.b16 %v1269
        %v3572 = vunpack.c.h.b16 %v1269
        %v3573 = vunpack.c.l.b16 %v1270
        %v3574 = vunpack.c.h.b16 %v1270
        %v3575 = vunpack.c.l.b16 %v1271
        %v3576 = vunpack.c.h.b16 %v1271
        %v3577 = vunpack.c.l.b16 %v1272
        %v3578 = vunpack.c.h.b16 %v1272
        %v3579 = vunpack.c.l.b16 %v1273
        %v3580 = vunpack.c.h.b16 %v1273
        %v3581 = vunpack.c.l.b16 %v1274
        %v3582 = vunpack.c.h.b16 %v1274
        %v3583 = vunpack.c.l.b16 %v1275
        %v3584 = vunpack.c.h.b16 %v1275
        %v3585 = vunpack.c.l.b16 %v1276
        %v3586 = vunpack.c.h.b16 %v1276
        %v3587 = vunpack.c.l.b16 %v1277
        %v3588 = vunpack.c.h.b16 %v1277
        %v3589 = vunpack.c.l.b16 %v1278
        %v3590 = vunpack.c.h.b16 %v1278
        %v3591 = vunpack.c.l.b16 %v1279
        %v3592 = vunpack.c.h.b16 %v1279
        %v3593 = vunpack.c.l.b16 %v1280
        %v3594 = vunpack.c.h.b16 %v1280
        %v3595 = vunpack.c.l.b16 %v1281
        %v3596 = vunpack.c.h.b16 %v1281
        %v3597 = vunpack.c.l.b16 %v1282
        %v3598 = vunpack.c.h.b16 %v1282
        %v3599 = vunpack.c.l.b16 %v1283
        %v3600 = vunpack.c.h.b16 %v1283
        %v3601 = vunpack.c.l.b16 %v1284
        %v3602 = vunpack.c.h.b16 %v1284
        %v3603 = vunpack.c.l.b16 %v1285
        %v3604 = vunpack.c.h.b16 %v1285
        %v3605 = vunpack.c.l.b16 %v1286
        %v3606 = vunpack.c.h.b16 %v1286
        %v3607 = vunpack.c.l.b16 %v1287
        %v3608 = vunpack.c.h.b16 %v1287
        %v3609 = vunpack.c.l.b16 %v1288
        %v3610 = vunpack.c.h.b16 %v1288
        %v3611 = vunpack.c.l.b16 %v1289
        %v3612 = vunpack.c.h.b16 %v1289
        %v3613 = vunpack.c.l.b16 %v1290
        %v3614 = vunpack.c.h.b16 %v1290
        %v3615 = vunpack.c.l.b16 %v1291
        %v3616 = vunpack.c.h.b16 %v1291
        %v3617 = vunpack.c.l.b16 %v1292
        %v3618 = vunpack.c.h.b16 %v1292
        %v3619 = vunpack.c.l.b16 %v1293
        %v3620 = vunpack.c.h.b16 %v1293
        %v3621 = vunpack.c.l.b16 %v1294
        %v3622 = vunpack.c.h.b16 %v1294
        %v3623 = vunpack.c.l.b16 %v1295
        %v3624 = vunpack.c.h.b16 %v1295
        %v3625 = vunpack.c.l.b16 %v1296
        %v3626 = vunpack.c.h.b16 %v1296
        %v3627 = vunpack.c.l.b16 %v1297
        %v3628 = vunpack.c.h.b16 %v1297
        %v3629 = vunpack.c.l.b16 %v1298
        %v3630 = vunpack.c.h.b16 %v1298
        %v3631 = vunpack.c.l.b16 %v1299
        %v3632 = vunpack.c.h.b16 %v1299
        %v3633 = vunpack.c.l.b16 %v1300
        %v3634 = vunpack.c.h.b16 %v1300
        %v3635 = vunpack.c.l.b16 %v1301
        %v3636 = vunpack.c.h.b16 %v1301
        %v3637 = vunpack.c.l.b16 %v1302
        %v3638 = vunpack.c.h.b16 %v1302
        %v3639 = vunpack.c.l.b16 %v1303
        %v3640 = vunpack.c.h.b16 %v1303
        %v3641 = vunpack.c.l.b16 %v1304
        %v3642 = vunpack.c.h.b16 %v1304
        %v3643 = vunpack.c.l.b16 %v1305
        %v3644 = vunpack.c.h.b16 %v1305
        %v3645 = vunpack.c.l.b16 %v1306
        %v3646 = vunpack.c.h.b16 %v1306
        %v3647 = vunpack.c.l.b16 %v1307
        %v3648 = vunpack.c.h.b16 %v1307
        %v3649 = vunpack.c.l.b16 %v1308
        %v3650 = vunpack.c.h.b16 %v1308
        %v3651 = vunpack.c.l.b16 %v1309
        %v3652 = vunpack.c.h.b16 %v1309
        %v3653 = vunpack.c.l.b16 %v1310
        %v3654 = vunpack.c.h.b16 %v1310
        %v3655 = vunpack.c.l.b16 %v1311
        %v3656 = vunpack.c.h.b16 %v1311
        %v3657 = vunpack.c.l.b16 %v1312
        %v3658 = vunpack.c.h.b16 %v1312
        %v3659 = vunpack.c.l.b16 %v1313
        %v3660 = vunpack.c.h.b16 %v1313
        %v3661 = vunpack.c.l.b16 %v1314
        %v3662 = vunpack.c.h.b16 %v1314
        %v3663 = vunpack.c.l.b16 %v1315
        %v3664 = vunpack.c.h.b16 %v1315
        %v3665 = vunpack.c.l.b16 %v1316
        %v3666 = vunpack.c.h.b16 %v1316
        %v3667 = vunpack.c.l.b16 %v1317
        %v3668 = vunpack.c.h.b16 %v1317
        %v3669 = vunpack.c.l.b16 %v1318
        %v3670 = vunpack.c.h.b16 %v1318
        %v3671 = vunpack.c.l.b16 %v1319
        %v3672 = vunpack.c.h.b16 %v1319
        %v3673 = vunpack.c.l.b16 %v1320
        %v3674 = vunpack.c.h.b16 %v1320
        %v3675 = vunpack.c.l.b16 %v1321
        %v3676 = vunpack.c.h.b16 %v1321
        %v3677 = vunpack.c.l.b16 %v1322
        %v3678 = vunpack.c.h.b16 %v1322
        %v3679 = vunpack.c.l.b16 %v1323
        %v3680 = vunpack.c.h.b16 %v1323
        %v3681 = vunpack.c.l.b16 %v1324
        %v3682 = vunpack.c.h.b16 %v1324
        %v3683 = vunpack.c.l.b16 %v1325
        %v3684 = vunpack.c.h.b16 %v1325
        %v3685 = vunpack.c.l.b16 %v1326
        %v3686 = vunpack.c.h.b16 %v1326
        %v3687 = vunpack.c.l.b16 %v1327
        %v3688 = vunpack.c.h.b16 %v1327
        %v3689 = vunpack.c.l.b16 %v1328
        %v3690 = vunpack.c.h.b16 %v1328
        %v3691 = vunpack.c.l.b16 %v1329
        %v3692 = vunpack.c.h.b16 %v1329
        %v3693 = vunpack.c.l.b16 %v1330
        %v3694 = vunpack.c.h.b16 %v1330
        %v3695 = vunpack.c.l.b16 %v1331
        %v3696 = vunpack.c.h.b16 %v1331
        %v3697 = vunpack.c.l.b16 %v1332
        %v3698 = vunpack.c.h.b16 %v1332
        %v3699 = vunpack.c.l.b16 %v1333
        %v3700 = vunpack.c.h.b16 %v1333
        %v3701 = vunpack.c.l.b16 %v1334
        %v3702 = vunpack.c.h.b16 %v1334
        %v3703 = vunpack.c.l.b16 %v1335
        %v3704 = vunpack.c.h.b16 %v1335
        %v3705 = vunpack.c.l.b16 %v1336
        %v3706 = vunpack.c.h.b16 %v1336
        %v3707 = vunpack.c.l.b16 %v1337
        %v3708 = vunpack.c.h.b16 %v1337
        %v3709 = vunpack.c.l.b16 %v1338
        %v3710 = vunpack.c.h.b16 %v1338
        %v3711 = vunpack.c.l.b16 %v1339
        %v3712 = vunpack.c.h.b16 %v1339
        %v3713 = vunpack.c.l.b16 %v1340
        %v3714 = vunpack.c.h.b16 %v1340
        %v3715 = vunpack.c.l.b16 %v1341
        %v3716 = vunpack.c.h.b16 %v1341
        %v3717 = vunpack.c.l.b16 %v1342
        %v3718 = vunpack.c.h.b16 %v1342
        %v3719 = vunpack.c.l.b16 %v1343
        %v3720 = vunpack.c.h.b16 %v1343
        %v3721 = vunpack.c.l.b16 %v1344
        %v3722 = vunpack.c.h.b16 %v1344
        %v3723 = vunpack.c.l.b16 %v1345
        %v3724 = vunpack.c.h.b16 %v1345
        %v3725 = vunpack.c.l.b16 %v1346
        %v3726 = vunpack.c.h.b16 %v1346
        %v3727 = vunpack.c.l.b16 %v1347
        %v3728 = vunpack.c.h.b16 %v1347
        %v3729 = vunpack.c.l.b16 %v1348
        %v3730 = vunpack.c.h.b16 %v1348
        %v3731 = vunpack.c.l.b16 %v1349
        %v3732 = vunpack.c.h.b16 %v1349
        %v3733 = vunpack.c.l.b16 %v1350
        %v3734 = vunpack.c.h.b16 %v1350
        %v3735 = vunpack.c.l.b16 %v1351
        %v3736 = vunpack.c.h.b16 %v1351
        %v3737 = vunpack.c.l.b16 %v1352
        %v3738 = vunpack.c.h.b16 %v1352
        %v3739 = vunpack.c.l.b16 %v1353
        %v3740 = vunpack.c.h.b16 %v1353
        %v3741 = vunpack.c.l.b16 %v1354
        %v3742 = vunpack.c.h.b16 %v1354
        %v3743 = vunpack.c.l.b16 %v1355
        %v3744 = vunpack.c.h.b16 %v1355
        %v3745 = vunpack.c.l.b16 %v1356
        %v3746 = vunpack.c.h.b16 %v1356
        %v3747 = vunpack.c.l.b16 %v1357
        %v3748 = vunpack.c.h.b16 %v1357
        %v3749 = vunpack.c.l.b16 %v1358
        %v3750 = vunpack.c.h.b16 %v1358
        %v3751 = vunpack.c.l.b16 %v1359
        %v3752 = vunpack.c.h.b16 %v1359
        %v3753 = vunpack.c.l.b16 %v1360
        %v3754 = vunpack.c.h.b16 %v1360
        %v3755 = vunpack.c.l.b16 %v1361
        %v3756 = vunpack.c.h.b16 %v1361
        %v3757 = vunpack.c.l.b16 %v1362
        %v3758 = vunpack.c.h.b16 %v1362
        %v3759 = vunpack.c.l.b16 %v1363
        %v3760 = vunpack.c.h.b16 %v1363
        %v3761 = vunpack.c.l.b16 %v1364
        %v3762 = vunpack.c.h.b16 %v1364
        %v3763 = vunpack.c.l.b16 %v1365
        %v3764 = vunpack.c.h.b16 %v1365
        %v3765 = vunpack.c.l.b16 %v1366
        %v3766 = vunpack.c.h.b16 %v1366
        %v3767 = vunpack.c.l.b16 %v1367
        %v3768 = vunpack.c.h.b16 %v1367
        %v3769 = vunpack.c.l.b16 %v1368
        %v3770 = vunpack.c.h.b16 %v1368
        %v3771 = vunpack.c.l.b16 %v1369
        %v3772 = vunpack.c.h.b16 %v1369
        %v3773 = vunpack.c.l.b16 %v1370
        %v3774 = vunpack.c.h.b16 %v1370
        %v3775 = vunpack.c.l.b16 %v1371
        %v3776 = vunpack.c.h.b16 %v1371
        %v3777 = vunpack.c.l.b16 %v1372
        %v3778 = vunpack.c.h.b16 %v1372
        %v3779 = vunpack.c.l.b16 %v1373
        %v3780 = vunpack.c.h.b16 %v1373
        %v3781 = vunpack.c.l.b16 %v1374
        %v3782 = vunpack.c.h.b16 %v1374
        %v3783 = vunpack.c.l.b16 %v1375
        %v3784 = vunpack.c.h.b16 %v1375
        %v3785 = vunpack.c.l.b16 %v1376
        %v3786 = vunpack.c.h.b16 %v1376
        %v3787 = vpack.c.b16 %v2191, %v2187
        %v3788 = vpack.c.b16 %v2192, %v2188
        %v3789 = vpack.c.b16 %v2193, %v2189
        %v3790 = vpack.c.b16 %v2194, %v2190
        %v3791 = vpack.c.b16 %v2199, %v2195
        %v3792 = vpack.c.b16 %v2200, %v2196
        %v3793 = vpack.c.b16 %v2201, %v2197
        %v3794 = vpack.c.b16 %v2202, %v2198
        %v3795 = vpack.c.b16 %v2207, %v2203
        %v3796 = vpack.c.b16 %v2208, %v2204
        %v3797 = vpack.c.b16 %v2209, %v2205
        %v3798 = vpack.c.b16 %v2210, %v2206
        %v3799 = vpack.c.b16 %v2215, %v2211
        %v3800 = vpack.c.b16 %v2216, %v2212
        %v3801 = vpack.c.b16 %v2217, %v2213
        %v3802 = vpack.c.b16 %v2218, %v2214
        %v3803 = vpack.c.b16 %v2223, %v2219
        %v3804 = vpack.c.b16 %v2224, %v2220
        %v3805 = vpack.c.b16 %v2225, %v2221
        %v3806 = vpack.c.b16 %v2226, %v2222
        %v3807 = vpack.c.b16 %v2231, %v2227
        %v3808 = vpack.c.b16 %v2232, %v2228
        %v3809 = vpack.c.b16 %v2233, %v2229
        %v3810 = vpack.c.b16 %v2234, %v2230
        %v3811 = vpack.c.b16 %v2239, %v2235
        %v3812 = vpack.c.b16 %v2240, %v2236
        %v3813 = vpack.c.b16 %v2241, %v2237
        %v3814 = vpack.c.b16 %v2242, %v2238
        %v3815 = vpack.c.b16 %v2247, %v2243
        %v3816 = vpack.c.b16 %v2248, %v2244
        %v3817 = vpack.c.b16 %v2249, %v2245
        %v3818 = vpack.c.b16 %v2250, %v2246
        %v3819 = vpack.c.b16 %v2255, %v2251
        %v3820 = vpack.c.b16 %v2256, %v2252
        %v3821 = vpack.c.b16 %v2257, %v2253
        %v3822 = vpack.c.b16 %v2258, %v2254
        %v3823 = vpack.c.b16 %v2263, %v2259
        %v3824 = vpack.c.b16 %v2264, %v2260
        %v3825 = vpack.c.b16 %v2265, %v2261
        %v3826 = vpack.c.b16 %v2266, %v2262
        %v3827 = vpack.c.b16 %v2271, %v2267
        %v3828 = vpack.c.b16 %v2272, %v2268
        %v3829 = vpack.c.b16 %v2273, %v2269
        %v3830 = vpack.c.b16 %v2274, %v2270
        %v3831 = vpack.c.b16 %v2279, %v2275
        %v3832 = vpack.c.b16 %v2280, %v2276
        %v3833 = vpack.c.b16 %v2281, %v2277
        %v3834 = vpack.c.b16 %v2282, %v2278
        %v3835 = vpack.c.b16 %v2287, %v2283
        %v3836 = vpack.c.b16 %v2288, %v2284
        %v3837 = vpack.c.b16 %v2289, %v2285
        %v3838 = vpack.c.b16 %v2290, %v2286
        %v3839 = vpack.c.b16 %v2295, %v2291
        %v3840 = vpack.c.b16 %v2296, %v2292
        %v3841 = vpack.c.b16 %v2297, %v2293
        %v3842 = vpack.c.b16 %v2298, %v2294
        %v3843 = vpack.c.b16 %v2303, %v2299
        %v3844 = vpack.c.b16 %v2304, %v2300
        %v3845 = vpack.c.b16 %v2305, %v2301
        %v3846 = vpack.c.b16 %v2306, %v2302
        %v3847 = vpack.c.b16 %v2311, %v2307
        %v3848 = vpack.c.b16 %v2312, %v2308
        %v3849 = vpack.c.b16 %v2313, %v2309
        %v3850 = vpack.c.b16 %v2314, %v2310
        %v3851 = vpack.c.b16 %v2319, %v2315
        %v3852 = vpack.c.b16 %v2320, %v2316
        %v3853 = vpack.c.b16 %v2321, %v2317
        %v3854 = vpack.c.b16 %v2322, %v2318
        %v3855 = vpack.c.b16 %v2327, %v2323
        %v3856 = vpack.c.b16 %v2328, %v2324
        %v3857 = vpack.c.b16 %v2329, %v2325
        %v3858 = vpack.c.b16 %v2330, %v2326
        %v3859 = vpack.c.b16 %v2335, %v2331
        %v3860 = vpack.c.b16 %v2336, %v2332
        %v3861 = vpack.c.b16 %v2337, %v2333
        %v3862 = vpack.c.b16 %v2338, %v2334
        %v3863 = vpack.c.b16 %v2343, %v2339
        %v3864 = vpack.c.b16 %v2344, %v2340
        %v3865 = vpack.c.b16 %v2345, %v2341
        %v3866 = vpack.c.b16 %v2346, %v2342
        %v3867 = vpack.c.b16 %v2351, %v2347
        %v3868 = vpack.c.b16 %v2352, %v2348
        %v3869 = vpack.c.b16 %v2353, %v2349
        %v3870 = vpack.c.b16 %v2354, %v2350
        %v3871 = vpack.c.b16 %v2359, %v2355
        %v3872 = vpack.c.b16 %v2360, %v2356
        %v3873 = vpack.c.b16 %v2361, %v2357
        %v3874 = vpack.c.b16 %v2362, %v2358
        %v3875 = vpack.c.b16 %v2367, %v2363
        %v3876 = vpack.c.b16 %v2368, %v2364
        %v3877 = vpack.c.b16 %v2369, %v2365
        %v3878 = vpack.c.b16 %v2370, %v2366
        %v3879 = vpack.c.b16 %v2375, %v2371
        %v3880 = vpack.c.b16 %v2376, %v2372
        %v3881 = vpack.c.b16 %v2377, %v2373
        %v3882 = vpack.c.b16 %v2378, %v2374
        %v3883 = vpack.c.b16 %v2383, %v2379
        %v3884 = vpack.c.b16 %v2384, %v2380
        %v3885 = vpack.c.b16 %v2385, %v2381
        %v3886 = vpack.c.b16 %v2386, %v2382
        %v3887 = vpack.c.b16 %v2391, %v2387
        %v3888 = vpack.c.b16 %v2392, %v2388
        %v3889 = vpack.c.b16 %v2393, %v2389
        %v3890 = vpack.c.b16 %v2394, %v2390
        %v3891 = vpack.c.b16 %v2399, %v2395
        %v3892 = vpack.c.b16 %v2400, %v2396
        %v3893 = vpack.c.b16 %v2401, %v2397
        %v3894 = vpack.c.b16 %v2402, %v2398
        %v3895 = vpack.c.b16 %v2407, %v2403
        %v3896 = vpack.c.b16 %v2408, %v2404
        %v3897 = vpack.c.b16 %v2409, %v2405
        %v3898 = vpack.c.b16 %v2410, %v2406
        %v3899 = vpack.c.b16 %v2415, %v2411
        %v3900 = vpack.c.b16 %v2416, %v2412
        %v3901 = vpack.c.b16 %v2417, %v2413
        %v3902 = vpack.c.b16 %v2418, %v2414
        %v3903 = vpack.c.b16 %v2423, %v2419
        %v3904 = vpack.c.b16 %v2424, %v2420
        %v3905 = vpack.c.b16 %v2425, %v2421
        %v3906 = vpack.c.b16 %v2426, %v2422
        %v3907 = vpack.c.b16 %v2431, %v2427
        %v3908 = vpack.c.b16 %v2432, %v2428
        %v3909 = vpack.c.b16 %v2433, %v2429
        %v3910 = vpack.c.b16 %v2434, %v2430
        %v3911 = vpack.c.b16 %v2439, %v2435
        %v3912 = vpack.c.b16 %v2440, %v2436
        %v3913 = vpack.c.b16 %v2441, %v2437
        %v3914 = vpack.c.b16 %v2442, %v2438
        %v3915 = vpack.c.b16 %v2447, %v2443
        %v3916 = vpack.c.b16 %v2448, %v2444
        %v3917 = vpack.c.b16 %v2449, %v2445
        %v3918 = vpack.c.b16 %v2450, %v2446
        %v3919 = vpack.c.b16 %v2455, %v2451
        %v3920 = vpack.c.b16 %v2456, %v2452
        %v3921 = vpack.c.b16 %v2457, %v2453
        %v3922 = vpack.c.b16 %v2458, %v2454
        %v3923 = vpack.c.b16 %v2463, %v2459
        %v3924 = vpack.c.b16 %v2464, %v2460
        %v3925 = vpack.c.b16 %v2465, %v2461
        %v3926 = vpack.c.b16 %v2466, %v2462
        %v3927 = vpack.c.b16 %v2471, %v2467
        %v3928 = vpack.c.b16 %v2472, %v2468
        %v3929 = vpack.c.b16 %v2473, %v2469
        %v3930 = vpack.c.b16 %v2474, %v2470
        %v3931 = vpack.c.b16 %v2479, %v2475
        %v3932 = vpack.c.b16 %v2480, %v2476
        %v3933 = vpack.c.b16 %v2481, %v2477
        %v3934 = vpack.c.b16 %v2482, %v2478
        %v3935 = vpack.c.b16 %v2487, %v2483
        %v3936 = vpack.c.b16 %v2488, %v2484
        %v3937 = vpack.c.b16 %v2489, %v2485
        %v3938 = vpack.c.b16 %v2490, %v2486
        %v3939 = vpack.c.b16 %v2495, %v2491
        %v3940 = vpack.c.b16 %v2496, %v2492
        %v3941 = vpack.c.b16 %v2497, %v2493
        %v3942 = vpack.c.b16 %v2498, %v2494
        %v3943 = vpack.c.b16 %v2503, %v2499
        %v3944 = vpack.c.b16 %v2504, %v2500
        %v3945 = vpack.c.b16 %v2505, %v2501
        %v3946 = vpack.c.b16 %v2506, %v2502
        %v3947 = vpack.c.b16 %v2511, %v2507
        %v3948 = vpack.c.b16 %v2512, %v2508
        %v3949 = vpack.c.b16 %v2513, %v2509
        %v3950 = vpack.c.b16 %v2514, %v2510
        %v3951 = vpack.c.b16 %v2519, %v2515
        %v3952 = vpack.c.b16 %v2520, %v2516
        %v3953 = vpack.c.b16 %v2521, %v2517
        %v3954 = vpack.c.b16 %v2522, %v2518
        %v3955 = vpack.c.b16 %v2527, %v2523
        %v3956 = vpack.c.b16 %v2528, %v2524
        %v3957 = vpack.c.b16 %v2529, %v2525
        %v3958 = vpack.c.b16 %v2530, %v2526
        %v3959 = vpack.c.b16 %v2535, %v2531
        %v3960 = vpack.c.b16 %v2536, %v2532
        %v3961 = vpack.c.b16 %v2537, %v2533
        %v3962 = vpack.c.b16 %v2538, %v2534
        %v3963 = vpack.c.b16 %v2543, %v2539
        %v3964 = vpack.c.b16 %v2544, %v2540
        %v3965 = vpack.c.b16 %v2545, %v2541
        %v3966 = vpack.c.b16 %v2546, %v2542
        %v3967 = vpack.c.b16 %v2551, %v2547
        %v3968 = vpack.c.b16 %v2552, %v2548
        %v3969 = vpack.c.b16 %v2553, %v2549
        %v3970 = vpack.c.b16 %v2554, %v2550
        %v3971 = vpack.c.b16 %v2559, %v2555
        %v3972 = vpack.c.b16 %v2560, %v2556
        %v3973 = vpack.c.b16 %v2561, %v2557
        %v3974 = vpack.c.b16 %v2562, %v2558
        %v3975 = vpack.c.b16 %v2567, %v2563
        %v3976 = vpack.c.b16 %v2568, %v2564
        %v3977 = vpack.c.b16 %v2569, %v2565
        %v3978 = vpack.c.b16 %v2570, %v2566
        %v3979 = vpack.c.b16 %v2575, %v2571
        %v3980 = vpack.c.b16 %v2576, %v2572
        %v3981 = vpack.c.b16 %v2577, %v2573
        %v3982 = vpack.c.b16 %v2578, %v2574
        %v3983 = vpack.c.b16 %v2583, %v2579
        %v3984 = vpack.c.b16 %v2584, %v2580
        %v3985 = vpack.c.b16 %v2585, %v2581
        %v3986 = vpack.c.b16 %v2586, %v2582
        %v3987 = vpack.c.b16 %v2591, %v2587
        %v3988 = vpack.c.b16 %v2592, %v2588
        %v3989 = vpack.c.b16 %v2593, %v2589
        %v3990 = vpack.c.b16 %v2594, %v2590
        %v3991 = vpack.c.b16 %v2599, %v2595
        %v3992 = vpack.c.b16 %v2600, %v2596
        %v3993 = vpack.c.b16 %v2601, %v2597
        %v3994 = vpack.c.b16 %v2602, %v2598
        %v3995 = vpack.c.b16 %v2607, %v2603
        %v3996 = vpack.c.b16 %v2608, %v2604
        %v3997 = vpack.c.b16 %v2609, %v2605
        %v3998 = vpack.c.b16 %v2610, %v2606
        %v3999 = vpack.c.b16 %v2615, %v2611
        %v4000 = vpack.c.b16 %v2616, %v2612
        %v4001 = vpack.c.b16 %v2617, %v2613
        %v4002 = vpack.c.b16 %v2618, %v2614
        %v4003 = vpack.c.b16 %v2623, %v2619
        %v4004 = vpack.c.b16 %v2624, %v2620
        %v4005 = vpack.c.b16 %v2625, %v2621
        %v4006 = vpack.c.b16 %v2626, %v2622
        %v4007 = vpack.c.b16 %v2631, %v2627
        %v4008 = vpack.c.b16 %v2632, %v2628
        %v4009 = vpack.c.b16 %v2633, %v2629
        %v4010 = vpack.c.b16 %v2634, %v2630
        %v4011 = vpack.c.b16 %v2639, %v2635
        %v4012 = vpack.c.b16 %v2640, %v2636
        %v4013 = vpack.c.b16 %v2641, %v2637
        %v4014 = vpack.c.b16 %v2642, %v2638
        %v4015 = vpack.c.b16 %v2647, %v2643
        %v4016 = vpack.c.b16 %v2648, %v2644
        %v4017 = vpack.c.b16 %v2649, %v2645
        %v4018 = vpack.c.b16 %v2650, %v2646
        %v4019 = vpack.c.b16 %v2655, %v2651
        %v4020 = vpack.c.b16 %v2656, %v2652
        %v4021 = vpack.c.b16 %v2657, %v2653
        %v4022 = vpack.c.b16 %v2658, %v2654
        %v4023 = vpack.c.b16 %v2663, %v2659
        %v4024 = vpack.c.b16 %v2664, %v2660
        %v4025 = vpack.c.b16 %v2665, %v2661
        %v4026 = vpack.c.b16 %v2666, %v2662
        %v4027 = vpack.c.b16 %v2671, %v2667
        %v4028 = vpack.c.b16 %v2672, %v2668
        %v4029 = vpack.c.b16 %v2673, %v2669
        %v4030 = vpack.c.b16 %v2674, %v2670
        %v4031 = vpack.c.b16 %v2679, %v2675
        %v4032 = vpack.c.b16 %v2680, %v2676
        %v4033 = vpack.c.b16 %v2681, %v2677
        %v4034 = vpack.c.b16 %v2682, %v2678
        %v4035 = vpack.c.b16 %v2687, %v2683
        %v4036 = vpack.c.b16 %v2688, %v2684
        %v4037 = vpack.c.b16 %v2689, %v2685
        %v4038 = vpack.c.b16 %v2690, %v2686
        %v4039 = vpack.c.b16 %v2695, %v2691
        %v4040 = vpack.c.b16 %v2696, %v2692
        %v4041 = vpack.c.b16 %v2697, %v2693
        %v4042 = vpack.c.b16 %v2698, %v2694
        %v4043 = vpack.c.b16 %v2703, %v2699
        %v4044 = vpack.c.b16 %v2704, %v2700
        %v4045 = vpack.c.b16 %v2705, %v2701
        %v4046 = vpack.c.b16 %v2706, %v2702
        %v4047 = vpack.c.b16 %v2711, %v2707
        %v4048 = vpack.c.b16 %v2712, %v2708
        %v4049 = vpack.c.b16 %v2713, %v2709
        %v4050 = vpack.c.b16 %v2714, %v2710
        %v4051 = vpack.c.b16 %v2719, %v2715
        %v4052 = vpack.c.b16 %v2720, %v2716
        %v4053 = vpack.c.b16 %v2721, %v2717
        %v4054 = vpack.c.b16 %v2722, %v2718
        %v4055 = vpack.c.b16 %v2727, %v2723
        %v4056 = vpack.c.b16 %v2728, %v2724
        %v4057 = vpack.c.b16 %v2729, %v2725
        %v4058 = vpack.c.b16 %v2730, %v2726
        %v4059 = vpack.c.b16 %v2735, %v2731
        %v4060 = vpack.c.b16 %v2736, %v2732
        %v4061 = vpack.c.b16 %v2737, %v2733
        %v4062 = vpack.c.b16 %v2738, %v2734
        %v4063 = vpack.c.b16 %v2743, %v2739
        %v4064 = vpack.c.b16 %v2744, %v2740
        %v4065 = vpack.c.b16 %v2745, %v2741
        %v4066 = vpack.c.b16 %v2746, %v2742
        %v4067 = vpack.c.b16 %v2751, %v2747
        %v4068 = vpack.c.b16 %v2752, %v2748
        %v4069 = vpack.c.b16 %v2753, %v2749
        %v4070 = vpack.c.b16 %v2754, %v2750
        %v4071 = vpack.c.b16 %v2759, %v2755
        %v4072 = vpack.c.b16 %v2760, %v2756
        %v4073 = vpack.c.b16 %v2761, %v2757
        %v4074 = vpack.c.b16 %v2762, %v2758
        %v4075 = vpack.c.b16 %v2767, %v2763
        %v4076 = vpack.c.b16 %v2768, %v2764
        %v4077 = vpack.c.b16 %v2769, %v2765
        %v4078 = vpack.c.b16 %v2770, %v2766
        %v4079 = vpack.c.b16 %v2775, %v2771
        %v4080 = vpack.c.b16 %v2776, %v2772
        %v4081 = vpack.c.b16 %v2777, %v2773
        %v4082 = vpack.c.b16 %v2778, %v2774
        %v4083 = vpack.c.b16 %v2783, %v2779
        %v4084 = vpack.c.b16 %v2784, %v2780
        %v4085 = vpack.c.b16 %v2785, %v2781
        %v4086 = vpack.c.b16 %v2786, %v2782
        %v4087 = vpack.c.b16 %v2791, %v2787
        %v4088 = vpack.c.b16 %v2792, %v2788
        %v4089 = vpack.c.b16 %v2793, %v2789
        %v4090 = vpack.c.b16 %v2794, %v2790
        %v4091 = vpack.c.b16 %v2799, %v2795
        %v4092 = vpack.c.b16 %v2800, %v2796
        %v4093 = vpack.c.b16 %v2801, %v2797
        %v4094 = vpack.c.b16 %v2802, %v2798
        %v4095 = vpack.c.b16 %v2807, %v2803
        %v4096 = vpack.c.b16 %v2808, %v2804
        %v4097 = vpack.c.b16 %v2809, %v2805
        %v4098 = vpack.c.b16 %v2810, %v2806
        %v4099 = vpack.c.b16 %v2815, %v2811
        %v4100 = vpack.c.b16 %v2816, %v2812
        %v4101 = vpack.c.b16 %v2817, %v2813
        %v4102 = vpack.c.b16 %v2818, %v2814
        %v4103 = vpack.c.b16 %v2823, %v2819
        %v4104 = vpack.c.b16 %v2824, %v2820
        %v4105 = vpack.c.b16 %v2825, %v2821
        %v4106 = vpack.c.b16 %v2826, %v2822
        %v4107 = vpack.c.b16 %v2831, %v2827
        %v4108 = vpack.c.b16 %v2832, %v2828
        %v4109 = vpack.c.b16 %v2833, %v2829
        %v4110 = vpack.c.b16 %v2834, %v2830
        %v4111 = vpack.c.b16 %v2839, %v2835
        %v4112 = vpack.c.b16 %v2840, %v2836
        %v4113 = vpack.c.b16 %v2841, %v2837
        %v4114 = vpack.c.b16 %v2842, %v2838
        %v4115 = vpack.c.b16 %v2847, %v2843
        %v4116 = vpack.c.b16 %v2848, %v2844
        %v4117 = vpack.c.b16 %v2849, %v2845
        %v4118 = vpack.c.b16 %v2850, %v2846
        %v4119 = vpack.c.b16 %v2855, %v2851
        %v4120 = vpack.c.b16 %v2856, %v2852
        %v4121 = vpack.c.b16 %v2857, %v2853
        %v4122 = vpack.c.b16 %v2858, %v2854
        %v4123 = vpack.c.b16 %v2863, %v2859
        %v4124 = vpack.c.b16 %v2864, %v2860
        %v4125 = vpack.c.b16 %v2865, %v2861
        %v4126 = vpack.c.b16 %v2866, %v2862
        %v4127 = vpack.c.b16 %v2871, %v2867
        %v4128 = vpack.c.b16 %v2872, %v2868
        %v4129 = vpack.c.b16 %v2873, %v2869
        %v4130 = vpack.c.b16 %v2874, %v2870
        %v4131 = vpack.c.b16 %v2879, %v2875
        %v4132 = vpack.c.b16 %v2880, %v2876
        %v4133 = vpack.c.b16 %v2881, %v2877
        %v4134 = vpack.c.b16 %v2882, %v2878
        %v4135 = vpack.c.b16 %v2887, %v2883
        %v4136 = vpack.c.b16 %v2888, %v2884
        %v4137 = vpack.c.b16 %v2889, %v2885
        %v4138 = vpack.c.b16 %v2890, %v2886
        %v4139 = vpack.c.b16 %v2895, %v2891
        %v4140 = vpack.c.b16 %v2896, %v2892
        %v4141 = vpack.c.b16 %v2897, %v2893
        %v4142 = vpack.c.b16 %v2898, %v2894
        %v4143 = vpack.c.b16 %v2903, %v2899
        %v4144 = vpack.c.b16 %v2904, %v2900
        %v4145 = vpack.c.b16 %v2905, %v2901
        %v4146 = vpack.c.b16 %v2906, %v2902
        %v4147 = vpack.c.b16 %v2911, %v2907
        %v4148 = vpack.c.b16 %v2912, %v2908
        %v4149 = vpack.c.b16 %v2913, %v2909
        %v4150 = vpack.c.b16 %v2914, %v2910
        %v4151 = vpack.c.b16 %v2919, %v2915
        %v4152 = vpack.c.b16 %v2920, %v2916
        %v4153 = vpack.c.b16 %v2921, %v2917
        %v4154 = vpack.c.b16 %v2922, %v2918
        %v4155 = vpack.c.b16 %v2927, %v2923
        %v4156 = vpack.c.b16 %v2928, %v2924
        %v4157 = vpack.c.b16 %v2929, %v2925
        %v4158 = vpack.c.b16 %v2930, %v2926
        %v4159 = vpack.c.b16 %v2935, %v2931
        %v4160 = vpack.c.b16 %v2936, %v2932
        %v4161 = vpack.c.b16 %v2937, %v2933
        %v4162 = vpack.c.b16 %v2938, %v2934
        %v4163 = vpack.c.b16 %v2943, %v2939
        %v4164 = vpack.c.b16 %v2944, %v2940
        %v4165 = vpack.c.b16 %v2945, %v2941
        %v4166 = vpack.c.b16 %v2946, %v2942
        %v4167 = vpack.c.b16 %v2951, %v2947
        %v4168 = vpack.c.b16 %v2952, %v2948
        %v4169 = vpack.c.b16 %v2953, %v2949
        %v4170 = vpack.c.b16 %v2954, %v2950
        %v4171 = vpack.c.b16 %v2959, %v2955
        %v4172 = vpack.c.b16 %v2960, %v2956
        %v4173 = vpack.c.b16 %v2961, %v2957
        %v4174 = vpack.c.b16 %v2962, %v2958
        %v4175 = vpack.c.b16 %v2967, %v2963
        %v4176 = vpack.c.b16 %v2968, %v2964
        %v4177 = vpack.c.b16 %v2969, %v2965
        %v4178 = vpack.c.b16 %v2970, %v2966
        %v4179 = vpack.c.b16 %v2975, %v2971
        %v4180 = vpack.c.b16 %v2976, %v2972
        %v4181 = vpack.c.b16 %v2977, %v2973
        %v4182 = vpack.c.b16 %v2978, %v2974
        %v4183 = vpack.c.b16 %v2983, %v2979
        %v4184 = vpack.c.b16 %v2984, %v2980
        %v4185 = vpack.c.b16 %v2985, %v2981
        %v4186 = vpack.c.b16 %v2986, %v2982
        %v4187 = vpack.c.b16 %v2991, %v2987
        %v4188 = vpack.c.b16 %v2992, %v2988
        %v4189 = vpack.c.b16 %v2993, %v2989
        %v4190 = vpack.c.b16 %v2994, %v2990
        %v4191 = vpack.c.b16 %v2999, %v2995
        %v4192 = vpack.c.b16 %v3000, %v2996
        %v4193 = vpack.c.b16 %v3001, %v2997
        %v4194 = vpack.c.b16 %v3002, %v2998
        %v4195 = vpack.c.b16 %v3007, %v3003
        %v4196 = vpack.c.b16 %v3008, %v3004
        %v4197 = vpack.c.b16 %v3009, %v3005
        %v4198 = vpack.c.b16 %v3010, %v3006
        %v4199 = vpack.c.b16 %v3015, %v3011
        %v4200 = vpack.c.b16 %v3016, %v3012
        %v4201 = vpack.c.b16 %v3017, %v3013
        %v4202 = vpack.c.b16 %v3018, %v3014
        %v4203 = vpack.c.b16 %v3023, %v3019
        %v4204 = vpack.c.b16 %v3024, %v3020
        %v4205 = vpack.c.b16 %v3025, %v3021
        %v4206 = vpack.c.b16 %v3026, %v3022
        %v4207 = vpack.c.b16 %v3031, %v3027
        %v4208 = vpack.c.b16 %v3032, %v3028
        %v4209 = vpack.c.b16 %v3033, %v3029
        %v4210 = vpack.c.b16 %v3034, %v3030
        %v4211 = vpack.c.b16 %v3039, %v3035
        %v4212 = vpack.c.b16 %v3040, %v3036
        %v4213 = vpack.c.b16 %v3041, %v3037
        %v4214 = vpack.c.b16 %v3042, %v3038
        %v4215 = vpack.c.b16 %v3047, %v3043
        %v4216 = vpack.c.b16 %v3048, %v3044
        %v4217 = vpack.c.b16 %v3049, %v3045
        %v4218 = vpack.c.b16 %v3050, %v3046
        %v4219 = vpack.c.b16 %v3055, %v3051
        %v4220 = vpack.c.b16 %v3056, %v3052
        %v4221 = vpack.c.b16 %v3057, %v3053
        %v4222 = vpack.c.b16 %v3058, %v3054
        %v4223 = vpack.c.b16 %v3063, %v3059
        %v4224 = vpack.c.b16 %v3064, %v3060
        %v4225 = vpack.c.b16 %v3065, %v3061
        %v4226 = vpack.c.b16 %v3066, %v3062
        %v4227 = vpack.c.b16 %v3071, %v3067
        %v4228 = vpack.c.b16 %v3072, %v3068
        %v4229 = vpack.c.b16 %v3073, %v3069
        %v4230 = vpack.c.b16 %v3074, %v3070
        %v4231 = vpack.c.b16 %v3079, %v3075
        %v4232 = vpack.c.b16 %v3080, %v3076
        %v4233 = vpack.c.b16 %v3081, %v3077
        %v4234 = vpack.c.b16 %v3082, %v3078
        %v4235 = vpack.c.b16 %v3087, %v3083
        %v4236 = vpack.c.b16 %v3088, %v3084
        %v4237 = vpack.c.b16 %v3089, %v3085
        %v4238 = vpack.c.b16 %v3090, %v3086
        %v4239 = vpack.c.b16 %v3095, %v3091
        %v4240 = vpack.c.b16 %v3096, %v3092
        %v4241 = vpack.c.b16 %v3097, %v3093
        %v4242 = vpack.c.b16 %v3098, %v3094
        %v4243 = vpack.c.b16 %v3103, %v3099
        %v4244 = vpack.c.b16 %v3104, %v3100
        %v4245 = vpack.c.b16 %v3105, %v3101
        %v4246 = vpack.c.b16 %v3106, %v3102
        %v4247 = vpack.c.b16 %v3111, %v3107
        %v4248 = vpack.c.b16 %v3112, %v3108
        %v4249 = vpack.c.b16 %v3113, %v3109
        %v4250 = vpack.c.b16 %v3114, %v3110
        %v4251 = vpack.c.b16 %v3119, %v3115
        %v4252 = vpack.c.b16 %v3120, %v3116
        %v4253 = vpack.c.b16 %v3121, %v3117
        %v4254 = vpack.c.b16 %v3122, %v3118
        %v4255 = vpack.c.b16 %v3127, %v3123
        %v4256 = vpack.c.b16 %v3128, %v3124
        %v4257 = vpack.c.b16 %v3129, %v3125
        %v4258 = vpack.c.b16 %v3130, %v3126
        %v4259 = vpack.c.b16 %v3135, %v3131
        %v4260 = vpack.c.b16 %v3136, %v3132
        %v4261 = vpack.c.b16 %v3137, %v3133
        %v4262 = vpack.c.b16 %v3138, %v3134
        %v4263 = vpack.c.b16 %v3143, %v3139
        %v4264 = vpack.c.b16 %v3144, %v3140
        %v4265 = vpack.c.b16 %v3145, %v3141
        %v4266 = vpack.c.b16 %v3146, %v3142
        %v4267 = vpack.c.b16 %v3151, %v3147
        %v4268 = vpack.c.b16 %v3152, %v3148
        %v4269 = vpack.c.b16 %v3153, %v3149
        %v4270 = vpack.c.b16 %v3154, %v3150
        %v4271 = vpack.c.b16 %v3159, %v3155
        %v4272 = vpack.c.b16 %v3160, %v3156
        %v4273 = vpack.c.b16 %v3161, %v3157
        %v4274 = vpack.c.b16 %v3162, %v3158
        %v4275 = vpack.c.b16 %v3167, %v3163
        %v4276 = vpack.c.b16 %v3168, %v3164
        %v4277 = vpack.c.b16 %v3169, %v3165
        %v4278 = vpack.c.b16 %v3170, %v3166
        %v4279 = vpack.c.b16 %v3175, %v3171
        %v4280 = vpack.c.b16 %v3176, %v3172
        %v4281 = vpack.c.b16 %v3177, %v3173
        %v4282 = vpack.c.b16 %v3178, %v3174
        %v4283 = vpack.c.b16 %v3183, %v3179
        %v4284 = vpack.c.b16 %v3184, %v3180
        %v4285 = vpack.c.b16 %v3185, %v3181
        %v4286 = vpack.c.b16 %v3186, %v3182
        %v4287 = vpack.c.b16 %v3191, %v3187
        %v4288 = vpack.c.b16 %v3192, %v3188
        %v4289 = vpack.c.b16 %v3193, %v3189
        %v4290 = vpack.c.b16 %v3194, %v3190
        %v4291 = vpack.c.b16 %v3199, %v3195
        %v4292 = vpack.c.b16 %v3200, %v3196
        %v4293 = vpack.c.b16 %v3201, %v3197
        %v4294 = vpack.c.b16 %v3202, %v3198
        %v4295 = vpack.c.b16 %v3207, %v3203
        %v4296 = vpack.c.b16 %v3208, %v3204
        %v4297 = vpack.c.b16 %v3209, %v3205
        %v4298 = vpack.c.b16 %v3210, %v3206
        %v4299 = vpack.c.b16 %v3215, %v3211
        %v4300 = vpack.c.b16 %v3216, %v3212
        %v4301 = vpack.c.b16 %v3217, %v3213
        %v4302 = vpack.c.b16 %v3218, %v3214
        %v4303 = vpack.c.b16 %v3223, %v3219
        %v4304 = vpack.c.b16 %v3224, %v3220
        %v4305 = vpack.c.b16 %v3225, %v3221
        %v4306 = vpack.c.b16 %v3226, %v3222
        %v4307 = vpack.c.b16 %v3231, %v3227
        %v4308 = vpack.c.b16 %v3232, %v3228
        %v4309 = vpack.c.b16 %v3233, %v3229
        %v4310 = vpack.c.b16 %v3234, %v3230
        %v4311 = vpack.c.b16 %v3239, %v3235
        %v4312 = vpack.c.b16 %v3240, %v3236
        %v4313 = vpack.c.b16 %v3241, %v3237
        %v4314 = vpack.c.b16 %v3242, %v3238
        %v4315 = vpack.c.b16 %v3247, %v3243
        %v4316 = vpack.c.b16 %v3248, %v3244
        %v4317 = vpack.c.b16 %v3249, %v3245
        %v4318 = vpack.c.b16 %v3250, %v3246
        %v4319 = vpack.c.b16 %v3255, %v3251
        %v4320 = vpack.c.b16 %v3256, %v3252
        %v4321 = vpack.c.b16 %v3257, %v3253
        %v4322 = vpack.c.b16 %v3258, %v3254
        %v4323 = vpack.c.b16 %v3263, %v3259
        %v4324 = vpack.c.b16 %v3264, %v3260
        %v4325 = vpack.c.b16 %v3265, %v3261
        %v4326 = vpack.c.b16 %v3266, %v3262
        %v4327 = vpack.c.b16 %v3271, %v3267
        %v4328 = vpack.c.b16 %v3272, %v3268
        %v4329 = vpack.c.b16 %v3273, %v3269
        %v4330 = vpack.c.b16 %v3274, %v3270
        %v4331 = vpack.c.b16 %v3279, %v3275
        %v4332 = vpack.c.b16 %v3280, %v3276
        %v4333 = vpack.c.b16 %v3281, %v3277
        %v4334 = vpack.c.b16 %v3282, %v3278
        %v4335 = vpack.c.b16 %v3287, %v3283
        %v4336 = vpack.c.b16 %v3288, %v3284
        %v4337 = vpack.c.b16 %v3289, %v3285
        %v4338 = vpack.c.b16 %v3290, %v3286
        %v4339 = vpack.c.b16 %v3295, %v3291
        %v4340 = vpack.c.b16 %v3296, %v3292
        %v4341 = vpack.c.b16 %v3297, %v3293
        %v4342 = vpack.c.b16 %v3298, %v3294
        %v4343 = vpack.c.b16 %v3303, %v3299
        %v4344 = vpack.c.b16 %v3304, %v3300
        %v4345 = vpack.c.b16 %v3305, %v3301
        %v4346 = vpack.c.b16 %v3306, %v3302
        %v4347 = vpack.c.b16 %v3311, %v3307
        %v4348 = vpack.c.b16 %v3312, %v3308
        %v4349 = vpack.c.b16 %v3313, %v3309
        %v4350 = vpack.c.b16 %v3314, %v3310
        %v4351 = vpack.c.b16 %v3319, %v3315
        %v4352 = vpack.c.b16 %v3320, %v3316
        %v4353 = vpack.c.b16 %v3321, %v3317
        %v4354 = vpack.c.b16 %v3322, %v3318
        %v4355 = vpack.c.b16 %v3327, %v3323
        %v4356 = vpack.c.b16 %v3328, %v3324
        %v4357 = vpack.c.b16 %v3329, %v3325
        %v4358 = vpack.c.b16 %v3330, %v3326
        %v4359 = vpack.c.b16 %v3335, %v3331
        %v4360 = vpack.c.b16 %v3336, %v3332
        %v4361 = vpack.c.b16 %v3337, %v3333
        %v4362 = vpack.c.b16 %v3338, %v3334
        %v4363 = vpack.c.b16 %v3343, %v3339
        %v4364 = vpack.c.b16 %v3344, %v3340
        %v4365 = vpack.c.b16 %v3345, %v3341
        %v4366 = vpack.c.b16 %v3346, %v3342
        %v4367 = vpack.c.b16 %v3351, %v3347
        %v4368 = vpack.c.b16 %v3352, %v3348
        %v4369 = vpack.c.b16 %v3353, %v3349
        %v4370 = vpack.c.b16 %v3354, %v3350
        %v4371 = vpack.c.b16 %v3359, %v3355
        %v4372 = vpack.c.b16 %v3360, %v3356
        %v4373 = vpack.c.b16 %v3361, %v3357
        %v4374 = vpack.c.b16 %v3362, %v3358
        %v4375 = vpack.c.b16 %v3367, %v3363
        %v4376 = vpack.c.b16 %v3368, %v3364
        %v4377 = vpack.c.b16 %v3369, %v3365
        %v4378 = vpack.c.b16 %v3370, %v3366
        %v4379 = vpack.c.b16 %v3375, %v3371
        %v4380 = vpack.c.b16 %v3376, %v3372
        %v4381 = vpack.c.b16 %v3377, %v3373
        %v4382 = vpack.c.b16 %v3378, %v3374
        %v4383 = vpack.c.b16 %v3383, %v3379
        %v4384 = vpack.c.b16 %v3384, %v3380
        %v4385 = vpack.c.b16 %v3385, %v3381
        %v4386 = vpack.c.b16 %v3386, %v3382
        %v4387 = vpack.c.b16 %v3391, %v3387
        %v4388 = vpack.c.b16 %v3392, %v3388
        %v4389 = vpack.c.b16 %v3393, %v3389
        %v4390 = vpack.c.b16 %v3394, %v3390
        %v4391 = vpack.c.b16 %v3399, %v3395
        %v4392 = vpack.c.b16 %v3400, %v3396
        %v4393 = vpack.c.b16 %v3401, %v3397
        %v4394 = vpack.c.b16 %v3402, %v3398
        %v4395 = vpack.c.b16 %v3407, %v3403
        %v4396 = vpack.c.b16 %v3408, %v3404
        %v4397 = vpack.c.b16 %v3409, %v3405
        %v4398 = vpack.c.b16 %v3410, %v3406
        %v4399 = vpack.c.b16 %v3415, %v3411
        %v4400 = vpack.c.b16 %v3416, %v3412
        %v4401 = vpack.c.b16 %v3417, %v3413
        %v4402 = vpack.c.b16 %v3418, %v3414
        %v4403 = vpack.c.b16 %v3423, %v3419
        %v4404 = vpack.c.b16 %v3424, %v3420
        %v4405 = vpack.c.b16 %v3425, %v3421
        %v4406 = vpack.c.b16 %v3426, %v3422
        %v4407 = vpack.c.b16 %v3431, %v3427
        %v4408 = vpack.c.b16 %v3432, %v3428
        %v4409 = vpack.c.b16 %v3433, %v3429
        %v4410 = vpack.c.b16 %v3434, %v3430
        %v4411 = vpack.c.b16 %v3439, %v3435
        %v4412 = vpack.c.b16 %v3440, %v3436
        %v4413 = vpack.c.b16 %v3441, %v3437
        %v4414 = vpack.c.b16 %v3442, %v3438
        %v4415 = vpack.c.b16 %v3447, %v3443
        %v4416 = vpack.c.b16 %v3448, %v3444
        %v4417 = vpack.c.b16 %v3449, %v3445
        %v4418 = vpack.c.b16 %v3450, %v3446
        %v4419 = vpack.c.b16 %v3455, %v3451
        %v4420 = vpack.c.b16 %v3456, %v3452
        %v4421 = vpack.c.b16 %v3457, %v3453
        %v4422 = vpack.c.b16 %v3458, %v3454
        %v4423 = vpack.c.b16 %v3463, %v3459
        %v4424 = vpack.c.b16 %v3464, %v3460
        %v4425 = vpack.c.b16 %v3465, %v3461
        %v4426 = vpack.c.b16 %v3466, %v3462
        %v4427 = vpack.c.b16 %v3471, %v3467
        %v4428 = vpack.c.b16 %v3472, %v3468
        %v4429 = vpack.c.b16 %v3473, %v3469
        %v4430 = vpack.c.b16 %v3474, %v3470
        %v4431 = vpack.c.b16 %v3479, %v3475
        %v4432 = vpack.c.b16 %v3480, %v3476
        %v4433 = vpack.c.b16 %v3481, %v3477
        %v4434 = vpack.c.b16 %v3482, %v3478
        %v4435 = vpack.c.b16 %v3487, %v3483
        %v4436 = vpack.c.b16 %v3488, %v3484
        %v4437 = vpack.c.b16 %v3489, %v3485
        %v4438 = vpack.c.b16 %v3490, %v3486
        %v4439 = vpack.c.b16 %v3495, %v3491
        %v4440 = vpack.c.b16 %v3496, %v3492
        %v4441 = vpack.c.b16 %v3497, %v3493
        %v4442 = vpack.c.b16 %v3498, %v3494
        %v4443 = vpack.c.b16 %v3503, %v3499
        %v4444 = vpack.c.b16 %v3504, %v3500
        %v4445 = vpack.c.b16 %v3505, %v3501
        %v4446 = vpack.c.b16 %v3506, %v3502
        %v4447 = vpack.c.b16 %v3511, %v3507
        %v4448 = vpack.c.b16 %v3512, %v3508
        %v4449 = vpack.c.b16 %v3513, %v3509
        %v4450 = vpack.c.b16 %v3514, %v3510
        %v4451 = vpack.c.b16 %v3519, %v3515
        %v4452 = vpack.c.b16 %v3520, %v3516
        %v4453 = vpack.c.b16 %v3521, %v3517
        %v4454 = vpack.c.b16 %v3522, %v3518
        %v4455 = vpack.c.b16 %v3527, %v3523
        %v4456 = vpack.c.b16 %v3528, %v3524
        %v4457 = vpack.c.b16 %v3529, %v3525
        %v4458 = vpack.c.b16 %v3530, %v3526
        %v4459 = vpack.c.b16 %v3535, %v3531
        %v4460 = vpack.c.b16 %v3536, %v3532
        %v4461 = vpack.c.b16 %v3537, %v3533
        %v4462 = vpack.c.b16 %v3538, %v3534
        %v4463 = vpack.c.b16 %v3543, %v3539
        %v4464 = vpack.c.b16 %v3544, %v3540
        %v4465 = vpack.c.b16 %v3545, %v3541
        %v4466 = vpack.c.b16 %v3546, %v3542
        %v4467 = vpack.c.b16 %v3551, %v3547
        %v4468 = vpack.c.b16 %v3552, %v3548
        %v4469 = vpack.c.b16 %v3553, %v3549
        %v4470 = vpack.c.b16 %v3554, %v3550
        %v4471 = vpack.c.b16 %v3559, %v3555
        %v4472 = vpack.c.b16 %v3560, %v3556
        %v4473 = vpack.c.b16 %v3561, %v3557
        %v4474 = vpack.c.b16 %v3562, %v3558
        %v4475 = vpack.c.b16 %v3567, %v3563
        %v4476 = vpack.c.b16 %v3568, %v3564
        %v4477 = vpack.c.b16 %v3569, %v3565
        %v4478 = vpack.c.b16 %v3570, %v3566
        %v4479 = vpack.c.b16 %v3575, %v3571
        %v4480 = vpack.c.b16 %v3576, %v3572
        %v4481 = vpack.c.b16 %v3577, %v3573
        %v4482 = vpack.c.b16 %v3578, %v3574
        %v4483 = vpack.c.b16 %v3583, %v3579
        %v4484 = vpack.c.b16 %v3584, %v3580
        %v4485 = vpack.c.b16 %v3585, %v3581
        %v4486 = vpack.c.b16 %v3586, %v3582
        %v4487 = vpack.c.b16 %v3591, %v3587
        %v4488 = vpack.c.b16 %v3592, %v3588
        %v4489 = vpack.c.b16 %v3593, %v3589
        %v4490 = vpack.c.b16 %v3594, %v3590
        %v4491 = vpack.c.b16 %v3599, %v3595
        %v4492 = vpack.c.b16 %v3600, %v3596
        %v4493 = vpack.c.b16 %v3601, %v3597
        %v4494 = vpack.c.b16 %v3602, %v3598
        %v4495 = vpack.c.b16 %v3607, %v3603
        %v4496 = vpack.c.b16 %v3608, %v3604
        %v4497 = vpack.c.b16 %v3609, %v3605
        %v4498 = vpack.c.b16 %v3610, %v3606
        %v4499 = vpack.c.b16 %v3615, %v3611
        %v4500 = vpack.c.b16 %v3616, %v3612
        %v4501 = vpack.c.b16 %v3617, %v3613
        %v4502 = vpack.c.b16 %v3618, %v3614
        %v4503 = vpack.c.b16 %v3623, %v3619
        %v4504 = vpack.c.b16 %v3624, %v3620
        %v4505 = vpack.c.b16 %v3625, %v3621
        %v4506 = vpack.c.b16 %v3626, %v3622
        %v4507 = vpack.c.b16 %v3631, %v3627
        %v4508 = vpack.c.b16 %v3632, %v3628
        %v4509 = vpack.c.b16 %v3633, %v3629
        %v4510 = vpack.c.b16 %v3634, %v3630
        %v4511 = vpack.c.b16 %v3639, %v3635
        %v4512 = vpack.c.b16 %v3640, %v3636
        %v4513 = vpack.c.b16 %v3641, %v3637
        %v4514 = vpack.c.b16 %v3642, %v3638
        %v4515 = vpack.c.b16 %v3647, %v3643
        %v4516 = vpack.c.b16 %v3648, %v3644
        %v4517 = vpack.c.b16 %v3649, %v3645
        %v4518 = vpack.c.b16 %v3650, %v3646
        %v4519 = vpack.c.b16 %v3655, %v3651
        %v4520 = vpack.c.b16 %v3656, %v3652
        %v4521 = vpack.c.b16 %v3657, %v3653
        %v4522 = vpack.c.b16 %v3658, %v3654
        %v4523 = vpack.c.b16 %v3663, %v3659
        %v4524 = vpack.c.b16 %v3664, %v3660
        %v4525 = vpack.c.b16 %v3665, %v3661
        %v4526 = vpack.c.b16 %v3666, %v3662
        %v4527 = vpack.c.b16 %v3671, %v3667
        %v4528 = vpack.c.b16 %v3672, %v3668
        %v4529 = vpack.c.b16 %v3673, %v3669
        %v4530 = vpack.c.b16 %v3674, %v3670
        %v4531 = vpack.c.b16 %v3679, %v3675
        %v4532 = vpack.c.b16 %v3680, %v3676
        %v4533 = vpack.c.b16 %v3681, %v3677
        %v4534 = vpack.c.b16 %v3682, %v3678
        %v4535 = vpack.c.b16 %v3687, %v3683
        %v4536 = vpack.c.b16 %v3688, %v3684
        %v4537 = vpack.c.b16 %v3689, %v3685
        %v4538 = vpack.c.b16 %v3690, %v3686
        %v4539 = vpack.c.b16 %v3695, %v3691
        %v4540 = vpack.c.b16 %v3696, %v3692
        %v4541 = vpack.c.b16 %v3697, %v3693
        %v4542 = vpack.c.b16 %v3698, %v3694
        %v4543 = vpack.c.b16 %v3703, %v3699
        %v4544 = vpack.c.b16 %v3704, %v3700
        %v4545 = vpack.c.b16 %v3705, %v3701
        %v4546 = vpack.c.b16 %v3706, %v3702
        %v4547 = vpack.c.b16 %v3711, %v3707
        %v4548 = vpack.c.b16 %v3712, %v3708
        %v4549 = vpack.c.b16 %v3713, %v3709
        %v4550 = vpack.c.b16 %v3714, %v3710
        %v4551 = vpack.c.b16 %v3719, %v3715
        %v4552 = vpack.c.b16 %v3720, %v3716
        %v4553 = vpack.c.b16 %v3721, %v3717
        %v4554 = vpack.c.b16 %v3722, %v3718
        %v4555 = vpack.c.b16 %v3727, %v3723
        %v4556 = vpack.c.b16 %v3728, %v3724
        %v4557 = vpack.c.b16 %v3729, %v3725
        %v4558 = vpack.c.b16 %v3730, %v3726
        %v4559 = vpack.c.b16 %v3735, %v3731
        %v4560 = vpack.c.b16 %v3736, %v3732
        %v4561 = vpack.c.b16 %v3737, %v3733
        %v4562 = vpack.c.b16 %v3738, %v3734
        %v4563 = vpack.c.b16 %v3743, %v3739
        %v4564 = vpack.c.b16 %v3744, %v3740
        %v4565 = vpack.c.b16 %v3745, %v3741
        %v4566 = vpack.c.b16 %v3746, %v3742
        %v4567 = vpack.c.b16 %v3751, %v3747
        %v4568 = vpack.c.b16 %v3752, %v3748
        %v4569 = vpack.c.b16 %v3753, %v3749
        %v4570 = vpack.c.b16 %v3754, %v3750
        %v4571 = vpack.c.b16 %v3759, %v3755
        %v4572 = vpack.c.b16 %v3760, %v3756
        %v4573 = vpack.c.b16 %v3761, %v3757
        %v4574 = vpack.c.b16 %v3762, %v3758
        %v4575 = vpack.c.b16 %v3767, %v3763
        %v4576 = vpack.c.b16 %v3768, %v3764
        %v4577 = vpack.c.b16 %v3769, %v3765
        %v4578 = vpack.c.b16 %v3770, %v3766
        %v4579 = vpack.c.b16 %v3775, %v3771
        %v4580 = vpack.c.b16 %v3776, %v3772
        %v4581 = vpack.c.b16 %v3777, %v3773
        %v4582 = vpack.c.b16 %v3778, %v3774
        %v4583 = vpack.c.b16 %v3783, %v3779
        %v4584 = vpack.c.b16 %v3784, %v3780
        %v4585 = vpack.c.b16 %v3785, %v3781
        %v4586 = vpack.c.b16 %v3786, %v3782
        %5387 = vmatpush.bf16.msra.mxu0 %v3815
        %5388 = vmatpush.bf16.msra.mxu0 %v3811
        %5389 = vmatpush.bf16.msra.mxu0 %v3807
        %5390 = vmatpush.bf16.msra.mxu0 %v3803
        %5391 = vmatpush.bf16.msra.mxu0 %v3799
        %5392 = vmatpush.bf16.msra.mxu0 %v3795
        %5393 = vmatpush.bf16.msra.mxu0 %v3791
        %5394 = vmatpush.bf16.msra.mxu0 %v3787
        %5395 = vmatmul.bf16.gmra.mxu0 %v552
        %v5396 = vpop.f32.mrf.mxu0
        %v5397 = vadd.f32 %v1379, %v5396
        %v5398 = vpop.f32.mrf.mxu0
        %5399 = vdwg.mxu0
        %5400 = vmatpush.bf16.msra.mxu0 %v3847
        %5401 = vmatpush.bf16.msra.mxu0 %v3843
        %5402 = vmatpush.bf16.msra.mxu0 %v3839
        %5403 = vmatpush.bf16.msra.mxu0 %v3835
        %5404 = vmatpush.bf16.msra.mxu0 %v3831
        %5405 = vmatpush.bf16.msra.mxu0 %v3827
        %5406 = vmatpush.bf16.msra.mxu0 %v3823
        %5407 = vmatpush.bf16.msra.mxu0 %v3819
        %5408 = vmatmul.bf16.gmra.mxu0 %v553
        %v5409 = vpop.f32.mrf.mxu0
        %v5410 = vadd.f32 %v5397, %v5409
        %v5411 = vpop.f32.mrf.mxu0
        %5412 = vdwg.mxu0
        %5413 = vmatpush.bf16.msra.mxu0 %v3879
        %5414 = vmatpush.bf16.msra.mxu0 %v3875
        %5415 = vmatpush.bf16.msra.mxu0 %v3871
        %5416 = vmatpush.bf16.msra.mxu0 %v3867
        %5417 = vmatpush.bf16.msra.mxu0 %v3863
        %5418 = vmatpush.bf16.msra.mxu0 %v3859
        %5419 = vmatpush.bf16.msra.mxu0 %v3855
        %5420 = vmatpush.bf16.msra.mxu0 %v3851
        %5421 = vmatmul.bf16.gmra.mxu0 %v554
        %v5422 = vpop.f32.mrf.mxu0
        %v5423 = vadd.f32 %v5410, %v5422
        %v5424 = vpop.f32.mrf.mxu0
        %5425 = vdwg.mxu0
        %5426 = vmatpush.bf16.msra.mxu0 %v3911
        %5427 = vmatpush.bf16.msra.mxu0 %v3907
        %5428 = vmatpush.bf16.msra.mxu0 %v3903
        %5429 = vmatpush.bf16.msra.mxu0 %v3899
        %5430 = vmatpush.bf16.msra.mxu0 %v3895
        %5431 = vmatpush.bf16.msra.mxu0 %v3891
        %5432 = vmatpush.bf16.msra.mxu0 %v3887
        %5433 = vmatpush.bf16.msra.mxu0 %v3883
        %5434 = vmatmul.bf16.gmra.mxu0 %v555
        %v5435 = vpop.f32.mrf.mxu0
        %v5436 = vadd.f32 %v5423, %v5435
        %v5437 = vpop.f32.mrf.mxu0
        %5438 = vdwg.mxu0
        %5439 = vmatpush.bf16.msra.mxu0 %v3943
        %5440 = vmatpush.bf16.msra.mxu0 %v3939
        %5441 = vmatpush.bf16.msra.mxu0 %v3935
        %5442 = vmatpush.bf16.msra.mxu0 %v3931
        %5443 = vmatpush.bf16.msra.mxu0 %v3927
        %5444 = vmatpush.bf16.msra.mxu0 %v3923
        %5445 = vmatpush.bf16.msra.mxu0 %v3919
        %5446 = vmatpush.bf16.msra.mxu0 %v3915
        %5447 = vmatmul.bf16.gmra.mxu0 %v556
        %v5448 = vpop.f32.mrf.mxu0
        %v5449 = vadd.f32 %v5436, %v5448
        %v5450 = vpop.f32.mrf.mxu0
        %5451 = vdwg.mxu0
        %5452 = vmatpush.bf16.msra.mxu0 %v3975
        %5453 = vmatpush.bf16.msra.mxu0 %v3971
        %5454 = vmatpush.bf16.msra.mxu0 %v3967
        %5455 = vmatpush.bf16.msra.mxu0 %v3963
        %5456 = vmatpush.bf16.msra.mxu0 %v3959
        %5457 = vmatpush.bf16.msra.mxu0 %v3955
        %5458 = vmatpush.bf16.msra.mxu0 %v3951
        %5459 = vmatpush.bf16.msra.mxu0 %v3947
        %5460 = vmatmul.bf16.gmra.mxu0 %v557
        %v5461 = vpop.f32.mrf.mxu0
        %v5462 = vadd.f32 %v5449, %v5461
        %v5463 = vpop.f32.mrf.mxu0
        %5464 = vdwg.mxu0
        %5465 = vmatpush.bf16.msra.mxu0 %v4007
        %5466 = vmatpush.bf16.msra.mxu0 %v4003
        %5467 = vmatpush.bf16.msra.mxu0 %v3999
        %5468 = vmatpush.bf16.msra.mxu0 %v3995
        %5469 = vmatpush.bf16.msra.mxu0 %v3991
        %5470 = vmatpush.bf16.msra.mxu0 %v3987
        %5471 = vmatpush.bf16.msra.mxu0 %v3983
        %5472 = vmatpush.bf16.msra.mxu0 %v3979
        %5473 = vmatmul.bf16.gmra.mxu0 %v558
        %v5474 = vpop.f32.mrf.mxu0
        %v5475 = vadd.f32 %v5462, %v5474
        %v5476 = vpop.f32.mrf.mxu0
        %5477 = vdwg.mxu0
        %5478 = vmatpush.bf16.msra.mxu0 %v4039
        %5479 = vmatpush.bf16.msra.mxu0 %v4035
        %5480 = vmatpush.bf16.msra.mxu0 %v4031
        %5481 = vmatpush.bf16.msra.mxu0 %v4027
        %5482 = vmatpush.bf16.msra.mxu0 %v4023
        %5483 = vmatpush.bf16.msra.mxu0 %v4019
        %5484 = vmatpush.bf16.msra.mxu0 %v4015
        %5485 = vmatpush.bf16.msra.mxu0 %v4011
        %5486 = vmatmul.bf16.gmra.mxu0 %v559
        %v5487 = vpop.f32.mrf.mxu0
        %v5488 = vadd.f32 %v5475, %v5487
        %v5489 = vpop.f32.mrf.mxu0
        %5490 = vdwg.mxu0
        %5491 = vmatpush.bf16.msra.mxu0 %v4071
        %5492 = vmatpush.bf16.msra.mxu0 %v4067
        %5493 = vmatpush.bf16.msra.mxu0 %v4063
        %5494 = vmatpush.bf16.msra.mxu0 %v4059
        %5495 = vmatpush.bf16.msra.mxu0 %v4055
        %5496 = vmatpush.bf16.msra.mxu0 %v4051
        %5497 = vmatpush.bf16.msra.mxu0 %v4047
        %5498 = vmatpush.bf16.msra.mxu0 %v4043
        %5499 = vmatmul.bf16.gmra.mxu0 %v560
        %v5500 = vpop.f32.mrf.mxu0
        %v5501 = vadd.f32 %v5488, %v5500
        %v5502 = vpop.f32.mrf.mxu0
        %5503 = vdwg.mxu0
        %5504 = vmatpush.bf16.msra.mxu0 %v4103
        %5505 = vmatpush.bf16.msra.mxu0 %v4099
        %5506 = vmatpush.bf16.msra.mxu0 %v4095
        %5507 = vmatpush.bf16.msra.mxu0 %v4091
        %5508 = vmatpush.bf16.msra.mxu0 %v4087
        %5509 = vmatpush.bf16.msra.mxu0 %v4083
        %5510 = vmatpush.bf16.msra.mxu0 %v4079
        %5511 = vmatpush.bf16.msra.mxu0 %v4075
        %5512 = vmatmul.bf16.gmra.mxu0 %v561
        %v5513 = vpop.f32.mrf.mxu0
        %v5514 = vadd.f32 %v5501, %v5513
        %v5515 = vpop.f32.mrf.mxu0
        %5516 = vdwg.mxu0
        %5517 = vmatpush.bf16.msra.mxu0 %v4135
        %5518 = vmatpush.bf16.msra.mxu0 %v4131
        %5519 = vmatpush.bf16.msra.mxu0 %v4127
        %5520 = vmatpush.bf16.msra.mxu0 %v4123
        %5521 = vmatpush.bf16.msra.mxu0 %v4119
        %5522 = vmatpush.bf16.msra.mxu0 %v4115
        %5523 = vmatpush.bf16.msra.mxu0 %v4111
        %5524 = vmatpush.bf16.msra.mxu0 %v4107
        %5525 = vmatmul.bf16.gmra.mxu0 %v562
        %v5526 = vpop.f32.mrf.mxu0
        %v5527 = vadd.f32 %v5514, %v5526
        %v5528 = vpop.f32.mrf.mxu0
        %5529 = vdwg.mxu0
        %5530 = vmatpush.bf16.msra.mxu0 %v4167
        %5531 = vmatpush.bf16.msra.mxu0 %v4163
        %5532 = vmatpush.bf16.msra.mxu0 %v4159
        %5533 = vmatpush.bf16.msra.mxu0 %v4155
        %5534 = vmatpush.bf16.msra.mxu0 %v4151
        %5535 = vmatpush.bf16.msra.mxu0 %v4147
        %5536 = vmatpush.bf16.msra.mxu0 %v4143
        %5537 = vmatpush.bf16.msra.mxu0 %v4139
        %5538 = vmatmul.bf16.gmra.mxu0 %v563
        %v5539 = vpop.f32.mrf.mxu0
        %v5540 = vadd.f32 %v5527, %v5539
        %v5541 = vpop.f32.mrf.mxu0
        %5542 = vdwg.mxu0
        %5543 = vmatpush.bf16.msra.mxu0 %v4199
        %5544 = vmatpush.bf16.msra.mxu0 %v4195
        %5545 = vmatpush.bf16.msra.mxu0 %v4191
        %5546 = vmatpush.bf16.msra.mxu0 %v4187
        %5547 = vmatpush.bf16.msra.mxu0 %v4183
        %5548 = vmatpush.bf16.msra.mxu0 %v4179
        %5549 = vmatpush.bf16.msra.mxu0 %v4175
        %5550 = vmatpush.bf16.msra.mxu0 %v4171
        %5551 = vmatmul.bf16.gmra.mxu0 %v564
        %v5552 = vpop.f32.mrf.mxu0
        %v5553 = vadd.f32 %v5540, %v5552
        %v5554 = vpop.f32.mrf.mxu0
        %5555 = vdwg.mxu0
        %5556 = vmatpush.bf16.msra.mxu0 %v4231
        %5557 = vmatpush.bf16.msra.mxu0 %v4227
        %5558 = vmatpush.bf16.msra.mxu0 %v4223
        %5559 = vmatpush.bf16.msra.mxu0 %v4219
        %5560 = vmatpush.bf16.msra.mxu0 %v4215
        %5561 = vmatpush.bf16.msra.mxu0 %v4211
        %5562 = vmatpush.bf16.msra.mxu0 %v4207
        %5563 = vmatpush.bf16.msra.mxu0 %v4203
        %5564 = vmatmul.bf16.gmra.mxu0 %v565
        %v5565 = vpop.f32.mrf.mxu0
        %v5566 = vadd.f32 %v5553, %v5565
        %v5567 = vpop.f32.mrf.mxu0
        %5568 = vdwg.mxu0
        %5569 = vmatpush.bf16.msra.mxu0 %v4263
        %5570 = vmatpush.bf16.msra.mxu0 %v4259
        %5571 = vmatpush.bf16.msra.mxu0 %v4255
        %5572 = vmatpush.bf16.msra.mxu0 %v4251
        %5573 = vmatpush.bf16.msra.mxu0 %v4247
        %5574 = vmatpush.bf16.msra.mxu0 %v4243
        %5575 = vmatpush.bf16.msra.mxu0 %v4239
        %5576 = vmatpush.bf16.msra.mxu0 %v4235
        %5577 = vmatmul.bf16.gmra.mxu0 %v566
        %v5578 = vpop.f32.mrf.mxu0
        %v5579 = vadd.f32 %v5566, %v5578
        %v5580 = vpop.f32.mrf.mxu0
        %5581 = vdwg.mxu0
        %5582 = vmatpush.bf16.msra.mxu0 %v4295
        %5583 = vmatpush.bf16.msra.mxu0 %v4291
        %5584 = vmatpush.bf16.msra.mxu0 %v4287
        %5585 = vmatpush.bf16.msra.mxu0 %v4283
        %5586 = vmatpush.bf16.msra.mxu0 %v4279
        %5587 = vmatpush.bf16.msra.mxu0 %v4275
        %5588 = vmatpush.bf16.msra.mxu0 %v4271
        %5589 = vmatpush.bf16.msra.mxu0 %v4267
        %5590 = vmatmul.bf16.gmra.mxu0 %v567
        %v5591 = vpop.f32.mrf.mxu0
        %v5592 = vadd.f32 %v5579, %v5591
        %v5593 = vpop.f32.mrf.mxu0
        %5594 = vdwg.mxu0
        %5595 = vmatpush.bf16.msra.mxu0 %v4327
        %5596 = vmatpush.bf16.msra.mxu0 %v4323
        %5597 = vmatpush.bf16.msra.mxu0 %v4319
        %5598 = vmatpush.bf16.msra.mxu0 %v4315
        %5599 = vmatpush.bf16.msra.mxu0 %v4311
        %5600 = vmatpush.bf16.msra.mxu0 %v4307
        %5601 = vmatpush.bf16.msra.mxu0 %v4303
        %5602 = vmatpush.bf16.msra.mxu0 %v4299
        %5603 = vmatmul.bf16.gmra.mxu0 %v568
        %v5604 = vpop.f32.mrf.mxu0
        %v5605 = vadd.f32 %v5592, %v5604
        %v5606 = vpop.f32.mrf.mxu0
        %5607 = vdwg.mxu0
        %5608 = vmatpush.bf16.msra.mxu0 %v4359
        %5609 = vmatpush.bf16.msra.mxu0 %v4355
        %5610 = vmatpush.bf16.msra.mxu0 %v4351
        %5611 = vmatpush.bf16.msra.mxu0 %v4347
        %5612 = vmatpush.bf16.msra.mxu0 %v4343
        %5613 = vmatpush.bf16.msra.mxu0 %v4339
        %5614 = vmatpush.bf16.msra.mxu0 %v4335
        %5615 = vmatpush.bf16.msra.mxu0 %v4331
        %5616 = vmatmul.bf16.gmra.mxu0 %v569
        %v5617 = vpop.f32.mrf.mxu0
        %v5618 = vadd.f32 %v5605, %v5617
        %v5619 = vpop.f32.mrf.mxu0
        %5620 = vdwg.mxu0
        %5621 = vmatpush.bf16.msra.mxu0 %v4391
        %5622 = vmatpush.bf16.msra.mxu0 %v4387
        %5623 = vmatpush.bf16.msra.mxu0 %v4383
        %5624 = vmatpush.bf16.msra.mxu0 %v4379
        %5625 = vmatpush.bf16.msra.mxu0 %v4375
        %5626 = vmatpush.bf16.msra.mxu0 %v4371
        %5627 = vmatpush.bf16.msra.mxu0 %v4367
        %5628 = vmatpush.bf16.msra.mxu0 %v4363
        %5629 = vmatmul.bf16.gmra.mxu0 %v570
        %v5630 = vpop.f32.mrf.mxu0
        %v5631 = vadd.f32 %v5618, %v5630
        %v5632 = vpop.f32.mrf.mxu0
        %5633 = vdwg.mxu0
        %5634 = vmatpush.bf16.msra.mxu0 %v4423
        %5635 = vmatpush.bf16.msra.mxu0 %v4419
        %5636 = vmatpush.bf16.msra.mxu0 %v4415
        %5637 = vmatpush.bf16.msra.mxu0 %v4411
        %5638 = vmatpush.bf16.msra.mxu0 %v4407
        %5639 = vmatpush.bf16.msra.mxu0 %v4403
        %5640 = vmatpush.bf16.msra.mxu0 %v4399
        %5641 = vmatpush.bf16.msra.mxu0 %v4395
        %5642 = vmatmul.bf16.gmra.mxu0 %v571
        %v5643 = vpop.f32.mrf.mxu0
        %v5644 = vadd.f32 %v5631, %v5643
        %v5645 = vpop.f32.mrf.mxu0
        %5646 = vdwg.mxu0
        %5647 = vmatpush.bf16.msra.mxu0 %v4455
        %5648 = vmatpush.bf16.msra.mxu0 %v4451
        %5649 = vmatpush.bf16.msra.mxu0 %v4447
        %5650 = vmatpush.bf16.msra.mxu0 %v4443
        %5651 = vmatpush.bf16.msra.mxu0 %v4439
        %5652 = vmatpush.bf16.msra.mxu0 %v4435
        %5653 = vmatpush.bf16.msra.mxu0 %v4431
        %5654 = vmatpush.bf16.msra.mxu0 %v4427
        %5655 = vmatmul.bf16.gmra.mxu0 %v572
        %v5656 = vpop.f32.mrf.mxu0
        %v5657 = vadd.f32 %v5644, %v5656
        %v5658 = vpop.f32.mrf.mxu0
        %5659 = vdwg.mxu0
        %5660 = vmatpush.bf16.msra.mxu0 %v4487
        %5661 = vmatpush.bf16.msra.mxu0 %v4483
        %5662 = vmatpush.bf16.msra.mxu0 %v4479
        %5663 = vmatpush.bf16.msra.mxu0 %v4475
        %5664 = vmatpush.bf16.msra.mxu0 %v4471
        %5665 = vmatpush.bf16.msra.mxu0 %v4467
        %5666 = vmatpush.bf16.msra.mxu0 %v4463
        %5667 = vmatpush.bf16.msra.mxu0 %v4459
        %5668 = vmatmul.bf16.gmra.mxu0 %v573
        %v5669 = vpop.f32.mrf.mxu0
        %v5670 = vadd.f32 %v5657, %v5669
        %v5671 = vpop.f32.mrf.mxu0
        %5672 = vdwg.mxu0
        %5673 = vmatpush.bf16.msra.mxu0 %v4519
        %5674 = vmatpush.bf16.msra.mxu0 %v4515
        %5675 = vmatpush.bf16.msra.mxu0 %v4511
        %5676 = vmatpush.bf16.msra.mxu0 %v4507
        %5677 = vmatpush.bf16.msra.mxu0 %v4503
        %5678 = vmatpush.bf16.msra.mxu0 %v4499
        %5679 = vmatpush.bf16.msra.mxu0 %v4495
        %5680 = vmatpush.bf16.msra.mxu0 %v4491
        %5681 = vmatmul.bf16.gmra.mxu0 %v574
        %v5682 = vpop.f32.mrf.mxu0
        %v5683 = vadd.f32 %v5670, %v5682
        %v5684 = vpop.f32.mrf.mxu0
        %5685 = vdwg.mxu0
        %5686 = vmatpush.bf16.msra.mxu0 %v4551
        %5687 = vmatpush.bf16.msra.mxu0 %v4547
        %5688 = vmatpush.bf16.msra.mxu0 %v4543
        %5689 = vmatpush.bf16.msra.mxu0 %v4539
        %5690 = vmatpush.bf16.msra.mxu0 %v4535
        %5691 = vmatpush.bf16.msra.mxu0 %v4531
        %5692 = vmatpush.bf16.msra.mxu0 %v4527
        %5693 = vmatpush.bf16.msra.mxu0 %v4523
        %5694 = vmatmul.bf16.gmra.mxu0 %v575
        %v5695 = vpop.f32.mrf.mxu0
        %v5696 = vadd.f32 %v5683, %v5695
        %v5697 = vpop.f32.mrf.mxu0
        %5698 = vdwg.mxu0
        %5699 = vmatpush.bf16.msra.mxu0 %v4583
        %5700 = vmatpush.bf16.msra.mxu0 %v4579
        %5701 = vmatpush.bf16.msra.mxu0 %v4575
        %5702 = vmatpush.bf16.msra.mxu0 %v4571
        %5703 = vmatpush.bf16.msra.mxu0 %v4567
        %5704 = vmatpush.bf16.msra.mxu0 %v4563
        %5705 = vmatpush.bf16.msra.mxu0 %v4559
        %5706 = vmatpush.bf16.msra.mxu0 %v4555
        %5707 = vmatmul.bf16.gmra.mxu0 %v576
        %v5708 = vpop.f32.mrf.mxu0
        %v5709 = vadd.f32 %v5696, %v5708
        %v5710 = vpop.f32.mrf.mxu0
        %5711 = vdwg.mxu0
        %5712 = vmatpush.bf16.msra.mxu0 %v3816
        %5713 = vmatpush.bf16.msra.mxu0 %v3812
        %5714 = vmatpush.bf16.msra.mxu0 %v3808
        %5715 = vmatpush.bf16.msra.mxu0 %v3804
        %5716 = vmatpush.bf16.msra.mxu0 %v3800
        %5717 = vmatpush.bf16.msra.mxu0 %v3796
        %5718 = vmatpush.bf16.msra.mxu0 %v3792
        %5719 = vmatpush.bf16.msra.mxu0 %v3788
        %5720 = vmatmul.bf16.gmra.mxu0 %v552
        %v5721 = vpop.f32.mrf.mxu0
        %v5722 = vadd.f32 %v1380, %v5721
        %v5723 = vpop.f32.mrf.mxu0
        %5724 = vdwg.mxu0
        %5725 = vmatpush.bf16.msra.mxu0 %v3848
        %5726 = vmatpush.bf16.msra.mxu0 %v3844
        %5727 = vmatpush.bf16.msra.mxu0 %v3840
        %5728 = vmatpush.bf16.msra.mxu0 %v3836
        %5729 = vmatpush.bf16.msra.mxu0 %v3832
        %5730 = vmatpush.bf16.msra.mxu0 %v3828
        %5731 = vmatpush.bf16.msra.mxu0 %v3824
        %5732 = vmatpush.bf16.msra.mxu0 %v3820
        %5733 = vmatmul.bf16.gmra.mxu0 %v553
        %v5734 = vpop.f32.mrf.mxu0
        %v5735 = vadd.f32 %v5722, %v5734
        %v5736 = vpop.f32.mrf.mxu0
        %5737 = vdwg.mxu0
        %5738 = vmatpush.bf16.msra.mxu0 %v3880
        %5739 = vmatpush.bf16.msra.mxu0 %v3876
        %5740 = vmatpush.bf16.msra.mxu0 %v3872
        %5741 = vmatpush.bf16.msra.mxu0 %v3868
        %5742 = vmatpush.bf16.msra.mxu0 %v3864
        %5743 = vmatpush.bf16.msra.mxu0 %v3860
        %5744 = vmatpush.bf16.msra.mxu0 %v3856
        %5745 = vmatpush.bf16.msra.mxu0 %v3852
        %5746 = vmatmul.bf16.gmra.mxu0 %v554
        %v5747 = vpop.f32.mrf.mxu0
        %v5748 = vadd.f32 %v5735, %v5747
        %v5749 = vpop.f32.mrf.mxu0
        %5750 = vdwg.mxu0
        %5751 = vmatpush.bf16.msra.mxu0 %v3912
        %5752 = vmatpush.bf16.msra.mxu0 %v3908
        %5753 = vmatpush.bf16.msra.mxu0 %v3904
        %5754 = vmatpush.bf16.msra.mxu0 %v3900
        %5755 = vmatpush.bf16.msra.mxu0 %v3896
        %5756 = vmatpush.bf16.msra.mxu0 %v3892
        %5757 = vmatpush.bf16.msra.mxu0 %v3888
        %5758 = vmatpush.bf16.msra.mxu0 %v3884
        %5759 = vmatmul.bf16.gmra.mxu0 %v555
        %v5760 = vpop.f32.mrf.mxu0
        %v5761 = vadd.f32 %v5748, %v5760
        %v5762 = vpop.f32.mrf.mxu0
        %5763 = vdwg.mxu0
        %5764 = vmatpush.bf16.msra.mxu0 %v3944
        %5765 = vmatpush.bf16.msra.mxu0 %v3940
        %5766 = vmatpush.bf16.msra.mxu0 %v3936
        %5767 = vmatpush.bf16.msra.mxu0 %v3932
        %5768 = vmatpush.bf16.msra.mxu0 %v3928
        %5769 = vmatpush.bf16.msra.mxu0 %v3924
        %5770 = vmatpush.bf16.msra.mxu0 %v3920
        %5771 = vmatpush.bf16.msra.mxu0 %v3916
        %5772 = vmatmul.bf16.gmra.mxu0 %v556
        %v5773 = vpop.f32.mrf.mxu0
        %v5774 = vadd.f32 %v5761, %v5773
        %v5775 = vpop.f32.mrf.mxu0
        %5776 = vdwg.mxu0
        %5777 = vmatpush.bf16.msra.mxu0 %v3976
        %5778 = vmatpush.bf16.msra.mxu0 %v3972
        %5779 = vmatpush.bf16.msra.mxu0 %v3968
        %5780 = vmatpush.bf16.msra.mxu0 %v3964
        %5781 = vmatpush.bf16.msra.mxu0 %v3960
        %5782 = vmatpush.bf16.msra.mxu0 %v3956
        %5783 = vmatpush.bf16.msra.mxu0 %v3952
        %5784 = vmatpush.bf16.msra.mxu0 %v3948
        %5785 = vmatmul.bf16.gmra.mxu0 %v557
        %v5786 = vpop.f32.mrf.mxu0
        %v5787 = vadd.f32 %v5774, %v5786
        %v5788 = vpop.f32.mrf.mxu0
        %5789 = vdwg.mxu0
        %5790 = vmatpush.bf16.msra.mxu0 %v4008
        %5791 = vmatpush.bf16.msra.mxu0 %v4004
        %5792 = vmatpush.bf16.msra.mxu0 %v4000
        %5793 = vmatpush.bf16.msra.mxu0 %v3996
        %5794 = vmatpush.bf16.msra.mxu0 %v3992
        %5795 = vmatpush.bf16.msra.mxu0 %v3988
        %5796 = vmatpush.bf16.msra.mxu0 %v3984
        %5797 = vmatpush.bf16.msra.mxu0 %v3980
        %5798 = vmatmul.bf16.gmra.mxu0 %v558
        %v5799 = vpop.f32.mrf.mxu0
        %v5800 = vadd.f32 %v5787, %v5799
        %v5801 = vpop.f32.mrf.mxu0
        %5802 = vdwg.mxu0
        %5803 = vmatpush.bf16.msra.mxu0 %v4040
        %5804 = vmatpush.bf16.msra.mxu0 %v4036
        %5805 = vmatpush.bf16.msra.mxu0 %v4032
        %5806 = vmatpush.bf16.msra.mxu0 %v4028
        %5807 = vmatpush.bf16.msra.mxu0 %v4024
        %5808 = vmatpush.bf16.msra.mxu0 %v4020
        %5809 = vmatpush.bf16.msra.mxu0 %v4016
        %5810 = vmatpush.bf16.msra.mxu0 %v4012
        %5811 = vmatmul.bf16.gmra.mxu0 %v559
        %v5812 = vpop.f32.mrf.mxu0
        %v5813 = vadd.f32 %v5800, %v5812
        %v5814 = vpop.f32.mrf.mxu0
        %5815 = vdwg.mxu0
        %5816 = vmatpush.bf16.msra.mxu0 %v4072
        %5817 = vmatpush.bf16.msra.mxu0 %v4068
        %5818 = vmatpush.bf16.msra.mxu0 %v4064
        %5819 = vmatpush.bf16.msra.mxu0 %v4060
        %5820 = vmatpush.bf16.msra.mxu0 %v4056
        %5821 = vmatpush.bf16.msra.mxu0 %v4052
        %5822 = vmatpush.bf16.msra.mxu0 %v4048
        %5823 = vmatpush.bf16.msra.mxu0 %v4044
        %5824 = vmatmul.bf16.gmra.mxu0 %v560
        %v5825 = vpop.f32.mrf.mxu0
        %v5826 = vadd.f32 %v5813, %v5825
        %v5827 = vpop.f32.mrf.mxu0
        %5828 = vdwg.mxu0
        %5829 = vmatpush.bf16.msra.mxu0 %v4104
        %5830 = vmatpush.bf16.msra.mxu0 %v4100
        %5831 = vmatpush.bf16.msra.mxu0 %v4096
        %5832 = vmatpush.bf16.msra.mxu0 %v4092
        %5833 = vmatpush.bf16.msra.mxu0 %v4088
        %5834 = vmatpush.bf16.msra.mxu0 %v4084
        %5835 = vmatpush.bf16.msra.mxu0 %v4080
        %5836 = vmatpush.bf16.msra.mxu0 %v4076
        %5837 = vmatmul.bf16.gmra.mxu0 %v561
        %v5838 = vpop.f32.mrf.mxu0
        %v5839 = vadd.f32 %v5826, %v5838
        %v5840 = vpop.f32.mrf.mxu0
        %5841 = vdwg.mxu0
        %5842 = vmatpush.bf16.msra.mxu0 %v4136
        %5843 = vmatpush.bf16.msra.mxu0 %v4132
        %5844 = vmatpush.bf16.msra.mxu0 %v4128
        %5845 = vmatpush.bf16.msra.mxu0 %v4124
        %5846 = vmatpush.bf16.msra.mxu0 %v4120
        %5847 = vmatpush.bf16.msra.mxu0 %v4116
        %5848 = vmatpush.bf16.msra.mxu0 %v4112
        %5849 = vmatpush.bf16.msra.mxu0 %v4108
        %5850 = vmatmul.bf16.gmra.mxu0 %v562
        %v5851 = vpop.f32.mrf.mxu0
        %v5852 = vadd.f32 %v5839, %v5851
        %v5853 = vpop.f32.mrf.mxu0
        %5854 = vdwg.mxu0
        %5855 = vmatpush.bf16.msra.mxu0 %v4168
        %5856 = vmatpush.bf16.msra.mxu0 %v4164
        %5857 = vmatpush.bf16.msra.mxu0 %v4160
        %5858 = vmatpush.bf16.msra.mxu0 %v4156
        %5859 = vmatpush.bf16.msra.mxu0 %v4152
        %5860 = vmatpush.bf16.msra.mxu0 %v4148
        %5861 = vmatpush.bf16.msra.mxu0 %v4144
        %5862 = vmatpush.bf16.msra.mxu0 %v4140
        %5863 = vmatmul.bf16.gmra.mxu0 %v563
        %v5864 = vpop.f32.mrf.mxu0
        %v5865 = vadd.f32 %v5852, %v5864
        %v5866 = vpop.f32.mrf.mxu0
        %5867 = vdwg.mxu0
        %5868 = vmatpush.bf16.msra.mxu0 %v4200
        %5869 = vmatpush.bf16.msra.mxu0 %v4196
        %5870 = vmatpush.bf16.msra.mxu0 %v4192
        %5871 = vmatpush.bf16.msra.mxu0 %v4188
        %5872 = vmatpush.bf16.msra.mxu0 %v4184
        %5873 = vmatpush.bf16.msra.mxu0 %v4180
        %5874 = vmatpush.bf16.msra.mxu0 %v4176
        %5875 = vmatpush.bf16.msra.mxu0 %v4172
        %5876 = vmatmul.bf16.gmra.mxu0 %v564
        %v5877 = vpop.f32.mrf.mxu0
        %v5878 = vadd.f32 %v5865, %v5877
        %v5879 = vpop.f32.mrf.mxu0
        %5880 = vdwg.mxu0
        %5881 = vmatpush.bf16.msra.mxu0 %v4232
        %5882 = vmatpush.bf16.msra.mxu0 %v4228
        %5883 = vmatpush.bf16.msra.mxu0 %v4224
        %5884 = vmatpush.bf16.msra.mxu0 %v4220
        %5885 = vmatpush.bf16.msra.mxu0 %v4216
        %5886 = vmatpush.bf16.msra.mxu0 %v4212
        %5887 = vmatpush.bf16.msra.mxu0 %v4208
        %5888 = vmatpush.bf16.msra.mxu0 %v4204
        %5889 = vmatmul.bf16.gmra.mxu0 %v565
        %v5890 = vpop.f32.mrf.mxu0
        %v5891 = vadd.f32 %v5878, %v5890
        %v5892 = vpop.f32.mrf.mxu0
        %5893 = vdwg.mxu0
        %5894 = vmatpush.bf16.msra.mxu0 %v4264
        %5895 = vmatpush.bf16.msra.mxu0 %v4260
        %5896 = vmatpush.bf16.msra.mxu0 %v4256
        %5897 = vmatpush.bf16.msra.mxu0 %v4252
        %5898 = vmatpush.bf16.msra.mxu0 %v4248
        %5899 = vmatpush.bf16.msra.mxu0 %v4244
        %5900 = vmatpush.bf16.msra.mxu0 %v4240
        %5901 = vmatpush.bf16.msra.mxu0 %v4236
        %5902 = vmatmul.bf16.gmra.mxu0 %v566
        %v5903 = vpop.f32.mrf.mxu0
        %v5904 = vadd.f32 %v5891, %v5903
        %v5905 = vpop.f32.mrf.mxu0
        %5906 = vdwg.mxu0
        %5907 = vmatpush.bf16.msra.mxu0 %v4296
        %5908 = vmatpush.bf16.msra.mxu0 %v4292
        %5909 = vmatpush.bf16.msra.mxu0 %v4288
        %5910 = vmatpush.bf16.msra.mxu0 %v4284
        %5911 = vmatpush.bf16.msra.mxu0 %v4280
        %5912 = vmatpush.bf16.msra.mxu0 %v4276
        %5913 = vmatpush.bf16.msra.mxu0 %v4272
        %5914 = vmatpush.bf16.msra.mxu0 %v4268
        %5915 = vmatmul.bf16.gmra.mxu0 %v567
        %v5916 = vpop.f32.mrf.mxu0
        %v5917 = vadd.f32 %v5904, %v5916
        %v5918 = vpop.f32.mrf.mxu0
        %5919 = vdwg.mxu0
        %5920 = vmatpush.bf16.msra.mxu0 %v4328
        %5921 = vmatpush.bf16.msra.mxu0 %v4324
        %5922 = vmatpush.bf16.msra.mxu0 %v4320
        %5923 = vmatpush.bf16.msra.mxu0 %v4316
        %5924 = vmatpush.bf16.msra.mxu0 %v4312
        %5925 = vmatpush.bf16.msra.mxu0 %v4308
        %5926 = vmatpush.bf16.msra.mxu0 %v4304
        %5927 = vmatpush.bf16.msra.mxu0 %v4300
        %5928 = vmatmul.bf16.gmra.mxu0 %v568
        %v5929 = vpop.f32.mrf.mxu0
        %v5930 = vadd.f32 %v5917, %v5929
        %v5931 = vpop.f32.mrf.mxu0
        %5932 = vdwg.mxu0
        %5933 = vmatpush.bf16.msra.mxu0 %v4360
        %5934 = vmatpush.bf16.msra.mxu0 %v4356
        %5935 = vmatpush.bf16.msra.mxu0 %v4352
        %5936 = vmatpush.bf16.msra.mxu0 %v4348
        %5937 = vmatpush.bf16.msra.mxu0 %v4344
        %5938 = vmatpush.bf16.msra.mxu0 %v4340
        %5939 = vmatpush.bf16.msra.mxu0 %v4336
        %5940 = vmatpush.bf16.msra.mxu0 %v4332
        %5941 = vmatmul.bf16.gmra.mxu0 %v569
        %v5942 = vpop.f32.mrf.mxu0
        %v5943 = vadd.f32 %v5930, %v5942
        %v5944 = vpop.f32.mrf.mxu0
        %5945 = vdwg.mxu0
        %5946 = vmatpush.bf16.msra.mxu0 %v4392
        %5947 = vmatpush.bf16.msra.mxu0 %v4388
        %5948 = vmatpush.bf16.msra.mxu0 %v4384
        %5949 = vmatpush.bf16.msra.mxu0 %v4380
        %5950 = vmatpush.bf16.msra.mxu0 %v4376
        %5951 = vmatpush.bf16.msra.mxu0 %v4372
        %5952 = vmatpush.bf16.msra.mxu0 %v4368
        %5953 = vmatpush.bf16.msra.mxu0 %v4364
        %5954 = vmatmul.bf16.gmra.mxu0 %v570
        %v5955 = vpop.f32.mrf.mxu0
        %v5956 = vadd.f32 %v5943, %v5955
        %v5957 = vpop.f32.mrf.mxu0
        %5958 = vdwg.mxu0
        %5959 = vmatpush.bf16.msra.mxu0 %v4424
        %5960 = vmatpush.bf16.msra.mxu0 %v4420
        %5961 = vmatpush.bf16.msra.mxu0 %v4416
        %5962 = vmatpush.bf16.msra.mxu0 %v4412
        %5963 = vmatpush.bf16.msra.mxu0 %v4408
        %5964 = vmatpush.bf16.msra.mxu0 %v4404
        %5965 = vmatpush.bf16.msra.mxu0 %v4400
        %5966 = vmatpush.bf16.msra.mxu0 %v4396
        %5967 = vmatmul.bf16.gmra.mxu0 %v571
        %v5968 = vpop.f32.mrf.mxu0
        %v5969 = vadd.f32 %v5956, %v5968
        %v5970 = vpop.f32.mrf.mxu0
        %5971 = vdwg.mxu0
        %5972 = vmatpush.bf16.msra.mxu0 %v4456
        %5973 = vmatpush.bf16.msra.mxu0 %v4452
        %5974 = vmatpush.bf16.msra.mxu0 %v4448
        %5975 = vmatpush.bf16.msra.mxu0 %v4444
        %5976 = vmatpush.bf16.msra.mxu0 %v4440
        %5977 = vmatpush.bf16.msra.mxu0 %v4436
        %5978 = vmatpush.bf16.msra.mxu0 %v4432
        %5979 = vmatpush.bf16.msra.mxu0 %v4428
        %5980 = vmatmul.bf16.gmra.mxu0 %v572
        %v5981 = vpop.f32.mrf.mxu0
        %v5982 = vadd.f32 %v5969, %v5981
        %v5983 = vpop.f32.mrf.mxu0
        %5984 = vdwg.mxu0
        %5985 = vmatpush.bf16.msra.mxu0 %v4488
        %5986 = vmatpush.bf16.msra.mxu0 %v4484
        %5987 = vmatpush.bf16.msra.mxu0 %v4480
        %5988 = vmatpush.bf16.msra.mxu0 %v4476
        %5989 = vmatpush.bf16.msra.mxu0 %v4472
        %5990 = vmatpush.bf16.msra.mxu0 %v4468
        %5991 = vmatpush.bf16.msra.mxu0 %v4464
        %5992 = vmatpush.bf16.msra.mxu0 %v4460
        %5993 = vmatmul.bf16.gmra.mxu0 %v573
        %v5994 = vpop.f32.mrf.mxu0
        %v5995 = vadd.f32 %v5982, %v5994
        %v5996 = vpop.f32.mrf.mxu0
        %5997 = vdwg.mxu0
        %5998 = vmatpush.bf16.msra.mxu0 %v4520
        %5999 = vmatpush.bf16.msra.mxu0 %v4516
        %6000 = vmatpush.bf16.msra.mxu0 %v4512
        %6001 = vmatpush.bf16.msra.mxu0 %v4508
        %6002 = vmatpush.bf16.msra.mxu0 %v4504
        %6003 = vmatpush.bf16.msra.mxu0 %v4500
        %6004 = vmatpush.bf16.msra.mxu0 %v4496
        %6005 = vmatpush.bf16.msra.mxu0 %v4492
        %6006 = vmatmul.bf16.gmra.mxu0 %v574
        %v6007 = vpop.f32.mrf.mxu0
        %v6008 = vadd.f32 %v5995, %v6007
        %v6009 = vpop.f32.mrf.mxu0
        %6010 = vdwg.mxu0
        %6011 = vmatpush.bf16.msra.mxu0 %v4552
        %6012 = vmatpush.bf16.msra.mxu0 %v4548
        %6013 = vmatpush.bf16.msra.mxu0 %v4544
        %6014 = vmatpush.bf16.msra.mxu0 %v4540
        %6015 = vmatpush.bf16.msra.mxu0 %v4536
        %6016 = vmatpush.bf16.msra.mxu0 %v4532
        %6017 = vmatpush.bf16.msra.mxu0 %v4528
        %6018 = vmatpush.bf16.msra.mxu0 %v4524
        %6019 = vmatmul.bf16.gmra.mxu0 %v575
        %v6020 = vpop.f32.mrf.mxu0
        %v6021 = vadd.f32 %v6008, %v6020
        %v6022 = vpop.f32.mrf.mxu0
        %6023 = vdwg.mxu0
        %6024 = vmatpush.bf16.msra.mxu0 %v4584
        %6025 = vmatpush.bf16.msra.mxu0 %v4580
        %6026 = vmatpush.bf16.msra.mxu0 %v4576
        %6027 = vmatpush.bf16.msra.mxu0 %v4572
        %6028 = vmatpush.bf16.msra.mxu0 %v4568
        %6029 = vmatpush.bf16.msra.mxu0 %v4564
        %6030 = vmatpush.bf16.msra.mxu0 %v4560
        %6031 = vmatpush.bf16.msra.mxu0 %v4556
        %6032 = vmatmul.bf16.gmra.mxu0 %v576
        %v6033 = vpop.f32.mrf.mxu0
        %v6034 = vadd.f32 %v6021, %v6033
        %v6035 = vpop.f32.mrf.mxu0
        %6036 = vdwg.mxu0
        %6037 = vmatpush.bf16.msra.mxu0 %v3817
        %6038 = vmatpush.bf16.msra.mxu0 %v3813
        %6039 = vmatpush.bf16.msra.mxu0 %v3809
        %6040 = vmatpush.bf16.msra.mxu0 %v3805
        %6041 = vmatpush.bf16.msra.mxu0 %v3801
        %6042 = vmatpush.bf16.msra.mxu0 %v3797
        %6043 = vmatpush.bf16.msra.mxu0 %v3793
        %6044 = vmatpush.bf16.msra.mxu0 %v3789
        %6045 = vmatmul.bf16.gmra.mxu0 %v552
        %v6046 = vpop.f32.mrf.mxu0
        %v6047 = vadd.f32 %v1381, %v6046
        %v6048 = vpop.f32.mrf.mxu0
        %6049 = vdwg.mxu0
        %6050 = vmatpush.bf16.msra.mxu0 %v3849
        %6051 = vmatpush.bf16.msra.mxu0 %v3845
        %6052 = vmatpush.bf16.msra.mxu0 %v3841
        %6053 = vmatpush.bf16.msra.mxu0 %v3837
        %6054 = vmatpush.bf16.msra.mxu0 %v3833
        %6055 = vmatpush.bf16.msra.mxu0 %v3829
        %6056 = vmatpush.bf16.msra.mxu0 %v3825
        %6057 = vmatpush.bf16.msra.mxu0 %v3821
        %6058 = vmatmul.bf16.gmra.mxu0 %v553
        %v6059 = vpop.f32.mrf.mxu0
        %v6060 = vadd.f32 %v6047, %v6059
        %v6061 = vpop.f32.mrf.mxu0
        %6062 = vdwg.mxu0
        %6063 = vmatpush.bf16.msra.mxu0 %v3881
        %6064 = vmatpush.bf16.msra.mxu0 %v3877
        %6065 = vmatpush.bf16.msra.mxu0 %v3873
        %6066 = vmatpush.bf16.msra.mxu0 %v3869
        %6067 = vmatpush.bf16.msra.mxu0 %v3865
        %6068 = vmatpush.bf16.msra.mxu0 %v3861
        %6069 = vmatpush.bf16.msra.mxu0 %v3857
        %6070 = vmatpush.bf16.msra.mxu0 %v3853
        %6071 = vmatmul.bf16.gmra.mxu0 %v554
        %v6072 = vpop.f32.mrf.mxu0
        %v6073 = vadd.f32 %v6060, %v6072
        %v6074 = vpop.f32.mrf.mxu0
        %6075 = vdwg.mxu0
        %6076 = vmatpush.bf16.msra.mxu0 %v3913
        %6077 = vmatpush.bf16.msra.mxu0 %v3909
        %6078 = vmatpush.bf16.msra.mxu0 %v3905
        %6079 = vmatpush.bf16.msra.mxu0 %v3901
        %6080 = vmatpush.bf16.msra.mxu0 %v3897
        %6081 = vmatpush.bf16.msra.mxu0 %v3893
        %6082 = vmatpush.bf16.msra.mxu0 %v3889
        %6083 = vmatpush.bf16.msra.mxu0 %v3885
        %6084 = vmatmul.bf16.gmra.mxu0 %v555
        %v6085 = vpop.f32.mrf.mxu0
        %v6086 = vadd.f32 %v6073, %v6085
        %v6087 = vpop.f32.mrf.mxu0
        %6088 = vdwg.mxu0
        %6089 = vmatpush.bf16.msra.mxu0 %v3945
        %6090 = vmatpush.bf16.msra.mxu0 %v3941
        %6091 = vmatpush.bf16.msra.mxu0 %v3937
        %6092 = vmatpush.bf16.msra.mxu0 %v3933
        %6093 = vmatpush.bf16.msra.mxu0 %v3929
        %6094 = vmatpush.bf16.msra.mxu0 %v3925
        %6095 = vmatpush.bf16.msra.mxu0 %v3921
        %6096 = vmatpush.bf16.msra.mxu0 %v3917
        %6097 = vmatmul.bf16.gmra.mxu0 %v556
        %v6098 = vpop.f32.mrf.mxu0
        %v6099 = vadd.f32 %v6086, %v6098
        %v6100 = vpop.f32.mrf.mxu0
        %6101 = vdwg.mxu0
        %6102 = vmatpush.bf16.msra.mxu0 %v3977
        %6103 = vmatpush.bf16.msra.mxu0 %v3973
        %6104 = vmatpush.bf16.msra.mxu0 %v3969
        %6105 = vmatpush.bf16.msra.mxu0 %v3965
        %6106 = vmatpush.bf16.msra.mxu0 %v3961
        %6107 = vmatpush.bf16.msra.mxu0 %v3957
        %6108 = vmatpush.bf16.msra.mxu0 %v3953
        %6109 = vmatpush.bf16.msra.mxu0 %v3949
        %6110 = vmatmul.bf16.gmra.mxu0 %v557
        %v6111 = vpop.f32.mrf.mxu0
        %v6112 = vadd.f32 %v6099, %v6111
        %v6113 = vpop.f32.mrf.mxu0
        %6114 = vdwg.mxu0
        %6115 = vmatpush.bf16.msra.mxu0 %v4009
        %6116 = vmatpush.bf16.msra.mxu0 %v4005
        %6117 = vmatpush.bf16.msra.mxu0 %v4001
        %6118 = vmatpush.bf16.msra.mxu0 %v3997
        %6119 = vmatpush.bf16.msra.mxu0 %v3993
        %6120 = vmatpush.bf16.msra.mxu0 %v3989
        %6121 = vmatpush.bf16.msra.mxu0 %v3985
        %6122 = vmatpush.bf16.msra.mxu0 %v3981
        %6123 = vmatmul.bf16.gmra.mxu0 %v558
        %v6124 = vpop.f32.mrf.mxu0
        %v6125 = vadd.f32 %v6112, %v6124
        %v6126 = vpop.f32.mrf.mxu0
        %6127 = vdwg.mxu0
        %6128 = vmatpush.bf16.msra.mxu0 %v4041
        %6129 = vmatpush.bf16.msra.mxu0 %v4037
        %6130 = vmatpush.bf16.msra.mxu0 %v4033
        %6131 = vmatpush.bf16.msra.mxu0 %v4029
        %6132 = vmatpush.bf16.msra.mxu0 %v4025
        %6133 = vmatpush.bf16.msra.mxu0 %v4021
        %6134 = vmatpush.bf16.msra.mxu0 %v4017
        %6135 = vmatpush.bf16.msra.mxu0 %v4013
        %6136 = vmatmul.bf16.gmra.mxu0 %v559
        %v6137 = vpop.f32.mrf.mxu0
        %v6138 = vadd.f32 %v6125, %v6137
        %v6139 = vpop.f32.mrf.mxu0
        %6140 = vdwg.mxu0
        %6141 = vmatpush.bf16.msra.mxu0 %v4073
        %6142 = vmatpush.bf16.msra.mxu0 %v4069
        %6143 = vmatpush.bf16.msra.mxu0 %v4065
        %6144 = vmatpush.bf16.msra.mxu0 %v4061
        %6145 = vmatpush.bf16.msra.mxu0 %v4057
        %6146 = vmatpush.bf16.msra.mxu0 %v4053
        %6147 = vmatpush.bf16.msra.mxu0 %v4049
        %6148 = vmatpush.bf16.msra.mxu0 %v4045
        %6149 = vmatmul.bf16.gmra.mxu0 %v560
        %v6150 = vpop.f32.mrf.mxu0
        %v6151 = vadd.f32 %v6138, %v6150
        %v6152 = vpop.f32.mrf.mxu0
        %6153 = vdwg.mxu0
        %6154 = vmatpush.bf16.msra.mxu0 %v4105
        %6155 = vmatpush.bf16.msra.mxu0 %v4101
        %6156 = vmatpush.bf16.msra.mxu0 %v4097
        %6157 = vmatpush.bf16.msra.mxu0 %v4093
        %6158 = vmatpush.bf16.msra.mxu0 %v4089
        %6159 = vmatpush.bf16.msra.mxu0 %v4085
        %6160 = vmatpush.bf16.msra.mxu0 %v4081
        %6161 = vmatpush.bf16.msra.mxu0 %v4077
        %6162 = vmatmul.bf16.gmra.mxu0 %v561
        %v6163 = vpop.f32.mrf.mxu0
        %v6164 = vadd.f32 %v6151, %v6163
        %v6165 = vpop.f32.mrf.mxu0
        %6166 = vdwg.mxu0
        %6167 = vmatpush.bf16.msra.mxu0 %v4137
        %6168 = vmatpush.bf16.msra.mxu0 %v4133
        %6169 = vmatpush.bf16.msra.mxu0 %v4129
        %6170 = vmatpush.bf16.msra.mxu0 %v4125
        %6171 = vmatpush.bf16.msra.mxu0 %v4121
        %6172 = vmatpush.bf16.msra.mxu0 %v4117
        %6173 = vmatpush.bf16.msra.mxu0 %v4113
        %6174 = vmatpush.bf16.msra.mxu0 %v4109
        %6175 = vmatmul.bf16.gmra.mxu0 %v562
        %v6176 = vpop.f32.mrf.mxu0
        %v6177 = vadd.f32 %v6164, %v6176
        %v6178 = vpop.f32.mrf.mxu0
        %6179 = vdwg.mxu0
        %6180 = vmatpush.bf16.msra.mxu0 %v4169
        %6181 = vmatpush.bf16.msra.mxu0 %v4165
        %6182 = vmatpush.bf16.msra.mxu0 %v4161
        %6183 = vmatpush.bf16.msra.mxu0 %v4157
        %6184 = vmatpush.bf16.msra.mxu0 %v4153
        %6185 = vmatpush.bf16.msra.mxu0 %v4149
        %6186 = vmatpush.bf16.msra.mxu0 %v4145
        %6187 = vmatpush.bf16.msra.mxu0 %v4141
        %6188 = vmatmul.bf16.gmra.mxu0 %v563
        %v6189 = vpop.f32.mrf.mxu0
        %v6190 = vadd.f32 %v6177, %v6189
        %v6191 = vpop.f32.mrf.mxu0
        %6192 = vdwg.mxu0
        %6193 = vmatpush.bf16.msra.mxu0 %v4201
        %6194 = vmatpush.bf16.msra.mxu0 %v4197
        %6195 = vmatpush.bf16.msra.mxu0 %v4193
        %6196 = vmatpush.bf16.msra.mxu0 %v4189
        %6197 = vmatpush.bf16.msra.mxu0 %v4185
        %6198 = vmatpush.bf16.msra.mxu0 %v4181
        %6199 = vmatpush.bf16.msra.mxu0 %v4177
        %6200 = vmatpush.bf16.msra.mxu0 %v4173
        %6201 = vmatmul.bf16.gmra.mxu0 %v564
        %v6202 = vpop.f32.mrf.mxu0
        %v6203 = vadd.f32 %v6190, %v6202
        %v6204 = vpop.f32.mrf.mxu0
        %6205 = vdwg.mxu0
        %6206 = vmatpush.bf16.msra.mxu0 %v4233
        %6207 = vmatpush.bf16.msra.mxu0 %v4229
        %6208 = vmatpush.bf16.msra.mxu0 %v4225
        %6209 = vmatpush.bf16.msra.mxu0 %v4221
        %6210 = vmatpush.bf16.msra.mxu0 %v4217
        %6211 = vmatpush.bf16.msra.mxu0 %v4213
        %6212 = vmatpush.bf16.msra.mxu0 %v4209
        %6213 = vmatpush.bf16.msra.mxu0 %v4205
        %6214 = vmatmul.bf16.gmra.mxu0 %v565
        %v6215 = vpop.f32.mrf.mxu0
        %v6216 = vadd.f32 %v6203, %v6215
        %v6217 = vpop.f32.mrf.mxu0
        %6218 = vdwg.mxu0
        %6219 = vmatpush.bf16.msra.mxu0 %v4265
        %6220 = vmatpush.bf16.msra.mxu0 %v4261
        %6221 = vmatpush.bf16.msra.mxu0 %v4257
        %6222 = vmatpush.bf16.msra.mxu0 %v4253
        %6223 = vmatpush.bf16.msra.mxu0 %v4249
        %6224 = vmatpush.bf16.msra.mxu0 %v4245
        %6225 = vmatpush.bf16.msra.mxu0 %v4241
        %6226 = vmatpush.bf16.msra.mxu0 %v4237
        %6227 = vmatmul.bf16.gmra.mxu0 %v566
        %v6228 = vpop.f32.mrf.mxu0
        %v6229 = vadd.f32 %v6216, %v6228
        %v6230 = vpop.f32.mrf.mxu0
        %6231 = vdwg.mxu0
        %6232 = vmatpush.bf16.msra.mxu0 %v4297
        %6233 = vmatpush.bf16.msra.mxu0 %v4293
        %6234 = vmatpush.bf16.msra.mxu0 %v4289
        %6235 = vmatpush.bf16.msra.mxu0 %v4285
        %6236 = vmatpush.bf16.msra.mxu0 %v4281
        %6237 = vmatpush.bf16.msra.mxu0 %v4277
        %6238 = vmatpush.bf16.msra.mxu0 %v4273
        %6239 = vmatpush.bf16.msra.mxu0 %v4269
        %6240 = vmatmul.bf16.gmra.mxu0 %v567
        %v6241 = vpop.f32.mrf.mxu0
        %v6242 = vadd.f32 %v6229, %v6241
        %v6243 = vpop.f32.mrf.mxu0
        %6244 = vdwg.mxu0
        %6245 = vmatpush.bf16.msra.mxu0 %v4329
        %6246 = vmatpush.bf16.msra.mxu0 %v4325
        %6247 = vmatpush.bf16.msra.mxu0 %v4321
        %6248 = vmatpush.bf16.msra.mxu0 %v4317
        %6249 = vmatpush.bf16.msra.mxu0 %v4313
        %6250 = vmatpush.bf16.msra.mxu0 %v4309
        %6251 = vmatpush.bf16.msra.mxu0 %v4305
        %6252 = vmatpush.bf16.msra.mxu0 %v4301
        %6253 = vmatmul.bf16.gmra.mxu0 %v568
        %v6254 = vpop.f32.mrf.mxu0
        %v6255 = vadd.f32 %v6242, %v6254
        %v6256 = vpop.f32.mrf.mxu0
        %6257 = vdwg.mxu0
        %6258 = vmatpush.bf16.msra.mxu0 %v4361
        %6259 = vmatpush.bf16.msra.mxu0 %v4357
        %6260 = vmatpush.bf16.msra.mxu0 %v4353
        %6261 = vmatpush.bf16.msra.mxu0 %v4349
        %6262 = vmatpush.bf16.msra.mxu0 %v4345
        %6263 = vmatpush.bf16.msra.mxu0 %v4341
        %6264 = vmatpush.bf16.msra.mxu0 %v4337
        %6265 = vmatpush.bf16.msra.mxu0 %v4333
        %6266 = vmatmul.bf16.gmra.mxu0 %v569
        %v6267 = vpop.f32.mrf.mxu0
        %v6268 = vadd.f32 %v6255, %v6267
        %v6269 = vpop.f32.mrf.mxu0
        %6270 = vdwg.mxu0
        %6271 = vmatpush.bf16.msra.mxu0 %v4393
        %6272 = vmatpush.bf16.msra.mxu0 %v4389
        %6273 = vmatpush.bf16.msra.mxu0 %v4385
        %6274 = vmatpush.bf16.msra.mxu0 %v4381
        %6275 = vmatpush.bf16.msra.mxu0 %v4377
        %6276 = vmatpush.bf16.msra.mxu0 %v4373
        %6277 = vmatpush.bf16.msra.mxu0 %v4369
        %6278 = vmatpush.bf16.msra.mxu0 %v4365
        %6279 = vmatmul.bf16.gmra.mxu0 %v570
        %v6280 = vpop.f32.mrf.mxu0
        %v6281 = vadd.f32 %v6268, %v6280
        %v6282 = vpop.f32.mrf.mxu0
        %6283 = vdwg.mxu0
        %6284 = vmatpush.bf16.msra.mxu0 %v4425
        %6285 = vmatpush.bf16.msra.mxu0 %v4421
        %6286 = vmatpush.bf16.msra.mxu0 %v4417
        %6287 = vmatpush.bf16.msra.mxu0 %v4413
        %6288 = vmatpush.bf16.msra.mxu0 %v4409
        %6289 = vmatpush.bf16.msra.mxu0 %v4405
        %6290 = vmatpush.bf16.msra.mxu0 %v4401
        %6291 = vmatpush.bf16.msra.mxu0 %v4397
        %6292 = vmatmul.bf16.gmra.mxu0 %v571
        %v6293 = vpop.f32.mrf.mxu0
        %v6294 = vadd.f32 %v6281, %v6293
        %v6295 = vpop.f32.mrf.mxu0
        %6296 = vdwg.mxu0
        %6297 = vmatpush.bf16.msra.mxu0 %v4457
        %6298 = vmatpush.bf16.msra.mxu0 %v4453
        %6299 = vmatpush.bf16.msra.mxu0 %v4449
        %6300 = vmatpush.bf16.msra.mxu0 %v4445
        %6301 = vmatpush.bf16.msra.mxu0 %v4441
        %6302 = vmatpush.bf16.msra.mxu0 %v4437
        %6303 = vmatpush.bf16.msra.mxu0 %v4433
        %6304 = vmatpush.bf16.msra.mxu0 %v4429
        %6305 = vmatmul.bf16.gmra.mxu0 %v572
        %v6306 = vpop.f32.mrf.mxu0
        %v6307 = vadd.f32 %v6294, %v6306
        %v6308 = vpop.f32.mrf.mxu0
        %6309 = vdwg.mxu0
        %6310 = vmatpush.bf16.msra.mxu0 %v4489
        %6311 = vmatpush.bf16.msra.mxu0 %v4485
        %6312 = vmatpush.bf16.msra.mxu0 %v4481
        %6313 = vmatpush.bf16.msra.mxu0 %v4477
        %6314 = vmatpush.bf16.msra.mxu0 %v4473
        %6315 = vmatpush.bf16.msra.mxu0 %v4469
        %6316 = vmatpush.bf16.msra.mxu0 %v4465
        %6317 = vmatpush.bf16.msra.mxu0 %v4461
        %6318 = vmatmul.bf16.gmra.mxu0 %v573
        %v6319 = vpop.f32.mrf.mxu0
        %v6320 = vadd.f32 %v6307, %v6319
        %v6321 = vpop.f32.mrf.mxu0
        %6322 = vdwg.mxu0
        %6323 = vmatpush.bf16.msra.mxu0 %v4521
        %6324 = vmatpush.bf16.msra.mxu0 %v4517
        %6325 = vmatpush.bf16.msra.mxu0 %v4513
        %6326 = vmatpush.bf16.msra.mxu0 %v4509
        %6327 = vmatpush.bf16.msra.mxu0 %v4505
        %6328 = vmatpush.bf16.msra.mxu0 %v4501
        %6329 = vmatpush.bf16.msra.mxu0 %v4497
        %6330 = vmatpush.bf16.msra.mxu0 %v4493
        %6331 = vmatmul.bf16.gmra.mxu0 %v574
        %v6332 = vpop.f32.mrf.mxu0
        %v6333 = vadd.f32 %v6320, %v6332
        %v6334 = vpop.f32.mrf.mxu0
        %6335 = vdwg.mxu0
        %6336 = vmatpush.bf16.msra.mxu0 %v4553
        %6337 = vmatpush.bf16.msra.mxu0 %v4549
        %6338 = vmatpush.bf16.msra.mxu0 %v4545
        %6339 = vmatpush.bf16.msra.mxu0 %v4541
        %6340 = vmatpush.bf16.msra.mxu0 %v4537
        %6341 = vmatpush.bf16.msra.mxu0 %v4533
        %6342 = vmatpush.bf16.msra.mxu0 %v4529
        %6343 = vmatpush.bf16.msra.mxu0 %v4525
        %6344 = vmatmul.bf16.gmra.mxu0 %v575
        %v6345 = vpop.f32.mrf.mxu0
        %v6346 = vadd.f32 %v6333, %v6345
        %v6347 = vpop.f32.mrf.mxu0
        %6348 = vdwg.mxu0
        %6349 = vmatpush.bf16.msra.mxu0 %v4585
        %6350 = vmatpush.bf16.msra.mxu0 %v4581
        %6351 = vmatpush.bf16.msra.mxu0 %v4577
        %6352 = vmatpush.bf16.msra.mxu0 %v4573
        %6353 = vmatpush.bf16.msra.mxu0 %v4569
        %6354 = vmatpush.bf16.msra.mxu0 %v4565
        %6355 = vmatpush.bf16.msra.mxu0 %v4561
        %6356 = vmatpush.bf16.msra.mxu0 %v4557
        %6357 = vmatmul.bf16.gmra.mxu0 %v576
        %v6358 = vpop.f32.mrf.mxu0
        %v6359 = vadd.f32 %v6346, %v6358
        %v6360 = vpop.f32.mrf.mxu0
        %6361 = vdwg.mxu0
        %6362 = vmatpush.bf16.msra.mxu0 %v3818
        %6363 = vmatpush.bf16.msra.mxu0 %v3814
        %6364 = vmatpush.bf16.msra.mxu0 %v3810
        %6365 = vmatpush.bf16.msra.mxu0 %v3806
        %6366 = vmatpush.bf16.msra.mxu0 %v3802
        %6367 = vmatpush.bf16.msra.mxu0 %v3798
        %6368 = vmatpush.bf16.msra.mxu0 %v3794
        %6369 = vmatpush.bf16.msra.mxu0 %v3790
        %6370 = vmatmul.bf16.gmra.mxu0 %v552
        %v6371 = vpop.f32.mrf.mxu0
        %v6372 = vadd.f32 %v1382, %v6371
        %v6373 = vpop.f32.mrf.mxu0
        %6374 = vdwg.mxu0
        %6375 = vmatpush.bf16.msra.mxu0 %v3850
        %6376 = vmatpush.bf16.msra.mxu0 %v3846
        %6377 = vmatpush.bf16.msra.mxu0 %v3842
        %6378 = vmatpush.bf16.msra.mxu0 %v3838
        %6379 = vmatpush.bf16.msra.mxu0 %v3834
        %6380 = vmatpush.bf16.msra.mxu0 %v3830
        %6381 = vmatpush.bf16.msra.mxu0 %v3826
        %6382 = vmatpush.bf16.msra.mxu0 %v3822
        %6383 = vmatmul.bf16.gmra.mxu0 %v553
        %v6384 = vpop.f32.mrf.mxu0
        %v6385 = vadd.f32 %v6372, %v6384
        %v6386 = vpop.f32.mrf.mxu0
        %6387 = vdwg.mxu0
        %6388 = vmatpush.bf16.msra.mxu0 %v3882
        %6389 = vmatpush.bf16.msra.mxu0 %v3878
        %6390 = vmatpush.bf16.msra.mxu0 %v3874
        %6391 = vmatpush.bf16.msra.mxu0 %v3870
        %6392 = vmatpush.bf16.msra.mxu0 %v3866
        %6393 = vmatpush.bf16.msra.mxu0 %v3862
        %6394 = vmatpush.bf16.msra.mxu0 %v3858
        %6395 = vmatpush.bf16.msra.mxu0 %v3854
        %6396 = vmatmul.bf16.gmra.mxu0 %v554
        %v6397 = vpop.f32.mrf.mxu0
        %v6398 = vadd.f32 %v6385, %v6397
        %v6399 = vpop.f32.mrf.mxu0
        %6400 = vdwg.mxu0
        %6401 = vmatpush.bf16.msra.mxu0 %v3914
        %6402 = vmatpush.bf16.msra.mxu0 %v3910
        %6403 = vmatpush.bf16.msra.mxu0 %v3906
        %6404 = vmatpush.bf16.msra.mxu0 %v3902
        %6405 = vmatpush.bf16.msra.mxu0 %v3898
        %6406 = vmatpush.bf16.msra.mxu0 %v3894
        %6407 = vmatpush.bf16.msra.mxu0 %v3890
        %6408 = vmatpush.bf16.msra.mxu0 %v3886
        %6409 = vmatmul.bf16.gmra.mxu0 %v555
        %v6410 = vpop.f32.mrf.mxu0
        %v6411 = vadd.f32 %v6398, %v6410
        %v6412 = vpop.f32.mrf.mxu0
        %6413 = vdwg.mxu0
        %6414 = vmatpush.bf16.msra.mxu0 %v3946
        %6415 = vmatpush.bf16.msra.mxu0 %v3942
        %6416 = vmatpush.bf16.msra.mxu0 %v3938
        %6417 = vmatpush.bf16.msra.mxu0 %v3934
        %6418 = vmatpush.bf16.msra.mxu0 %v3930
        %6419 = vmatpush.bf16.msra.mxu0 %v3926
        %6420 = vmatpush.bf16.msra.mxu0 %v3922
        %6421 = vmatpush.bf16.msra.mxu0 %v3918
        %6422 = vmatmul.bf16.gmra.mxu0 %v556
        %v6423 = vpop.f32.mrf.mxu0
        %v6424 = vadd.f32 %v6411, %v6423
        %v6425 = vpop.f32.mrf.mxu0
        %6426 = vdwg.mxu0
        %6427 = vmatpush.bf16.msra.mxu0 %v3978
        %6428 = vmatpush.bf16.msra.mxu0 %v3974
        %6429 = vmatpush.bf16.msra.mxu0 %v3970
        %6430 = vmatpush.bf16.msra.mxu0 %v3966
        %6431 = vmatpush.bf16.msra.mxu0 %v3962
        %6432 = vmatpush.bf16.msra.mxu0 %v3958
        %6433 = vmatpush.bf16.msra.mxu0 %v3954
        %6434 = vmatpush.bf16.msra.mxu0 %v3950
        %6435 = vmatmul.bf16.gmra.mxu0 %v557
        %v6436 = vpop.f32.mrf.mxu0
        %v6437 = vadd.f32 %v6424, %v6436
        %v6438 = vpop.f32.mrf.mxu0
        %6439 = vdwg.mxu0
        %6440 = vmatpush.bf16.msra.mxu0 %v4010
        %6441 = vmatpush.bf16.msra.mxu0 %v4006
        %6442 = vmatpush.bf16.msra.mxu0 %v4002
        %6443 = vmatpush.bf16.msra.mxu0 %v3998
        %6444 = vmatpush.bf16.msra.mxu0 %v3994
        %6445 = vmatpush.bf16.msra.mxu0 %v3990
        %6446 = vmatpush.bf16.msra.mxu0 %v3986
        %6447 = vmatpush.bf16.msra.mxu0 %v3982
        %6448 = vmatmul.bf16.gmra.mxu0 %v558
        %v6449 = vpop.f32.mrf.mxu0
        %v6450 = vadd.f32 %v6437, %v6449
        %v6451 = vpop.f32.mrf.mxu0
        %6452 = vdwg.mxu0
        %6453 = vmatpush.bf16.msra.mxu0 %v4042
        %6454 = vmatpush.bf16.msra.mxu0 %v4038
        %6455 = vmatpush.bf16.msra.mxu0 %v4034
        %6456 = vmatpush.bf16.msra.mxu0 %v4030
        %6457 = vmatpush.bf16.msra.mxu0 %v4026
        %6458 = vmatpush.bf16.msra.mxu0 %v4022
        %6459 = vmatpush.bf16.msra.mxu0 %v4018
        %6460 = vmatpush.bf16.msra.mxu0 %v4014
        %6461 = vmatmul.bf16.gmra.mxu0 %v559
        %v6462 = vpop.f32.mrf.mxu0
        %v6463 = vadd.f32 %v6450, %v6462
        %v6464 = vpop.f32.mrf.mxu0
        %6465 = vdwg.mxu0
        %6466 = vmatpush.bf16.msra.mxu0 %v4074
        %6467 = vmatpush.bf16.msra.mxu0 %v4070
        %6468 = vmatpush.bf16.msra.mxu0 %v4066
        %6469 = vmatpush.bf16.msra.mxu0 %v4062
        %6470 = vmatpush.bf16.msra.mxu0 %v4058
        %6471 = vmatpush.bf16.msra.mxu0 %v4054
        %6472 = vmatpush.bf16.msra.mxu0 %v4050
        %6473 = vmatpush.bf16.msra.mxu0 %v4046
        %6474 = vmatmul.bf16.gmra.mxu0 %v560
        %v6475 = vpop.f32.mrf.mxu0
        %v6476 = vadd.f32 %v6463, %v6475
        %v6477 = vpop.f32.mrf.mxu0
        %6478 = vdwg.mxu0
        %6479 = vmatpush.bf16.msra.mxu0 %v4106
        %6480 = vmatpush.bf16.msra.mxu0 %v4102
        %6481 = vmatpush.bf16.msra.mxu0 %v4098
        %6482 = vmatpush.bf16.msra.mxu0 %v4094
        %6483 = vmatpush.bf16.msra.mxu0 %v4090
        %6484 = vmatpush.bf16.msra.mxu0 %v4086
        %6485 = vmatpush.bf16.msra.mxu0 %v4082
        %6486 = vmatpush.bf16.msra.mxu0 %v4078
        %6487 = vmatmul.bf16.gmra.mxu0 %v561
        %v6488 = vpop.f32.mrf.mxu0
        %v6489 = vadd.f32 %v6476, %v6488
        %v6490 = vpop.f32.mrf.mxu0
        %6491 = vdwg.mxu0
        %6492 = vmatpush.bf16.msra.mxu0 %v4138
        %6493 = vmatpush.bf16.msra.mxu0 %v4134
        %6494 = vmatpush.bf16.msra.mxu0 %v4130
        %6495 = vmatpush.bf16.msra.mxu0 %v4126
        %6496 = vmatpush.bf16.msra.mxu0 %v4122
        %6497 = vmatpush.bf16.msra.mxu0 %v4118
        %6498 = vmatpush.bf16.msra.mxu0 %v4114
        %6499 = vmatpush.bf16.msra.mxu0 %v4110
        %6500 = vmatmul.bf16.gmra.mxu0 %v562
        %v6501 = vpop.f32.mrf.mxu0
        %v6502 = vadd.f32 %v6489, %v6501
        %v6503 = vpop.f32.mrf.mxu0
        %6504 = vdwg.mxu0
        %6505 = vmatpush.bf16.msra.mxu0 %v4170
        %6506 = vmatpush.bf16.msra.mxu0 %v4166
        %6507 = vmatpush.bf16.msra.mxu0 %v4162
        %6508 = vmatpush.bf16.msra.mxu0 %v4158
        %6509 = vmatpush.bf16.msra.mxu0 %v4154
        %6510 = vmatpush.bf16.msra.mxu0 %v4150
        %6511 = vmatpush.bf16.msra.mxu0 %v4146
        %6512 = vmatpush.bf16.msra.mxu0 %v4142
        %6513 = vmatmul.bf16.gmra.mxu0 %v563
        %v6514 = vpop.f32.mrf.mxu0
        %v6515 = vadd.f32 %v6502, %v6514
        %v6516 = vpop.f32.mrf.mxu0
        %6517 = vdwg.mxu0
        %6518 = vmatpush.bf16.msra.mxu0 %v4202
        %6519 = vmatpush.bf16.msra.mxu0 %v4198
        %6520 = vmatpush.bf16.msra.mxu0 %v4194
        %6521 = vmatpush.bf16.msra.mxu0 %v4190
        %6522 = vmatpush.bf16.msra.mxu0 %v4186
        %6523 = vmatpush.bf16.msra.mxu0 %v4182
        %6524 = vmatpush.bf16.msra.mxu0 %v4178
        %6525 = vmatpush.bf16.msra.mxu0 %v4174
        %6526 = vmatmul.bf16.gmra.mxu0 %v564
        %v6527 = vpop.f32.mrf.mxu0
        %v6528 = vadd.f32 %v6515, %v6527
        %v6529 = vpop.f32.mrf.mxu0
        %6530 = vdwg.mxu0
        %6531 = vmatpush.bf16.msra.mxu0 %v4234
        %6532 = vmatpush.bf16.msra.mxu0 %v4230
        %6533 = vmatpush.bf16.msra.mxu0 %v4226
        %6534 = vmatpush.bf16.msra.mxu0 %v4222
        %6535 = vmatpush.bf16.msra.mxu0 %v4218
        %6536 = vmatpush.bf16.msra.mxu0 %v4214
        %6537 = vmatpush.bf16.msra.mxu0 %v4210
        %6538 = vmatpush.bf16.msra.mxu0 %v4206
        %6539 = vmatmul.bf16.gmra.mxu0 %v565
        %v6540 = vpop.f32.mrf.mxu0
        %v6541 = vadd.f32 %v6528, %v6540
        %v6542 = vpop.f32.mrf.mxu0
        %6543 = vdwg.mxu0
        %6544 = vmatpush.bf16.msra.mxu0 %v4266
        %6545 = vmatpush.bf16.msra.mxu0 %v4262
        %6546 = vmatpush.bf16.msra.mxu0 %v4258
        %6547 = vmatpush.bf16.msra.mxu0 %v4254
        %6548 = vmatpush.bf16.msra.mxu0 %v4250
        %6549 = vmatpush.bf16.msra.mxu0 %v4246
        %6550 = vmatpush.bf16.msra.mxu0 %v4242
        %6551 = vmatpush.bf16.msra.mxu0 %v4238
        %6552 = vmatmul.bf16.gmra.mxu0 %v566
        %v6553 = vpop.f32.mrf.mxu0
        %v6554 = vadd.f32 %v6541, %v6553
        %v6555 = vpop.f32.mrf.mxu0
        %6556 = vdwg.mxu0
        %6557 = vmatpush.bf16.msra.mxu0 %v4298
        %6558 = vmatpush.bf16.msra.mxu0 %v4294
        %6559 = vmatpush.bf16.msra.mxu0 %v4290
        %6560 = vmatpush.bf16.msra.mxu0 %v4286
        %6561 = vmatpush.bf16.msra.mxu0 %v4282
        %6562 = vmatpush.bf16.msra.mxu0 %v4278
        %6563 = vmatpush.bf16.msra.mxu0 %v4274
        %6564 = vmatpush.bf16.msra.mxu0 %v4270
        %6565 = vmatmul.bf16.gmra.mxu0 %v567
        %v6566 = vpop.f32.mrf.mxu0
        %v6567 = vadd.f32 %v6554, %v6566
        %v6568 = vpop.f32.mrf.mxu0
        %6569 = vdwg.mxu0
        %6570 = vmatpush.bf16.msra.mxu0 %v4330
        %6571 = vmatpush.bf16.msra.mxu0 %v4326
        %6572 = vmatpush.bf16.msra.mxu0 %v4322
        %6573 = vmatpush.bf16.msra.mxu0 %v4318
        %6574 = vmatpush.bf16.msra.mxu0 %v4314
        %6575 = vmatpush.bf16.msra.mxu0 %v4310
        %6576 = vmatpush.bf16.msra.mxu0 %v4306
        %6577 = vmatpush.bf16.msra.mxu0 %v4302
        %6578 = vmatmul.bf16.gmra.mxu0 %v568
        %v6579 = vpop.f32.mrf.mxu0
        %v6580 = vadd.f32 %v6567, %v6579
        %v6581 = vpop.f32.mrf.mxu0
        %6582 = vdwg.mxu0
        %6583 = vmatpush.bf16.msra.mxu0 %v4362
        %6584 = vmatpush.bf16.msra.mxu0 %v4358
        %6585 = vmatpush.bf16.msra.mxu0 %v4354
        %6586 = vmatpush.bf16.msra.mxu0 %v4350
        %6587 = vmatpush.bf16.msra.mxu0 %v4346
        %6588 = vmatpush.bf16.msra.mxu0 %v4342
        %6589 = vmatpush.bf16.msra.mxu0 %v4338
        %6590 = vmatpush.bf16.msra.mxu0 %v4334
        %6591 = vmatmul.bf16.gmra.mxu0 %v569
        %v6592 = vpop.f32.mrf.mxu0
        %v6593 = vadd.f32 %v6580, %v6592
        %v6594 = vpop.f32.mrf.mxu0
        %6595 = vdwg.mxu0
        %6596 = vmatpush.bf16.msra.mxu0 %v4394
        %6597 = vmatpush.bf16.msra.mxu0 %v4390
        %6598 = vmatpush.bf16.msra.mxu0 %v4386
        %6599 = vmatpush.bf16.msra.mxu0 %v4382
        %6600 = vmatpush.bf16.msra.mxu0 %v4378
        %6601 = vmatpush.bf16.msra.mxu0 %v4374
        %6602 = vmatpush.bf16.msra.mxu0 %v4370
        %6603 = vmatpush.bf16.msra.mxu0 %v4366
        %6604 = vmatmul.bf16.gmra.mxu0 %v570
        %v6605 = vpop.f32.mrf.mxu0
        %v6606 = vadd.f32 %v6593, %v6605
        %v6607 = vpop.f32.mrf.mxu0
        %6608 = vdwg.mxu0
        %6609 = vmatpush.bf16.msra.mxu0 %v4426
        %6610 = vmatpush.bf16.msra.mxu0 %v4422
        %6611 = vmatpush.bf16.msra.mxu0 %v4418
        %6612 = vmatpush.bf16.msra.mxu0 %v4414
        %6613 = vmatpush.bf16.msra.mxu0 %v4410
        %6614 = vmatpush.bf16.msra.mxu0 %v4406
        %6615 = vmatpush.bf16.msra.mxu0 %v4402
        %6616 = vmatpush.bf16.msra.mxu0 %v4398
        %6617 = vmatmul.bf16.gmra.mxu0 %v571
        %v6618 = vpop.f32.mrf.mxu0
        %v6619 = vadd.f32 %v6606, %v6618
        %v6620 = vpop.f32.mrf.mxu0
        %6621 = vdwg.mxu0
        %6622 = vmatpush.bf16.msra.mxu0 %v4458
        %6623 = vmatpush.bf16.msra.mxu0 %v4454
        %6624 = vmatpush.bf16.msra.mxu0 %v4450
        %6625 = vmatpush.bf16.msra.mxu0 %v4446
        %6626 = vmatpush.bf16.msra.mxu0 %v4442
        %6627 = vmatpush.bf16.msra.mxu0 %v4438
        %6628 = vmatpush.bf16.msra.mxu0 %v4434
        %6629 = vmatpush.bf16.msra.mxu0 %v4430
        %6630 = vmatmul.bf16.gmra.mxu0 %v572
        %v6631 = vpop.f32.mrf.mxu0
        %v6632 = vadd.f32 %v6619, %v6631
        %v6633 = vpop.f32.mrf.mxu0
        %6634 = vdwg.mxu0
        %6635 = vmatpush.bf16.msra.mxu0 %v4490
        %6636 = vmatpush.bf16.msra.mxu0 %v4486
        %6637 = vmatpush.bf16.msra.mxu0 %v4482
        %6638 = vmatpush.bf16.msra.mxu0 %v4478
        %6639 = vmatpush.bf16.msra.mxu0 %v4474
        %6640 = vmatpush.bf16.msra.mxu0 %v4470
        %6641 = vmatpush.bf16.msra.mxu0 %v4466
        %6642 = vmatpush.bf16.msra.mxu0 %v4462
        %6643 = vmatmul.bf16.gmra.mxu0 %v573
        %v6644 = vpop.f32.mrf.mxu0
        %v6645 = vadd.f32 %v6632, %v6644
        %v6646 = vpop.f32.mrf.mxu0
        %6647 = vdwg.mxu0
        %6648 = vmatpush.bf16.msra.mxu0 %v4522
        %6649 = vmatpush.bf16.msra.mxu0 %v4518
        %6650 = vmatpush.bf16.msra.mxu0 %v4514
        %6651 = vmatpush.bf16.msra.mxu0 %v4510
        %6652 = vmatpush.bf16.msra.mxu0 %v4506
        %6653 = vmatpush.bf16.msra.mxu0 %v4502
        %6654 = vmatpush.bf16.msra.mxu0 %v4498
        %6655 = vmatpush.bf16.msra.mxu0 %v4494
        %6656 = vmatmul.bf16.gmra.mxu0 %v574
        %v6657 = vpop.f32.mrf.mxu0
        %v6658 = vadd.f32 %v6645, %v6657
        %v6659 = vpop.f32.mrf.mxu0
        %6660 = vdwg.mxu0
        %6661 = vmatpush.bf16.msra.mxu0 %v4554
        %6662 = vmatpush.bf16.msra.mxu0 %v4550
        %6663 = vmatpush.bf16.msra.mxu0 %v4546
        %6664 = vmatpush.bf16.msra.mxu0 %v4542
        %6665 = vmatpush.bf16.msra.mxu0 %v4538
        %6666 = vmatpush.bf16.msra.mxu0 %v4534
        %6667 = vmatpush.bf16.msra.mxu0 %v4530
        %6668 = vmatpush.bf16.msra.mxu0 %v4526
        %6669 = vmatmul.bf16.gmra.mxu0 %v575
        %v6670 = vpop.f32.mrf.mxu0
        %v6671 = vadd.f32 %v6658, %v6670
        %v6672 = vpop.f32.mrf.mxu0
        %6673 = vdwg.mxu0
        %6674 = vmatpush.bf16.msra.mxu0 %v4586
        %6675 = vmatpush.bf16.msra.mxu0 %v4582
        %6676 = vmatpush.bf16.msra.mxu0 %v4578
        %6677 = vmatpush.bf16.msra.mxu0 %v4574
        %6678 = vmatpush.bf16.msra.mxu0 %v4570
        %6679 = vmatpush.bf16.msra.mxu0 %v4566
        %6680 = vmatpush.bf16.msra.mxu0 %v4562
        %6681 = vmatpush.bf16.msra.mxu0 %v4558
        %6682 = vmatmul.bf16.gmra.mxu0 %v576
        %v6683 = vpop.f32.mrf.mxu0
        %v6684 = vadd.f32 %v6671, %v6683
        %v6685 = vpop.f32.mrf.mxu0
        %6686 = vdwg.mxu0
        %vm6687 = vcmask 1041408
        %v6688 = vsel %vm6687, %v5709, 0.0
        %v6689 = vrot.slane %v6688, 4
        %v6690 = vadd.f32 %v6688, %v6689
        %v6691 = vrot.slane %v6690, 2
        %v6692 = vadd.f32 %v6690, %v6691
        %v6693 = vrot.slane %v6692, 1
        %v6694 = vadd.f32 %v6692, %v6693
        %v6695 = vsel %vm6687, %v6034, 0.0
        %v6696 = vrot.slane %v6695, 4
        %v6697 = vadd.f32 %v6695, %v6696
        %v6698 = vrot.slane %v6697, 2
        %v6699 = vadd.f32 %v6697, %v6698
        %v6700 = vrot.slane %v6699, 1
        %v6701 = vadd.f32 %v6699, %v6700
        %v6702 = vsel %vm6687, %v6359, 0.0
        %v6703 = vrot.slane %v6702, 4
        %v6704 = vadd.f32 %v6702, %v6703
        %v6705 = vrot.slane %v6704, 2
        %v6706 = vadd.f32 %v6704, %v6705
        %v6707 = vrot.slane %v6706, 1
        %v6708 = vadd.f32 %v6706, %v6707
        %v6709 = vsel %vm6687, %v6684, 0.0
        %v6710 = vrot.slane %v6709, 4
        %v6711 = vadd.f32 %v6709, %v6710
        %v6712 = vrot.slane %v6711, 2
        %v6713 = vadd.f32 %v6711, %v6712
        %v6714 = vrot.slane %v6713, 1
        %v6715 = vadd.f32 %v6713, %v6714
        %v6716 = vrcp.pop 2.0
        %v6717 = vmul.f32 2.0, %v6716
        %v6718 = vsub.f32 1.0, %v6717
        %v6719 = vmul.f32 %v6716, %v6718
        %v6720 = vadd.f32 %v6716, %v6719
        %vm6721 = vweird.f32 %v6716
        %v6722 = vsel %vm6721, %v6716, %v6720
        %v6723 = vmul.f32 %v6694, %v6722
        %v6724 = vmul.f32 %v6701, %v6722
        %v6725 = vmul.f32 %v6708, %v6722
        %v6726 = vmul.f32 %v6715, %v6722
        %v6727 = vsub.f32 %v5709, %v6723
        %v6728 = vsub.f32 %v6034, %v6724
        %v6729 = vsub.f32 %v6359, %v6725
        %v6730 = vsub.f32 %v6684, %v6726
        %v6731 = vmul.f32 %v6727, %v6727
        %v6732 = vmul.f32 %v6728, %v6728
        %v6733 = vmul.f32 %v6729, %v6729
        %v6734 = vmul.f32 %v6730, %v6730
        %v6735 = vsel %vm6687, %v6731, 0.0
        %v6736 = vrot.slane %v6735, 4
        %v6737 = vadd.f32 %v6735, %v6736
        %v6738 = vrot.slane %v6737, 2
        %v6739 = vadd.f32 %v6737, %v6738
        %v6740 = vrot.slane %v6739, 1
        %v6741 = vadd.f32 %v6739, %v6740
        %v6742 = vsel %vm6687, %v6732, 0.0
        %v6743 = vrot.slane %v6742, 4
        %v6744 = vadd.f32 %v6742, %v6743
        %v6745 = vrot.slane %v6744, 2
        %v6746 = vadd.f32 %v6744, %v6745
        %v6747 = vrot.slane %v6746, 1
        %v6748 = vadd.f32 %v6746, %v6747
        %v6749 = vsel %vm6687, %v6733, 0.0
        %v6750 = vrot.slane %v6749, 4
        %v6751 = vadd.f32 %v6749, %v6750
        %v6752 = vrot.slane %v6751, 2
        %v6753 = vadd.f32 %v6751, %v6752
        %v6754 = vrot.slane %v6753, 1
        %v6755 = vadd.f32 %v6753, %v6754
        %v6756 = vsel %vm6687, %v6734, 0.0
        %v6757 = vrot.slane %v6756, 4
        %v6758 = vadd.f32 %v6756, %v6757
        %v6759 = vrot.slane %v6758, 2
        %v6760 = vadd.f32 %v6758, %v6759
        %v6761 = vrot.slane %v6760, 1
        %v6762 = vadd.f32 %v6760, %v6761
        %v6763 = vmul.f32 %v6741, %v6722
        %v6764 = vmul.f32 %v6748, %v6722
        %v6765 = vmul.f32 %v6755, %v6722
        %v6766 = vmul.f32 %v6762, %v6722
        %v6767 = vadd.f32 %v6763, 1e-05
        %v6768 = vadd.f32 %v6764, 1e-05
        %v6769 = vadd.f32 %v6765, 1e-05
        %v6770 = vadd.f32 %v6766, 1e-05
        %v6771 = vrsqrt.pop %v6767
        %v6772 = vmul.f32 %v6771, %v6767
        %v6773 = vmul.f32 %v6772, %v6771
        %v6774 = vmul.f32 0.5, %v6773
        %v6775 = vsub.f32 1.5, %v6774
        %v6776 = vmul.f32 %v6771, %v6775
        %vm6777 = vweird.f32 %v6767
        %vm6778 = vweird.f32 %v6771
        %vm6779 = vmor %vm6777, %vm6778
        %v6780 = vsel %vm6779, %v6771, %v6776
        %v6781 = vrsqrt.pop %v6768
        %v6782 = vmul.f32 %v6781, %v6768
        %v6783 = vmul.f32 %v6782, %v6781
        %v6784 = vmul.f32 0.5, %v6783
        %v6785 = vsub.f32 1.5, %v6784
        %v6786 = vmul.f32 %v6781, %v6785
        %vm6787 = vweird.f32 %v6768
        %vm6788 = vweird.f32 %v6781
        %vm6789 = vmor %vm6787, %vm6788
        %v6790 = vsel %vm6789, %v6781, %v6786
        %v6791 = vrsqrt.pop %v6769
        %v6792 = vmul.f32 %v6791, %v6769
        %v6793 = vmul.f32 %v6792, %v6791
        %v6794 = vmul.f32 0.5, %v6793
        %v6795 = vsub.f32 1.5, %v6794
        %v6796 = vmul.f32 %v6791, %v6795
        %vm6797 = vweird.f32 %v6769
        %vm6798 = vweird.f32 %v6791
        %vm6799 = vmor %vm6797, %vm6798
        %v6800 = vsel %vm6799, %v6791, %v6796
        %v6801 = vrsqrt.pop %v6770
        %v6802 = vmul.f32 %v6801, %v6770
        %v6803 = vmul.f32 %v6802, %v6801
        %v6804 = vmul.f32 0.5, %v6803
        %v6805 = vsub.f32 1.5, %v6804
        %v6806 = vmul.f32 %v6801, %v6805
        %vm6807 = vweird.f32 %v6770
        %vm6808 = vweird.f32 %v6801
        %vm6809 = vmor %vm6807, %vm6808
        %v6810 = vsel %vm6809, %v6801, %v6806
        %v6811 = vmul.f32 %v6727, %v6780
        %v6812 = vmul.f32 %v6728, %v6790
        %v6813 = vmul.f32 %v6729, %v6800
        %v6814 = vmul.f32 %v6730, %v6810
        %v6815 = vld [vmem:[%s397] sm:$0xf]
        %v6817 = vperm.slane %v6815, 0
        %v6818 = vperm.slane %v6815, 1
        %v6819 = vperm.slane %v6815, 2
        %v6820 = vperm.slane %v6815, 3
        %v6825 = vmul.f32 %v6811, %v6817
        %v6826 = vmul.f32 %v6812, %v6818
        %v6827 = vmul.f32 %v6813, %v6819
        %v6828 = vmul.f32 %v6814, %v6820
        %v6829 = vld [vmem:[%s407] sm:$0xf]
        %v6831 = vperm.slane %v6829, 0
        %v6832 = vperm.slane %v6829, 1
        %v6833 = vperm.slane %v6829, 2
        %v6834 = vperm.slane %v6829, 3
        %v6839 = vadd.f32 %v6825, %v6831
        %v6840 = vadd.f32 %v6826, %v6832
        %v6841 = vadd.f32 %v6827, %v6833
        %v6842 = vadd.f32 %v6828, %v6834
        %vm6843 = vcmp.gt.f32.partialorder %v6839, 0.0
        %vm6844 = vcmp.gt.f32.partialorder %v6840, 0.0
        %vm6845 = vcmp.gt.f32.partialorder %v6841, 0.0
        %vm6846 = vcmp.gt.f32.partialorder %v6842, 0.0
        %v6847 = vmul.f32 %v6839, 0.1
        %v6848 = vmul.f32 %v6840, 0.1
        %v6849 = vmul.f32 %v6841, 0.1
        %v6850 = vmul.f32 %v6842, 0.1
        %v6851 = vsel %vm6843, %v6839, %v6847
        %v6852 = vsel %vm6844, %v6840, %v6848
        %v6853 = vsel %vm6845, %v6841, %v6849
        %v6854 = vsel %vm6846, %v6842, %v6850
        %v6859 = vrot.slane %v6852, 6
        %v6860 = vrot.slane %v6853, 4
        %v6861 = vrot.slane %v6854, 2
        %v6862 = vsel %vm6687, %v6851, %v6859
        %vm6863 = vcmask 1045508
        %v6864 = vsel %vm6863, %v6860, %v6861
        %vm6865 = vcmask 1043456
        %v6866 = vsel %vm6865, %v6862, %v6864
        %6868 = vst [vmem:[%s458] sm:$0xff] %v6866
        %v6869 = vpack.c.bf16 %v6851, %v6851
        %v6870 = vpack.c.bf16 %v6852, %v6852
        %v6871 = vpack.c.bf16 %v6853, %v6853
        %v6872 = vpack.c.bf16 %v6854, %v6854
        %v6873 = vld [vmem:[%s473] sm:$0xf]
        %v6874 = vld [vmem:[%s473 + $0x4] sm:$0xf]
        %v6875 = vld [vmem:[%s473 + $0x8] sm:$0xf]
        %v6876 = vld [vmem:[%s473 + $0xc] sm:$0xf]
        %v6877 = vld [vmem:[%s473 + $0x10] sm:$0xf]
        %v6878 = vld [vmem:[%s473 + $0x14] sm:$0xf]
        %v6879 = vld [vmem:[%s473 + $0x18] sm:$0xf]
        %v6880 = vld [vmem:[%s473 + $0x1c] sm:$0xf]
        %v6881 = vld [vmem:[%s473 + $0x20] sm:$0xf]
        %v6882 = vld [vmem:[%s473 + $0x24] sm:$0xf]
        %v6883 = vld [vmem:[%s473 + $0x28] sm:$0xf]
        %v6884 = vld [vmem:[%s473 + $0x2c] sm:$0xf]
        %v6885 = vld [vmem:[%s473 + $0x30] sm:$0xf]
        %v6886 = vld [vmem:[%s473 + $0x34] sm:$0xf]
        %v6887 = vld [vmem:[%s473 + $0x38] sm:$0xf]
        %v6888 = vld [vmem:[%s473 + $0x3c] sm:$0xf]
        %v6889 = vld [vmem:[%s473 + $0x40] sm:$0xf]
        %v6890 = vld [vmem:[%s473 + $0x44] sm:$0xf]
        %v6891 = vld [vmem:[%s473 + $0x48] sm:$0xf]
        %v6892 = vld [vmem:[%s473 + $0x4c] sm:$0xf]
        %v6893 = vld [vmem:[%s473 + $0x50] sm:$0xf]
        %v6894 = vld [vmem:[%s473 + $0x54] sm:$0xf]
        %v6895 = vld [vmem:[%s473 + $0x58] sm:$0xf]
        %v6896 = vld [vmem:[%s473 + $0x5c] sm:$0xf]
        %v6897 = vld [vmem:[%s473 + $0x60] sm:$0xf]
        %v6898 = vld [vmem:[%s473 + $0x64] sm:$0xf]
        %v6899 = vld [vmem:[%s473 + $0x68] sm:$0xf]
        %v6900 = vld [vmem:[%s473 + $0x6c] sm:$0xf]
        %v6901 = vld [vmem:[%s473 + $0x70] sm:$0xf]
        %v6902 = vld [vmem:[%s473 + $0x74] sm:$0xf]
        %v6903 = vld [vmem:[%s473 + $0x78] sm:$0xf]
        %v6904 = vld [vmem:[%s473 + $0x7c] sm:$0xf]
        %v6905 = vld [vmem:[%s473 + $0x80] sm:$0xf]
        %v6906 = vld [vmem:[%s473 + $0x84] sm:$0xf]
        %v6907 = vld [vmem:[%s473 + $0x88] sm:$0xf]
        %v6908 = vld [vmem:[%s473 + $0x8c] sm:$0xf]
        %v6909 = vld [vmem:[%s473 + $0x90] sm:$0xf]
        %v6910 = vld [vmem:[%s473 + $0x94] sm:$0xf]
        %v6911 = vld [vmem:[%s473 + $0x98] sm:$0xf]
        %v6912 = vld [vmem:[%s473 + $0x9c] sm:$0xf]
        %v6913 = vld [vmem:[%s473 + $0xa0] sm:$0xf]
        %v6914 = vld [vmem:[%s473 + $0xa4] sm:$0xf]
        %v6915 = vld [vmem:[%s473 + $0xa8] sm:$0xf]
        %v6916 = vld [vmem:[%s473 + $0xac] sm:$0xf]
        %v6917 = vld [vmem:[%s473 + $0xb0] sm:$0xf]
        %v6918 = vld [vmem:[%s473 + $0xb4] sm:$0xf]
        %v6919 = vld [vmem:[%s473 + $0xb8] sm:$0xf]
        %v6920 = vld [vmem:[%s473 + $0xbc] sm:$0xf]
        %v6921 = vld [vmem:[%s473 + $0xc0] sm:$0xf]
        %v6922 = vld [vmem:[%s473 + $0xc4] sm:$0xf]
        %v6923 = vld [vmem:[%s473 + $0xc8] sm:$0xf]
        %v6924 = vld [vmem:[%s473 + $0xcc] sm:$0xf]
        %v6925 = vld [vmem:[%s473 + $0xd0] sm:$0xf]
        %v6926 = vld [vmem:[%s473 + $0xd4] sm:$0xf]
        %v6927 = vld [vmem:[%s473 + $0xd8] sm:$0xf]
        %v6928 = vld [vmem:[%s473 + $0xdc] sm:$0xf]
        %v6929 = vld [vmem:[%s473 + $0xe0] sm:$0xf]
        %v6930 = vld [vmem:[%s473 + $0xe4] sm:$0xf]
        %v6931 = vld [vmem:[%s473 + $0xe8] sm:$0xf]
        %v6932 = vld [vmem:[%s473 + $0xec] sm:$0xf]
        %v6933 = vld [vmem:[%s473 + $0xf0] sm:$0xf]
        %v6934 = vld [vmem:[%s473 + $0xf4] sm:$0xf]
        %v6935 = vld [vmem:[%s473 + $0xf8] sm:$0xf]
        %v6936 = vld [vmem:[%s473 + $0xfc] sm:$0xf]
        %v6937 = vld [vmem:[#allocation2] sm:$0x1]
        %p6938 = scmp.eq.s32.totalorder %s34, 0
        %s6939 = scalar_select %p6938, 1.0, 0.0
        %v6940 = vstv %s6939
        %v6941 = vmul.f32 %v6937, %v6940
        %v6943 = vperm.slane %v6941, 0
        %v7009 = vunpack.c.l.b16 %v6873
        %v7010 = vunpack.c.l.b16 %v6874
        %v7011 = vunpack.c.l.b16 %v6875
        %v7012 = vunpack.c.l.b16 %v6876
        %v7013 = vunpack.c.l.b16 %v6877
        %v7014 = vunpack.c.l.b16 %v6878
        %v7015 = vunpack.c.l.b16 %v6879
        %v7016 = vunpack.c.l.b16 %v6880
        %v7017 = vunpack.c.l.b16 %v6881
        %v7018 = vunpack.c.l.b16 %v6882
        %v7019 = vunpack.c.l.b16 %v6883
        %v7020 = vunpack.c.l.b16 %v6884
        %v7021 = vunpack.c.l.b16 %v6885
        %v7022 = vunpack.c.l.b16 %v6886
        %v7023 = vunpack.c.l.b16 %v6887
        %v7024 = vunpack.c.l.b16 %v6888
        %v7025 = vunpack.c.l.b16 %v6889
        %v7026 = vunpack.c.l.b16 %v6890
        %v7027 = vunpack.c.l.b16 %v6891
        %v7028 = vunpack.c.l.b16 %v6892
        %v7029 = vunpack.c.l.b16 %v6893
        %v7030 = vunpack.c.l.b16 %v6894
        %v7031 = vunpack.c.l.b16 %v6895
        %v7032 = vunpack.c.l.b16 %v6896
        %v7033 = vunpack.c.l.b16 %v6897
        %v7034 = vunpack.c.l.b16 %v6898
        %v7035 = vunpack.c.l.b16 %v6899
        %v7036 = vunpack.c.l.b16 %v6900
        %v7037 = vunpack.c.l.b16 %v6901
        %v7038 = vunpack.c.l.b16 %v6902
        %v7039 = vunpack.c.l.b16 %v6903
        %v7040 = vunpack.c.l.b16 %v6904
        %v7041 = vunpack.c.l.b16 %v6905
        %v7042 = vunpack.c.l.b16 %v6906
        %v7043 = vunpack.c.l.b16 %v6907
        %v7044 = vunpack.c.l.b16 %v6908
        %v7045 = vunpack.c.l.b16 %v6909
        %v7046 = vunpack.c.l.b16 %v6910
        %v7047 = vunpack.c.l.b16 %v6911
        %v7048 = vunpack.c.l.b16 %v6912
        %v7049 = vunpack.c.l.b16 %v6913
        %v7050 = vunpack.c.l.b16 %v6914
        %v7051 = vunpack.c.l.b16 %v6915
        %v7052 = vunpack.c.l.b16 %v6916
        %v7053 = vunpack.c.l.b16 %v6917
        %v7054 = vunpack.c.l.b16 %v6918
        %v7055 = vunpack.c.l.b16 %v6919
        %v7056 = vunpack.c.l.b16 %v6920
        %v7057 = vunpack.c.l.b16 %v6921
        %v7058 = vunpack.c.l.b16 %v6922
        %v7059 = vunpack.c.l.b16 %v6923
        %v7060 = vunpack.c.l.b16 %v6924
        %v7061 = vunpack.c.l.b16 %v6925
        %v7062 = vunpack.c.l.b16 %v6926
        %v7063 = vunpack.c.l.b16 %v6927
        %v7064 = vunpack.c.l.b16 %v6928
        %v7065 = vunpack.c.l.b16 %v6929
        %v7066 = vunpack.c.l.b16 %v6930
        %v7067 = vunpack.c.l.b16 %v6931
        %v7068 = vunpack.c.l.b16 %v6932
        %v7069 = vunpack.c.l.b16 %v6933
        %v7070 = vunpack.c.l.b16 %v6934
        %v7071 = vunpack.c.l.b16 %v6935
        %v7072 = vunpack.c.l.b16 %v6936
        %v7073 = vpack.c.b16 %v7010, %v7009
        %v7074 = vpack.c.b16 %v7012, %v7011
        %v7075 = vpack.c.b16 %v7014, %v7013
        %v7076 = vpack.c.b16 %v7016, %v7015
        %v7077 = vpack.c.b16 %v7018, %v7017
        %v7078 = vpack.c.b16 %v7020, %v7019
        %v7079 = vpack.c.b16 %v7022, %v7021
        %v7080 = vpack.c.b16 %v7024, %v7023
        %v7081 = vpack.c.b16 %v7026, %v7025
        %v7082 = vpack.c.b16 %v7028, %v7027
        %v7083 = vpack.c.b16 %v7030, %v7029
        %v7084 = vpack.c.b16 %v7032, %v7031
        %v7085 = vpack.c.b16 %v7034, %v7033
        %v7086 = vpack.c.b16 %v7036, %v7035
        %v7087 = vpack.c.b16 %v7038, %v7037
        %v7088 = vpack.c.b16 %v7040, %v7039
        %v7089 = vpack.c.b16 %v7042, %v7041
        %v7090 = vpack.c.b16 %v7044, %v7043
        %v7091 = vpack.c.b16 %v7046, %v7045
        %v7092 = vpack.c.b16 %v7048, %v7047
        %v7093 = vpack.c.b16 %v7050, %v7049
        %v7094 = vpack.c.b16 %v7052, %v7051
        %v7095 = vpack.c.b16 %v7054, %v7053
        %v7096 = vpack.c.b16 %v7056, %v7055
        %v7097 = vpack.c.b16 %v7058, %v7057
        %v7098 = vpack.c.b16 %v7060, %v7059
        %v7099 = vpack.c.b16 %v7062, %v7061
        %v7100 = vpack.c.b16 %v7064, %v7063
        %v7101 = vpack.c.b16 %v7066, %v7065
        %v7102 = vpack.c.b16 %v7068, %v7067
        %v7103 = vpack.c.b16 %v7070, %v7069
        %v7104 = vpack.c.b16 %v7072, %v7071
        %7137 = vmatpush.bf16.msra.mxu0 %v7080
        %7138 = vmatpush.bf16.msra.mxu0 %v7079
        %7139 = vmatpush.bf16.msra.mxu0 %v7078
        %7140 = vmatpush.bf16.msra.mxu0 %v7077
        %7141 = vmatpush.bf16.msra.mxu0 %v7076
        %7142 = vmatpush.bf16.msra.mxu0 %v7075
        %7143 = vmatpush.bf16.msra.mxu0 %v7074
        %7144 = vmatpush.bf16.msra.mxu0 %v7073
        %7145 = vmatmul.bf16.gmra.mxu0 %v6869
        %v7146 = vpop.f32.mrf.mxu0
        %v7147 = vadd.f32 %v6943, %v7146
        %v7148 = vpop.f32.mrf.mxu0
        %7149 = vdwg.mxu0
        %7150 = vmatpush.bf16.msra.mxu0 %v7088
        %7151 = vmatpush.bf16.msra.mxu0 %v7087
        %7152 = vmatpush.bf16.msra.mxu0 %v7086
        %7153 = vmatpush.bf16.msra.mxu0 %v7085
        %7154 = vmatpush.bf16.msra.mxu0 %v7084
        %7155 = vmatpush.bf16.msra.mxu0 %v7083
        %7156 = vmatpush.bf16.msra.mxu0 %v7082
        %7157 = vmatpush.bf16.msra.mxu0 %v7081
        %7158 = vmatmul.bf16.gmra.mxu0 %v6870
        %v7159 = vpop.f32.mrf.mxu0
        %v7160 = vadd.f32 %v7147, %v7159
        %v7161 = vpop.f32.mrf.mxu0
        %7162 = vdwg.mxu0
        %7163 = vmatpush.bf16.msra.mxu0 %v7096
        %7164 = vmatpush.bf16.msra.mxu0 %v7095
        %7165 = vmatpush.bf16.msra.mxu0 %v7094
        %7166 = vmatpush.bf16.msra.mxu0 %v7093
        %7167 = vmatpush.bf16.msra.mxu0 %v7092
        %7168 = vmatpush.bf16.msra.mxu0 %v7091
        %7169 = vmatpush.bf16.msra.mxu0 %v7090
        %7170 = vmatpush.bf16.msra.mxu0 %v7089
        %7171 = vmatmul.bf16.gmra.mxu0 %v6871
        %v7172 = vpop.f32.mrf.mxu0
        %v7173 = vadd.f32 %v7160, %v7172
        %v7174 = vpop.f32.mrf.mxu0
        %7175 = vdwg.mxu0
        %7176 = vmatpush.bf16.msra.mxu0 %v7104
        %7177 = vmatpush.bf16.msra.mxu0 %v7103
        %7178 = vmatpush.bf16.msra.mxu0 %v7102
        %7179 = vmatpush.bf16.msra.mxu0 %v7101
        %7180 = vmatpush.bf16.msra.mxu0 %v7100
        %7181 = vmatpush.bf16.msra.mxu0 %v7099
        %7182 = vmatpush.bf16.msra.mxu0 %v7098
        %7183 = vmatpush.bf16.msra.mxu0 %v7097
        %7184 = vmatmul.bf16.gmra.mxu0 %v6872
        %v7185 = vpop.f32.mrf.mxu0
        %v7186 = vadd.f32 %v7173, %v7185
        %v7187 = vpop.f32.mrf.mxu0
        %7188 = vdwg.mxu0
        %vm7189 = vcmask 1024
        %7190 = vst.msk [vmem:[%s479] sm:$0x3] %vm7189, %v7186
        %s7191 = sand.u32 %s214, 1
        %s7192 = scalar_lea.sflag [#allocation5], %s7191
        %s7193 = sand.u32 %s214, 1
        %s7194 = smul.addr %s7193, 8
        %s7195 = scalar_lea.vmem [#allocation11], %s7194
        %p7196 = scmp.lt.s32.totalorder %s34, 1
        %s7197 = scalar_select %p7196, %s34, 1
        %s7198 = smul.addr %s7197, 2
        %s7199 = scalar_lea.vmem %s8, %s7198
        // Predicated region
        $region65: #{discriminator_forward.5} parent=47 // pred_check
          %p7200 = pneg %p224
        $region66: #{discriminator_forward.5} parent=47 // pred_check_branch
          %7202 = sbr.rel (%p7200) target = $region68
        $region67: #{discriminator_forward.5} parent=47 // pred_region
          %s7203 = smul.u32 4, %s34
          %7205 = vsyncadd %s7192, 0
          %s7206 = smul.addr %s7203, 2
          %s7207 = scalar_lea.hbm %s7, %s7206
          %s7209 = sshll.u32 %s7195, 4
          %s7210 = int_to_ptr.vmem [resolvable:$true] %s7209
          %s7211 = sshll.u32 %s7207, 4
          %s7212 = int_to_ptr.hbm [resolvable:$true] %s7211
          %7214 = dma.vmem_to_hbm [thread:$0]  %s7210, 128, %s7212, %s7192
        $region68: #{discriminator_forward.5} parent=47 // pred_fallthru
          _
        // Predicated region
        $region69: #{discriminator_forward.5} parent=47 // pred_check
          %p7215 = pneg %p250
        $region70: #{discriminator_forward.5} parent=47 // pred_check_branch
          %7217 = sbr.rel (%p7215) target = $region72
        $region71: #{discriminator_forward.5} parent=47 // pred_region
          _
        $region72: #{discriminator_forward.5} parent=47 // pred_fallthru
          _
      $region48: #{discriminator_forward.5} parent=5 // pred_fallthru
        _
      %p7218 = scmp.le.s32.totalorder 2, %s29
      // Predicated region
      $region73: #{discriminator_forward.5} parent=5 // pred_check
        %p7219 = pneg %p7218
      $region74: #{discriminator_forward.5} parent=5 // pred_check_branch
        %7221 = sbr.rel (%p7219) target = $region76
      $region75: #{discriminator_forward.5} parent=5 // pred_region
        %s7222 = ssub.s32 %s29, 2
        // Predicated region
        $region77: #{discriminator_forward.5} parent=75 // pred_check
          %p7223 = pneg %p230
        $region78: #{discriminator_forward.5} parent=75 // pred_check_branch
          %7225 = sbr.rel (%p7223) target = $region80
        $region79: #{discriminator_forward.5} parent=75 // pred_region
          %s7226 = sand.u32 %s215, 1
          %s7227 = scalar_lea.sflag [#allocation5], %s7226
          %s7228 = sand.u32 %s215, 1
          %s7229 = smul.addr %s7228, 8
          %s7230 = scalar_lea.vmem [#allocation11], %s7229
          %7232 = dma.done %s7227, 128
        $region80: #{discriminator_forward.5} parent=75 // pred_fallthru
          _
        // Predicated region
        $region81: #{discriminator_forward.5} parent=75 // pred_check
          %p7233 = pneg %p256
        $region82: #{discriminator_forward.5} parent=75 // pred_check_branch
          %7235 = sbr.rel (%p7233) target = $region84
        $region83: #{discriminator_forward.5} parent=75 // pred_region
          %p7236 = scmp.lt.s32.totalorder %s35, 1
          %s7237 = scalar_select %p7236, %s35, 1
          %s7238 = smul.addr %s7237, 2
          %s7239 = scalar_lea.vmem %s8, %s7238
        $region84: #{discriminator_forward.5} parent=75 // pred_fallthru
          _
      $region76: #{discriminator_forward.5} parent=5 // pred_fallthru
        _
    $region6: #{discriminator_forward.5} parent=1 // loop_footer
      %s33 = sadd.s32 1, %s29
    $region7: #{discriminator_forward.5} parent=1 // loop_footer_branch
      %28 = sbr.rel target = $region3
    $region8: #{discriminator_forward.5} parent=1 // loop_exit
      _
    %7240 = vsyncpa [#allocation4], 1
    %s7241 = scalar_lea.sflag [#allocation4], 1
    %7242 = vsyncpa %s7241, 1
    %7243 = vsyncpa [#allocation7], 1
    %s7244 = scalar_lea.sflag [#allocation7], 1
    %7245 = vsyncpa %s7244, 1
    %7246 = vsyncpa [#allocation10], 1
    %s7247 = scalar_lea.sflag [#allocation10], 1
    %7248 = vsyncpa %s7247, 1
    %7249 = vsyncpa [#allocation5], 1
    %s7250 = scalar_lea.sflag [#allocation5], 1
    %7251 = vsyncpa %s7250, 1

</llo_original>
